<compile_context>
chip_gen: v7x
topology: tpu7x:2x2x1
jax: 0.10.0
libtpu: 0.0.40
codegen_flags: <defaults>
</compile_context>

<pallas_src>
import functools
import math

import jax
import jax.numpy as jnp
from jax.experimental import pallas as pl
from jax.experimental.pallas import tpu as pltpu


_VMEM_LIMIT = 48 * 1024 * 1024        # leave headroom below v7x's 64 MiB physical VMEM
_STEP_VMEM_BUDGET = 24 * 1024 * 1024  # rough cap on the per-step double-buffered blocks


def _round_up(x, m):
    return (x + m - 1) // m * m


# --------------------------- Pallas kernels ---------------------------------

def _fused_conv_stats_kernel(x_ref, w_ref, mask_ref, y_ref, sum_ref, sumsq_ref,
                             acc_ref, *, width, l_pad, imgs):
    """Fused 3x3/s1/p1 conv (im2col done in VMEM via 9 shifted matmuls) + BN stats.

    x_ref    : (imgs, P_store, Cin_p) bf16 - zero-padded NHWC images flattened over
               (H+2, W+2); tap (kh, kw) is a static row shift of kh*(W+2)+kw.
    w_ref    : (9, Cin_p, Cp) bf16    - tap-major transposed weights (constant block).
    mask_ref : (1, l_pad, 1) f32      - 1.0 on rows that map to a valid (h, w).
    y_ref    : (imgs, l_pad, Cp) bf16 - pre-BN conv output (junk wrap rows included).
    sum_ref / sumsq_ref : (1, 1, Cp) f32 - per-grid-step partial BN statistics.
    acc_ref  : (l_pad, Cp) f32 VMEM scratch accumulator, reused per image.
    """
    row_stride = width + 2
    cp = acc_ref.shape[1]
    m = mask_ref[0, :, :]                                   # (l_pad, 1)
    psum = jnp.zeros((1, cp), jnp.float32)
    psumsq = jnp.zeros((1, cp), jnp.float32)
    for b in range(imgs):
        for t in range(9):
            kh, kw = divmod(t, 3)
            start = kh * row_stride + kw                    # static offset
            xs = x_ref[b, start:start + l_pad, :]           # (l_pad, Cin_p)
            contrib = jnp.dot(xs, w_ref[t],
                              preferred_element_type=jnp.float32)
            if t == 0:
                acc_ref[...] = contrib                      # reset per image
            else:
                acc_ref[...] += contrib
        acc = acc_ref[...]
        ym = acc * m                                        # zero junk rows for stats
        psum = psum + jnp.sum(ym, axis=0, keepdims=True)
        psumsq = psumsq + jnp.sum(ym * acc, axis=0, keepdims=True)
        y_ref[b, :, :] = acc.astype(y_ref.dtype)            # bf16 writeback
    sum_ref[0, :, :] = psum
    sumsq_ref[0, :, :] = psumsq


def _weight_mean_kernel(w_ref, out_ref, *, true_k):
    """Row-mean of the flattened (K, Cp) weights; lane-dense (1, Cp) output."""
    out_ref[...] = jnp.sum(w_ref[...], axis=0, keepdims=True) * (1.0 / true_k)


# --------------------------- pallas_call wrappers ----------------------------

def _fused_conv_bn_stats(x_flat, w9, mask, *, width, l_pad, imgs):
    n_pad, p_store, cin_p = x_flat.shape
    cp = w9.shape[-1]
    steps = n_pad // imgs
    kernel = functools.partial(_fused_conv_stats_kernel,
                               width=width, l_pad=l_pad, imgs=imgs)
    return pl.pallas_call(
        kernel,
        out_shape=(
            jax.ShapeDtypeStruct((n_pad, l_pad, cp), jnp.bfloat16),  # pre-BN conv out
            jax.ShapeDtypeStruct((steps, 1, cp), jnp.float32),       # partial sum
            jax.ShapeDtypeStruct((steps, 1, cp), jnp.float32),       # partial sum of sq
        ),
        grid=(steps,),
        in_specs=[
            pl.BlockSpec((imgs, p_store, cin_p), lambda g: (g, 0, 0)),
            # constant index_map -> weights/mask are DMA'd once and stay resident
            pl.BlockSpec((9, cin_p, cp), lambda g: (0, 0, 0)),
            pl.BlockSpec((1, l_pad, 1), lambda g: (0, 0, 0)),
        ],
        out_specs=(
            pl.BlockSpec((imgs, l_pad, cp), lambda g: (g, 0, 0)),
            pl.BlockSpec((1, 1, cp), lambda g: (g, 0, 0)),
            pl.BlockSpec((1, 1, cp), lambda g: (g, 0, 0)),
        ),
        scratch_shapes=[pltpu.VMEM((l_pad, cp), jnp.float32)],
        compiler_params=pltpu.CompilerParams(
            dimension_semantics=("parallel",),   # partial stats -> megacore-friendly
            vmem_limit_bytes=_VMEM_LIMIT),
    )(x_flat, w9, mask)


def _weight_mean(w_kc, true_k):
    k, cp = w_kc.shape
    out = pl.pallas_call(
        functools.partial(_weight_mean_kernel, true_k=float(true_k)),
        out_shape=jax.ShapeDtypeStruct((1, cp), jnp.float32),
        grid=(1,),
        in_specs=[pl.BlockSpec((k, cp), lambda i: (0, 0))],
        out_specs=pl.BlockSpec((1, cp), lambda i: (0, 0)),
    )(w_kc)
    return out[0]


# --------------------------- JAX glue ----------------------------------------

def init_convolution15_params(key, in_features, out_features):
    """Kaiming-normal (mode='fan_out', relu) init + BatchNorm2d affine defaults."""
    fan_out = out_features * 3 * 3
    std = math.sqrt(2.0 / fan_out)
    return dict(
        weights=std * jax.random.normal(key, (out_features, in_features, 3, 3), jnp.float32),
        bn_gamma=jnp.ones((out_features,), jnp.float32),
        bn_beta=jnp.zeros((out_features,), jnp.float32),
    )


@functools.partial(jax.jit, static_argnames=("epoch", "i", "images_per_step"))
def convolution15_forward(params, x, epoch, gate, i, images_per_step=8):
    w = params["weights"]
    Cout, Cin = w.shape[:2]
    Cp = _round_up(Cout, 128)          # lane-dense output channels

    if epoch >= 4 and i == 0:
        # "data" branch: per-output-channel mean of the flattened weights (exact, f32).
        K = Cin * 9
        w_kc = jnp.zeros((K, Cp), jnp.float32).at[:, :Cout].set(w.reshape(Cout, K).T)
        return _weight_mean(w_kc, K)[:Cout]

    if epoch >= 4:
        # weights.mul(gate.view(Cout,1,1,1)) == per-output-channel scaling (f32).
        w = w * gate.reshape(Cout, 1, 1, 1).astype(w.dtype)

    N, _, H, W = x.shape
    Cin_p = _round_up(Cin, 8)                     # sublane-aligned contraction dim
    P = (H + 2) * (W + 2)                         # padded image, flattened spatially
    L = H * (W + 2)                               # rows so j = h*(W+2)+w covers outputs
    L_pad = _round_up(L, 8)
    P_store = 2 * (W + 2) + 2 + L_pad             # max static tap offset + L_pad

    # images per grid step: amortize per-step pipeline overhead, clamp to VMEM budget.
    imgs = max(1, min(images_per_step, N))
    per_img_bytes = 2 * (P_store * Cin_p + 2 * L_pad * Cp)   # dbl-buffered x + y blocks
    while imgs > 1 and imgs * per_img_bytes > _STEP_VMEM_BUDGET:
        imgs //= 2
    N_pad = _round_up(N, imgs)                    # zero images are stat-inert

    # NCHW -> zero-padded NHWC, flattened over (H+2, W+2); bf16 for the MXU.
    x_nhwc = jnp.transpose(x, (0, 2, 3, 1))
    x_pad = jnp.pad(x_nhwc, ((0, 0), (1, 1), (1, 1), (0, Cin_p - Cin)))
    x_flat = x_pad.reshape(N, P, Cin_p)
    x_flat = jnp.pad(x_flat, ((0, N_pad - N), (0, P_store - P), (0, 0))).astype(jnp.bfloat16)

    # weights -> (tap, Cin_p, Cp), tap index t = kh*3 + kw, bf16 (f32 accumulation).
    w9 = jnp.transpose(w, (2, 3, 1, 0)).reshape(9, Cin, Cout)
    w9 = jnp.pad(w9, ((0, 0), (0, Cin_p - Cin), (0, Cp - Cout))).astype(jnp.bfloat16)

    # validity mask over the l_pad computed rows (wrap/pad junk rows -> 0 for BN stats).
    j = jnp.arange(L_pad)
    valid = ((j % (W + 2)) < W) & ((j // (W + 2)) < H)
    mask = valid.astype(jnp.float32).reshape(1, L_pad, 1)

    y, psum, psumsq = _fused_conv_bn_stats(x_flat, w9, mask,
                                           width=W, l_pad=L_pad, imgs=imgs)

    # Fold batch statistics + affine params (training-mode BN, biased variance).
    eps = 1e-5
    M = N * H * W
    mean = jnp.sum(psum[:, 0, :Cout], axis=0) / M
    var = jnp.sum(psumsq[:, 0, :Cout], axis=0) / M - mean * mean
    var = jnp.maximum(var, 0.0)                   # guard E[y^2]-mean^2 cancellation
    scale = params["bn_gamma"] * jax.lax.rsqrt(var + eps)
    shift = params["bn_beta"] - mean * scale

    # Epilogue: XLA fuses slice + scale/shift + NCHW transpose into one pass over y.
    y_valid = y[:N, :H * (W + 2), :Cout].astype(jnp.float32)
    y_valid = y_valid.reshape(N, H, W + 2, Cout)[:, :, :W, :]
    out = y_valid * scale.reshape(1, 1, 1, Cout) + shift.reshape(1, 1, 1, Cout)
    return jnp.transpose(out, (0, 3, 1, 2))       # back to NCHW


# --------------------------- reference (for sanity check) ---------------------

def _reference_forward(params, x, epoch, gate, i, eps=1e-5):
    Cout = params["weights"].shape[0]
    w = params["weights"]
    if epoch >= 4 and i == 0:
        return jnp.mean(w.reshape(Cout, -1), axis=1)
    if epoch >= 4:
        w = w * gate.reshape(Cout, 1, 1, 1)
    y = jax.lax.conv_general_dilated(
        x, w, window_strides=(1, 1), padding=((1, 1), (1, 1)),
        dimension_numbers=("NCHW", "OIHW", "NCHW"))
    mean = jnp.mean(y, axis=(0, 2, 3), keepdims=True)
    var = jnp.mean((y - mean) ** 2, axis=(0, 2, 3), keepdims=True)
    yhat = (y - mean) * jax.lax.rsqrt(var + eps)
    return (yhat * params["bn_gamma"].reshape(1, Cout, 1, 1)
            + params["bn_beta"].reshape(1, Cout, 1, 1))


# --------------------------- demo / smoke test --------------------------------

if __name__ == "__main__":
    key = jax.random.PRNGKey(0)
    kx, kg, kp = jax.random.split(key, 3)

    in_features, out_features = 4, 8
    x = jax.random.normal(kx, (2, in_features, 16, 16), jnp.float32)   # NCHW input
    gate = jax.random.uniform(kg, (out_features,), jnp.float32) + 0.5
    params = init_convolution15_params(kp, in_features, out_features)

    # epoch < 4 -> BN(conv(x, W))
    out1 = convolution15_forward(params, x, epoch=1, gate=gate, i=1)
    # epoch >= 4, i == 0 -> per-output-channel weight mean, shape (Cout,)
    d = convolution15_forward(params, x, epoch=4, gate=gate, i=0)
    # epoch >= 4, i != 0 -> BN(conv(x, W * gate))
    out3 = convolution15_forward(params, x, epoch=5, gate=gate, i=1)
    jax.block_until_ready((out1, d, out3))

    assert out1.shape == (2, out_features, 16, 16)
    assert d.shape == (out_features,)
    assert out3.shape == (2, out_features, 16, 16)

    # Loose tolerance on conv outputs: kernel matmul is bf16 (f32 accum), ref is f32.
    ref1 = _reference_forward(params, x, 1, gate, 1)
    refd = _reference_forward(params, x, 4, gate, 0)
    ref3 = _reference_forward(params, x, 5, gate, 1)
    assert float(jnp.max(jnp.abs(out1 - ref1))) < 0.2
    assert float(jnp.max(jnp.abs(d - refd))) < 1e-5
    assert float(jnp.max(jnp.abs(out3 - ref3))) < 0.2

    print("KERNEL_OK")
</pallas_src>

<mosaic_0001>
module attributes {stable_mosaic.version = 11 : i64} {
  func.func @_fused_conv_stats_kernel(%arg0: i32, %arg1: memref<2x326x8xbf16, #tpu.memory_space<vmem>>, %arg2: memref<9x8x128xbf16, #tpu.memory_space<vmem>>, %arg3: memref<1x288x1xf32, #tpu.memory_space<vmem>>, %arg4: memref<2x288x128xbf16, #tpu.memory_space<vmem>>, %arg5: memref<1x1x128xf32, #tpu.memory_space<vmem>>, %arg6: memref<1x1x128xf32, #tpu.memory_space<vmem>>, %arg7: memref<288x128xf32, #tpu.memory_space<vmem>>) attributes {dimension_semantics = [#tpu.dimension_semantics<parallel>], iteration_bounds = array<i64: 1>, scalar_prefetch = 0 : i64, scratch_operands = 1 : i64, tpu.core_type = #tpu.core_type<tc>, window_params = [{transform_indices = @transform_0, window_bounds = array<i64: 2, 326, 8>}, {pipeline_mode = #tpu.pipeline_mode<synchronous>, transform_indices = @transform_1, window_bounds = array<i64: 9, 8, 128>}, {pipeline_mode = #tpu.pipeline_mode<synchronous>, transform_indices = @transform_2, window_bounds = array<i64: 1, 288, 1>}, {transform_indices = @transform_3, window_bounds = array<i64: 2, 288, 128>}, {transform_indices = @transform_4, window_bounds = array<i64: 1, 1, 128>}, {transform_indices = @transform_5, window_bounds = array<i64: 1, 1, 128>}]} {
    %c0 = arith.constant 0 : index
    %c0_0 = arith.constant 0 : index
    %c0_1 = arith.constant 0 : index
    %0 = vector.load %arg3[%c0, %c0_0, %c0_1] : memref<1x288x1xf32, #tpu.memory_space<vmem>>, vector<1x288x1xf32>
    %1 = vector.shape_cast %0 : vector<1x288x1xf32> to vector<288x1xf32>
    %cst = arith.constant 0.000000e+00 : f32
    %2 = vector.broadcast %cst : f32 to vector<1x128xf32>
    %cst_2 = arith.constant 0.000000e+00 : f32
    %3 = vector.broadcast %cst_2 : f32 to vector<1x128xf32>
    %c0_3 = arith.constant 0 : index
    %c0_4 = arith.constant 0 : index
    %c0_5 = arith.constant 0 : index
    %4 = vector.load %arg1[%c0_3, %c0_4, %c0_5] : memref<2x326x8xbf16, #tpu.memory_space<vmem>>, vector<1x288x8xbf16>
    %5 = vector.shape_cast %4 : vector<1x288x8xbf16> to vector<288x8xbf16>
    %c0_6 = arith.constant 0 : index
    %c0_7 = arith.constant 0 : index
    %c0_8 = arith.constant 0 : index
    %6 = vector.load %arg2[%c0_6, %c0_7, %c0_8] : memref<9x8x128xbf16, #tpu.memory_space<vmem>>, vector<1x8x128xbf16>
    %7 = vector.shape_cast %6 : vector<1x8x128xbf16> to vector<8x128xbf16>
    %cst_9 = arith.constant dense<0.000000e+00> : vector<288x128xf32>
    %8 = tpu.matmul %5, %7, %cst_9 {dimension_numbers = #tpu.dot_dimension_numbers<[1], [0], [0], [1], [0, 0, 1, 1], [], []>} : vector<288x8xbf16>, vector<8x128xbf16>, vector<288x128xf32> -> vector<288x128xf32>
    %c0_10 = arith.constant 0 : index
    %c0_11 = arith.constant 0 : index
    %9 = vector.load %arg7[%c0_10, %c0_11] : memref<288x128xf32, #tpu.memory_space<vmem>>, vector<288x128xf32>
    tpu.vector_store %arg7[%c0_10, %c0_11], %8 {strides = array<i32>} : memref<288x128xf32, #tpu.memory_space<vmem>>, vector<288x128xf32>,
    %c0_12 = arith.constant 0 : index
    %c1 = arith.constant 1 : index
    %c0_13 = arith.constant 0 : index
    %10 = vector.load %arg1[%c0_12, %c1, %c0_13] : memref<2x326x8xbf16, #tpu.memory_space<vmem>>, vector<1x288x8xbf16>
    %11 = vector.shape_cast %10 : vector<1x288x8xbf16> to vector<288x8xbf16>
    %c1_14 = arith.constant 1 : index
    %c0_15 = arith.constant 0 : index
    %c0_16 = arith.constant 0 : index
    %12 = vector.load %arg2[%c1_14, %c0_15, %c0_16] : memref<9x8x128xbf16, #tpu.memory_space<vmem>>, vector<1x8x128xbf16>
    %13 = vector.shape_cast %12 : vector<1x8x128xbf16> to vector<8x128xbf16>
    %cst_17 = arith.constant dense<0.000000e+00> : vector<288x128xf32>
    %14 = tpu.matmul %11, %13, %cst_17 {dimension_numbers = #tpu.dot_dimension_numbers<[1], [0], [0], [1], [0, 0, 1, 1], [], []>} : vector<288x8xbf16>, vector<8x128xbf16>, vector<288x128xf32> -> vector<288x128xf32>
    %c0_18 = arith.constant 0 : index
    %c0_19 = arith.constant 0 : index
    %15 = vector.load %arg7[%c0_18, %c0_19] : memref<288x128xf32, #tpu.memory_space<vmem>>, vector<288x128xf32>
    %16 = arith.addf %15, %14 : vector<288x128xf32>
    %c0_20 = arith.constant 0 : index
    %c0_21 = arith.constant 0 : index
    %17 = vector.load %arg7[%c0_20, %c0_21] : memref<288x128xf32, #tpu.memory_space<vmem>>, vector<288x128xf32>
    tpu.vector_store %arg7[%c0_20, %c0_21], %16 {strides = array<i32>} : memref<288x128xf32, #tpu.memory_space<vmem>>, vector<288x128xf32>,
    %c0_22 = arith.constant 0 : index
    %c2 = arith.constant 2 : index
    %c0_23 = arith.constant 0 : index
    %18 = vector.load %arg1[%c0_22, %c2, %c0_23] : memref<2x326x8xbf16, #tpu.memory_space<vmem>>, vector<1x288x8xbf16>
    %19 = vector.shape_cast %18 : vector<1x288x8xbf16> to vector<288x8xbf16>
    %c2_24 = arith.constant 2 : index
    %c0_25 = arith.constant 0 : index
    %c0_26 = arith.constant 0 : index
    %20 = vector.load %arg2[%c2_24, %c0_25, %c0_26] : memref<9x8x128xbf16, #tpu.memory_space<vmem>>, vector<1x8x128xbf16>
    %21 = vector.shape_cast %20 : vector<1x8x128xbf16> to vector<8x128xbf16>
    %cst_27 = arith.constant dense<0.000000e+00> : vector<288x128xf32>
    %22 = tpu.matmul %19, %21, %cst_27 {dimension_numbers = #tpu.dot_dimension_numbers<[1], [0], [0], [1], [0, 0, 1, 1], [], []>} : vector<288x8xbf16>, vector<8x128xbf16>, vector<288x128xf32> -> vector<288x128xf32>
    %c0_28 = arith.constant 0 : index
    %c0_29 = arith.constant 0 : index
    %23 = vector.load %arg7[%c0_28, %c0_29] : memref<288x128xf32, #tpu.memory_space<vmem>>, vector<288x128xf32>
    %24 = arith.addf %23, %22 : vector<288x128xf32>
    %c0_30 = arith.constant 0 : index
    %c0_31 = arith.constant 0 : index
    %25 = vector.load %arg7[%c0_30, %c0_31] : memref<288x128xf32, #tpu.memory_space<vmem>>, vector<288x128xf32>
    tpu.vector_store %arg7[%c0_30, %c0_31], %24 {strides = array<i32>} : memref<288x128xf32, #tpu.memory_space<vmem>>, vector<288x128xf32>,
    %c0_32 = arith.constant 0 : index
    %c18 = arith.constant 18 : index
    %c0_33 = arith.constant 0 : index
    %26 = vector.load %arg1[%c0_32, %c18, %c0_33] : memref<2x326x8xbf16, #tpu.memory_space<vmem>>, vector<1x288x8xbf16>
    %27 = vector.shape_cast %26 : vector<1x288x8xbf16> to vector<288x8xbf16>
    %c3 = arith.constant 3 : index
    %c0_34 = arith.constant 0 : index
    %c0_35 = arith.constant 0 : index
    %28 = vector.load %arg2[%c3, %c0_34, %c0_35] : memref<9x8x128xbf16, #tpu.memory_space<vmem>>, vector<1x8x128xbf16>
    %29 = vector.shape_cast %28 : vector<1x8x128xbf16> to vector<8x128xbf16>
    %cst_36 = arith.constant dense<0.000000e+00> : vector<288x128xf32>
    %30 = tpu.matmul %27, %29, %cst_36 {dimension_numbers = #tpu.dot_dimension_numbers<[1], [0], [0], [1], [0, 0, 1, 1], [], []>} : vector<288x8xbf16>, vector<8x128xbf16>, vector<288x128xf32> -> vector<288x128xf32>
    %c0_37 = arith.constant 0 : index
    %c0_38 = arith.constant 0 : index
    %31 = vector.load %arg7[%c0_37, %c0_38] : memref<288x128xf32, #tpu.memory_space<vmem>>, vector<288x128xf32>
    %32 = arith.addf %31, %30 : vector<288x128xf32>
    %c0_39 = arith.constant 0 : index
    %c0_40 = arith.constant 0 : index
    %33 = vector.load %arg7[%c0_39, %c0_40] : memref<288x128xf32, #tpu.memory_space<vmem>>, vector<288x128xf32>
    tpu.vector_store %arg7[%c0_39, %c0_40], %32 {strides = array<i32>} : memref<288x128xf32, #tpu.memory_space<vmem>>, vector<288x128xf32>,
    %c0_41 = arith.constant 0 : index
    %c19 = arith.constant 19 : index
    %c0_42 = arith.constant 0 : index
    %34 = vector.load %arg1[%c0_41, %c19, %c0_42] : memref<2x326x8xbf16, #tpu.memory_space<vmem>>, vector<1x288x8xbf16>
    %35 = vector.shape_cast %34 : vector<1x288x8xbf16> to vector<288x8xbf16>
    %c4 = arith.constant 4 : index
    %c0_43 = arith.constant 0 : index
    %c0_44 = arith.constant 0 : index
    %36 = vector.load %arg2[%c4, %c0_43, %c0_44] : memref<9x8x128xbf16, #tpu.memory_space<vmem>>, vector<1x8x128xbf16>
    %37 = vector.shape_cast %36 : vector<1x8x128xbf16> to vector<8x128xbf16>
    %cst_45 = arith.constant dense<0.000000e+00> : vector<288x128xf32>
    %38 = tpu.matmul %35, %37, %cst_45 {dimension_numbers = #tpu.dot_dimension_numbers<[1], [0], [0], [1], [0, 0, 1, 1], [], []>} : vector<288x8xbf16>, vector<8x128xbf16>, vector<288x128xf32> -> vector<288x128xf32>
    %c0_46 = arith.constant 0 : index
    %c0_47 = arith.constant 0 : index
    %39 = vector.load %arg7[%c0_46, %c0_47] : memref<288x128xf32, #tpu.memory_space<vmem>>, vector<288x128xf32>
    %40 = arith.addf %39, %38 : vector<288x128xf32>
    %c0_48 = arith.constant 0 : index
    %c0_49 = arith.constant 0 : index
    %41 = vector.load %arg7[%c0_48, %c0_49] : memref<288x128xf32, #tpu.memory_space<vmem>>, vector<288x128xf32>
    tpu.vector_store %arg7[%c0_48, %c0_49], %40 {strides = array<i32>} : memref<288x128xf32, #tpu.memory_space<vmem>>, vector<288x128xf32>,
    %c0_50 = arith.constant 0 : index
    %c20 = arith.constant 20 : index
    %c0_51 = arith.constant 0 : index
    %42 = vector.load %arg1[%c0_50, %c20, %c0_51] : memref<2x326x8xbf16, #tpu.memory_space<vmem>>, vector<1x288x8xbf16>
    %43 = vector.shape_cast %42 : vector<1x288x8xbf16> to vector<288x8xbf16>
    %c5 = arith.constant 5 : index
    %c0_52 = arith.constant 0 : index
    %c0_53 = arith.constant 0 : index
    %44 = vector.load %arg2[%c5, %c0_52, %c0_53] : memref<9x8x128xbf16, #tpu.memory_space<vmem>>, vector<1x8x128xbf16>
    %45 = vector.shape_cast %44 : vector<1x8x128xbf16> to vector<8x128xbf16>
    %cst_54 = arith.constant dense<0.000000e+00> : vector<288x128xf32>
    %46 = tpu.matmul %43, %45, %cst_54 {dimension_numbers = #tpu.dot_dimension_numbers<[1], [0], [0], [1], [0, 0, 1, 1], [], []>} : vector<288x8xbf16>, vector<8x128xbf16>, vector<288x128xf32> -> vector<288x128xf32>
    %c0_55 = arith.constant 0 : index
    %c0_56 = arith.constant 0 : index
    %47 = vector.load %arg7[%c0_55, %c0_56] : memref<288x128xf32, #tpu.memory_space<vmem>>, vector<288x128xf32>
    %48 = arith.addf %47, %46 : vector<288x128xf32>
    %c0_57 = arith.constant 0 : index
    %c0_58 = arith.constant 0 : index
    %49 = vector.load %arg7[%c0_57, %c0_58] : memref<288x128xf32, #tpu.memory_space<vmem>>, vector<288x128xf32>
    tpu.vector_store %arg7[%c0_57, %c0_58], %48 {strides = array<i32>} : memref<288x128xf32, #tpu.memory_space<vmem>>, vector<288x128xf32>,
    %c0_59 = arith.constant 0 : index
    %c36 = arith.constant 36 : index
    %c0_60 = arith.constant 0 : index
    %50 = vector.load %arg1[%c0_59, %c36, %c0_60] : memref<2x326x8xbf16, #tpu.memory_space<vmem>>, vector<1x288x8xbf16>
    %51 = vector.shape_cast %50 : vector<1x288x8xbf16> to vector<288x8xbf16>
    %c6 = arith.constant 6 : index
    %c0_61 = arith.constant 0 : index
    %c0_62 = arith.constant 0 : index
    %52 = vector.load %arg2[%c6, %c0_61, %c0_62] : memref<9x8x128xbf16, #tpu.memory_space<vmem>>, vector<1x8x128xbf16>
    %53 = vector.shape_cast %52 : vector<1x8x128xbf16> to vector<8x128xbf16>
    %cst_63 = arith.constant dense<0.000000e+00> : vector<288x128xf32>
    %54 = tpu.matmul %51, %53, %cst_63 {dimension_numbers = #tpu.dot_dimension_numbers<[1], [0], [0], [1], [0, 0, 1, 1], [], []>} : vector<288x8xbf16>, vector<8x128xbf16>, vector<288x128xf32> -> vector<288x128xf32>
    %c0_64 = arith.constant 0 : index
    %c0_65 = arith.constant 0 : index
    %55 = vector.load %arg7[%c0_64, %c0_65] : memref<288x128xf32, #tpu.memory_space<vmem>>, vector<288x128xf32>
    %56 = arith.addf %55, %54 : vector<288x128xf32>
    %c0_66 = arith.constant 0 : index
    %c0_67 = arith.constant 0 : index
    %57 = vector.load %arg7[%c0_66, %c0_67] : memref<288x128xf32, #tpu.memory_space<vmem>>, vector<288x128xf32>
    tpu.vector_store %arg7[%c0_66, %c0_67], %56 {strides = array<i32>} : memref<288x128xf32, #tpu.memory_space<vmem>>, vector<288x128xf32>,
    %c0_68 = arith.constant 0 : index
    %c37 = arith.constant 37 : index
    %c0_69 = arith.constant 0 : index
    %58 = vector.load %arg1[%c0_68, %c37, %c0_69] : memref<2x326x8xbf16, #tpu.memory_space<vmem>>, vector<1x288x8xbf16>
    %59 = vector.shape_cast %58 : vector<1x288x8xbf16> to vector<288x8xbf16>
    %c7 = arith.constant 7 : index
    %c0_70 = arith.constant 0 : index
    %c0_71 = arith.constant 0 : index
    %60 = vector.load %arg2[%c7, %c0_70, %c0_71] : memref<9x8x128xbf16, #tpu.memory_space<vmem>>, vector<1x8x128xbf16>
    %61 = vector.shape_cast %60 : vector<1x8x128xbf16> to vector<8x128xbf16>
    %cst_72 = arith.constant dense<0.000000e+00> : vector<288x128xf32>
    %62 = tpu.matmul %59, %61, %cst_72 {dimension_numbers = #tpu.dot_dimension_numbers<[1], [0], [0], [1], [0, 0, 1, 1], [], []>} : vector<288x8xbf16>, vector<8x128xbf16>, vector<288x128xf32> -> vector<288x128xf32>
    %c0_73 = arith.constant 0 : index
    %c0_74 = arith.constant 0 : index
    %63 = vector.load %arg7[%c0_73, %c0_74] : memref<288x128xf32, #tpu.memory_space<vmem>>, vector<288x128xf32>
    %64 = arith.addf %63, %62 : vector<288x128xf32>
    %c0_75 = arith.constant 0 : index
    %c0_76 = arith.constant 0 : index
    %65 = vector.load %arg7[%c0_75, %c0_76] : memref<288x128xf32, #tpu.memory_space<vmem>>, vector<288x128xf32>
    tpu.vector_store %arg7[%c0_75, %c0_76], %64 {strides = array<i32>} : memref<288x128xf32, #tpu.memory_space<vmem>>, vector<288x128xf32>,
    %c0_77 = arith.constant 0 : index
    %c38 = arith.constant 38 : index
    %c0_78 = arith.constant 0 : index
    %66 = vector.load %arg1[%c0_77, %c38, %c0_78] : memref<2x326x8xbf16, #tpu.memory_space<vmem>>, vector<1x288x8xbf16>
    %67 = vector.shape_cast %66 : vector<1x288x8xbf16> to vector<288x8xbf16>
    %c8 = arith.constant 8 : index
    %c0_79 = arith.constant 0 : index
    %c0_80 = arith.constant 0 : index
    %68 = vector.load %arg2[%c8, %c0_79, %c0_80] : memref<9x8x128xbf16, #tpu.memory_space<vmem>>, vector<1x8x128xbf16>
    %69 = vector.shape_cast %68 : vector<1x8x128xbf16> to vector<8x128xbf16>
    %cst_81 = arith.constant dense<0.000000e+00> : vector<288x128xf32>
    %70 = tpu.matmul %67, %69, %cst_81 {dimension_numbers = #tpu.dot_dimension_numbers<[1], [0], [0], [1], [0, 0, 1, 1], [], []>} : vector<288x8xbf16>, vector<8x128xbf16>, vector<288x128xf32> -> vector<288x128xf32>
    %c0_82 = arith.constant 0 : index
    %c0_83 = arith.constant 0 : index
    %71 = vector.load %arg7[%c0_82, %c0_83] : memref<288x128xf32, #tpu.memory_space<vmem>>, vector<288x128xf32>
    %72 = arith.addf %71, %70 : vector<288x128xf32>
    %c0_84 = arith.constant 0 : index
    %c0_85 = arith.constant 0 : index
    %73 = vector.load %arg7[%c0_84, %c0_85] : memref<288x128xf32, #tpu.memory_space<vmem>>, vector<288x128xf32>
    tpu.vector_store %arg7[%c0_84, %c0_85], %72 {strides = array<i32>} : memref<288x128xf32, #tpu.memory_space<vmem>>, vector<288x128xf32>,
    %c0_86 = arith.constant 0 : index
    %c0_87 = arith.constant 0 : index
    %74 = vector.load %arg7[%c0_86, %c0_87] : memref<288x128xf32, #tpu.memory_space<vmem>>, vector<288x128xf32>
    %75 = vector.broadcast %1 : vector<288x1xf32> to vector<288x128xf32>
    %76 = arith.mulf %74, %75 : vector<288x128xf32>
    %cst_88 = arith.constant dense<0.000000e+00> : vector<128xf32>
    %77 = vector.multi_reduction <add>, %76, %cst_88 [0] : vector<288x128xf32> to vector<128xf32>
    %78 = vector.shape_cast %77 : vector<128xf32> to vector<1x128xf32>
    %79 = arith.addf %2, %78 : vector<1x128xf32>
    %80 = arith.mulf %76, %74 : vector<288x128xf32>
    %cst_89 = arith.constant dense<0.000000e+00> : vector<128xf32>
    %81 = vector.multi_reduction <add>, %80, %cst_89 [0] : vector<288x128xf32> to vector<128xf32>
    %82 = vector.shape_cast %81 : vector<128xf32> to vector<1x128xf32>
    %83 = arith.addf %3, %82 : vector<1x128xf32>
    %84 = arith.truncf %74 : vector<288x128xf32> to vector<288x128xbf16>
    %c0_90 = arith.constant 0 : index
    %c0_91 = arith.constant 0 : index
    %c0_92 = arith.constant 0 : index
    %85 = vector.load %arg4[%c0_90, %c0_91, %c0_92] : memref<2x288x128xbf16, #tpu.memory_space<vmem>>, vector<1x288x128xbf16>
    %86 = vector.shape_cast %85 : vector<1x288x128xbf16> to vector<288x128xbf16>
    %87 = vector.shape_cast %84 : vector<288x128xbf16> to vector<1x288x128xbf16>
    tpu.vector_store %arg4[%c0_90, %c0_91, %c0_92], %87 {strides = array<i32>} : memref<2x288x128xbf16, #tpu.memory_space<vmem>>, vector<1x288x128xbf16>,
    %c1_93 = arith.constant 1 : index
    %c0_94 = arith.constant 0 : index
    %c0_95 = arith.constant 0 : index
    %88 = vector.load %arg1[%c1_93, %c0_94, %c0_95] : memref<2x326x8xbf16, #tpu.memory_space<vmem>>, vector<1x288x8xbf16>
    %89 = vector.shape_cast %88 : vector<1x288x8xbf16> to vector<288x8xbf16>
    %c0_96 = arith.constant 0 : index
    %c0_97 = arith.constant 0 : index
    %c0_98 = arith.constant 0 : index
    %90 = vector.load %arg2[%c0_96, %c0_97, %c0_98] : memref<9x8x128xbf16, #tpu.memory_space<vmem>>, vector<1x8x128xbf16>
    %91 = vector.shape_cast %90 : vector<1x8x128xbf16> to vector<8x128xbf16>
    %cst_99 = arith.constant dense<0.000000e+00> : vector<288x128xf32>
    %92 = tpu.matmul %89, %91, %cst_99 {dimension_numbers = #tpu.dot_dimension_numbers<[1], [0], [0], [1], [0, 0, 1, 1], [], []>} : vector<288x8xbf16>, vector<8x128xbf16>, vector<288x128xf32> -> vector<288x128xf32>
    %c0_100 = arith.constant 0 : index
    %c0_101 = arith.constant 0 : index
    %93 = vector.load %arg7[%c0_100, %c0_101] : memref<288x128xf32, #tpu.memory_space<vmem>>, vector<288x128xf32>
    tpu.vector_store %arg7[%c0_100, %c0_101], %92 {strides = array<i32>} : memref<288x128xf32, #tpu.memory_space<vmem>>, vector<288x128xf32>,
    %c1_102 = arith.constant 1 : index
    %c1_103 = arith.constant 1 : index
    %c0_104 = arith.constant 0 : index
    %94 = vector.load %arg1[%c1_102, %c1_103, %c0_104] : memref<2x326x8xbf16, #tpu.memory_space<vmem>>, vector<1x288x8xbf16>
    %95 = vector.shape_cast %94 : vector<1x288x8xbf16> to vector<288x8xbf16>
    %c1_105 = arith.constant 1 : index
    %c0_106 = arith.constant 0 : index
    %c0_107 = arith.constant 0 : index
    %96 = vector.load %arg2[%c1_105, %c0_106, %c0_107] : memref<9x8x128xbf16, #tpu.memory_space<vmem>>, vector<1x8x128xbf16>
    %97 = vector.shape_cast %96 : vector<1x8x128xbf16> to vector<8x128xbf16>
    %cst_108 = arith.constant dense<0.000000e+00> : vector<288x128xf32>
    %98 = tpu.matmul %95, %97, %cst_108 {dimension_numbers = #tpu.dot_dimension_numbers<[1], [0], [0], [1], [0, 0, 1, 1], [], []>} : vector<288x8xbf16>, vector<8x128xbf16>, vector<288x128xf32> -> vector<288x128xf32>
    %c0_109 = arith.constant 0 : index
    %c0_110 = arith.constant 0 : index
    %99 = vector.load %arg7[%c0_109, %c0_110] : memref<288x128xf32, #tpu.memory_space<vmem>>, vector<288x128xf32>
    %100 = arith.addf %99, %98 : vector<288x128xf32>
    %c0_111 = arith.constant 0 : index
    %c0_112 = arith.constant 0 : index
    %101 = vector.load %arg7[%c0_111, %c0_112] : memref<288x128xf32, #tpu.memory_space<vmem>>, vector<288x128xf32>
    tpu.vector_store %arg7[%c0_111, %c0_112], %100 {strides = array<i32>} : memref<288x128xf32, #tpu.memory_space<vmem>>, vector<288x128xf32>,
    %c1_113 = arith.constant 1 : index
    %c2_114 = arith.constant 2 : index
    %c0_115 = arith.constant 0 : index
    %102 = vector.load %arg1[%c1_113, %c2_114, %c0_115] : memref<2x326x8xbf16, #tpu.memory_space<vmem>>, vector<1x288x8xbf16>
    %103 = vector.shape_cast %102 : vector<1x288x8xbf16> to vector<288x8xbf16>
    %c2_116 = arith.constant 2 : index
    %c0_117 = arith.constant 0 : index
    %c0_118 = arith.constant 0 : index
    %104 = vector.load %arg2[%c2_116, %c0_117, %c0_118] : memref<9x8x128xbf16, #tpu.memory_space<vmem>>, vector<1x8x128xbf16>
    %105 = vector.shape_cast %104 : vector<1x8x128xbf16> to vector<8x128xbf16>
    %cst_119 = arith.constant dense<0.000000e+00> : vector<288x128xf32>
    %106 = tpu.matmul %103, %105, %cst_119 {dimension_numbers = #tpu.dot_dimension_numbers<[1], [0], [0], [1], [0, 0, 1, 1], [], []>} : vector<288x8xbf16>, vector<8x128xbf16>, vector<288x128xf32> -> vector<288x128xf32>
    %c0_120 = arith.constant 0 : index
    %c0_121 = arith.constant 0 : index
    %107 = vector.load %arg7[%c0_120, %c0_121] : memref<288x128xf32, #tpu.memory_space<vmem>>, vector<288x128xf32>
    %108 = arith.addf %107, %106 : vector<288x128xf32>
    %c0_122 = arith.constant 0 : index
    %c0_123 = arith.constant 0 : index
    %109 = vector.load %arg7[%c0_122, %c0_123] : memref<288x128xf32, #tpu.memory_space<vmem>>, vector<288x128xf32>
    tpu.vector_store %arg7[%c0_122, %c0_123], %108 {strides = array<i32>} : memref<288x128xf32, #tpu.memory_space<vmem>>, vector<288x128xf32>,
    %c1_124 = arith.constant 1 : index
    %c18_125 = arith.constant 18 : index
    %c0_126 = arith.constant 0 : index
    %110 = vector.load %arg1[%c1_124, %c18_125, %c0_126] : memref<2x326x8xbf16, #tpu.memory_space<vmem>>, vector<1x288x8xbf16>
    %111 = vector.shape_cast %110 : vector<1x288x8xbf16> to vector<288x8xbf16>
    %c3_127 = arith.constant 3 : index
    %c0_128 = arith.constant 0 : index
    %c0_129 = arith.constant 0 : index
    %112 = vector.load %arg2[%c3_127, %c0_128, %c0_129] : memref<9x8x128xbf16, #tpu.memory_space<vmem>>, vector<1x8x128xbf16>
    %113 = vector.shape_cast %112 : vector<1x8x128xbf16> to vector<8x128xbf16>
    %cst_130 = arith.constant dense<0.000000e+00> : vector<288x128xf32>
    %114 = tpu.matmul %111, %113, %cst_130 {dimension_numbers = #tpu.dot_dimension_numbers<[1], [0], [0], [1], [0, 0, 1, 1], [], []>} : vector<288x8xbf16>, vector<8x128xbf16>, vector<288x128xf32> -> vector<288x128xf32>
    %c0_131 = arith.constant 0 : index
    %c0_132 = arith.constant 0 : index
    %115 = vector.load %arg7[%c0_131, %c0_132] : memref<288x128xf32, #tpu.memory_space<vmem>>, vector<288x128xf32>
    %116 = arith.addf %115, %114 : vector<288x128xf32>
    %c0_133 = arith.constant 0 : index
    %c0_134 = arith.constant 0 : index
    %117 = vector.load %arg7[%c0_133, %c0_134] : memref<288x128xf32, #tpu.memory_space<vmem>>, vector<288x128xf32>
    tpu.vector_store %arg7[%c0_133, %c0_134], %116 {strides = array<i32>} : memref<288x128xf32, #tpu.memory_space<vmem>>, vector<288x128xf32>,
    %c1_135 = arith.constant 1 : index
    %c19_136 = arith.constant 19 : index
    %c0_137 = arith.constant 0 : index
    %118 = vector.load %arg1[%c1_135, %c19_136, %c0_137] : memref<2x326x8xbf16, #tpu.memory_space<vmem>>, vector<1x288x8xbf16>
    %119 = vector.shape_cast %118 : vector<1x288x8xbf16> to vector<288x8xbf16>
    %c4_138 = arith.constant 4 : index
    %c0_139 = arith.constant 0 : index
    %c0_140 = arith.constant 0 : index
    %120 = vector.load %arg2[%c4_138, %c0_139, %c0_140] : memref<9x8x128xbf16, #tpu.memory_space<vmem>>, vector<1x8x128xbf16>
    %121 = vector.shape_cast %120 : vector<1x8x128xbf16> to vector<8x128xbf16>
    %cst_141 = arith.constant dense<0.000000e+00> : vector<288x128xf32>
    %122 = tpu.matmul %119, %121, %cst_141 {dimension_numbers = #tpu.dot_dimension_numbers<[1], [0], [0], [1], [0, 0, 1, 1], [], []>} : vector<288x8xbf16>, vector<8x128xbf16>, vector<288x128xf32> -> vector<288x128xf32>
    %c0_142 = arith.constant 0 : index
    %c0_143 = arith.constant 0 : index
    %123 = vector.load %arg7[%c0_142, %c0_143] : memref<288x128xf32, #tpu.memory_space<vmem>>, vector<288x128xf32>
    %124 = arith.addf %123, %122 : vector<288x128xf32>
    %c0_144 = arith.constant 0 : index
    %c0_145 = arith.constant 0 : index
    %125 = vector.load %arg7[%c0_144, %c0_145] : memref<288x128xf32, #tpu.memory_space<vmem>>, vector<288x128xf32>
    tpu.vector_store %arg7[%c0_144, %c0_145], %124 {strides = array<i32>} : memref<288x128xf32, #tpu.memory_space<vmem>>, vector<288x128xf32>,
    %c1_146 = arith.constant 1 : index
    %c20_147 = arith.constant 20 : index
    %c0_148 = arith.constant 0 : index
    %126 = vector.load %arg1[%c1_146, %c20_147, %c0_148] : memref<2x326x8xbf16, #tpu.memory_space<vmem>>, vector<1x288x8xbf16>
    %127 = vector.shape_cast %126 : vector<1x288x8xbf16> to vector<288x8xbf16>
    %c5_149 = arith.constant 5 : index
    %c0_150 = arith.constant 0 : index
    %c0_151 = arith.constant 0 : index
    %128 = vector.load %arg2[%c5_149, %c0_150, %c0_151] : memref<9x8x128xbf16, #tpu.memory_space<vmem>>, vector<1x8x128xbf16>
    %129 = vector.shape_cast %128 : vector<1x8x128xbf16> to vector<8x128xbf16>
    %cst_152 = arith.constant dense<0.000000e+00> : vector<288x128xf32>
    %130 = tpu.matmul %127, %129, %cst_152 {dimension_numbers = #tpu.dot_dimension_numbers<[1], [0], [0], [1], [0, 0, 1, 1], [], []>} : vector<288x8xbf16>, vector<8x128xbf16>, vector<288x128xf32> -> vector<288x128xf32>
    %c0_153 = arith.constant 0 : index
    %c0_154 = arith.constant 0 : index
    %131 = vector.load %arg7[%c0_153, %c0_154] : memref<288x128xf32, #tpu.memory_space<vmem>>, vector<288x128xf32>
    %132 = arith.addf %131, %130 : vector<288x128xf32>
    %c0_155 = arith.constant 0 : index
    %c0_156 = arith.constant 0 : index
    %133 = vector.load %arg7[%c0_155, %c0_156] : memref<288x128xf32, #tpu.memory_space<vmem>>, vector<288x128xf32>
    tpu.vector_store %arg7[%c0_155, %c0_156], %132 {strides = array<i32>} : memref<288x128xf32, #tpu.memory_space<vmem>>, vector<288x128xf32>,
    %c1_157 = arith.constant 1 : index
    %c36_158 = arith.constant 36 : index
    %c0_159 = arith.constant 0 : index
    %134 = vector.load %arg1[%c1_157, %c36_158, %c0_159] : memref<2x326x8xbf16, #tpu.memory_space<vmem>>, vector<1x288x8xbf16>
    %135 = vector.shape_cast %134 : vector<1x288x8xbf16> to vector<288x8xbf16>
    %c6_160 = arith.constant 6 : index
    %c0_161 = arith.constant 0 : index
    %c0_162 = arith.constant 0 : index
    %136 = vector.load %arg2[%c6_160, %c0_161, %c0_162] : memref<9x8x128xbf16, #tpu.memory_space<vmem>>, vector<1x8x128xbf16>
    %137 = vector.shape_cast %136 : vector<1x8x128xbf16> to vector<8x128xbf16>
    %cst_163 = arith.constant dense<0.000000e+00> : vector<288x128xf32>
    %138 = tpu.matmul %135, %137, %cst_163 {dimension_numbers = #tpu.dot_dimension_numbers<[1], [0], [0], [1], [0, 0, 1, 1], [], []>} : vector<288x8xbf16>, vector<8x128xbf16>, vector<288x128xf32> -> vector<288x128xf32>
    %c0_164 = arith.constant 0 : index
    %c0_165 = arith.constant 0 : index
    %139 = vector.load %arg7[%c0_164, %c0_165] : memref<288x128xf32, #tpu.memory_space<vmem>>, vector<288x128xf32>
    %140 = arith.addf %139, %138 : vector<288x128xf32>
    %c0_166 = arith.constant 0 : index
    %c0_167 = arith.constant 0 : index
    %141 = vector.load %arg7[%c0_166, %c0_167] : memref<288x128xf32, #tpu.memory_space<vmem>>, vector<288x128xf32>
    tpu.vector_store %arg7[%c0_166, %c0_167], %140 {strides = array<i32>} : memref<288x128xf32, #tpu.memory_space<vmem>>, vector<288x128xf32>,
    %c1_168 = arith.constant 1 : index
    %c37_169 = arith.constant 37 : index
    %c0_170 = arith.constant 0 : index
    %142 = vector.load %arg1[%c1_168, %c37_169, %c0_170] : memref<2x326x8xbf16, #tpu.memory_space<vmem>>, vector<1x288x8xbf16>
    %143 = vector.shape_cast %142 : vector<1x288x8xbf16> to vector<288x8xbf16>
    %c7_171 = arith.constant 7 : index
    %c0_172 = arith.constant 0 : index
    %c0_173 = arith.constant 0 : index
    %144 = vector.load %arg2[%c7_171, %c0_172, %c0_173] : memref<9x8x128xbf16, #tpu.memory_space<vmem>>, vector<1x8x128xbf16>
    %145 = vector.shape_cast %144 : vector<1x8x128xbf16> to vector<8x128xbf16>
    %cst_174 = arith.constant dense<0.000000e+00> : vector<288x128xf32>
    %146 = tpu.matmul %143, %145, %cst_174 {dimension_numbers = #tpu.dot_dimension_numbers<[1], [0], [0], [1], [0, 0, 1, 1], [], []>} : vector<288x8xbf16>, vector<8x128xbf16>, vector<288x128xf32> -> vector<288x128xf32>
    %c0_175 = arith.constant 0 : index
    %c0_176 = arith.constant 0 : index
    %147 = vector.load %arg7[%c0_175, %c0_176] : memref<288x128xf32, #tpu.memory_space<vmem>>, vector<288x128xf32>
    %148 = arith.addf %147, %146 : vector<288x128xf32>
    %c0_177 = arith.constant 0 : index
    %c0_178 = arith.constant 0 : index
    %149 = vector.load %arg7[%c0_177, %c0_178] : memref<288x128xf32, #tpu.memory_space<vmem>>, vector<288x128xf32>
    tpu.vector_store %arg7[%c0_177, %c0_178], %148 {strides = array<i32>} : memref<288x128xf32, #tpu.memory_space<vmem>>, vector<288x128xf32>,
    %c1_179 = arith.constant 1 : index
    %c38_180 = arith.constant 38 : index
    %c0_181 = arith.constant 0 : index
    %150 = vector.load %arg1[%c1_179, %c38_180, %c0_181] : memref<2x326x8xbf16, #tpu.memory_space<vmem>>, vector<1x288x8xbf16>
    %151 = vector.shape_cast %150 : vector<1x288x8xbf16> to vector<288x8xbf16>
    %c8_182 = arith.constant 8 : index
    %c0_183 = arith.constant 0 : index
    %c0_184 = arith.constant 0 : index
    %152 = vector.load %arg2[%c8_182, %c0_183, %c0_184] : memref<9x8x128xbf16, #tpu.memory_space<vmem>>, vector<1x8x128xbf16>
    %153 = vector.shape_cast %152 : vector<1x8x128xbf16> to vector<8x128xbf16>
    %cst_185 = arith.constant dense<0.000000e+00> : vector<288x128xf32>
    %154 = tpu.matmul %151, %153, %cst_185 {dimension_numbers = #tpu.dot_dimension_numbers<[1], [0], [0], [1], [0, 0, 1, 1], [], []>} : vector<288x8xbf16>, vector<8x128xbf16>, vector<288x128xf32> -> vector<288x128xf32>
    %c0_186 = arith.constant 0 : index
    %c0_187 = arith.constant 0 : index
    %155 = vector.load %arg7[%c0_186, %c0_187] : memref<288x128xf32, #tpu.memory_space<vmem>>, vector<288x128xf32>
    %156 = arith.addf %155, %154 : vector<288x128xf32>
    %c0_188 = arith.constant 0 : index
    %c0_189 = arith.constant 0 : index
    %157 = vector.load %arg7[%c0_188, %c0_189] : memref<288x128xf32, #tpu.memory_space<vmem>>, vector<288x128xf32>
    tpu.vector_store %arg7[%c0_188, %c0_189], %156 {strides = array<i32>} : memref<288x128xf32, #tpu.memory_space<vmem>>, vector<288x128xf32>,
    %c0_190 = arith.constant 0 : index
    %c0_191 = arith.constant 0 : index
    %158 = vector.load %arg7[%c0_190, %c0_191] : memref<288x128xf32, #tpu.memory_space<vmem>>, vector<288x128xf32>
    %159 = vector.broadcast %1 : vector<288x1xf32> to vector<288x128xf32>
    %160 = arith.mulf %158, %159 : vector<288x128xf32>
    %cst_192 = arith.constant dense<0.000000e+00> : vector<128xf32>
    %161 = vector.multi_reduction <add>, %160, %cst_192 [0] : vector<288x128xf32> to vector<128xf32>
    %162 = vector.shape_cast %161 : vector<128xf32> to vector<1x128xf32>
    %163 = arith.addf %79, %162 : vector<1x128xf32>
    %164 = arith.mulf %160, %158 : vector<288x128xf32>
    %cst_193 = arith.constant dense<0.000000e+00> : vector<128xf32>
    %165 = vector.multi_reduction <add>, %164, %cst_193 [0] : vector<288x128xf32> to vector<128xf32>
    %166 = vector.shape_cast %165 : vector<128xf32> to vector<1x128xf32>
    %167 = arith.addf %83, %166 : vector<1x128xf32>
    %168 = arith.truncf %158 : vector<288x128xf32> to vector<288x128xbf16>
    %c1_194 = arith.constant 1 : index
    %c0_195 = arith.constant 0 : index
    %c0_196 = arith.constant 0 : index
    %169 = vector.load %arg4[%c1_194, %c0_195, %c0_196] : memref<2x288x128xbf16, #tpu.memory_space<vmem>>, vector<1x288x128xbf16>
    %170 = vector.shape_cast %169 : vector<1x288x128xbf16> to vector<288x128xbf16>
    %171 = vector.shape_cast %168 : vector<288x128xbf16> to vector<1x288x128xbf16>
    tpu.vector_store %arg4[%c1_194, %c0_195, %c0_196], %171 {strides = array<i32>} : memref<2x288x128xbf16, #tpu.memory_space<vmem>>, vector<1x288x128xbf16>,
    %c0_197 = arith.constant 0 : index
    %c0_198 = arith.constant 0 : index
    %c0_199 = arith.constant 0 : index
    %172 = vector.load %arg5[%c0_197, %c0_198, %c0_199] : memref<1x1x128xf32, #tpu.memory_space<vmem>>, vector<1x1x128xf32>
    %173 = vector.shape_cast %172 : vector<1x1x128xf32> to vector<1x128xf32>
    %174 = vector.shape_cast %163 : vector<1x128xf32> to vector<1x1x128xf32>
    tpu.vector_store %arg5[%c0_197, %c0_198, %c0_199], %174 {strides = array<i32>} : memref<1x1x128xf32, #tpu.memory_space<vmem>>, vector<1x1x128xf32>,
    %c0_200 = arith.constant 0 : index
    %c0_201 = arith.constant 0 : index
    %c0_202 = arith.constant 0 : index
    %175 = vector.load %arg6[%c0_200, %c0_201, %c0_202] : memref<1x1x128xf32, #tpu.memory_space<vmem>>, vector<1x1x128xf32>
    %176 = vector.shape_cast %175 : vector<1x1x128xf32> to vector<1x128xf32>
    %177 = vector.shape_cast %167 : vector<1x128xf32> to vector<1x1x128xf32>
    tpu.vector_store %arg6[%c0_200, %c0_201, %c0_202], %177 {strides = array<i32>} : memref<1x1x128xf32, #tpu.memory_space<vmem>>, vector<1x1x128xf32>,
    return
  }
  func.func @transform_0(%arg0: i32) -> (i32, i32, i32) {
    %c0_i32 = arith.constant 0 : i32
    %c0_i32_0 = arith.constant 0 : i32
    %c0_i32_1 = arith.constant 0 : i32
    return %arg0, %c0_i32, %c0_i32_0 : i32, i32, i32
  }
  func.func @transform_1(%arg0: i32) -> (i32, i32, i32) {
    %c0_i32 = arith.constant 0 : i32
    %c0_i32_0 = arith.constant 0 : i32
    %c0_i32_1 = arith.constant 0 : i32
    %c0_i32_2 = arith.constant 0 : i32
    return %c0_i32, %c0_i32_0, %c0_i32_1 : i32, i32, i32
  }
  func.func @transform_2(%arg0: i32) -> (i32, i32, i32) {
    %c0_i32 = arith.constant 0 : i32
    %c0_i32_0 = arith.constant 0 : i32
    %c0_i32_1 = arith.constant 0 : i32
    %c0_i32_2 = arith.constant 0 : i32
    return %c0_i32, %c0_i32_0, %c0_i32_1 : i32, i32, i32
  }
  func.func @transform_3(%arg0: i32) -> (i32, i32, i32) {
    %c0_i32 = arith.constant 0 : i32
    %c0_i32_0 = arith.constant 0 : i32
    %c0_i32_1 = arith.constant 0 : i32
    return %arg0, %c0_i32, %c0_i32_0 : i32, i32, i32
  }
  func.func @transform_4(%arg0: i32) -> (i32, i32, i32) {
    %c0_i32 = arith.constant 0 : i32
    %c0_i32_0 = arith.constant 0 : i32
    %c0_i32_1 = arith.constant 0 : i32
    return %arg0, %c0_i32, %c0_i32_0 : i32, i32, i32
  }
  func.func @transform_5(%arg0: i32) -> (i32, i32, i32) {
    %c0_i32 = arith.constant 0 : i32
    %c0_i32_0 = arith.constant 0 : i32
    %c0_i32_1 = arith.constant 0 : i32
    return %arg0, %c0_i32, %c0_i32_0 : i32, i32, i32
  }
}

</mosaic_0001>

<llo_original>
// kernel: convolution15_forward.1
$region0: #{convolution15_forward.1}
  #allocation0 [shape = 'u32[]', space=smem, size = 0x4, offset = 0x4, fixed_abs, tag = 'smem constant byte address 0x4 - core index']
  #allocation1 [shape = 'u32[144,128]{1,0:T(1,128)}', space=vmem, size = 0x12000, scoped, tag = 'internal scratch']
  #allocation2 [shape = 'f32[288,128]{1,0:T(8,128)}', space=vmem, size = 0x24000, scoped, tag = 'scratch operand']
  %s0 = inlined_call_operand.vmem [shape: bf16[2,326,8], index: 0, kind: input, shape index: {}]
  %s1 = inlined_call_operand.vmem [shape: bf16[9,8,128], index: 1, kind: input, shape index: {}]
  %s2 = inlined_call_operand.vmem [shape: f32[1,288,1], index: 2, kind: input, shape index: {}]
  %s3 = inlined_call_operand.vmem [shape: bf16[2,288,128], index: 3, kind: output, shape index: {0}]
  %s4 = inlined_call_operand.vmem [shape: f32[1,1,128], index: 4, kind: output, shape index: {1}]
  %s5 = inlined_call_operand.vmem [shape: f32[1,1,128], index: 5, kind: output, shape index: {2}]
  %6 = xla_tuple %s3, %s4, %s5
  %s7 = sld [smem:[#allocation0]]
  $region38: #{convolution15_forward.1} parent=0
    _
  %s9 = ssub.s32 1, %s7
  %s10 = scalar_select 0, %s9, %s7
  // Predicated region
  $region2: #{convolution15_forward.1} parent=0 // pred_check
    _
  $region3: #{convolution15_forward.1} parent=0 // pred_check_branch
    %12 = sbr.rel (0) target = $region5
  $region4: #{convolution15_forward.1} parent=0 // pred_region
    _
  $region5: #{convolution15_forward.1} parent=0 // pred_fallthru
    _
  // Predicated region
  $region6: #{convolution15_forward.1} parent=0 // pred_check
    _
  $region7: #{convolution15_forward.1} parent=0 // pred_check_branch
    %14 = sbr.rel (0) target = $region9
  $region8: #{convolution15_forward.1} parent=0 // pred_region
    _
  $region9: #{convolution15_forward.1} parent=0 // pred_fallthru
    _
  // Predicated region
  $region10: #{convolution15_forward.1} parent=0 // pred_check
    _
  $region11: #{convolution15_forward.1} parent=0 // pred_check_branch
    %16 = sbr.rel (0) target = $region13
  $region12: #{convolution15_forward.1} parent=0 // pred_region
    _
  $region13: #{convolution15_forward.1} parent=0 // pred_fallthru
    _
  %v18 = vld [vmem:[%s2] sm:$0xff]
  %v19 = vld [vmem:[%s2 + $0x8] sm:$0xff]
  %v20 = vld [vmem:[%s2 + $0x10] sm:$0xff]
  %v21 = vld [vmem:[%s2 + $0x18] sm:$0xff]
  %v22 = vld [vmem:[%s2 + $0x20] sm:$0xff]
  %v23 = vld [vmem:[%s2 + $0x28] sm:$0xff]
  %v24 = vld [vmem:[%s2 + $0x30] sm:$0xff]
  %v25 = vld [vmem:[%s2 + $0x38] sm:$0xff]
  %v26 = vld [vmem:[%s2 + $0x40] sm:$0xff]
  %v27 = vld [vmem:[%s2 + $0x48] sm:$0xff]
  %v28 = vld [vmem:[%s2 + $0x50] sm:$0xff]
  %v29 = vld [vmem:[%s2 + $0x58] sm:$0xff]
  %v30 = vld [vmem:[%s2 + $0x60] sm:$0xff]
  %v31 = vld [vmem:[%s2 + $0x68] sm:$0xff]
  %v32 = vld [vmem:[%s2 + $0x70] sm:$0xff]
  %v33 = vld [vmem:[%s2 + $0x78] sm:$0xff]
  %v34 = vld [vmem:[%s2 + $0x80] sm:$0xff]
  %v35 = vld [vmem:[%s2 + $0x88] sm:$0xff]
  %v36 = vld [vmem:[%s2 + $0x90] sm:$0xff]
  %v37 = vld [vmem:[%s2 + $0x98] sm:$0xff]
  %v38 = vld [vmem:[%s2 + $0xa0] sm:$0xff]
  %v39 = vld [vmem:[%s2 + $0xa8] sm:$0xff]
  %v40 = vld [vmem:[%s2 + $0xb0] sm:$0xff]
  %v41 = vld [vmem:[%s2 + $0xb8] sm:$0xff]
  %v42 = vld [vmem:[%s2 + $0xc0] sm:$0xff]
  %v43 = vld [vmem:[%s2 + $0xc8] sm:$0xff]
  %v44 = vld [vmem:[%s2 + $0xd0] sm:$0xff]
  %v45 = vld [vmem:[%s2 + $0xd8] sm:$0xff]
  %v46 = vld [vmem:[%s2 + $0xe0] sm:$0xff]
  %v47 = vld [vmem:[%s2 + $0xe8] sm:$0xff]
  %v48 = vld [vmem:[%s2 + $0xf0] sm:$0xff]
  %v49 = vld [vmem:[%s2 + $0xf8] sm:$0xff]
  %v50 = vld [vmem:[%s2 + $0x100] sm:$0xff]
  %v51 = vld [vmem:[%s2 + $0x108] sm:$0xff]
  %v52 = vld [vmem:[%s2 + $0x110] sm:$0xff]
  %v53 = vld [vmem:[%s2 + $0x118] sm:$0xff]
  %v54 = vld [vmem:[%s0] sm:$0xf]
  %v55 = vld [vmem:[%s0 + $0x4] sm:$0xf]
  %v56 = vld [vmem:[%s0 + $0x8] sm:$0xf]
  %v57 = vld [vmem:[%s0 + $0xc] sm:$0xf]
  %v58 = vld [vmem:[%s0 + $0x10] sm:$0xf]
  %v59 = vld [vmem:[%s0 + $0x14] sm:$0xf]
  %v60 = vld [vmem:[%s0 + $0x18] sm:$0xf]
  %v61 = vld [vmem:[%s0 + $0x1c] sm:$0xf]
  %v62 = vld [vmem:[%s0 + $0x20] sm:$0xf]
  %v63 = vld [vmem:[%s0 + $0x24] sm:$0xf]
  %v64 = vld [vmem:[%s0 + $0x28] sm:$0xf]
  %v65 = vld [vmem:[%s0 + $0x2c] sm:$0xf]
  %v66 = vld [vmem:[%s0 + $0x30] sm:$0xf]
  %v67 = vld [vmem:[%s0 + $0x34] sm:$0xf]
  %v68 = vld [vmem:[%s0 + $0x38] sm:$0xf]
  %v69 = vld [vmem:[%s0 + $0x3c] sm:$0xf]
  %v70 = vld [vmem:[%s0 + $0x40] sm:$0xf]
  %v71 = vld [vmem:[%s0 + $0x44] sm:$0xf]
  %v72 = vld [vmem:[%s0 + $0x48] sm:$0xf]
  %v73 = vld [vmem:[%s0 + $0x4c] sm:$0xf]
  %v74 = vld [vmem:[%s0 + $0x50] sm:$0xf]
  %v75 = vld [vmem:[%s0 + $0x54] sm:$0xf]
  %v76 = vld [vmem:[%s0 + $0x58] sm:$0xf]
  %v77 = vld [vmem:[%s0 + $0x5c] sm:$0xf]
  %v78 = vld [vmem:[%s0 + $0x60] sm:$0xf]
  %v79 = vld [vmem:[%s0 + $0x64] sm:$0xf]
  %v80 = vld [vmem:[%s0 + $0x68] sm:$0xf]
  %v81 = vld [vmem:[%s0 + $0x6c] sm:$0xf]
  %v82 = vld [vmem:[%s0 + $0x70] sm:$0xf]
  %v83 = vld [vmem:[%s0 + $0x74] sm:$0xf]
  %v84 = vld [vmem:[%s0 + $0x78] sm:$0xf]
  %v85 = vld [vmem:[%s0 + $0x7c] sm:$0xf]
  %v86 = vld [vmem:[%s0 + $0x80] sm:$0xf]
  %v87 = vld [vmem:[%s0 + $0x84] sm:$0xf]
  %v88 = vld [vmem:[%s0 + $0x88] sm:$0xf]
  %v89 = vld [vmem:[%s0 + $0x8c] sm:$0xf]
  %v90 = vld [vmem:[%s1] sm:$0xf]
  %v127 = vunpack.c.l.b16 %v54
  %v128 = vunpack.c.l.b16 %v55
  %v129 = vunpack.c.l.b16 %v56
  %v130 = vunpack.c.l.b16 %v57
  %v131 = vunpack.c.l.b16 %v58
  %v132 = vunpack.c.l.b16 %v59
  %v133 = vunpack.c.l.b16 %v60
  %v134 = vunpack.c.l.b16 %v61
  %v135 = vunpack.c.l.b16 %v62
  %v136 = vunpack.c.l.b16 %v63
  %v137 = vunpack.c.l.b16 %v64
  %v138 = vunpack.c.l.b16 %v65
  %v139 = vunpack.c.l.b16 %v66
  %v140 = vunpack.c.l.b16 %v67
  %v141 = vunpack.c.l.b16 %v68
  %v142 = vunpack.c.l.b16 %v69
  %v143 = vunpack.c.l.b16 %v70
  %v144 = vunpack.c.l.b16 %v71
  %v145 = vunpack.c.l.b16 %v72
  %v146 = vunpack.c.l.b16 %v73
  %v147 = vunpack.c.l.b16 %v74
  %v148 = vunpack.c.l.b16 %v75
  %v149 = vunpack.c.l.b16 %v76
  %v150 = vunpack.c.l.b16 %v77
  %v151 = vunpack.c.l.b16 %v78
  %v152 = vunpack.c.l.b16 %v79
  %v153 = vunpack.c.l.b16 %v80
  %v154 = vunpack.c.l.b16 %v81
  %v155 = vunpack.c.l.b16 %v82
  %v156 = vunpack.c.l.b16 %v83
  %v157 = vunpack.c.l.b16 %v84
  %v158 = vunpack.c.l.b16 %v85
  %v159 = vunpack.c.l.b16 %v86
  %v160 = vunpack.c.l.b16 %v87
  %v161 = vunpack.c.l.b16 %v88
  %v162 = vunpack.c.l.b16 %v89
  %v163 = vpack.c.b16 %v128, %v127
  %v164 = vpack.c.b16 %v130, %v129
  %v165 = vpack.c.b16 %v132, %v131
  %v166 = vpack.c.b16 %v134, %v133
  %v167 = vpack.c.b16 %v136, %v135
  %v168 = vpack.c.b16 %v138, %v137
  %v169 = vpack.c.b16 %v140, %v139
  %v170 = vpack.c.b16 %v142, %v141
  %v171 = vpack.c.b16 %v144, %v143
  %v172 = vpack.c.b16 %v146, %v145
  %v173 = vpack.c.b16 %v148, %v147
  %v174 = vpack.c.b16 %v150, %v149
  %v175 = vpack.c.b16 %v152, %v151
  %v176 = vpack.c.b16 %v154, %v153
  %v177 = vpack.c.b16 %v156, %v155
  %v178 = vpack.c.b16 %v158, %v157
  %v179 = vpack.c.b16 %v160, %v159
  %v180 = vpack.c.b16 %v162, %v161
  %vm181 = vcmask 64512
  %v183 = vsel %vm181, %v163, 0
  %v186 = vsel %vm181, %v164, 0
  %v189 = vsel %vm181, %v165, 0
  %v192 = vsel %vm181, %v166, 0
  %v195 = vsel %vm181, %v167, 0
  %v198 = vsel %vm181, %v168, 0
  %v201 = vsel %vm181, %v169, 0
  %v204 = vsel %vm181, %v170, 0
  %v207 = vsel %vm181, %v171, 0
  %v210 = vsel %vm181, %v172, 0
  %v213 = vsel %vm181, %v173, 0
  %v216 = vsel %vm181, %v174, 0
  %v219 = vsel %vm181, %v175, 0
  %v222 = vsel %vm181, %v176, 0
  %v225 = vsel %vm181, %v177, 0
  %v228 = vsel %vm181, %v178, 0
  %v231 = vsel %vm181, %v179, 0
  %v234 = vsel %vm181, %v180, 0
  %vm236 = vcmask 1043456
  %v238 = vsel %vm236, %v90, 0
  %240 = vmatprep.subr.bf16.mxu0 0
  %241 = vmatpush1.bf16.msra.mxu0 %v238
  %242 = vmatprep.subr.bf16.mxu0 0
  %243 = vmatpush1.bf16.msra.mxu0 0
  %244 = vmatprep.subr.bf16.mxu0 0
  %245 = vmatpush1.bf16.msra.mxu0 0
  %246 = vmatprep.subr.bf16.mxu0 0
  %247 = vmatpush1.bf16.msra.mxu0 0
  %248 = vmatprep.subr.bf16.mxu0 0
  %249 = vmatpush1.bf16.msra.mxu0 0
  %250 = vmatprep.subr.bf16.mxu0 0
  %251 = vmatpush1.bf16.msra.mxu0 0
  %252 = vmatprep.subr.bf16.mxu0 0
  %253 = vmatpush1.bf16.msra.mxu0 0
  %254 = vmatprep.subr.bf16.mxu0 0
  %255 = vmatpush1.bf16.msra.mxu0 0
  %256 = vmatprep.subr.bf16.mxu0 0
  %257 = vmatpush1.bf16.msra.mxu0 0
  %258 = vmatprep.subr.bf16.mxu0 0
  %259 = vmatpush1.bf16.msra.mxu0 0
  %260 = vmatprep.subr.bf16.mxu0 0
  %261 = vmatpush1.bf16.msra.mxu0 0
  %262 = vmatprep.subr.bf16.mxu0 0
  %263 = vmatpush1.bf16.msra.mxu0 0
  %264 = vmatprep.subr.bf16.mxu0 0
  %265 = vmatpush1.bf16.msra.mxu0 0
  %266 = vmatprep.subr.bf16.mxu0 0
  %267 = vmatpush1.bf16.msra.mxu0 0
  %268 = vmatprep.subr.bf16.mxu0 0
  %269 = vmatpush1.bf16.msra.mxu0 0
  %270 = vmatprep.subr.bf16.mxu0 0
  %271 = vmatpush1.bf16.msra.mxu0 0
  %272 = vmatprep.mubr.bf16.mxu0 0
  %273 = vmatmul.mubr.bf16.gmra.mrb[0].mxu0 %v183
  %v274 = vpop.f32.mrb[0].mxu0
  %v275 = vadd.f32 0.0, %v274
  %v276 = vpop.f32.mrb[0].mxu0
  %v277 = vpop.f32.mrb[0].mxu0
  %v278 = vadd.f32 0.0, %v277
  %v279 = vpop.f32.mrb[0].mxu0
  %280 = vmatprep.mubr.bf16.mxu0 0
  %281 = vmatmul.mubr.bf16.gmra.mrb[0].mxu0 %v186
  %v282 = vpop.f32.mrb[0].mxu0
  %v283 = vadd.f32 0.0, %v282
  %v284 = vpop.f32.mrb[0].mxu0
  %v285 = vpop.f32.mrb[0].mxu0
  %v286 = vadd.f32 0.0, %v285
  %v287 = vpop.f32.mrb[0].mxu0
  %288 = vmatprep.mubr.bf16.mxu0 0
  %289 = vmatmul.mubr.bf16.gmra.mrb[0].mxu0 %v189
  %v290 = vpop.f32.mrb[0].mxu0
  %v291 = vadd.f32 0.0, %v290
  %v292 = vpop.f32.mrb[0].mxu0
  %v293 = vpop.f32.mrb[0].mxu0
  %v294 = vadd.f32 0.0, %v293
  %v295 = vpop.f32.mrb[0].mxu0
  %296 = vmatprep.mubr.bf16.mxu0 0
  %297 = vmatmul.mubr.bf16.gmra.mrb[0].mxu0 %v192
  %v298 = vpop.f32.mrb[0].mxu0
  %v299 = vadd.f32 0.0, %v298
  %v300 = vpop.f32.mrb[0].mxu0
  %v301 = vpop.f32.mrb[0].mxu0
  %v302 = vadd.f32 0.0, %v301
  %v303 = vpop.f32.mrb[0].mxu0
  %304 = vmatprep.mubr.bf16.mxu0 0
  %305 = vmatmul.mubr.bf16.gmra.mrb[0].mxu0 %v195
  %v306 = vpop.f32.mrb[0].mxu0
  %v307 = vadd.f32 0.0, %v306
  %v308 = vpop.f32.mrb[0].mxu0
  %v309 = vpop.f32.mrb[0].mxu0
  %v310 = vadd.f32 0.0, %v309
  %v311 = vpop.f32.mrb[0].mxu0
  %312 = vmatprep.mubr.bf16.mxu0 0
  %313 = vmatmul.mubr.bf16.gmra.mrb[0].mxu0 %v198
  %v314 = vpop.f32.mrb[0].mxu0
  %v315 = vadd.f32 0.0, %v314
  %v316 = vpop.f32.mrb[0].mxu0
  %v317 = vpop.f32.mrb[0].mxu0
  %v318 = vadd.f32 0.0, %v317
  %v319 = vpop.f32.mrb[0].mxu0
  %320 = vmatprep.mubr.bf16.mxu0 0
  %321 = vmatmul.mubr.bf16.gmra.mrb[0].mxu0 %v201
  %v322 = vpop.f32.mrb[0].mxu0
  %v323 = vadd.f32 0.0, %v322
  %v324 = vpop.f32.mrb[0].mxu0
  %v325 = vpop.f32.mrb[0].mxu0
  %v326 = vadd.f32 0.0, %v325
  %v327 = vpop.f32.mrb[0].mxu0
  %328 = vmatprep.mubr.bf16.mxu0 0
  %329 = vmatmul.mubr.bf16.gmra.mrb[0].mxu0 %v204
  %v330 = vpop.f32.mrb[0].mxu0
  %v331 = vadd.f32 0.0, %v330
  %v332 = vpop.f32.mrb[0].mxu0
  %v333 = vpop.f32.mrb[0].mxu0
  %v334 = vadd.f32 0.0, %v333
  %v335 = vpop.f32.mrb[0].mxu0
  %336 = vmatprep.mubr.bf16.mxu0 0
  %337 = vmatmul.mubr.bf16.gmra.mrb[0].mxu0 %v207
  %v338 = vpop.f32.mrb[0].mxu0
  %v339 = vadd.f32 0.0, %v338
  %v340 = vpop.f32.mrb[0].mxu0
  %v341 = vpop.f32.mrb[0].mxu0
  %v342 = vadd.f32 0.0, %v341
  %v343 = vpop.f32.mrb[0].mxu0
  %344 = vmatprep.mubr.bf16.mxu0 0
  %345 = vmatmul.mubr.bf16.gmra.mrb[0].mxu0 %v210
  %v346 = vpop.f32.mrb[0].mxu0
  %v347 = vadd.f32 0.0, %v346
  %v348 = vpop.f32.mrb[0].mxu0
  %v349 = vpop.f32.mrb[0].mxu0
  %v350 = vadd.f32 0.0, %v349
  %v351 = vpop.f32.mrb[0].mxu0
  %352 = vmatprep.mubr.bf16.mxu0 0
  %353 = vmatmul.mubr.bf16.gmra.mrb[0].mxu0 %v213
  %v354 = vpop.f32.mrb[0].mxu0
  %v355 = vadd.f32 0.0, %v354
  %v356 = vpop.f32.mrb[0].mxu0
  %v357 = vpop.f32.mrb[0].mxu0
  %v358 = vadd.f32 0.0, %v357
  %v359 = vpop.f32.mrb[0].mxu0
  %360 = vmatprep.mubr.bf16.mxu0 0
  %361 = vmatmul.mubr.bf16.gmra.mrb[0].mxu0 %v216
  %v362 = vpop.f32.mrb[0].mxu0
  %v363 = vadd.f32 0.0, %v362
  %v364 = vpop.f32.mrb[0].mxu0
  %v365 = vpop.f32.mrb[0].mxu0
  %v366 = vadd.f32 0.0, %v365
  %v367 = vpop.f32.mrb[0].mxu0
  %368 = vmatprep.mubr.bf16.mxu0 0
  %369 = vmatmul.mubr.bf16.gmra.mrb[0].mxu0 %v219
  %v370 = vpop.f32.mrb[0].mxu0
  %v371 = vadd.f32 0.0, %v370
  %v372 = vpop.f32.mrb[0].mxu0
  %v373 = vpop.f32.mrb[0].mxu0
  %v374 = vadd.f32 0.0, %v373
  %v375 = vpop.f32.mrb[0].mxu0
  %376 = vmatprep.mubr.bf16.mxu0 0
  %377 = vmatmul.mubr.bf16.gmra.mrb[0].mxu0 %v222
  %v378 = vpop.f32.mrb[0].mxu0
  %v379 = vadd.f32 0.0, %v378
  %v380 = vpop.f32.mrb[0].mxu0
  %v381 = vpop.f32.mrb[0].mxu0
  %v382 = vadd.f32 0.0, %v381
  %v383 = vpop.f32.mrb[0].mxu0
  %384 = vmatprep.mubr.bf16.mxu0 0
  %385 = vmatmul.mubr.bf16.gmra.mrb[0].mxu0 %v225
  %v386 = vpop.f32.mrb[0].mxu0
  %v387 = vadd.f32 0.0, %v386
  %v388 = vpop.f32.mrb[0].mxu0
  %v389 = vpop.f32.mrb[0].mxu0
  %v390 = vadd.f32 0.0, %v389
  %v391 = vpop.f32.mrb[0].mxu0
  %392 = vmatprep.mubr.bf16.mxu0 0
  %393 = vmatmul.mubr.bf16.gmra.mrb[0].mxu0 %v228
  %v394 = vpop.f32.mrb[0].mxu0
  %v395 = vadd.f32 0.0, %v394
  %v396 = vpop.f32.mrb[0].mxu0
  %v397 = vpop.f32.mrb[0].mxu0
  %v398 = vadd.f32 0.0, %v397
  %v399 = vpop.f32.mrb[0].mxu0
  %400 = vmatprep.mubr.bf16.mxu0 0
  %401 = vmatmul.mubr.bf16.gmra.mrb[0].mxu0 %v231
  %v402 = vpop.f32.mrb[0].mxu0
  %v403 = vadd.f32 0.0, %v402
  %v404 = vpop.f32.mrb[0].mxu0
  %v405 = vpop.f32.mrb[0].mxu0
  %v406 = vadd.f32 0.0, %v405
  %v407 = vpop.f32.mrb[0].mxu0
  %408 = vmatprep.mubr.bf16.mxu0 0
  %409 = vmatmul.mubr.bf16.gmra.mrb[0].mxu0 %v234
  %v410 = vpop.f32.mrb[0].mxu0
  %v411 = vadd.f32 0.0, %v410
  %v412 = vpop.f32.mrb[0].mxu0
  %v413 = vpop.f32.mrb[0].mxu0
  %v414 = vadd.f32 0.0, %v413
  %v415 = vpop.f32.mrb[0].mxu0
  %416 = vdwg.mxu0
  %417 = vst [vmem:[#allocation2] sm:$0xff] %v275
  %418 = vst [vmem:[#allocation2 + $0x8] sm:$0xff] %v278
  %419 = vst [vmem:[#allocation2 + $0x10] sm:$0xff] %v283
  %420 = vst [vmem:[#allocation2 + $0x18] sm:$0xff] %v286
  %421 = vst [vmem:[#allocation2 + $0x20] sm:$0xff] %v291
  %422 = vst [vmem:[#allocation2 + $0x28] sm:$0xff] %v294
  %423 = vst [vmem:[#allocation2 + $0x30] sm:$0xff] %v299
  %424 = vst [vmem:[#allocation2 + $0x38] sm:$0xff] %v302
  %425 = vst [vmem:[#allocation2 + $0x40] sm:$0xff] %v307
  %426 = vst [vmem:[#allocation2 + $0x48] sm:$0xff] %v310
  %427 = vst [vmem:[#allocation2 + $0x50] sm:$0xff] %v315
  %428 = vst [vmem:[#allocation2 + $0x58] sm:$0xff] %v318
  %429 = vst [vmem:[#allocation2 + $0x60] sm:$0xff] %v323
  %430 = vst [vmem:[#allocation2 + $0x68] sm:$0xff] %v326
  %431 = vst [vmem:[#allocation2 + $0x70] sm:$0xff] %v331
  %432 = vst [vmem:[#allocation2 + $0x78] sm:$0xff] %v334
  %433 = vst [vmem:[#allocation2 + $0x80] sm:$0xff] %v339
  %434 = vst [vmem:[#allocation2 + $0x88] sm:$0xff] %v342
  %435 = vst [vmem:[#allocation2 + $0x90] sm:$0xff] %v347
  %436 = vst [vmem:[#allocation2 + $0x98] sm:$0xff] %v350
  %437 = vst [vmem:[#allocation2 + $0xa0] sm:$0xff] %v355
  %438 = vst [vmem:[#allocation2 + $0xa8] sm:$0xff] %v358
  %439 = vst [vmem:[#allocation2 + $0xb0] sm:$0xff] %v363
  %440 = vst [vmem:[#allocation2 + $0xb8] sm:$0xff] %v366
  %441 = vst [vmem:[#allocation2 + $0xc0] sm:$0xff] %v371
  %442 = vst [vmem:[#allocation2 + $0xc8] sm:$0xff] %v374
  %443 = vst [vmem:[#allocation2 + $0xd0] sm:$0xff] %v379
  %444 = vst [vmem:[#allocation2 + $0xd8] sm:$0xff] %v382
  %445 = vst [vmem:[#allocation2 + $0xe0] sm:$0xff] %v387
  %446 = vst [vmem:[#allocation2 + $0xe8] sm:$0xff] %v390
  %447 = vst [vmem:[#allocation2 + $0xf0] sm:$0xff] %v395
  %448 = vst [vmem:[#allocation2 + $0xf8] sm:$0xff] %v398
  %449 = vst [vmem:[#allocation2 + $0x100] sm:$0xff] %v403
  %450 = vst [vmem:[#allocation2 + $0x108] sm:$0xff] %v406
  %451 = vst [vmem:[#allocation2 + $0x110] sm:$0xff] %v411
  %452 = vst [vmem:[#allocation2 + $0x118] sm:$0xff] %v414
  %v453 = vld [vmem:[%s0] sm:$0xf]
  %v454 = vld [vmem:[%s0 + $0x4] sm:$0xf]
  %v455 = vld [vmem:[%s0 + $0x8] sm:$0xf]
  %v456 = vld [vmem:[%s0 + $0xc] sm:$0xf]
  %v457 = vld [vmem:[%s0 + $0x10] sm:$0xf]
  %v458 = vld [vmem:[%s0 + $0x14] sm:$0xf]
  %v459 = vld [vmem:[%s0 + $0x18] sm:$0xf]
  %v460 = vld [vmem:[%s0 + $0x1c] sm:$0xf]
  %v461 = vld [vmem:[%s0 + $0x20] sm:$0xf]
  %v462 = vld [vmem:[%s0 + $0x24] sm:$0xf]
  %v463 = vld [vmem:[%s0 + $0x28] sm:$0xf]
  %v464 = vld [vmem:[%s0 + $0x2c] sm:$0xf]
  %v465 = vld [vmem:[%s0 + $0x30] sm:$0xf]
  %v466 = vld [vmem:[%s0 + $0x34] sm:$0xf]
  %v467 = vld [vmem:[%s0 + $0x38] sm:$0xf]
  %v468 = vld [vmem:[%s0 + $0x3c] sm:$0xf]
  %v469 = vld [vmem:[%s0 + $0x40] sm:$0xf]
  %v470 = vld [vmem:[%s0 + $0x44] sm:$0xf]
  %v471 = vld [vmem:[%s0 + $0x48] sm:$0xf]
  %v472 = vld [vmem:[%s0 + $0x4c] sm:$0xf]
  %v473 = vld [vmem:[%s0 + $0x50] sm:$0xf]
  %v474 = vld [vmem:[%s0 + $0x54] sm:$0xf]
  %v475 = vld [vmem:[%s0 + $0x58] sm:$0xf]
  %v476 = vld [vmem:[%s0 + $0x5c] sm:$0xf]
  %v477 = vld [vmem:[%s0 + $0x60] sm:$0xf]
  %v478 = vld [vmem:[%s0 + $0x64] sm:$0xf]
  %v479 = vld [vmem:[%s0 + $0x68] sm:$0xf]
  %v480 = vld [vmem:[%s0 + $0x6c] sm:$0xf]
  %v481 = vld [vmem:[%s0 + $0x70] sm:$0xf]
  %v482 = vld [vmem:[%s0 + $0x74] sm:$0xf]
  %v483 = vld [vmem:[%s0 + $0x78] sm:$0xf]
  %v484 = vld [vmem:[%s0 + $0x7c] sm:$0xf]
  %v485 = vld [vmem:[%s0 + $0x80] sm:$0xf]
  %v486 = vld [vmem:[%s0 + $0x84] sm:$0xf]
  %v487 = vld [vmem:[%s0 + $0x88] sm:$0xf]
  %v488 = vld [vmem:[%s0 + $0x8c] sm:$0xf]
  %v489 = vld [vmem:[%s0 + $0x90] sm:$0x1]
  %s490 = scalar_lea.vmem %s1, 4
  %v491 = vld [vmem:[%s490] sm:$0xf]
  %v529 = vunpack.c.l.b16 %v453
  %v530 = vunpack.c.l.b16 %v454
  %v531 = vunpack.c.l.b16 %v455
  %v532 = vunpack.c.l.b16 %v456
  %v533 = vunpack.c.l.b16 %v457
  %v534 = vunpack.c.l.b16 %v458
  %v535 = vunpack.c.l.b16 %v459
  %v536 = vunpack.c.l.b16 %v460
  %v537 = vunpack.c.l.b16 %v461
  %v538 = vunpack.c.l.b16 %v462
  %v539 = vunpack.c.l.b16 %v463
  %v540 = vunpack.c.l.b16 %v464
  %v541 = vunpack.c.l.b16 %v465
  %v542 = vunpack.c.l.b16 %v466
  %v543 = vunpack.c.l.b16 %v467
  %v544 = vunpack.c.l.b16 %v468
  %v545 = vunpack.c.l.b16 %v469
  %v546 = vunpack.c.l.b16 %v470
  %v547 = vunpack.c.l.b16 %v471
  %v548 = vunpack.c.l.b16 %v472
  %v549 = vunpack.c.l.b16 %v473
  %v550 = vunpack.c.l.b16 %v474
  %v551 = vunpack.c.l.b16 %v475
  %v552 = vunpack.c.l.b16 %v476
  %v553 = vunpack.c.l.b16 %v477
  %v554 = vunpack.c.l.b16 %v478
  %v555 = vunpack.c.l.b16 %v479
  %v556 = vunpack.c.l.b16 %v480
  %v557 = vunpack.c.l.b16 %v481
  %v558 = vunpack.c.l.b16 %v482
  %v559 = vunpack.c.l.b16 %v483
  %v560 = vunpack.c.l.b16 %v484
  %v561 = vunpack.c.l.b16 %v485
  %v562 = vunpack.c.l.b16 %v486
  %v563 = vunpack.c.l.b16 %v487
  %v564 = vunpack.c.l.b16 %v488
  %v565 = vunpack.c.l.b16 %v489
  %v566 = vpack.c.b16 %v530, %v529
  %v567 = vpack.c.b16 %v532, %v531
  %v568 = vpack.c.b16 %v534, %v533
  %v569 = vpack.c.b16 %v536, %v535
  %v570 = vpack.c.b16 %v538, %v537
  %v571 = vpack.c.b16 %v540, %v539
  %v572 = vpack.c.b16 %v542, %v541
  %v573 = vpack.c.b16 %v544, %v543
  %v574 = vpack.c.b16 %v546, %v545
  %v575 = vpack.c.b16 %v548, %v547
  %v576 = vpack.c.b16 %v550, %v549
  %v577 = vpack.c.b16 %v552, %v551
  %v578 = vpack.c.b16 %v554, %v553
  %v579 = vpack.c.b16 %v556, %v555
  %v580 = vpack.c.b16 %v558, %v557
  %v581 = vpack.c.b16 %v560, %v559
  %v582 = vpack.c.b16 %v562, %v561
  %v583 = vpack.c.b16 %v564, %v563
  %v584 = vpack.c.b16 %v565, %v565
  %vm585 = vsmask.f32 7424
  %v587 = vshrl.u32 %v566, 16
  %v589 = vshll.u32 %v566, 16
  %v591 = vrot.slane %v589, 1
  %v592 = vor.u32 %v587, %v591
  %v594 = vshll.u32 %v567, 16
  %v596 = vrot.slane %v594, 1
  %v597 = vsel %vm585, %v592, %v596
  %v598 = vshrl.u32 %v567, 16
  %v600 = vor.u32 %v598, %v596
  %v602 = vshll.u32 %v568, 16
  %v604 = vrot.slane %v602, 1
  %v605 = vsel %vm585, %v600, %v604
  %v606 = vshrl.u32 %v568, 16
  %v608 = vor.u32 %v606, %v604
  %v610 = vshll.u32 %v569, 16
  %v612 = vrot.slane %v610, 1
  %v613 = vsel %vm585, %v608, %v612
  %v614 = vshrl.u32 %v569, 16
  %v616 = vor.u32 %v614, %v612
  %v618 = vshll.u32 %v570, 16
  %v620 = vrot.slane %v618, 1
  %v621 = vsel %vm585, %v616, %v620
  %v622 = vshrl.u32 %v570, 16
  %v624 = vor.u32 %v622, %v620
  %v626 = vshll.u32 %v571, 16
  %v628 = vrot.slane %v626, 1
  %v629 = vsel %vm585, %v624, %v628
  %v630 = vshrl.u32 %v571, 16
  %v632 = vor.u32 %v630, %v628
  %v634 = vshll.u32 %v572, 16
  %v636 = vrot.slane %v634, 1
  %v637 = vsel %vm585, %v632, %v636
  %v638 = vshrl.u32 %v572, 16
  %v640 = vor.u32 %v638, %v636
  %v642 = vshll.u32 %v573, 16
  %v644 = vrot.slane %v642, 1
  %v645 = vsel %vm585, %v640, %v644
  %v646 = vshrl.u32 %v573, 16
  %v648 = vor.u32 %v646, %v644
  %v650 = vshll.u32 %v574, 16
  %v652 = vrot.slane %v650, 1
  %v653 = vsel %vm585, %v648, %v652
  %v654 = vshrl.u32 %v574, 16
  %v656 = vor.u32 %v654, %v652
  %v658 = vshll.u32 %v575, 16
  %v660 = vrot.slane %v658, 1
  %v661 = vsel %vm585, %v656, %v660
  %v662 = vshrl.u32 %v575, 16
  %v664 = vor.u32 %v662, %v660
  %v666 = vshll.u32 %v576, 16
  %v668 = vrot.slane %v666, 1
  %v669 = vsel %vm585, %v664, %v668
  %v670 = vshrl.u32 %v576, 16
  %v672 = vor.u32 %v670, %v668
  %v674 = vshll.u32 %v577, 16
  %v676 = vrot.slane %v674, 1
  %v677 = vsel %vm585, %v672, %v676
  %v678 = vshrl.u32 %v577, 16
  %v680 = vor.u32 %v678, %v676
  %v682 = vshll.u32 %v578, 16
  %v684 = vrot.slane %v682, 1
  %v685 = vsel %vm585, %v680, %v684
  %v686 = vshrl.u32 %v578, 16
  %v688 = vor.u32 %v686, %v684
  %v690 = vshll.u32 %v579, 16
  %v692 = vrot.slane %v690, 1
  %v693 = vsel %vm585, %v688, %v692
  %v694 = vshrl.u32 %v579, 16
  %v696 = vor.u32 %v694, %v692
  %v698 = vshll.u32 %v580, 16
  %v700 = vrot.slane %v698, 1
  %v701 = vsel %vm585, %v696, %v700
  %v702 = vshrl.u32 %v580, 16
  %v704 = vor.u32 %v702, %v700
  %v706 = vshll.u32 %v581, 16
  %v708 = vrot.slane %v706, 1
  %v709 = vsel %vm585, %v704, %v708
  %v710 = vshrl.u32 %v581, 16
  %v712 = vor.u32 %v710, %v708
  %v714 = vshll.u32 %v582, 16
  %v716 = vrot.slane %v714, 1
  %v717 = vsel %vm585, %v712, %v716
  %v718 = vshrl.u32 %v582, 16
  %v720 = vor.u32 %v718, %v716
  %v722 = vshll.u32 %v583, 16
  %v724 = vrot.slane %v722, 1
  %v725 = vsel %vm585, %v720, %v724
  %v726 = vshrl.u32 %v583, 16
  %v728 = vor.u32 %v726, %v724
  %v730 = vshll.u32 %v584, 16
  %v732 = vrot.slane %v730, 1
  %v733 = vsel %vm585, %v728, %v732
  %v735 = vsel %vm181, %v597, 0
  %v738 = vsel %vm181, %v605, 0
  %v741 = vsel %vm181, %v613, 0
  %v744 = vsel %vm181, %v621, 0
  %v747 = vsel %vm181, %v629, 0
  %v750 = vsel %vm181, %v637, 0
  %v753 = vsel %vm181, %v645, 0
  %v756 = vsel %vm181, %v653, 0
  %v759 = vsel %vm181, %v661, 0
  %v762 = vsel %vm181, %v669, 0
  %v765 = vsel %vm181, %v677, 0
  %v768 = vsel %vm181, %v685, 0
  %v771 = vsel %vm181, %v693, 0
  %v774 = vsel %vm181, %v701, 0
  %v777 = vsel %vm181, %v709, 0
  %v780 = vsel %vm181, %v717, 0
  %v783 = vsel %vm181, %v725, 0
  %v786 = vsel %vm181, %v733, 0
  %v789 = vsel %vm236, %v491, 0
  %791 = vmatprep.subr.bf16.mxu0 0
  %792 = vmatpush1.bf16.msra.mxu0 %v789
  %793 = vmatprep.subr.bf16.mxu0 0
  %794 = vmatpush1.bf16.msra.mxu0 0
  %795 = vmatprep.subr.bf16.mxu0 0
  %796 = vmatpush1.bf16.msra.mxu0 0
  %797 = vmatprep.subr.bf16.mxu0 0
  %798 = vmatpush1.bf16.msra.mxu0 0
  %799 = vmatprep.subr.bf16.mxu0 0
  %800 = vmatpush1.bf16.msra.mxu0 0
  %801 = vmatprep.subr.bf16.mxu0 0
  %802 = vmatpush1.bf16.msra.mxu0 0
  %803 = vmatprep.subr.bf16.mxu0 0
  %804 = vmatpush1.bf16.msra.mxu0 0
  %805 = vmatprep.subr.bf16.mxu0 0
  %806 = vmatpush1.bf16.msra.mxu0 0
  %807 = vmatprep.subr.bf16.mxu0 0
  %808 = vmatpush1.bf16.msra.mxu0 0
  %809 = vmatprep.subr.bf16.mxu0 0
  %810 = vmatpush1.bf16.msra.mxu0 0
  %811 = vmatprep.subr.bf16.mxu0 0
  %812 = vmatpush1.bf16.msra.mxu0 0
  %813 = vmatprep.subr.bf16.mxu0 0
  %814 = vmatpush1.bf16.msra.mxu0 0
  %815 = vmatprep.subr.bf16.mxu0 0
  %816 = vmatpush1.bf16.msra.mxu0 0
  %817 = vmatprep.subr.bf16.mxu0 0
  %818 = vmatpush1.bf16.msra.mxu0 0
  %819 = vmatprep.subr.bf16.mxu0 0
  %820 = vmatpush1.bf16.msra.mxu0 0
  %821 = vmatprep.subr.bf16.mxu0 0
  %822 = vmatpush1.bf16.msra.mxu0 0
  %823 = vmatprep.mubr.bf16.mxu0 0
  %824 = vmatmul.mubr.bf16.gmra.mrb[0].mxu0 %v735
  %v825 = vpop.f32.mrb[0].mxu0
  %v826 = vadd.f32 0.0, %v825
  %v827 = vpop.f32.mrb[0].mxu0
  %v828 = vpop.f32.mrb[0].mxu0
  %v829 = vadd.f32 0.0, %v828
  %v830 = vpop.f32.mrb[0].mxu0
  %831 = vmatprep.mubr.bf16.mxu0 0
  %832 = vmatmul.mubr.bf16.gmra.mrb[0].mxu0 %v738
  %v833 = vpop.f32.mrb[0].mxu0
  %v834 = vadd.f32 0.0, %v833
  %v835 = vpop.f32.mrb[0].mxu0
  %v836 = vpop.f32.mrb[0].mxu0
  %v837 = vadd.f32 0.0, %v836
  %v838 = vpop.f32.mrb[0].mxu0
  %839 = vmatprep.mubr.bf16.mxu0 0
  %840 = vmatmul.mubr.bf16.gmra.mrb[0].mxu0 %v741
  %v841 = vpop.f32.mrb[0].mxu0
  %v842 = vadd.f32 0.0, %v841
  %v843 = vpop.f32.mrb[0].mxu0
  %v844 = vpop.f32.mrb[0].mxu0
  %v845 = vadd.f32 0.0, %v844
  %v846 = vpop.f32.mrb[0].mxu0
  %847 = vmatprep.mubr.bf16.mxu0 0
  %848 = vmatmul.mubr.bf16.gmra.mrb[0].mxu0 %v744
  %v849 = vpop.f32.mrb[0].mxu0
  %v850 = vadd.f32 0.0, %v849
  %v851 = vpop.f32.mrb[0].mxu0
  %v852 = vpop.f32.mrb[0].mxu0
  %v853 = vadd.f32 0.0, %v852
  %v854 = vpop.f32.mrb[0].mxu0
  %855 = vmatprep.mubr.bf16.mxu0 0
  %856 = vmatmul.mubr.bf16.gmra.mrb[0].mxu0 %v747
  %v857 = vpop.f32.mrb[0].mxu0
  %v858 = vadd.f32 0.0, %v857
  %v859 = vpop.f32.mrb[0].mxu0
  %v860 = vpop.f32.mrb[0].mxu0
  %v861 = vadd.f32 0.0, %v860
  %v862 = vpop.f32.mrb[0].mxu0
  %863 = vmatprep.mubr.bf16.mxu0 0
  %864 = vmatmul.mubr.bf16.gmra.mrb[0].mxu0 %v750
  %v865 = vpop.f32.mrb[0].mxu0
  %v866 = vadd.f32 0.0, %v865
  %v867 = vpop.f32.mrb[0].mxu0
  %v868 = vpop.f32.mrb[0].mxu0
  %v869 = vadd.f32 0.0, %v868
  %v870 = vpop.f32.mrb[0].mxu0
  %871 = vmatprep.mubr.bf16.mxu0 0
  %872 = vmatmul.mubr.bf16.gmra.mrb[0].mxu0 %v753
  %v873 = vpop.f32.mrb[0].mxu0
  %v874 = vadd.f32 0.0, %v873
  %v875 = vpop.f32.mrb[0].mxu0
  %v876 = vpop.f32.mrb[0].mxu0
  %v877 = vadd.f32 0.0, %v876
  %v878 = vpop.f32.mrb[0].mxu0
  %879 = vmatprep.mubr.bf16.mxu0 0
  %880 = vmatmul.mubr.bf16.gmra.mrb[0].mxu0 %v756
  %v881 = vpop.f32.mrb[0].mxu0
  %v882 = vadd.f32 0.0, %v881
  %v883 = vpop.f32.mrb[0].mxu0
  %v884 = vpop.f32.mrb[0].mxu0
  %v885 = vadd.f32 0.0, %v884
  %v886 = vpop.f32.mrb[0].mxu0
  %887 = vmatprep.mubr.bf16.mxu0 0
  %888 = vmatmul.mubr.bf16.gmra.mrb[0].mxu0 %v759
  %v889 = vpop.f32.mrb[0].mxu0
  %v890 = vadd.f32 0.0, %v889
  %v891 = vpop.f32.mrb[0].mxu0
  %v892 = vpop.f32.mrb[0].mxu0
  %v893 = vadd.f32 0.0, %v892
  %v894 = vpop.f32.mrb[0].mxu0
  %895 = vmatprep.mubr.bf16.mxu0 0
  %896 = vmatmul.mubr.bf16.gmra.mrb[0].mxu0 %v762
  %v897 = vpop.f32.mrb[0].mxu0
  %v898 = vadd.f32 0.0, %v897
  %v899 = vpop.f32.mrb[0].mxu0
  %v900 = vpop.f32.mrb[0].mxu0
  %v901 = vadd.f32 0.0, %v900
  %v902 = vpop.f32.mrb[0].mxu0
  %903 = vmatprep.mubr.bf16.mxu0 0
  %904 = vmatmul.mubr.bf16.gmra.mrb[0].mxu0 %v765
  %v905 = vpop.f32.mrb[0].mxu0
  %v906 = vadd.f32 0.0, %v905
  %v907 = vpop.f32.mrb[0].mxu0
  %v908 = vpop.f32.mrb[0].mxu0
  %v909 = vadd.f32 0.0, %v908
  %v910 = vpop.f32.mrb[0].mxu0
  %911 = vmatprep.mubr.bf16.mxu0 0
  %912 = vmatmul.mubr.bf16.gmra.mrb[0].mxu0 %v768
  %v913 = vpop.f32.mrb[0].mxu0
  %v914 = vadd.f32 0.0, %v913
  %v915 = vpop.f32.mrb[0].mxu0
  %v916 = vpop.f32.mrb[0].mxu0
  %v917 = vadd.f32 0.0, %v916
  %v918 = vpop.f32.mrb[0].mxu0
  %919 = vmatprep.mubr.bf16.mxu0 0
  %920 = vmatmul.mubr.bf16.gmra.mrb[0].mxu0 %v771
  %v921 = vpop.f32.mrb[0].mxu0
  %v922 = vadd.f32 0.0, %v921
  %v923 = vpop.f32.mrb[0].mxu0
  %v924 = vpop.f32.mrb[0].mxu0
  %v925 = vadd.f32 0.0, %v924
  %v926 = vpop.f32.mrb[0].mxu0
  %927 = vmatprep.mubr.bf16.mxu0 0
  %928 = vmatmul.mubr.bf16.gmra.mrb[0].mxu0 %v774
  %v929 = vpop.f32.mrb[0].mxu0
  %v930 = vadd.f32 0.0, %v929
  %v931 = vpop.f32.mrb[0].mxu0
  %v932 = vpop.f32.mrb[0].mxu0
  %v933 = vadd.f32 0.0, %v932
  %v934 = vpop.f32.mrb[0].mxu0
  %935 = vmatprep.mubr.bf16.mxu0 0
  %936 = vmatmul.mubr.bf16.gmra.mrb[0].mxu0 %v777
  %v937 = vpop.f32.mrb[0].mxu0
  %v938 = vadd.f32 0.0, %v937
  %v939 = vpop.f32.mrb[0].mxu0
  %v940 = vpop.f32.mrb[0].mxu0
  %v941 = vadd.f32 0.0, %v940
  %v942 = vpop.f32.mrb[0].mxu0
  %943 = vmatprep.mubr.bf16.mxu0 0
  %944 = vmatmul.mubr.bf16.gmra.mrb[0].mxu0 %v780
  %v945 = vpop.f32.mrb[0].mxu0
  %v946 = vadd.f32 0.0, %v945
  %v947 = vpop.f32.mrb[0].mxu0
  %v948 = vpop.f32.mrb[0].mxu0
  %v949 = vadd.f32 0.0, %v948
  %v950 = vpop.f32.mrb[0].mxu0
  %951 = vmatprep.mubr.bf16.mxu0 0
  %952 = vmatmul.mubr.bf16.gmra.mrb[0].mxu0 %v783
  %v953 = vpop.f32.mrb[0].mxu0
  %v954 = vadd.f32 0.0, %v953
  %v955 = vpop.f32.mrb[0].mxu0
  %v956 = vpop.f32.mrb[0].mxu0
  %v957 = vadd.f32 0.0, %v956
  %v958 = vpop.f32.mrb[0].mxu0
  %959 = vmatprep.mubr.bf16.mxu0 0
  %960 = vmatmul.mubr.bf16.gmra.mrb[0].mxu0 %v786
  %v961 = vpop.f32.mrb[0].mxu0
  %v962 = vadd.f32 0.0, %v961
  %v963 = vpop.f32.mrb[0].mxu0
  %v964 = vpop.f32.mrb[0].mxu0
  %v965 = vadd.f32 0.0, %v964
  %v966 = vpop.f32.mrb[0].mxu0
  %967 = vdwg.mxu0
  %v968 = vld [vmem:[#allocation2] sm:$0xff]
  %v969 = vld [vmem:[#allocation2 + $0x8] sm:$0xff]
  %v970 = vld [vmem:[#allocation2 + $0x10] sm:$0xff]
  %v971 = vld [vmem:[#allocation2 + $0x18] sm:$0xff]
  %v972 = vld [vmem:[#allocation2 + $0x20] sm:$0xff]
  %v973 = vld [vmem:[#allocation2 + $0x28] sm:$0xff]
  %v974 = vld [vmem:[#allocation2 + $0x30] sm:$0xff]
  %v975 = vld [vmem:[#allocation2 + $0x38] sm:$0xff]
  %v976 = vld [vmem:[#allocation2 + $0x40] sm:$0xff]
  %v977 = vld [vmem:[#allocation2 + $0x48] sm:$0xff]
  %v978 = vld [vmem:[#allocation2 + $0x50] sm:$0xff]
  %v979 = vld [vmem:[#allocation2 + $0x58] sm:$0xff]
  %v980 = vld [vmem:[#allocation2 + $0x60] sm:$0xff]
  %v981 = vld [vmem:[#allocation2 + $0x68] sm:$0xff]
  %v982 = vld [vmem:[#allocation2 + $0x70] sm:$0xff]
  %v983 = vld [vmem:[#allocation2 + $0x78] sm:$0xff]
  %v984 = vld [vmem:[#allocation2 + $0x80] sm:$0xff]
  %v985 = vld [vmem:[#allocation2 + $0x88] sm:$0xff]
  %v986 = vld [vmem:[#allocation2 + $0x90] sm:$0xff]
  %v987 = vld [vmem:[#allocation2 + $0x98] sm:$0xff]
  %v988 = vld [vmem:[#allocation2 + $0xa0] sm:$0xff]
  %v989 = vld [vmem:[#allocation2 + $0xa8] sm:$0xff]
  %v990 = vld [vmem:[#allocation2 + $0xb0] sm:$0xff]
  %v991 = vld [vmem:[#allocation2 + $0xb8] sm:$0xff]
  %v992 = vld [vmem:[#allocation2 + $0xc0] sm:$0xff]
  %v993 = vld [vmem:[#allocation2 + $0xc8] sm:$0xff]
  %v994 = vld [vmem:[#allocation2 + $0xd0] sm:$0xff]
  %v995 = vld [vmem:[#allocation2 + $0xd8] sm:$0xff]
  %v996 = vld [vmem:[#allocation2 + $0xe0] sm:$0xff]
  %v997 = vld [vmem:[#allocation2 + $0xe8] sm:$0xff]
  %v998 = vld [vmem:[#allocation2 + $0xf0] sm:$0xff]
  %v999 = vld [vmem:[#allocation2 + $0xf8] sm:$0xff]
  %v1000 = vld [vmem:[#allocation2 + $0x100] sm:$0xff]
  %v1001 = vld [vmem:[#allocation2 + $0x108] sm:$0xff]
  %v1002 = vld [vmem:[#allocation2 + $0x110] sm:$0xff]
  %v1003 = vld [vmem:[#allocation2 + $0x118] sm:$0xff]
  %v1004 = vadd.f32 %v968, %v826
  %v1005 = vadd.f32 %v969, %v829
  %v1006 = vadd.f32 %v970, %v834
  %v1007 = vadd.f32 %v971, %v837
  %v1008 = vadd.f32 %v972, %v842
  %v1009 = vadd.f32 %v973, %v845
  %v1010 = vadd.f32 %v974, %v850
  %v1011 = vadd.f32 %v975, %v853
  %v1012 = vadd.f32 %v976, %v858
  %v1013 = vadd.f32 %v977, %v861
  %v1014 = vadd.f32 %v978, %v866
  %v1015 = vadd.f32 %v979, %v869
  %v1016 = vadd.f32 %v980, %v874
  %v1017 = vadd.f32 %v981, %v877
  %v1018 = vadd.f32 %v982, %v882
  %v1019 = vadd.f32 %v983, %v885
  %v1020 = vadd.f32 %v984, %v890
  %v1021 = vadd.f32 %v985, %v893
  %v1022 = vadd.f32 %v986, %v898
  %v1023 = vadd.f32 %v987, %v901
  %v1024 = vadd.f32 %v988, %v906
  %v1025 = vadd.f32 %v989, %v909
  %v1026 = vadd.f32 %v990, %v914
  %v1027 = vadd.f32 %v991, %v917
  %v1028 = vadd.f32 %v992, %v922
  %v1029 = vadd.f32 %v993, %v925
  %v1030 = vadd.f32 %v994, %v930
  %v1031 = vadd.f32 %v995, %v933
  %v1032 = vadd.f32 %v996, %v938
  %v1033 = vadd.f32 %v997, %v941
  %v1034 = vadd.f32 %v998, %v946
  %v1035 = vadd.f32 %v999, %v949
  %v1036 = vadd.f32 %v1000, %v954
  %v1037 = vadd.f32 %v1001, %v957
  %v1038 = vadd.f32 %v1002, %v962
  %v1039 = vadd.f32 %v1003, %v965
  %1040 = vst [vmem:[#allocation2] sm:$0xff] %v1004
  %1041 = vst [vmem:[#allocation2 + $0x8] sm:$0xff] %v1005
  %1042 = vst [vmem:[#allocation2 + $0x10] sm:$0xff] %v1006
  %1043 = vst [vmem:[#allocation2 + $0x18] sm:$0xff] %v1007
  %1044 = vst [vmem:[#allocation2 + $0x20] sm:$0xff] %v1008
  %1045 = vst [vmem:[#allocation2 + $0x28] sm:$0xff] %v1009
  %1046 = vst [vmem:[#allocation2 + $0x30] sm:$0xff] %v1010
  %1047 = vst [vmem:[#allocation2 + $0x38] sm:$0xff] %v1011
  %1048 = vst [vmem:[#allocation2 + $0x40] sm:$0xff] %v1012
  %1049 = vst [vmem:[#allocation2 + $0x48] sm:$0xff] %v1013
  %1050 = vst [vmem:[#allocation2 + $0x50] sm:$0xff] %v1014
  %1051 = vst [vmem:[#allocation2 + $0x58] sm:$0xff] %v1015
  %1052 = vst [vmem:[#allocation2 + $0x60] sm:$0xff] %v1016
  %1053 = vst [vmem:[#allocation2 + $0x68] sm:$0xff] %v1017
  %1054 = vst [vmem:[#allocation2 + $0x70] sm:$0xff] %v1018
  %1055 = vst [vmem:[#allocation2 + $0x78] sm:$0xff] %v1019
  %1056 = vst [vmem:[#allocation2 + $0x80] sm:$0xff] %v1020
  %1057 = vst [vmem:[#allocation2 + $0x88] sm:$0xff] %v1021
  %1058 = vst [vmem:[#allocation2 + $0x90] sm:$0xff] %v1022
  %1059 = vst [vmem:[#allocation2 + $0x98] sm:$0xff] %v1023
  %1060 = vst [vmem:[#allocation2 + $0xa0] sm:$0xff] %v1024
  %1061 = vst [vmem:[#allocation2 + $0xa8] sm:$0xff] %v1025
  %1062 = vst [vmem:[#allocation2 + $0xb0] sm:$0xff] %v1026
  %1063 = vst [vmem:[#allocation2 + $0xb8] sm:$0xff] %v1027
  %1064 = vst [vmem:[#allocation2 + $0xc0] sm:$0xff] %v1028
  %1065 = vst [vmem:[#allocation2 + $0xc8] sm:$0xff] %v1029
  %1066 = vst [vmem:[#allocation2 + $0xd0] sm:$0xff] %v1030
  %1067 = vst [vmem:[#allocation2 + $0xd8] sm:$0xff] %v1031
  %1068 = vst [vmem:[#allocation2 + $0xe0] sm:$0xff] %v1032
  %1069 = vst [vmem:[#allocation2 + $0xe8] sm:$0xff] %v1033
  %1070 = vst [vmem:[#allocation2 + $0xf0] sm:$0xff] %v1034
  %1071 = vst [vmem:[#allocation2 + $0xf8] sm:$0xff] %v1035
  %1072 = vst [vmem:[#allocation2 + $0x100] sm:$0xff] %v1036
  %1073 = vst [vmem:[#allocation2 + $0x108] sm:$0xff] %v1037
  %1074 = vst [vmem:[#allocation2 + $0x110] sm:$0xff] %v1038
  %1075 = vst [vmem:[#allocation2 + $0x118] sm:$0xff] %v1039
  %v1076 = vld [vmem:[%s0] sm:$0xe]
  %v1077 = vld [vmem:[%s0 + $0x4] sm:$0xf]
  %v1078 = vld [vmem:[%s0 + $0x8] sm:$0xf]
  %v1079 = vld [vmem:[%s0 + $0xc] sm:$0xf]
  %v1080 = vld [vmem:[%s0 + $0x10] sm:$0xf]
  %v1081 = vld [vmem:[%s0 + $0x14] sm:$0xf]
  %v1082 = vld [vmem:[%s0 + $0x18] sm:$0xf]
  %v1083 = vld [vmem:[%s0 + $0x1c] sm:$0xf]
  %v1084 = vld [vmem:[%s0 + $0x20] sm:$0xf]
  %v1085 = vld [vmem:[%s0 + $0x24] sm:$0xf]
  %v1086 = vld [vmem:[%s0 + $0x28] sm:$0xf]
  %v1087 = vld [vmem:[%s0 + $0x2c] sm:$0xf]
  %v1088 = vld [vmem:[%s0 + $0x30] sm:$0xf]
  %v1089 = vld [vmem:[%s0 + $0x34] sm:$0xf]
  %v1090 = vld [vmem:[%s0 + $0x38] sm:$0xf]
  %v1091 = vld [vmem:[%s0 + $0x3c] sm:$0xf]
  %v1092 = vld [vmem:[%s0 + $0x40] sm:$0xf]
  %v1093 = vld [vmem:[%s0 + $0x44] sm:$0xf]
  %v1094 = vld [vmem:[%s0 + $0x48] sm:$0xf]
  %v1095 = vld [vmem:[%s0 + $0x4c] sm:$0xf]
  %v1096 = vld [vmem:[%s0 + $0x50] sm:$0xf]
  %v1097 = vld [vmem:[%s0 + $0x54] sm:$0xf]
  %v1098 = vld [vmem:[%s0 + $0x58] sm:$0xf]
  %v1099 = vld [vmem:[%s0 + $0x5c] sm:$0xf]
  %v1100 = vld [vmem:[%s0 + $0x60] sm:$0xf]
  %v1101 = vld [vmem:[%s0 + $0x64] sm:$0xf]
  %v1102 = vld [vmem:[%s0 + $0x68] sm:$0xf]
  %v1103 = vld [vmem:[%s0 + $0x6c] sm:$0xf]
  %v1104 = vld [vmem:[%s0 + $0x70] sm:$0xf]
  %v1105 = vld [vmem:[%s0 + $0x74] sm:$0xf]
  %v1106 = vld [vmem:[%s0 + $0x78] sm:$0xf]
  %v1107 = vld [vmem:[%s0 + $0x7c] sm:$0xf]
  %v1108 = vld [vmem:[%s0 + $0x80] sm:$0xf]
  %v1109 = vld [vmem:[%s0 + $0x84] sm:$0xf]
  %v1110 = vld [vmem:[%s0 + $0x88] sm:$0xf]
  %v1111 = vld [vmem:[%s0 + $0x8c] sm:$0xf]
  %v1112 = vld [vmem:[%s0 + $0x90] sm:$0x1]
  %s1113 = scalar_lea.vmem %s1, 8
  %v1114 = vld [vmem:[%s1113] sm:$0xf]
  %v1152 = vunpack.c.l.b16 %v1076
  %v1153 = vunpack.c.l.b16 %v1077
  %v1154 = vunpack.c.l.b16 %v1078
  %v1155 = vunpack.c.l.b16 %v1079
  %v1156 = vunpack.c.l.b16 %v1080
  %v1157 = vunpack.c.l.b16 %v1081
  %v1158 = vunpack.c.l.b16 %v1082
  %v1159 = vunpack.c.l.b16 %v1083
  %v1160 = vunpack.c.l.b16 %v1084
  %v1161 = vunpack.c.l.b16 %v1085
  %v1162 = vunpack.c.l.b16 %v1086
  %v1163 = vunpack.c.l.b16 %v1087
  %v1164 = vunpack.c.l.b16 %v1088
  %v1165 = vunpack.c.l.b16 %v1089
  %v1166 = vunpack.c.l.b16 %v1090
  %v1167 = vunpack.c.l.b16 %v1091
  %v1168 = vunpack.c.l.b16 %v1092
  %v1169 = vunpack.c.l.b16 %v1093
  %v1170 = vunpack.c.l.b16 %v1094
  %v1171 = vunpack.c.l.b16 %v1095
  %v1172 = vunpack.c.l.b16 %v1096
  %v1173 = vunpack.c.l.b16 %v1097
  %v1174 = vunpack.c.l.b16 %v1098
  %v1175 = vunpack.c.l.b16 %v1099
  %v1176 = vunpack.c.l.b16 %v1100
  %v1177 = vunpack.c.l.b16 %v1101
  %v1178 = vunpack.c.l.b16 %v1102
  %v1179 = vunpack.c.l.b16 %v1103
  %v1180 = vunpack.c.l.b16 %v1104
  %v1181 = vunpack.c.l.b16 %v1105
  %v1182 = vunpack.c.l.b16 %v1106
  %v1183 = vunpack.c.l.b16 %v1107
  %v1184 = vunpack.c.l.b16 %v1108
  %v1185 = vunpack.c.l.b16 %v1109
  %v1186 = vunpack.c.l.b16 %v1110
  %v1187 = vunpack.c.l.b16 %v1111
  %v1188 = vunpack.c.l.b16 %v1112
  %v1189 = vpack.c.b16 %v1153, %v1152
  %v1190 = vpack.c.b16 %v1155, %v1154
  %v1191 = vpack.c.b16 %v1157, %v1156
  %v1192 = vpack.c.b16 %v1159, %v1158
  %v1193 = vpack.c.b16 %v1161, %v1160
  %v1194 = vpack.c.b16 %v1163, %v1162
  %v1195 = vpack.c.b16 %v1165, %v1164
  %v1196 = vpack.c.b16 %v1167, %v1166
  %v1197 = vpack.c.b16 %v1169, %v1168
  %v1198 = vpack.c.b16 %v1171, %v1170
  %v1199 = vpack.c.b16 %v1173, %v1172
  %v1200 = vpack.c.b16 %v1175, %v1174
  %v1201 = vpack.c.b16 %v1177, %v1176
  %v1202 = vpack.c.b16 %v1179, %v1178
  %v1203 = vpack.c.b16 %v1181, %v1180
  %v1204 = vpack.c.b16 %v1183, %v1182
  %v1205 = vpack.c.b16 %v1185, %v1184
  %v1206 = vpack.c.b16 %v1187, %v1186
  %v1207 = vpack.c.b16 %v1188, %v1188
  %vm1208 = vcmask 1046528
  %v1209 = vrot.slane %v1189, 1
  %v1210 = vrot.slane %v1190, 1
  %v1211 = vsel %vm1208, %v1209, %v1210
  %v1212 = vrot.slane %v1191, 1
  %v1213 = vsel %vm1208, %v1210, %v1212
  %v1214 = vrot.slane %v1192, 1
  %v1215 = vsel %vm1208, %v1212, %v1214
  %v1216 = vrot.slane %v1193, 1
  %v1217 = vsel %vm1208, %v1214, %v1216
  %v1218 = vrot.slane %v1194, 1
  %v1219 = vsel %vm1208, %v1216, %v1218
  %v1220 = vrot.slane %v1195, 1
  %v1221 = vsel %vm1208, %v1218, %v1220
  %v1222 = vrot.slane %v1196, 1
  %v1223 = vsel %vm1208, %v1220, %v1222
  %v1224 = vrot.slane %v1197, 1
  %v1225 = vsel %vm1208, %v1222, %v1224
  %v1226 = vrot.slane %v1198, 1
  %v1227 = vsel %vm1208, %v1224, %v1226
  %v1228 = vrot.slane %v1199, 1
  %v1229 = vsel %vm1208, %v1226, %v1228
  %v1230 = vrot.slane %v1200, 1
  %v1231 = vsel %vm1208, %v1228, %v1230
  %v1232 = vrot.slane %v1201, 1
  %v1233 = vsel %vm1208, %v1230, %v1232
  %v1234 = vrot.slane %v1202, 1
  %v1235 = vsel %vm1208, %v1232, %v1234
  %v1236 = vrot.slane %v1203, 1
  %v1237 = vsel %vm1208, %v1234, %v1236
  %v1238 = vrot.slane %v1204, 1
  %v1239 = vsel %vm1208, %v1236, %v1238
  %v1240 = vrot.slane %v1205, 1
  %v1241 = vsel %vm1208, %v1238, %v1240
  %v1242 = vrot.slane %v1206, 1
  %v1243 = vsel %vm1208, %v1240, %v1242
  %v1244 = vrot.slane %v1207, 1
  %v1245 = vsel %vm1208, %v1242, %v1244
  %v1247 = vsel %vm181, %v1211, 0
  %v1250 = vsel %vm181, %v1213, 0
  %v1253 = vsel %vm181, %v1215, 0
  %v1256 = vsel %vm181, %v1217, 0
  %v1259 = vsel %vm181, %v1219, 0
  %v1262 = vsel %vm181, %v1221, 0
  %v1265 = vsel %vm181, %v1223, 0
  %v1268 = vsel %vm181, %v1225, 0
  %v1271 = vsel %vm181, %v1227, 0
  %v1274 = vsel %vm181, %v1229, 0
  %v1277 = vsel %vm181, %v1231, 0
  %v1280 = vsel %vm181, %v1233, 0
  %v1283 = vsel %vm181, %v1235, 0
  %v1286 = vsel %vm181, %v1237, 0
  %v1289 = vsel %vm181, %v1239, 0
  %v1292 = vsel %vm181, %v1241, 0
  %v1295 = vsel %vm181, %v1243, 0
  %v1298 = vsel %vm181, %v1245, 0
  %v1301 = vsel %vm236, %v1114, 0
  %1303 = vmatprep.subr.bf16.mxu0 0
  %1304 = vmatpush1.bf16.msra.mxu0 %v1301
  %1305 = vmatprep.subr.bf16.mxu0 0
  %1306 = vmatpush1.bf16.msra.mxu0 0
  %1307 = vmatprep.subr.bf16.mxu0 0
  %1308 = vmatpush1.bf16.msra.mxu0 0
  %1309 = vmatprep.subr.bf16.mxu0 0
  %1310 = vmatpush1.bf16.msra.mxu0 0
  %1311 = vmatprep.subr.bf16.mxu0 0
  %1312 = vmatpush1.bf16.msra.mxu0 0
  %1313 = vmatprep.subr.bf16.mxu0 0
  %1314 = vmatpush1.bf16.msra.mxu0 0
  %1315 = vmatprep.subr.bf16.mxu0 0
  %1316 = vmatpush1.bf16.msra.mxu0 0
  %1317 = vmatprep.subr.bf16.mxu0 0
  %1318 = vmatpush1.bf16.msra.mxu0 0
  %1319 = vmatprep.subr.bf16.mxu0 0
  %1320 = vmatpush1.bf16.msra.mxu0 0
  %1321 = vmatprep.subr.bf16.mxu0 0
  %1322 = vmatpush1.bf16.msra.mxu0 0
  %1323 = vmatprep.subr.bf16.mxu0 0
  %1324 = vmatpush1.bf16.msra.mxu0 0
  %1325 = vmatprep.subr.bf16.mxu0 0
  %1326 = vmatpush1.bf16.msra.mxu0 0
  %1327 = vmatprep.subr.bf16.mxu0 0
  %1328 = vmatpush1.bf16.msra.mxu0 0
  %1329 = vmatprep.subr.bf16.mxu0 0
  %1330 = vmatpush1.bf16.msra.mxu0 0
  %1331 = vmatprep.subr.bf16.mxu0 0
  %1332 = vmatpush1.bf16.msra.mxu0 0
  %1333 = vmatprep.subr.bf16.mxu0 0
  %1334 = vmatpush1.bf16.msra.mxu0 0
  %1335 = vmatprep.mubr.bf16.mxu0 0
  %1336 = vmatmul.mubr.bf16.gmra.mrb[0].mxu0 %v1247
  %v1337 = vpop.f32.mrb[0].mxu0
  %v1338 = vadd.f32 0.0, %v1337
  %v1339 = vpop.f32.mrb[0].mxu0
  %v1340 = vpop.f32.mrb[0].mxu0
  %v1341 = vadd.f32 0.0, %v1340
  %v1342 = vpop.f32.mrb[0].mxu0
  %1343 = vmatprep.mubr.bf16.mxu0 0
  %1344 = vmatmul.mubr.bf16.gmra.mrb[0].mxu0 %v1250
  %v1345 = vpop.f32.mrb[0].mxu0
  %v1346 = vadd.f32 0.0, %v1345
  %v1347 = vpop.f32.mrb[0].mxu0
  %v1348 = vpop.f32.mrb[0].mxu0
  %v1349 = vadd.f32 0.0, %v1348
  %v1350 = vpop.f32.mrb[0].mxu0
  %1351 = vmatprep.mubr.bf16.mxu0 0
  %1352 = vmatmul.mubr.bf16.gmra.mrb[0].mxu0 %v1253
  %v1353 = vpop.f32.mrb[0].mxu0
  %v1354 = vadd.f32 0.0, %v1353
  %v1355 = vpop.f32.mrb[0].mxu0
  %v1356 = vpop.f32.mrb[0].mxu0
  %v1357 = vadd.f32 0.0, %v1356
  %v1358 = vpop.f32.mrb[0].mxu0
  %1359 = vmatprep.mubr.bf16.mxu0 0
  %1360 = vmatmul.mubr.bf16.gmra.mrb[0].mxu0 %v1256
  %v1361 = vpop.f32.mrb[0].mxu0
  %v1362 = vadd.f32 0.0, %v1361
  %v1363 = vpop.f32.mrb[0].mxu0
  %v1364 = vpop.f32.mrb[0].mxu0
  %v1365 = vadd.f32 0.0, %v1364
  %v1366 = vpop.f32.mrb[0].mxu0
  %1367 = vmatprep.mubr.bf16.mxu0 0
  %1368 = vmatmul.mubr.bf16.gmra.mrb[0].mxu0 %v1259
  %v1369 = vpop.f32.mrb[0].mxu0
  %v1370 = vadd.f32 0.0, %v1369
  %v1371 = vpop.f32.mrb[0].mxu0
  %v1372 = vpop.f32.mrb[0].mxu0
  %v1373 = vadd.f32 0.0, %v1372
  %v1374 = vpop.f32.mrb[0].mxu0
  %1375 = vmatprep.mubr.bf16.mxu0 0
  %1376 = vmatmul.mubr.bf16.gmra.mrb[0].mxu0 %v1262
  %v1377 = vpop.f32.mrb[0].mxu0
  %v1378 = vadd.f32 0.0, %v1377
  %v1379 = vpop.f32.mrb[0].mxu0
  %v1380 = vpop.f32.mrb[0].mxu0
  %v1381 = vadd.f32 0.0, %v1380
  %v1382 = vpop.f32.mrb[0].mxu0
  %1383 = vmatprep.mubr.bf16.mxu0 0
  %1384 = vmatmul.mubr.bf16.gmra.mrb[0].mxu0 %v1265
  %v1385 = vpop.f32.mrb[0].mxu0
  %v1386 = vadd.f32 0.0, %v1385
  %v1387 = vpop.f32.mrb[0].mxu0
  %v1388 = vpop.f32.mrb[0].mxu0
  %v1389 = vadd.f32 0.0, %v1388
  %v1390 = vpop.f32.mrb[0].mxu0
  %1391 = vmatprep.mubr.bf16.mxu0 0
  %1392 = vmatmul.mubr.bf16.gmra.mrb[0].mxu0 %v1268
  %v1393 = vpop.f32.mrb[0].mxu0
  %v1394 = vadd.f32 0.0, %v1393
  %v1395 = vpop.f32.mrb[0].mxu0
  %v1396 = vpop.f32.mrb[0].mxu0
  %v1397 = vadd.f32 0.0, %v1396
  %v1398 = vpop.f32.mrb[0].mxu0
  %1399 = vmatprep.mubr.bf16.mxu0 0
  %1400 = vmatmul.mubr.bf16.gmra.mrb[0].mxu0 %v1271
  %v1401 = vpop.f32.mrb[0].mxu0
  %v1402 = vadd.f32 0.0, %v1401
  %v1403 = vpop.f32.mrb[0].mxu0
  %v1404 = vpop.f32.mrb[0].mxu0
  %v1405 = vadd.f32 0.0, %v1404
  %v1406 = vpop.f32.mrb[0].mxu0
  %1407 = vmatprep.mubr.bf16.mxu0 0
  %1408 = vmatmul.mubr.bf16.gmra.mrb[0].mxu0 %v1274
  %v1409 = vpop.f32.mrb[0].mxu0
  %v1410 = vadd.f32 0.0, %v1409
  %v1411 = vpop.f32.mrb[0].mxu0
  %v1412 = vpop.f32.mrb[0].mxu0
  %v1413 = vadd.f32 0.0, %v1412
  %v1414 = vpop.f32.mrb[0].mxu0
  %1415 = vmatprep.mubr.bf16.mxu0 0
  %1416 = vmatmul.mubr.bf16.gmra.mrb[0].mxu0 %v1277
  %v1417 = vpop.f32.mrb[0].mxu0
  %v1418 = vadd.f32 0.0, %v1417
  %v1419 = vpop.f32.mrb[0].mxu0
  %v1420 = vpop.f32.mrb[0].mxu0
  %v1421 = vadd.f32 0.0, %v1420
  %v1422 = vpop.f32.mrb[0].mxu0
  %1423 = vmatprep.mubr.bf16.mxu0 0
  %1424 = vmatmul.mubr.bf16.gmra.mrb[0].mxu0 %v1280
  %v1425 = vpop.f32.mrb[0].mxu0
  %v1426 = vadd.f32 0.0, %v1425
  %v1427 = vpop.f32.mrb[0].mxu0
  %v1428 = vpop.f32.mrb[0].mxu0
  %v1429 = vadd.f32 0.0, %v1428
  %v1430 = vpop.f32.mrb[0].mxu0
  %1431 = vmatprep.mubr.bf16.mxu0 0
  %1432 = vmatmul.mubr.bf16.gmra.mrb[0].mxu0 %v1283
  %v1433 = vpop.f32.mrb[0].mxu0
  %v1434 = vadd.f32 0.0, %v1433
  %v1435 = vpop.f32.mrb[0].mxu0
  %v1436 = vpop.f32.mrb[0].mxu0
  %v1437 = vadd.f32 0.0, %v1436
  %v1438 = vpop.f32.mrb[0].mxu0
  %1439 = vmatprep.mubr.bf16.mxu0 0
  %1440 = vmatmul.mubr.bf16.gmra.mrb[0].mxu0 %v1286
  %v1441 = vpop.f32.mrb[0].mxu0
  %v1442 = vadd.f32 0.0, %v1441
  %v1443 = vpop.f32.mrb[0].mxu0
  %v1444 = vpop.f32.mrb[0].mxu0
  %v1445 = vadd.f32 0.0, %v1444
  %v1446 = vpop.f32.mrb[0].mxu0
  %1447 = vmatprep.mubr.bf16.mxu0 0
  %1448 = vmatmul.mubr.bf16.gmra.mrb[0].mxu0 %v1289
  %v1449 = vpop.f32.mrb[0].mxu0
  %v1450 = vadd.f32 0.0, %v1449
  %v1451 = vpop.f32.mrb[0].mxu0
  %v1452 = vpop.f32.mrb[0].mxu0
  %v1453 = vadd.f32 0.0, %v1452
  %v1454 = vpop.f32.mrb[0].mxu0
  %1455 = vmatprep.mubr.bf16.mxu0 0
  %1456 = vmatmul.mubr.bf16.gmra.mrb[0].mxu0 %v1292
  %v1457 = vpop.f32.mrb[0].mxu0
  %v1458 = vadd.f32 0.0, %v1457
  %v1459 = vpop.f32.mrb[0].mxu0
  %v1460 = vpop.f32.mrb[0].mxu0
  %v1461 = vadd.f32 0.0, %v1460
  %v1462 = vpop.f32.mrb[0].mxu0
  %1463 = vmatprep.mubr.bf16.mxu0 0
  %1464 = vmatmul.mubr.bf16.gmra.mrb[0].mxu0 %v1295
  %v1465 = vpop.f32.mrb[0].mxu0
  %v1466 = vadd.f32 0.0, %v1465
  %v1467 = vpop.f32.mrb[0].mxu0
  %v1468 = vpop.f32.mrb[0].mxu0
  %v1469 = vadd.f32 0.0, %v1468
  %v1470 = vpop.f32.mrb[0].mxu0
  %1471 = vmatprep.mubr.bf16.mxu0 0
  %1472 = vmatmul.mubr.bf16.gmra.mrb[0].mxu0 %v1298
  %v1473 = vpop.f32.mrb[0].mxu0
  %v1474 = vadd.f32 0.0, %v1473
  %v1475 = vpop.f32.mrb[0].mxu0
  %v1476 = vpop.f32.mrb[0].mxu0
  %v1477 = vadd.f32 0.0, %v1476
  %v1478 = vpop.f32.mrb[0].mxu0
  %1479 = vdwg.mxu0
  %v1480 = vld [vmem:[#allocation2] sm:$0xff]
  %v1481 = vld [vmem:[#allocation2 + $0x8] sm:$0xff]
  %v1482 = vld [vmem:[#allocation2 + $0x10] sm:$0xff]
  %v1483 = vld [vmem:[#allocation2 + $0x18] sm:$0xff]
  %v1484 = vld [vmem:[#allocation2 + $0x20] sm:$0xff]
  %v1485 = vld [vmem:[#allocation2 + $0x28] sm:$0xff]
  %v1486 = vld [vmem:[#allocation2 + $0x30] sm:$0xff]
  %v1487 = vld [vmem:[#allocation2 + $0x38] sm:$0xff]
  %v1488 = vld [vmem:[#allocation2 + $0x40] sm:$0xff]
  %v1489 = vld [vmem:[#allocation2 + $0x48] sm:$0xff]
  %v1490 = vld [vmem:[#allocation2 + $0x50] sm:$0xff]
  %v1491 = vld [vmem:[#allocation2 + $0x58] sm:$0xff]
  %v1492 = vld [vmem:[#allocation2 + $0x60] sm:$0xff]
  %v1493 = vld [vmem:[#allocation2 + $0x68] sm:$0xff]
  %v1494 = vld [vmem:[#allocation2 + $0x70] sm:$0xff]
  %v1495 = vld [vmem:[#allocation2 + $0x78] sm:$0xff]
  %v1496 = vld [vmem:[#allocation2 + $0x80] sm:$0xff]
  %v1497 = vld [vmem:[#allocation2 + $0x88] sm:$0xff]
  %v1498 = vld [vmem:[#allocation2 + $0x90] sm:$0xff]
  %v1499 = vld [vmem:[#allocation2 + $0x98] sm:$0xff]
  %v1500 = vld [vmem:[#allocation2 + $0xa0] sm:$0xff]
  %v1501 = vld [vmem:[#allocation2 + $0xa8] sm:$0xff]
  %v1502 = vld [vmem:[#allocation2 + $0xb0] sm:$0xff]
  %v1503 = vld [vmem:[#allocation2 + $0xb8] sm:$0xff]
  %v1504 = vld [vmem:[#allocation2 + $0xc0] sm:$0xff]
  %v1505 = vld [vmem:[#allocation2 + $0xc8] sm:$0xff]
  %v1506 = vld [vmem:[#allocation2 + $0xd0] sm:$0xff]
  %v1507 = vld [vmem:[#allocation2 + $0xd8] sm:$0xff]
  %v1508 = vld [vmem:[#allocation2 + $0xe0] sm:$0xff]
  %v1509 = vld [vmem:[#allocation2 + $0xe8] sm:$0xff]
  %v1510 = vld [vmem:[#allocation2 + $0xf0] sm:$0xff]
  %v1511 = vld [vmem:[#allocation2 + $0xf8] sm:$0xff]
  %v1512 = vld [vmem:[#allocation2 + $0x100] sm:$0xff]
  %v1513 = vld [vmem:[#allocation2 + $0x108] sm:$0xff]
  %v1514 = vld [vmem:[#allocation2 + $0x110] sm:$0xff]
  %v1515 = vld [vmem:[#allocation2 + $0x118] sm:$0xff]
  %v1516 = vadd.f32 %v1480, %v1338
  %v1517 = vadd.f32 %v1481, %v1341
  %v1518 = vadd.f32 %v1482, %v1346
  %v1519 = vadd.f32 %v1483, %v1349
  %v1520 = vadd.f32 %v1484, %v1354
  %v1521 = vadd.f32 %v1485, %v1357
  %v1522 = vadd.f32 %v1486, %v1362
  %v1523 = vadd.f32 %v1487, %v1365
  %v1524 = vadd.f32 %v1488, %v1370
  %v1525 = vadd.f32 %v1489, %v1373
  %v1526 = vadd.f32 %v1490, %v1378
  %v1527 = vadd.f32 %v1491, %v1381
  %v1528 = vadd.f32 %v1492, %v1386
  %v1529 = vadd.f32 %v1493, %v1389
  %v1530 = vadd.f32 %v1494, %v1394
  %v1531 = vadd.f32 %v1495, %v1397
  %v1532 = vadd.f32 %v1496, %v1402
  %v1533 = vadd.f32 %v1497, %v1405
  %v1534 = vadd.f32 %v1498, %v1410
  %v1535 = vadd.f32 %v1499, %v1413
  %v1536 = vadd.f32 %v1500, %v1418
  %v1537 = vadd.f32 %v1501, %v1421
  %v1538 = vadd.f32 %v1502, %v1426
  %v1539 = vadd.f32 %v1503, %v1429
  %v1540 = vadd.f32 %v1504, %v1434
  %v1541 = vadd.f32 %v1505, %v1437
  %v1542 = vadd.f32 %v1506, %v1442
  %v1543 = vadd.f32 %v1507, %v1445
  %v1544 = vadd.f32 %v1508, %v1450
  %v1545 = vadd.f32 %v1509, %v1453
  %v1546 = vadd.f32 %v1510, %v1458
  %v1547 = vadd.f32 %v1511, %v1461
  %v1548 = vadd.f32 %v1512, %v1466
  %v1549 = vadd.f32 %v1513, %v1469
  %v1550 = vadd.f32 %v1514, %v1474
  %v1551 = vadd.f32 %v1515, %v1477
  %1552 = vst [vmem:[#allocation2] sm:$0xff] %v1516
  %1553 = vst [vmem:[#allocation2 + $0x8] sm:$0xff] %v1517
  %1554 = vst [vmem:[#allocation2 + $0x10] sm:$0xff] %v1518
  %1555 = vst [vmem:[#allocation2 + $0x18] sm:$0xff] %v1519
  %1556 = vst [vmem:[#allocation2 + $0x20] sm:$0xff] %v1520
  %1557 = vst [vmem:[#allocation2 + $0x28] sm:$0xff] %v1521
  %1558 = vst [vmem:[#allocation2 + $0x30] sm:$0xff] %v1522
  %1559 = vst [vmem:[#allocation2 + $0x38] sm:$0xff] %v1523
  %1560 = vst [vmem:[#allocation2 + $0x40] sm:$0xff] %v1524
  %1561 = vst [vmem:[#allocation2 + $0x48] sm:$0xff] %v1525
  %1562 = vst [vmem:[#allocation2 + $0x50] sm:$0xff] %v1526
  %1563 = vst [vmem:[#allocation2 + $0x58] sm:$0xff] %v1527
  %1564 = vst [vmem:[#allocation2 + $0x60] sm:$0xff] %v1528
  %1565 = vst [vmem:[#allocation2 + $0x68] sm:$0xff] %v1529
  %1566 = vst [vmem:[#allocation2 + $0x70] sm:$0xff] %v1530
  %1567 = vst [vmem:[#allocation2 + $0x78] sm:$0xff] %v1531
  %1568 = vst [vmem:[#allocation2 + $0x80] sm:$0xff] %v1532
  %1569 = vst [vmem:[#allocation2 + $0x88] sm:$0xff] %v1533
  %1570 = vst [vmem:[#allocation2 + $0x90] sm:$0xff] %v1534
  %1571 = vst [vmem:[#allocation2 + $0x98] sm:$0xff] %v1535
  %1572 = vst [vmem:[#allocation2 + $0xa0] sm:$0xff] %v1536
  %1573 = vst [vmem:[#allocation2 + $0xa8] sm:$0xff] %v1537
  %1574 = vst [vmem:[#allocation2 + $0xb0] sm:$0xff] %v1538
  %1575 = vst [vmem:[#allocation2 + $0xb8] sm:$0xff] %v1539
  %1576 = vst [vmem:[#allocation2 + $0xc0] sm:$0xff] %v1540
  %1577 = vst [vmem:[#allocation2 + $0xc8] sm:$0xff] %v1541
  %1578 = vst [vmem:[#allocation2 + $0xd0] sm:$0xff] %v1542
  %1579 = vst [vmem:[#allocation2 + $0xd8] sm:$0xff] %v1543
  %1580 = vst [vmem:[#allocation2 + $0xe0] sm:$0xff] %v1544
  %1581 = vst [vmem:[#allocation2 + $0xe8] sm:$0xff] %v1545
  %1582 = vst [vmem:[#allocation2 + $0xf0] sm:$0xff] %v1546
  %1583 = vst [vmem:[#allocation2 + $0xf8] sm:$0xff] %v1547
  %1584 = vst [vmem:[#allocation2 + $0x100] sm:$0xff] %v1548
  %1585 = vst [vmem:[#allocation2 + $0x108] sm:$0xff] %v1549
  %1586 = vst [vmem:[#allocation2 + $0x110] sm:$0xff] %v1550
  %1587 = vst [vmem:[#allocation2 + $0x118] sm:$0xff] %v1551
  %v1588 = vld [vmem:[%s0 + $0x8] sm:$0xe]
  %v1589 = vld [vmem:[%s0 + $0xc] sm:$0xf]
  %v1590 = vld [vmem:[%s0 + $0x10] sm:$0xf]
  %v1591 = vld [vmem:[%s0 + $0x14] sm:$0xf]
  %v1592 = vld [vmem:[%s0 + $0x18] sm:$0xf]
  %v1593 = vld [vmem:[%s0 + $0x1c] sm:$0xf]
  %v1594 = vld [vmem:[%s0 + $0x20] sm:$0xf]
  %v1595 = vld [vmem:[%s0 + $0x24] sm:$0xf]
  %v1596 = vld [vmem:[%s0 + $0x28] sm:$0xf]
  %v1597 = vld [vmem:[%s0 + $0x2c] sm:$0xf]
  %v1598 = vld [vmem:[%s0 + $0x30] sm:$0xf]
  %v1599 = vld [vmem:[%s0 + $0x34] sm:$0xf]
  %v1600 = vld [vmem:[%s0 + $0x38] sm:$0xf]
  %v1601 = vld [vmem:[%s0 + $0x3c] sm:$0xf]
  %v1602 = vld [vmem:[%s0 + $0x40] sm:$0xf]
  %v1603 = vld [vmem:[%s0 + $0x44] sm:$0xf]
  %v1604 = vld [vmem:[%s0 + $0x48] sm:$0xf]
  %v1605 = vld [vmem:[%s0 + $0x4c] sm:$0xf]
  %v1606 = vld [vmem:[%s0 + $0x50] sm:$0xf]
  %v1607 = vld [vmem:[%s0 + $0x54] sm:$0xf]
  %v1608 = vld [vmem:[%s0 + $0x58] sm:$0xf]
  %v1609 = vld [vmem:[%s0 + $0x5c] sm:$0xf]
  %v1610 = vld [vmem:[%s0 + $0x60] sm:$0xf]
  %v1611 = vld [vmem:[%s0 + $0x64] sm:$0xf]
  %v1612 = vld [vmem:[%s0 + $0x68] sm:$0xf]
  %v1613 = vld [vmem:[%s0 + $0x6c] sm:$0xf]
  %v1614 = vld [vmem:[%s0 + $0x70] sm:$0xf]
  %v1615 = vld [vmem:[%s0 + $0x74] sm:$0xf]
  %v1616 = vld [vmem:[%s0 + $0x78] sm:$0xf]
  %v1617 = vld [vmem:[%s0 + $0x7c] sm:$0xf]
  %v1618 = vld [vmem:[%s0 + $0x80] sm:$0xf]
  %v1619 = vld [vmem:[%s0 + $0x84] sm:$0xf]
  %v1620 = vld [vmem:[%s0 + $0x88] sm:$0xf]
  %v1621 = vld [vmem:[%s0 + $0x8c] sm:$0xf]
  %v1622 = vld [vmem:[%s0 + $0x90] sm:$0xf]
  %v1623 = vld [vmem:[%s0 + $0x94] sm:$0xf]
  %v1624 = vld [vmem:[%s0 + $0x98] sm:$0x1]
  %s1625 = scalar_lea.vmem %s1, 12
  %v1626 = vld [vmem:[%s1625] sm:$0xf]
  %v1664 = vunpack.c.l.b16 %v1588
  %v1665 = vunpack.c.l.b16 %v1589
  %v1666 = vunpack.c.l.b16 %v1590
  %v1667 = vunpack.c.l.b16 %v1591
  %v1668 = vunpack.c.l.b16 %v1592
  %v1669 = vunpack.c.l.b16 %v1593
  %v1670 = vunpack.c.l.b16 %v1594
  %v1671 = vunpack.c.l.b16 %v1595
  %v1672 = vunpack.c.l.b16 %v1596
  %v1673 = vunpack.c.l.b16 %v1597
  %v1674 = vunpack.c.l.b16 %v1598
  %v1675 = vunpack.c.l.b16 %v1599
  %v1676 = vunpack.c.l.b16 %v1600
  %v1677 = vunpack.c.l.b16 %v1601
  %v1678 = vunpack.c.l.b16 %v1602
  %v1679 = vunpack.c.l.b16 %v1603
  %v1680 = vunpack.c.l.b16 %v1604
  %v1681 = vunpack.c.l.b16 %v1605
  %v1682 = vunpack.c.l.b16 %v1606
  %v1683 = vunpack.c.l.b16 %v1607
  %v1684 = vunpack.c.l.b16 %v1608
  %v1685 = vunpack.c.l.b16 %v1609
  %v1686 = vunpack.c.l.b16 %v1610
  %v1687 = vunpack.c.l.b16 %v1611
  %v1688 = vunpack.c.l.b16 %v1612
  %v1689 = vunpack.c.l.b16 %v1613
  %v1690 = vunpack.c.l.b16 %v1614
  %v1691 = vunpack.c.l.b16 %v1615
  %v1692 = vunpack.c.l.b16 %v1616
  %v1693 = vunpack.c.l.b16 %v1617
  %v1694 = vunpack.c.l.b16 %v1618
  %v1695 = vunpack.c.l.b16 %v1619
  %v1696 = vunpack.c.l.b16 %v1620
  %v1697 = vunpack.c.l.b16 %v1621
  %v1698 = vunpack.c.l.b16 %v1622
  %v1699 = vunpack.c.l.b16 %v1623
  %v1700 = vunpack.c.l.b16 %v1624
  %v1701 = vpack.c.b16 %v1665, %v1664
  %v1702 = vpack.c.b16 %v1667, %v1666
  %v1703 = vpack.c.b16 %v1669, %v1668
  %v1704 = vpack.c.b16 %v1671, %v1670
  %v1705 = vpack.c.b16 %v1673, %v1672
  %v1706 = vpack.c.b16 %v1675, %v1674
  %v1707 = vpack.c.b16 %v1677, %v1676
  %v1708 = vpack.c.b16 %v1679, %v1678
  %v1709 = vpack.c.b16 %v1681, %v1680
  %v1710 = vpack.c.b16 %v1683, %v1682
  %v1711 = vpack.c.b16 %v1685, %v1684
  %v1712 = vpack.c.b16 %v1687, %v1686
  %v1713 = vpack.c.b16 %v1689, %v1688
  %v1714 = vpack.c.b16 %v1691, %v1690
  %v1715 = vpack.c.b16 %v1693, %v1692
  %v1716 = vpack.c.b16 %v1695, %v1694
  %v1717 = vpack.c.b16 %v1697, %v1696
  %v1718 = vpack.c.b16 %v1699, %v1698
  %v1719 = vpack.c.b16 %v1700, %v1700
  %v1720 = vrot.slane %v1701, 1
  %v1721 = vrot.slane %v1702, 1
  %v1722 = vsel %vm1208, %v1720, %v1721
  %v1723 = vrot.slane %v1703, 1
  %v1724 = vsel %vm1208, %v1721, %v1723
  %v1725 = vrot.slane %v1704, 1
  %v1726 = vsel %vm1208, %v1723, %v1725
  %v1727 = vrot.slane %v1705, 1
  %v1728 = vsel %vm1208, %v1725, %v1727
  %v1729 = vrot.slane %v1706, 1
  %v1730 = vsel %vm1208, %v1727, %v1729
  %v1731 = vrot.slane %v1707, 1
  %v1732 = vsel %vm1208, %v1729, %v1731
  %v1733 = vrot.slane %v1708, 1
  %v1734 = vsel %vm1208, %v1731, %v1733
  %v1735 = vrot.slane %v1709, 1
  %v1736 = vsel %vm1208, %v1733, %v1735
  %v1737 = vrot.slane %v1710, 1
  %v1738 = vsel %vm1208, %v1735, %v1737
  %v1739 = vrot.slane %v1711, 1
  %v1740 = vsel %vm1208, %v1737, %v1739
  %v1741 = vrot.slane %v1712, 1
  %v1742 = vsel %vm1208, %v1739, %v1741
  %v1743 = vrot.slane %v1713, 1
  %v1744 = vsel %vm1208, %v1741, %v1743
  %v1745 = vrot.slane %v1714, 1
  %v1746 = vsel %vm1208, %v1743, %v1745
  %v1747 = vrot.slane %v1715, 1
  %v1748 = vsel %vm1208, %v1745, %v1747
  %v1749 = vrot.slane %v1716, 1
  %v1750 = vsel %vm1208, %v1747, %v1749
  %v1751 = vrot.slane %v1717, 1
  %v1752 = vsel %vm1208, %v1749, %v1751
  %v1753 = vrot.slane %v1718, 1
  %v1754 = vsel %vm1208, %v1751, %v1753
  %v1755 = vrot.slane %v1719, 1
  %v1756 = vsel %vm1208, %v1753, %v1755
  %v1758 = vsel %vm181, %v1722, 0
  %v1761 = vsel %vm181, %v1724, 0
  %v1764 = vsel %vm181, %v1726, 0
  %v1767 = vsel %vm181, %v1728, 0
  %v1770 = vsel %vm181, %v1730, 0
  %v1773 = vsel %vm181, %v1732, 0
  %v1776 = vsel %vm181, %v1734, 0
  %v1779 = vsel %vm181, %v1736, 0
  %v1782 = vsel %vm181, %v1738, 0
  %v1785 = vsel %vm181, %v1740, 0
  %v1788 = vsel %vm181, %v1742, 0
  %v1791 = vsel %vm181, %v1744, 0
  %v1794 = vsel %vm181, %v1746, 0
  %v1797 = vsel %vm181, %v1748, 0
  %v1800 = vsel %vm181, %v1750, 0
  %v1803 = vsel %vm181, %v1752, 0
  %v1806 = vsel %vm181, %v1754, 0
  %v1809 = vsel %vm181, %v1756, 0
  %v1812 = vsel %vm236, %v1626, 0
  %1814 = vmatprep.subr.bf16.mxu0 0
  %1815 = vmatpush1.bf16.msra.mxu0 %v1812
  %1816 = vmatprep.subr.bf16.mxu0 0
  %1817 = vmatpush1.bf16.msra.mxu0 0
  %1818 = vmatprep.subr.bf16.mxu0 0
  %1819 = vmatpush1.bf16.msra.mxu0 0
  %1820 = vmatprep.subr.bf16.mxu0 0
  %1821 = vmatpush1.bf16.msra.mxu0 0
  %1822 = vmatprep.subr.bf16.mxu0 0
  %1823 = vmatpush1.bf16.msra.mxu0 0
  %1824 = vmatprep.subr.bf16.mxu0 0
  %1825 = vmatpush1.bf16.msra.mxu0 0
  %1826 = vmatprep.subr.bf16.mxu0 0
  %1827 = vmatpush1.bf16.msra.mxu0 0
  %1828 = vmatprep.subr.bf16.mxu0 0
  %1829 = vmatpush1.bf16.msra.mxu0 0
  %1830 = vmatprep.subr.bf16.mxu0 0
  %1831 = vmatpush1.bf16.msra.mxu0 0
  %1832 = vmatprep.subr.bf16.mxu0 0
  %1833 = vmatpush1.bf16.msra.mxu0 0
  %1834 = vmatprep.subr.bf16.mxu0 0
  %1835 = vmatpush1.bf16.msra.mxu0 0
  %1836 = vmatprep.subr.bf16.mxu0 0
  %1837 = vmatpush1.bf16.msra.mxu0 0
  %1838 = vmatprep.subr.bf16.mxu0 0
  %1839 = vmatpush1.bf16.msra.mxu0 0
  %1840 = vmatprep.subr.bf16.mxu0 0
  %1841 = vmatpush1.bf16.msra.mxu0 0
  %1842 = vmatprep.subr.bf16.mxu0 0
  %1843 = vmatpush1.bf16.msra.mxu0 0
  %1844 = vmatprep.subr.bf16.mxu0 0
  %1845 = vmatpush1.bf16.msra.mxu0 0
  %1846 = vmatprep.mubr.bf16.mxu0 0
  %1847 = vmatmul.mubr.bf16.gmra.mrb[0].mxu0 %v1758
  %v1848 = vpop.f32.mrb[0].mxu0
  %v1849 = vadd.f32 0.0, %v1848
  %v1850 = vpop.f32.mrb[0].mxu0
  %v1851 = vpop.f32.mrb[0].mxu0
  %v1852 = vadd.f32 0.0, %v1851
  %v1853 = vpop.f32.mrb[0].mxu0
  %1854 = vmatprep.mubr.bf16.mxu0 0
  %1855 = vmatmul.mubr.bf16.gmra.mrb[0].mxu0 %v1761
  %v1856 = vpop.f32.mrb[0].mxu0
  %v1857 = vadd.f32 0.0, %v1856
  %v1858 = vpop.f32.mrb[0].mxu0
  %v1859 = vpop.f32.mrb[0].mxu0
  %v1860 = vadd.f32 0.0, %v1859
  %v1861 = vpop.f32.mrb[0].mxu0
  %1862 = vmatprep.mubr.bf16.mxu0 0
  %1863 = vmatmul.mubr.bf16.gmra.mrb[0].mxu0 %v1764
  %v1864 = vpop.f32.mrb[0].mxu0
  %v1865 = vadd.f32 0.0, %v1864
  %v1866 = vpop.f32.mrb[0].mxu0
  %v1867 = vpop.f32.mrb[0].mxu0
  %v1868 = vadd.f32 0.0, %v1867
  %v1869 = vpop.f32.mrb[0].mxu0
  %1870 = vmatprep.mubr.bf16.mxu0 0
  %1871 = vmatmul.mubr.bf16.gmra.mrb[0].mxu0 %v1767
  %v1872 = vpop.f32.mrb[0].mxu0
  %v1873 = vadd.f32 0.0, %v1872
  %v1874 = vpop.f32.mrb[0].mxu0
  %v1875 = vpop.f32.mrb[0].mxu0
  %v1876 = vadd.f32 0.0, %v1875
  %v1877 = vpop.f32.mrb[0].mxu0
  %1878 = vmatprep.mubr.bf16.mxu0 0
  %1879 = vmatmul.mubr.bf16.gmra.mrb[0].mxu0 %v1770
  %v1880 = vpop.f32.mrb[0].mxu0
  %v1881 = vadd.f32 0.0, %v1880
  %v1882 = vpop.f32.mrb[0].mxu0
  %v1883 = vpop.f32.mrb[0].mxu0
  %v1884 = vadd.f32 0.0, %v1883
  %v1885 = vpop.f32.mrb[0].mxu0
  %1886 = vmatprep.mubr.bf16.mxu0 0
  %1887 = vmatmul.mubr.bf16.gmra.mrb[0].mxu0 %v1773
  %v1888 = vpop.f32.mrb[0].mxu0
  %v1889 = vadd.f32 0.0, %v1888
  %v1890 = vpop.f32.mrb[0].mxu0
  %v1891 = vpop.f32.mrb[0].mxu0
  %v1892 = vadd.f32 0.0, %v1891
  %v1893 = vpop.f32.mrb[0].mxu0
  %1894 = vmatprep.mubr.bf16.mxu0 0
  %1895 = vmatmul.mubr.bf16.gmra.mrb[0].mxu0 %v1776
  %v1896 = vpop.f32.mrb[0].mxu0
  %v1897 = vadd.f32 0.0, %v1896
  %v1898 = vpop.f32.mrb[0].mxu0
  %v1899 = vpop.f32.mrb[0].mxu0
  %v1900 = vadd.f32 0.0, %v1899
  %v1901 = vpop.f32.mrb[0].mxu0
  %1902 = vmatprep.mubr.bf16.mxu0 0
  %1903 = vmatmul.mubr.bf16.gmra.mrb[0].mxu0 %v1779
  %v1904 = vpop.f32.mrb[0].mxu0
  %v1905 = vadd.f32 0.0, %v1904
  %v1906 = vpop.f32.mrb[0].mxu0
  %v1907 = vpop.f32.mrb[0].mxu0
  %v1908 = vadd.f32 0.0, %v1907
  %v1909 = vpop.f32.mrb[0].mxu0
  %1910 = vmatprep.mubr.bf16.mxu0 0
  %1911 = vmatmul.mubr.bf16.gmra.mrb[0].mxu0 %v1782
  %v1912 = vpop.f32.mrb[0].mxu0
  %v1913 = vadd.f32 0.0, %v1912
  %v1914 = vpop.f32.mrb[0].mxu0
  %v1915 = vpop.f32.mrb[0].mxu0
  %v1916 = vadd.f32 0.0, %v1915
  %v1917 = vpop.f32.mrb[0].mxu0
  %1918 = vmatprep.mubr.bf16.mxu0 0
  %1919 = vmatmul.mubr.bf16.gmra.mrb[0].mxu0 %v1785
  %v1920 = vpop.f32.mrb[0].mxu0
  %v1921 = vadd.f32 0.0, %v1920
  %v1922 = vpop.f32.mrb[0].mxu0
  %v1923 = vpop.f32.mrb[0].mxu0
  %v1924 = vadd.f32 0.0, %v1923
  %v1925 = vpop.f32.mrb[0].mxu0
  %1926 = vmatprep.mubr.bf16.mxu0 0
  %1927 = vmatmul.mubr.bf16.gmra.mrb[0].mxu0 %v1788
  %v1928 = vpop.f32.mrb[0].mxu0
  %v1929 = vadd.f32 0.0, %v1928
  %v1930 = vpop.f32.mrb[0].mxu0
  %v1931 = vpop.f32.mrb[0].mxu0
  %v1932 = vadd.f32 0.0, %v1931
  %v1933 = vpop.f32.mrb[0].mxu0
  %1934 = vmatprep.mubr.bf16.mxu0 0
  %1935 = vmatmul.mubr.bf16.gmra.mrb[0].mxu0 %v1791
  %v1936 = vpop.f32.mrb[0].mxu0
  %v1937 = vadd.f32 0.0, %v1936
  %v1938 = vpop.f32.mrb[0].mxu0
  %v1939 = vpop.f32.mrb[0].mxu0
  %v1940 = vadd.f32 0.0, %v1939
  %v1941 = vpop.f32.mrb[0].mxu0
  %1942 = vmatprep.mubr.bf16.mxu0 0
  %1943 = vmatmul.mubr.bf16.gmra.mrb[0].mxu0 %v1794
  %v1944 = vpop.f32.mrb[0].mxu0
  %v1945 = vadd.f32 0.0, %v1944
  %v1946 = vpop.f32.mrb[0].mxu0
  %v1947 = vpop.f32.mrb[0].mxu0
  %v1948 = vadd.f32 0.0, %v1947
  %v1949 = vpop.f32.mrb[0].mxu0
  %1950 = vmatprep.mubr.bf16.mxu0 0
  %1951 = vmatmul.mubr.bf16.gmra.mrb[0].mxu0 %v1797
  %v1952 = vpop.f32.mrb[0].mxu0
  %v1953 = vadd.f32 0.0, %v1952
  %v1954 = vpop.f32.mrb[0].mxu0
  %v1955 = vpop.f32.mrb[0].mxu0
  %v1956 = vadd.f32 0.0, %v1955
  %v1957 = vpop.f32.mrb[0].mxu0
  %1958 = vmatprep.mubr.bf16.mxu0 0
  %1959 = vmatmul.mubr.bf16.gmra.mrb[0].mxu0 %v1800
  %v1960 = vpop.f32.mrb[0].mxu0
  %v1961 = vadd.f32 0.0, %v1960
  %v1962 = vpop.f32.mrb[0].mxu0
  %v1963 = vpop.f32.mrb[0].mxu0
  %v1964 = vadd.f32 0.0, %v1963
  %v1965 = vpop.f32.mrb[0].mxu0
  %1966 = vmatprep.mubr.bf16.mxu0 0
  %1967 = vmatmul.mubr.bf16.gmra.mrb[0].mxu0 %v1803
  %v1968 = vpop.f32.mrb[0].mxu0
  %v1969 = vadd.f32 0.0, %v1968
  %v1970 = vpop.f32.mrb[0].mxu0
  %v1971 = vpop.f32.mrb[0].mxu0
  %v1972 = vadd.f32 0.0, %v1971
  %v1973 = vpop.f32.mrb[0].mxu0
  %1974 = vmatprep.mubr.bf16.mxu0 0
  %1975 = vmatmul.mubr.bf16.gmra.mrb[0].mxu0 %v1806
  %v1976 = vpop.f32.mrb[0].mxu0
  %v1977 = vadd.f32 0.0, %v1976
  %v1978 = vpop.f32.mrb[0].mxu0
  %v1979 = vpop.f32.mrb[0].mxu0
  %v1980 = vadd.f32 0.0, %v1979
  %v1981 = vpop.f32.mrb[0].mxu0
  %1982 = vmatprep.mubr.bf16.mxu0 0
  %1983 = vmatmul.mubr.bf16.gmra.mrb[0].mxu0 %v1809
  %v1984 = vpop.f32.mrb[0].mxu0
  %v1985 = vadd.f32 0.0, %v1984
  %v1986 = vpop.f32.mrb[0].mxu0
  %v1987 = vpop.f32.mrb[0].mxu0
  %v1988 = vadd.f32 0.0, %v1987
  %v1989 = vpop.f32.mrb[0].mxu0
  %1990 = vdwg.mxu0
  %v1991 = vld [vmem:[#allocation2] sm:$0xff]
  %v1992 = vld [vmem:[#allocation2 + $0x8] sm:$0xff]
  %v1993 = vld [vmem:[#allocation2 + $0x10] sm:$0xff]
  %v1994 = vld [vmem:[#allocation2 + $0x18] sm:$0xff]
  %v1995 = vld [vmem:[#allocation2 + $0x20] sm:$0xff]
  %v1996 = vld [vmem:[#allocation2 + $0x28] sm:$0xff]
  %v1997 = vld [vmem:[#allocation2 + $0x30] sm:$0xff]
  %v1998 = vld [vmem:[#allocation2 + $0x38] sm:$0xff]
  %v1999 = vld [vmem:[#allocation2 + $0x40] sm:$0xff]
  %v2000 = vld [vmem:[#allocation2 + $0x48] sm:$0xff]
  %v2001 = vld [vmem:[#allocation2 + $0x50] sm:$0xff]
  %v2002 = vld [vmem:[#allocation2 + $0x58] sm:$0xff]
  %v2003 = vld [vmem:[#allocation2 + $0x60] sm:$0xff]
  %v2004 = vld [vmem:[#allocation2 + $0x68] sm:$0xff]
  %v2005 = vld [vmem:[#allocation2 + $0x70] sm:$0xff]
  %v2006 = vld [vmem:[#allocation2 + $0x78] sm:$0xff]
  %v2007 = vld [vmem:[#allocation2 + $0x80] sm:$0xff]
  %v2008 = vld [vmem:[#allocation2 + $0x88] sm:$0xff]
  %v2009 = vld [vmem:[#allocation2 + $0x90] sm:$0xff]
  %v2010 = vld [vmem:[#allocation2 + $0x98] sm:$0xff]
  %v2011 = vld [vmem:[#allocation2 + $0xa0] sm:$0xff]
  %v2012 = vld [vmem:[#allocation2 + $0xa8] sm:$0xff]
  %v2013 = vld [vmem:[#allocation2 + $0xb0] sm:$0xff]
  %v2014 = vld [vmem:[#allocation2 + $0xb8] sm:$0xff]
  %v2015 = vld [vmem:[#allocation2 + $0xc0] sm:$0xff]
  %v2016 = vld [vmem:[#allocation2 + $0xc8] sm:$0xff]
  %v2017 = vld [vmem:[#allocation2 + $0xd0] sm:$0xff]
  %v2018 = vld [vmem:[#allocation2 + $0xd8] sm:$0xff]
  %v2019 = vld [vmem:[#allocation2 + $0xe0] sm:$0xff]
  %v2020 = vld [vmem:[#allocation2 + $0xe8] sm:$0xff]
  %v2021 = vld [vmem:[#allocation2 + $0xf0] sm:$0xff]
  %v2022 = vld [vmem:[#allocation2 + $0xf8] sm:$0xff]
  %v2023 = vld [vmem:[#allocation2 + $0x100] sm:$0xff]
  %v2024 = vld [vmem:[#allocation2 + $0x108] sm:$0xff]
  %v2025 = vld [vmem:[#allocation2 + $0x110] sm:$0xff]
  %v2026 = vld [vmem:[#allocation2 + $0x118] sm:$0xff]
  %v2027 = vadd.f32 %v1991, %v1849
  %v2028 = vadd.f32 %v1992, %v1852
  %v2029 = vadd.f32 %v1993, %v1857
  %v2030 = vadd.f32 %v1994, %v1860
  %v2031 = vadd.f32 %v1995, %v1865
  %v2032 = vadd.f32 %v1996, %v1868
  %v2033 = vadd.f32 %v1997, %v1873
  %v2034 = vadd.f32 %v1998, %v1876
  %v2035 = vadd.f32 %v1999, %v1881
  %v2036 = vadd.f32 %v2000, %v1884
  %v2037 = vadd.f32 %v2001, %v1889
  %v2038 = vadd.f32 %v2002, %v1892
  %v2039 = vadd.f32 %v2003, %v1897
  %v2040 = vadd.f32 %v2004, %v1900
  %v2041 = vadd.f32 %v2005, %v1905
  %v2042 = vadd.f32 %v2006, %v1908
  %v2043 = vadd.f32 %v2007, %v1913
  %v2044 = vadd.f32 %v2008, %v1916
  %v2045 = vadd.f32 %v2009, %v1921
  %v2046 = vadd.f32 %v2010, %v1924
  %v2047 = vadd.f32 %v2011, %v1929
  %v2048 = vadd.f32 %v2012, %v1932
  %v2049 = vadd.f32 %v2013, %v1937
  %v2050 = vadd.f32 %v2014, %v1940
  %v2051 = vadd.f32 %v2015, %v1945
  %v2052 = vadd.f32 %v2016, %v1948
  %v2053 = vadd.f32 %v2017, %v1953
  %v2054 = vadd.f32 %v2018, %v1956
  %v2055 = vadd.f32 %v2019, %v1961
  %v2056 = vadd.f32 %v2020, %v1964
  %v2057 = vadd.f32 %v2021, %v1969
  %v2058 = vadd.f32 %v2022, %v1972
  %v2059 = vadd.f32 %v2023, %v1977
  %v2060 = vadd.f32 %v2024, %v1980
  %v2061 = vadd.f32 %v2025, %v1985
  %v2062 = vadd.f32 %v2026, %v1988
  %2063 = vst [vmem:[#allocation2] sm:$0xff] %v2027
  %2064 = vst [vmem:[#allocation2 + $0x8] sm:$0xff] %v2028
  %2065 = vst [vmem:[#allocation2 + $0x10] sm:$0xff] %v2029
  %2066 = vst [vmem:[#allocation2 + $0x18] sm:$0xff] %v2030
  %2067 = vst [vmem:[#allocation2 + $0x20] sm:$0xff] %v2031
  %2068 = vst [vmem:[#allocation2 + $0x28] sm:$0xff] %v2032
  %2069 = vst [vmem:[#allocation2 + $0x30] sm:$0xff] %v2033
  %2070 = vst [vmem:[#allocation2 + $0x38] sm:$0xff] %v2034
  %2071 = vst [vmem:[#allocation2 + $0x40] sm:$0xff] %v2035
  %2072 = vst [vmem:[#allocation2 + $0x48] sm:$0xff] %v2036
  %2073 = vst [vmem:[#allocation2 + $0x50] sm:$0xff] %v2037
  %2074 = vst [vmem:[#allocation2 + $0x58] sm:$0xff] %v2038
  %2075 = vst [vmem:[#allocation2 + $0x60] sm:$0xff] %v2039
  %2076 = vst [vmem:[#allocation2 + $0x68] sm:$0xff] %v2040
  %2077 = vst [vmem:[#allocation2 + $0x70] sm:$0xff] %v2041
  %2078 = vst [vmem:[#allocation2 + $0x78] sm:$0xff] %v2042
  %2079 = vst [vmem:[#allocation2 + $0x80] sm:$0xff] %v2043
  %2080 = vst [vmem:[#allocation2 + $0x88] sm:$0xff] %v2044
  %2081 = vst [vmem:[#allocation2 + $0x90] sm:$0xff] %v2045
  %2082 = vst [vmem:[#allocation2 + $0x98] sm:$0xff] %v2046
  %2083 = vst [vmem:[#allocation2 + $0xa0] sm:$0xff] %v2047
  %2084 = vst [vmem:[#allocation2 + $0xa8] sm:$0xff] %v2048
  %2085 = vst [vmem:[#allocation2 + $0xb0] sm:$0xff] %v2049
  %2086 = vst [vmem:[#allocation2 + $0xb8] sm:$0xff] %v2050
  %2087 = vst [vmem:[#allocation2 + $0xc0] sm:$0xff] %v2051
  %2088 = vst [vmem:[#allocation2 + $0xc8] sm:$0xff] %v2052
  %2089 = vst [vmem:[#allocation2 + $0xd0] sm:$0xff] %v2053
  %2090 = vst [vmem:[#allocation2 + $0xd8] sm:$0xff] %v2054
  %2091 = vst [vmem:[#allocation2 + $0xe0] sm:$0xff] %v2055
  %2092 = vst [vmem:[#allocation2 + $0xe8] sm:$0xff] %v2056
  %2093 = vst [vmem:[#allocation2 + $0xf0] sm:$0xff] %v2057
  %2094 = vst [vmem:[#allocation2 + $0xf8] sm:$0xff] %v2058
  %2095 = vst [vmem:[#allocation2 + $0x100] sm:$0xff] %v2059
  %2096 = vst [vmem:[#allocation2 + $0x108] sm:$0xff] %v2060
  %2097 = vst [vmem:[#allocation2 + $0x110] sm:$0xff] %v2061
  %2098 = vst [vmem:[#allocation2 + $0x118] sm:$0xff] %v2062
  %v2099 = vld [vmem:[%s0 + $0x8] sm:$0xe]
  %v2100 = vld [vmem:[%s0 + $0xc] sm:$0xf]
  %v2101 = vld [vmem:[%s0 + $0x10] sm:$0xf]
  %v2102 = vld [vmem:[%s0 + $0x14] sm:$0xf]
  %v2103 = vld [vmem:[%s0 + $0x18] sm:$0xf]
  %v2104 = vld [vmem:[%s0 + $0x1c] sm:$0xf]
  %v2105 = vld [vmem:[%s0 + $0x20] sm:$0xf]
  %v2106 = vld [vmem:[%s0 + $0x24] sm:$0xf]
  %v2107 = vld [vmem:[%s0 + $0x28] sm:$0xf]
  %v2108 = vld [vmem:[%s0 + $0x2c] sm:$0xf]
  %v2109 = vld [vmem:[%s0 + $0x30] sm:$0xf]
  %v2110 = vld [vmem:[%s0 + $0x34] sm:$0xf]
  %v2111 = vld [vmem:[%s0 + $0x38] sm:$0xf]
  %v2112 = vld [vmem:[%s0 + $0x3c] sm:$0xf]
  %v2113 = vld [vmem:[%s0 + $0x40] sm:$0xf]
  %v2114 = vld [vmem:[%s0 + $0x44] sm:$0xf]
  %v2115 = vld [vmem:[%s0 + $0x48] sm:$0xf]
  %v2116 = vld [vmem:[%s0 + $0x4c] sm:$0xf]
  %v2117 = vld [vmem:[%s0 + $0x50] sm:$0xf]
  %v2118 = vld [vmem:[%s0 + $0x54] sm:$0xf]
  %v2119 = vld [vmem:[%s0 + $0x58] sm:$0xf]
  %v2120 = vld [vmem:[%s0 + $0x5c] sm:$0xf]
  %v2121 = vld [vmem:[%s0 + $0x60] sm:$0xf]
  %v2122 = vld [vmem:[%s0 + $0x64] sm:$0xf]
  %v2123 = vld [vmem:[%s0 + $0x68] sm:$0xf]
  %v2124 = vld [vmem:[%s0 + $0x6c] sm:$0xf]
  %v2125 = vld [vmem:[%s0 + $0x70] sm:$0xf]
  %v2126 = vld [vmem:[%s0 + $0x74] sm:$0xf]
  %v2127 = vld [vmem:[%s0 + $0x78] sm:$0xf]
  %v2128 = vld [vmem:[%s0 + $0x7c] sm:$0xf]
  %v2129 = vld [vmem:[%s0 + $0x80] sm:$0xf]
  %v2130 = vld [vmem:[%s0 + $0x84] sm:$0xf]
  %v2131 = vld [vmem:[%s0 + $0x88] sm:$0xf]
  %v2132 = vld [vmem:[%s0 + $0x8c] sm:$0xf]
  %v2133 = vld [vmem:[%s0 + $0x90] sm:$0xf]
  %v2134 = vld [vmem:[%s0 + $0x94] sm:$0xf]
  %v2135 = vld [vmem:[%s0 + $0x98] sm:$0x3]
  %s2136 = scalar_lea.vmem %s1, 16
  %v2137 = vld [vmem:[%s2136] sm:$0xf]
  %v2175 = vunpack.c.l.b16 %v2099
  %v2176 = vunpack.c.l.b16 %v2100
  %v2177 = vunpack.c.l.b16 %v2101
  %v2178 = vunpack.c.l.b16 %v2102
  %v2179 = vunpack.c.l.b16 %v2103
  %v2180 = vunpack.c.l.b16 %v2104
  %v2181 = vunpack.c.l.b16 %v2105
  %v2182 = vunpack.c.l.b16 %v2106
  %v2183 = vunpack.c.l.b16 %v2107
  %v2184 = vunpack.c.l.b16 %v2108
  %v2185 = vunpack.c.l.b16 %v2109
  %v2186 = vunpack.c.l.b16 %v2110
  %v2187 = vunpack.c.l.b16 %v2111
  %v2188 = vunpack.c.l.b16 %v2112
  %v2189 = vunpack.c.l.b16 %v2113
  %v2190 = vunpack.c.l.b16 %v2114
  %v2191 = vunpack.c.l.b16 %v2115
  %v2192 = vunpack.c.l.b16 %v2116
  %v2193 = vunpack.c.l.b16 %v2117
  %v2194 = vunpack.c.l.b16 %v2118
  %v2195 = vunpack.c.l.b16 %v2119
  %v2196 = vunpack.c.l.b16 %v2120
  %v2197 = vunpack.c.l.b16 %v2121
  %v2198 = vunpack.c.l.b16 %v2122
  %v2199 = vunpack.c.l.b16 %v2123
  %v2200 = vunpack.c.l.b16 %v2124
  %v2201 = vunpack.c.l.b16 %v2125
  %v2202 = vunpack.c.l.b16 %v2126
  %v2203 = vunpack.c.l.b16 %v2127
  %v2204 = vunpack.c.l.b16 %v2128
  %v2205 = vunpack.c.l.b16 %v2129
  %v2206 = vunpack.c.l.b16 %v2130
  %v2207 = vunpack.c.l.b16 %v2131
  %v2208 = vunpack.c.l.b16 %v2132
  %v2209 = vunpack.c.l.b16 %v2133
  %v2210 = vunpack.c.l.b16 %v2134
  %v2211 = vunpack.c.l.b16 %v2135
  %v2212 = vpack.c.b16 %v2176, %v2175
  %v2213 = vpack.c.b16 %v2178, %v2177
  %v2214 = vpack.c.b16 %v2180, %v2179
  %v2215 = vpack.c.b16 %v2182, %v2181
  %v2216 = vpack.c.b16 %v2184, %v2183
  %v2217 = vpack.c.b16 %v2186, %v2185
  %v2218 = vpack.c.b16 %v2188, %v2187
  %v2219 = vpack.c.b16 %v2190, %v2189
  %v2220 = vpack.c.b16 %v2192, %v2191
  %v2221 = vpack.c.b16 %v2194, %v2193
  %v2222 = vpack.c.b16 %v2196, %v2195
  %v2223 = vpack.c.b16 %v2198, %v2197
  %v2224 = vpack.c.b16 %v2200, %v2199
  %v2225 = vpack.c.b16 %v2202, %v2201
  %v2226 = vpack.c.b16 %v2204, %v2203
  %v2227 = vpack.c.b16 %v2206, %v2205
  %v2228 = vpack.c.b16 %v2208, %v2207
  %v2229 = vpack.c.b16 %v2210, %v2209
  %v2230 = vpack.c.b16 %v2211, %v2211
  %vm2231 = vsmask.f32 6400
  %v2233 = vshrl.u32 %v2212, 16
  %v2235 = vrot.slane %v2233, 1
  %v2236 = vshll.u32 %v2212, 16
  %v2238 = vrot.slane %v2236, 2
  %v2239 = vor.u32 %v2235, %v2238
  %v2241 = vshrl.u32 %v2213, 16
  %v2243 = vrot.slane %v2241, 1
  %v2244 = vshll.u32 %v2213, 16
  %v2246 = vrot.slane %v2244, 2
  %v2247 = vor.u32 %v2243, %v2246
  %v2248 = vsel %vm2231, %v2239, %v2247
  %v2250 = vshrl.u32 %v2214, 16
  %v2252 = vrot.slane %v2250, 1
  %v2253 = vshll.u32 %v2214, 16
  %v2255 = vrot.slane %v2253, 2
  %v2256 = vor.u32 %v2252, %v2255
  %v2257 = vsel %vm2231, %v2247, %v2256
  %v2259 = vshrl.u32 %v2215, 16
  %v2261 = vrot.slane %v2259, 1
  %v2262 = vshll.u32 %v2215, 16
  %v2264 = vrot.slane %v2262, 2
  %v2265 = vor.u32 %v2261, %v2264
  %v2266 = vsel %vm2231, %v2256, %v2265
  %v2268 = vshrl.u32 %v2216, 16
  %v2270 = vrot.slane %v2268, 1
  %v2271 = vshll.u32 %v2216, 16
  %v2273 = vrot.slane %v2271, 2
  %v2274 = vor.u32 %v2270, %v2273
  %v2275 = vsel %vm2231, %v2265, %v2274
  %v2277 = vshrl.u32 %v2217, 16
  %v2279 = vrot.slane %v2277, 1
  %v2280 = vshll.u32 %v2217, 16
  %v2282 = vrot.slane %v2280, 2
  %v2283 = vor.u32 %v2279, %v2282
  %v2284 = vsel %vm2231, %v2274, %v2283
  %v2286 = vshrl.u32 %v2218, 16
  %v2288 = vrot.slane %v2286, 1
  %v2289 = vshll.u32 %v2218, 16
  %v2291 = vrot.slane %v2289, 2
  %v2292 = vor.u32 %v2288, %v2291
  %v2293 = vsel %vm2231, %v2283, %v2292
  %v2295 = vshrl.u32 %v2219, 16
  %v2297 = vrot.slane %v2295, 1
  %v2298 = vshll.u32 %v2219, 16
  %v2300 = vrot.slane %v2298, 2
  %v2301 = vor.u32 %v2297, %v2300
  %v2302 = vsel %vm2231, %v2292, %v2301
  %v2304 = vshrl.u32 %v2220, 16
  %v2306 = vrot.slane %v2304, 1
  %v2307 = vshll.u32 %v2220, 16
  %v2309 = vrot.slane %v2307, 2
  %v2310 = vor.u32 %v2306, %v2309
  %v2311 = vsel %vm2231, %v2301, %v2310
  %v2313 = vshrl.u32 %v2221, 16
  %v2315 = vrot.slane %v2313, 1
  %v2316 = vshll.u32 %v2221, 16
  %v2318 = vrot.slane %v2316, 2
  %v2319 = vor.u32 %v2315, %v2318
  %v2320 = vsel %vm2231, %v2310, %v2319
  %v2322 = vshrl.u32 %v2222, 16
  %v2324 = vrot.slane %v2322, 1
  %v2325 = vshll.u32 %v2222, 16
  %v2327 = vrot.slane %v2325, 2
  %v2328 = vor.u32 %v2324, %v2327
  %v2329 = vsel %vm2231, %v2319, %v2328
  %v2331 = vshrl.u32 %v2223, 16
  %v2333 = vrot.slane %v2331, 1
  %v2334 = vshll.u32 %v2223, 16
  %v2336 = vrot.slane %v2334, 2
  %v2337 = vor.u32 %v2333, %v2336
  %v2338 = vsel %vm2231, %v2328, %v2337
  %v2340 = vshrl.u32 %v2224, 16
  %v2342 = vrot.slane %v2340, 1
  %v2343 = vshll.u32 %v2224, 16
  %v2345 = vrot.slane %v2343, 2
  %v2346 = vor.u32 %v2342, %v2345
  %v2347 = vsel %vm2231, %v2337, %v2346
  %v2349 = vshrl.u32 %v2225, 16
  %v2351 = vrot.slane %v2349, 1
  %v2352 = vshll.u32 %v2225, 16
  %v2354 = vrot.slane %v2352, 2
  %v2355 = vor.u32 %v2351, %v2354
  %v2356 = vsel %vm2231, %v2346, %v2355
  %v2358 = vshrl.u32 %v2226, 16
  %v2360 = vrot.slane %v2358, 1
  %v2361 = vshll.u32 %v2226, 16
  %v2363 = vrot.slane %v2361, 2
  %v2364 = vor.u32 %v2360, %v2363
  %v2365 = vsel %vm2231, %v2355, %v2364
  %v2367 = vshrl.u32 %v2227, 16
  %v2369 = vrot.slane %v2367, 1
  %v2370 = vshll.u32 %v2227, 16
  %v2372 = vrot.slane %v2370, 2
  %v2373 = vor.u32 %v2369, %v2372
  %v2374 = vsel %vm2231, %v2364, %v2373
  %v2376 = vshrl.u32 %v2228, 16
  %v2378 = vrot.slane %v2376, 1
  %v2379 = vshll.u32 %v2228, 16
  %v2381 = vrot.slane %v2379, 2
  %v2382 = vor.u32 %v2378, %v2381
  %v2383 = vsel %vm2231, %v2373, %v2382
  %v2385 = vshrl.u32 %v2229, 16
  %v2387 = vrot.slane %v2385, 1
  %v2388 = vshll.u32 %v2229, 16
  %v2390 = vrot.slane %v2388, 2
  %v2391 = vor.u32 %v2387, %v2390
  %v2392 = vsel %vm2231, %v2382, %v2391
  %v2394 = vshrl.u32 %v2230, 16
  %v2396 = vrot.slane %v2394, 1
  %v2397 = vshll.u32 %v2230, 16
  %v2399 = vrot.slane %v2397, 2
  %v2400 = vor.u32 %v2396, %v2399
  %v2401 = vsel %vm2231, %v2391, %v2400
  %v2403 = vsel %vm181, %v2248, 0
  %v2406 = vsel %vm181, %v2257, 0
  %v2409 = vsel %vm181, %v2266, 0
  %v2412 = vsel %vm181, %v2275, 0
  %v2415 = vsel %vm181, %v2284, 0
  %v2418 = vsel %vm181, %v2293, 0
  %v2421 = vsel %vm181, %v2302, 0
  %v2424 = vsel %vm181, %v2311, 0
  %v2427 = vsel %vm181, %v2320, 0
  %v2430 = vsel %vm181, %v2329, 0
  %v2433 = vsel %vm181, %v2338, 0
  %v2436 = vsel %vm181, %v2347, 0
  %v2439 = vsel %vm181, %v2356, 0
  %v2442 = vsel %vm181, %v2365, 0
  %v2445 = vsel %vm181, %v2374, 0
  %v2448 = vsel %vm181, %v2383, 0
  %v2451 = vsel %vm181, %v2392, 0
  %v2454 = vsel %vm181, %v2401, 0
  %v2457 = vsel %vm236, %v2137, 0
  %2459 = vmatprep.subr.bf16.mxu0 0
  %2460 = vmatpush1.bf16.msra.mxu0 %v2457
  %2461 = vmatprep.subr.bf16.mxu0 0
  %2462 = vmatpush1.bf16.msra.mxu0 0
  %2463 = vmatprep.subr.bf16.mxu0 0
  %2464 = vmatpush1.bf16.msra.mxu0 0
  %2465 = vmatprep.subr.bf16.mxu0 0
  %2466 = vmatpush1.bf16.msra.mxu0 0
  %2467 = vmatprep.subr.bf16.mxu0 0
  %2468 = vmatpush1.bf16.msra.mxu0 0
  %2469 = vmatprep.subr.bf16.mxu0 0
  %2470 = vmatpush1.bf16.msra.mxu0 0
  %2471 = vmatprep.subr.bf16.mxu0 0
  %2472 = vmatpush1.bf16.msra.mxu0 0
  %2473 = vmatprep.subr.bf16.mxu0 0
  %2474 = vmatpush1.bf16.msra.mxu0 0
  %2475 = vmatprep.subr.bf16.mxu0 0
  %2476 = vmatpush1.bf16.msra.mxu0 0
  %2477 = vmatprep.subr.bf16.mxu0 0
  %2478 = vmatpush1.bf16.msra.mxu0 0
  %2479 = vmatprep.subr.bf16.mxu0 0
  %2480 = vmatpush1.bf16.msra.mxu0 0
  %2481 = vmatprep.subr.bf16.mxu0 0
  %2482 = vmatpush1.bf16.msra.mxu0 0
  %2483 = vmatprep.subr.bf16.mxu0 0
  %2484 = vmatpush1.bf16.msra.mxu0 0
  %2485 = vmatprep.subr.bf16.mxu0 0
  %2486 = vmatpush1.bf16.msra.mxu0 0
  %2487 = vmatprep.subr.bf16.mxu0 0
  %2488 = vmatpush1.bf16.msra.mxu0 0
  %2489 = vmatprep.subr.bf16.mxu0 0
  %2490 = vmatpush1.bf16.msra.mxu0 0
  %2491 = vmatprep.mubr.bf16.mxu0 0
  %2492 = vmatmul.mubr.bf16.gmra.mrb[0].mxu0 %v2403
  %v2493 = vpop.f32.mrb[0].mxu0
  %v2494 = vadd.f32 0.0, %v2493
  %v2495 = vpop.f32.mrb[0].mxu0
  %v2496 = vpop.f32.mrb[0].mxu0
  %v2497 = vadd.f32 0.0, %v2496
  %v2498 = vpop.f32.mrb[0].mxu0
  %2499 = vmatprep.mubr.bf16.mxu0 0
  %2500 = vmatmul.mubr.bf16.gmra.mrb[0].mxu0 %v2406
  %v2501 = vpop.f32.mrb[0].mxu0
  %v2502 = vadd.f32 0.0, %v2501
  %v2503 = vpop.f32.mrb[0].mxu0
  %v2504 = vpop.f32.mrb[0].mxu0
  %v2505 = vadd.f32 0.0, %v2504
  %v2506 = vpop.f32.mrb[0].mxu0
  %2507 = vmatprep.mubr.bf16.mxu0 0
  %2508 = vmatmul.mubr.bf16.gmra.mrb[0].mxu0 %v2409
  %v2509 = vpop.f32.mrb[0].mxu0
  %v2510 = vadd.f32 0.0, %v2509
  %v2511 = vpop.f32.mrb[0].mxu0
  %v2512 = vpop.f32.mrb[0].mxu0
  %v2513 = vadd.f32 0.0, %v2512
  %v2514 = vpop.f32.mrb[0].mxu0
  %2515 = vmatprep.mubr.bf16.mxu0 0
  %2516 = vmatmul.mubr.bf16.gmra.mrb[0].mxu0 %v2412
  %v2517 = vpop.f32.mrb[0].mxu0
  %v2518 = vadd.f32 0.0, %v2517
  %v2519 = vpop.f32.mrb[0].mxu0
  %v2520 = vpop.f32.mrb[0].mxu0
  %v2521 = vadd.f32 0.0, %v2520
  %v2522 = vpop.f32.mrb[0].mxu0
  %2523 = vmatprep.mubr.bf16.mxu0 0
  %2524 = vmatmul.mubr.bf16.gmra.mrb[0].mxu0 %v2415
  %v2525 = vpop.f32.mrb[0].mxu0
  %v2526 = vadd.f32 0.0, %v2525
  %v2527 = vpop.f32.mrb[0].mxu0
  %v2528 = vpop.f32.mrb[0].mxu0
  %v2529 = vadd.f32 0.0, %v2528
  %v2530 = vpop.f32.mrb[0].mxu0
  %2531 = vmatprep.mubr.bf16.mxu0 0
  %2532 = vmatmul.mubr.bf16.gmra.mrb[0].mxu0 %v2418
  %v2533 = vpop.f32.mrb[0].mxu0
  %v2534 = vadd.f32 0.0, %v2533
  %v2535 = vpop.f32.mrb[0].mxu0
  %v2536 = vpop.f32.mrb[0].mxu0
  %v2537 = vadd.f32 0.0, %v2536
  %v2538 = vpop.f32.mrb[0].mxu0
  %2539 = vmatprep.mubr.bf16.mxu0 0
  %2540 = vmatmul.mubr.bf16.gmra.mrb[0].mxu0 %v2421
  %v2541 = vpop.f32.mrb[0].mxu0
  %v2542 = vadd.f32 0.0, %v2541
  %v2543 = vpop.f32.mrb[0].mxu0
  %v2544 = vpop.f32.mrb[0].mxu0
  %v2545 = vadd.f32 0.0, %v2544
  %v2546 = vpop.f32.mrb[0].mxu0
  %2547 = vmatprep.mubr.bf16.mxu0 0
  %2548 = vmatmul.mubr.bf16.gmra.mrb[0].mxu0 %v2424
  %v2549 = vpop.f32.mrb[0].mxu0
  %v2550 = vadd.f32 0.0, %v2549
  %v2551 = vpop.f32.mrb[0].mxu0
  %v2552 = vpop.f32.mrb[0].mxu0
  %v2553 = vadd.f32 0.0, %v2552
  %v2554 = vpop.f32.mrb[0].mxu0
  %2555 = vmatprep.mubr.bf16.mxu0 0
  %2556 = vmatmul.mubr.bf16.gmra.mrb[0].mxu0 %v2427
  %v2557 = vpop.f32.mrb[0].mxu0
  %v2558 = vadd.f32 0.0, %v2557
  %v2559 = vpop.f32.mrb[0].mxu0
  %v2560 = vpop.f32.mrb[0].mxu0
  %v2561 = vadd.f32 0.0, %v2560
  %v2562 = vpop.f32.mrb[0].mxu0
  %2563 = vmatprep.mubr.bf16.mxu0 0
  %2564 = vmatmul.mubr.bf16.gmra.mrb[0].mxu0 %v2430
  %v2565 = vpop.f32.mrb[0].mxu0
  %v2566 = vadd.f32 0.0, %v2565
  %v2567 = vpop.f32.mrb[0].mxu0
  %v2568 = vpop.f32.mrb[0].mxu0
  %v2569 = vadd.f32 0.0, %v2568
  %v2570 = vpop.f32.mrb[0].mxu0
  %2571 = vmatprep.mubr.bf16.mxu0 0
  %2572 = vmatmul.mubr.bf16.gmra.mrb[0].mxu0 %v2433
  %v2573 = vpop.f32.mrb[0].mxu0
  %v2574 = vadd.f32 0.0, %v2573
  %v2575 = vpop.f32.mrb[0].mxu0
  %v2576 = vpop.f32.mrb[0].mxu0
  %v2577 = vadd.f32 0.0, %v2576
  %v2578 = vpop.f32.mrb[0].mxu0
  %2579 = vmatprep.mubr.bf16.mxu0 0
  %2580 = vmatmul.mubr.bf16.gmra.mrb[0].mxu0 %v2436
  %v2581 = vpop.f32.mrb[0].mxu0
  %v2582 = vadd.f32 0.0, %v2581
  %v2583 = vpop.f32.mrb[0].mxu0
  %v2584 = vpop.f32.mrb[0].mxu0
  %v2585 = vadd.f32 0.0, %v2584
  %v2586 = vpop.f32.mrb[0].mxu0
  %2587 = vmatprep.mubr.bf16.mxu0 0
  %2588 = vmatmul.mubr.bf16.gmra.mrb[0].mxu0 %v2439
  %v2589 = vpop.f32.mrb[0].mxu0
  %v2590 = vadd.f32 0.0, %v2589
  %v2591 = vpop.f32.mrb[0].mxu0
  %v2592 = vpop.f32.mrb[0].mxu0
  %v2593 = vadd.f32 0.0, %v2592
  %v2594 = vpop.f32.mrb[0].mxu0
  %2595 = vmatprep.mubr.bf16.mxu0 0
  %2596 = vmatmul.mubr.bf16.gmra.mrb[0].mxu0 %v2442
  %v2597 = vpop.f32.mrb[0].mxu0
  %v2598 = vadd.f32 0.0, %v2597
  %v2599 = vpop.f32.mrb[0].mxu0
  %v2600 = vpop.f32.mrb[0].mxu0
  %v2601 = vadd.f32 0.0, %v2600
  %v2602 = vpop.f32.mrb[0].mxu0
  %2603 = vmatprep.mubr.bf16.mxu0 0
  %2604 = vmatmul.mubr.bf16.gmra.mrb[0].mxu0 %v2445
  %v2605 = vpop.f32.mrb[0].mxu0
  %v2606 = vadd.f32 0.0, %v2605
  %v2607 = vpop.f32.mrb[0].mxu0
  %v2608 = vpop.f32.mrb[0].mxu0
  %v2609 = vadd.f32 0.0, %v2608
  %v2610 = vpop.f32.mrb[0].mxu0
  %2611 = vmatprep.mubr.bf16.mxu0 0
  %2612 = vmatmul.mubr.bf16.gmra.mrb[0].mxu0 %v2448
  %v2613 = vpop.f32.mrb[0].mxu0
  %v2614 = vadd.f32 0.0, %v2613
  %v2615 = vpop.f32.mrb[0].mxu0
  %v2616 = vpop.f32.mrb[0].mxu0
  %v2617 = vadd.f32 0.0, %v2616
  %v2618 = vpop.f32.mrb[0].mxu0
  %2619 = vmatprep.mubr.bf16.mxu0 0
  %2620 = vmatmul.mubr.bf16.gmra.mrb[0].mxu0 %v2451
  %v2621 = vpop.f32.mrb[0].mxu0
  %v2622 = vadd.f32 0.0, %v2621
  %v2623 = vpop.f32.mrb[0].mxu0
  %v2624 = vpop.f32.mrb[0].mxu0
  %v2625 = vadd.f32 0.0, %v2624
  %v2626 = vpop.f32.mrb[0].mxu0
  %2627 = vmatprep.mubr.bf16.mxu0 0
  %2628 = vmatmul.mubr.bf16.gmra.mrb[0].mxu0 %v2454
  %v2629 = vpop.f32.mrb[0].mxu0
  %v2630 = vadd.f32 0.0, %v2629
  %v2631 = vpop.f32.mrb[0].mxu0
  %v2632 = vpop.f32.mrb[0].mxu0
  %v2633 = vadd.f32 0.0, %v2632
  %v2634 = vpop.f32.mrb[0].mxu0
  %2635 = vdwg.mxu0
  %v2636 = vld [vmem:[#allocation2] sm:$0xff]
  %v2637 = vld [vmem:[#allocation2 + $0x8] sm:$0xff]
  %v2638 = vld [vmem:[#allocation2 + $0x10] sm:$0xff]
  %v2639 = vld [vmem:[#allocation2 + $0x18] sm:$0xff]
  %v2640 = vld [vmem:[#allocation2 + $0x20] sm:$0xff]
  %v2641 = vld [vmem:[#allocation2 + $0x28] sm:$0xff]
  %v2642 = vld [vmem:[#allocation2 + $0x30] sm:$0xff]
  %v2643 = vld [vmem:[#allocation2 + $0x38] sm:$0xff]
  %v2644 = vld [vmem:[#allocation2 + $0x40] sm:$0xff]
  %v2645 = vld [vmem:[#allocation2 + $0x48] sm:$0xff]
  %v2646 = vld [vmem:[#allocation2 + $0x50] sm:$0xff]
  %v2647 = vld [vmem:[#allocation2 + $0x58] sm:$0xff]
  %v2648 = vld [vmem:[#allocation2 + $0x60] sm:$0xff]
  %v2649 = vld [vmem:[#allocation2 + $0x68] sm:$0xff]
  %v2650 = vld [vmem:[#allocation2 + $0x70] sm:$0xff]
  %v2651 = vld [vmem:[#allocation2 + $0x78] sm:$0xff]
  %v2652 = vld [vmem:[#allocation2 + $0x80] sm:$0xff]
  %v2653 = vld [vmem:[#allocation2 + $0x88] sm:$0xff]
  %v2654 = vld [vmem:[#allocation2 + $0x90] sm:$0xff]
  %v2655 = vld [vmem:[#allocation2 + $0x98] sm:$0xff]
  %v2656 = vld [vmem:[#allocation2 + $0xa0] sm:$0xff]
  %v2657 = vld [vmem:[#allocation2 + $0xa8] sm:$0xff]
  %v2658 = vld [vmem:[#allocation2 + $0xb0] sm:$0xff]
  %v2659 = vld [vmem:[#allocation2 + $0xb8] sm:$0xff]
  %v2660 = vld [vmem:[#allocation2 + $0xc0] sm:$0xff]
  %v2661 = vld [vmem:[#allocation2 + $0xc8] sm:$0xff]
  %v2662 = vld [vmem:[#allocation2 + $0xd0] sm:$0xff]
  %v2663 = vld [vmem:[#allocation2 + $0xd8] sm:$0xff]
  %v2664 = vld [vmem:[#allocation2 + $0xe0] sm:$0xff]
  %v2665 = vld [vmem:[#allocation2 + $0xe8] sm:$0xff]
  %v2666 = vld [vmem:[#allocation2 + $0xf0] sm:$0xff]
  %v2667 = vld [vmem:[#allocation2 + $0xf8] sm:$0xff]
  %v2668 = vld [vmem:[#allocation2 + $0x100] sm:$0xff]
  %v2669 = vld [vmem:[#allocation2 + $0x108] sm:$0xff]
  %v2670 = vld [vmem:[#allocation2 + $0x110] sm:$0xff]
  %v2671 = vld [vmem:[#allocation2 + $0x118] sm:$0xff]
  %v2672 = vadd.f32 %v2636, %v2494
  %v2673 = vadd.f32 %v2637, %v2497
  %v2674 = vadd.f32 %v2638, %v2502
  %v2675 = vadd.f32 %v2639, %v2505
  %v2676 = vadd.f32 %v2640, %v2510
  %v2677 = vadd.f32 %v2641, %v2513
  %v2678 = vadd.f32 %v2642, %v2518
  %v2679 = vadd.f32 %v2643, %v2521
  %v2680 = vadd.f32 %v2644, %v2526
  %v2681 = vadd.f32 %v2645, %v2529
  %v2682 = vadd.f32 %v2646, %v2534
  %v2683 = vadd.f32 %v2647, %v2537
  %v2684 = vadd.f32 %v2648, %v2542
  %v2685 = vadd.f32 %v2649, %v2545
  %v2686 = vadd.f32 %v2650, %v2550
  %v2687 = vadd.f32 %v2651, %v2553
  %v2688 = vadd.f32 %v2652, %v2558
  %v2689 = vadd.f32 %v2653, %v2561
  %v2690 = vadd.f32 %v2654, %v2566
  %v2691 = vadd.f32 %v2655, %v2569
  %v2692 = vadd.f32 %v2656, %v2574
  %v2693 = vadd.f32 %v2657, %v2577
  %v2694 = vadd.f32 %v2658, %v2582
  %v2695 = vadd.f32 %v2659, %v2585
  %v2696 = vadd.f32 %v2660, %v2590
  %v2697 = vadd.f32 %v2661, %v2593
  %v2698 = vadd.f32 %v2662, %v2598
  %v2699 = vadd.f32 %v2663, %v2601
  %v2700 = vadd.f32 %v2664, %v2606
  %v2701 = vadd.f32 %v2665, %v2609
  %v2702 = vadd.f32 %v2666, %v2614
  %v2703 = vadd.f32 %v2667, %v2617
  %v2704 = vadd.f32 %v2668, %v2622
  %v2705 = vadd.f32 %v2669, %v2625
  %v2706 = vadd.f32 %v2670, %v2630
  %v2707 = vadd.f32 %v2671, %v2633
  %2708 = vst [vmem:[#allocation2] sm:$0xff] %v2672
  %2709 = vst [vmem:[#allocation2 + $0x8] sm:$0xff] %v2673
  %2710 = vst [vmem:[#allocation2 + $0x10] sm:$0xff] %v2674
  %2711 = vst [vmem:[#allocation2 + $0x18] sm:$0xff] %v2675
  %2712 = vst [vmem:[#allocation2 + $0x20] sm:$0xff] %v2676
  %2713 = vst [vmem:[#allocation2 + $0x28] sm:$0xff] %v2677
  %2714 = vst [vmem:[#allocation2 + $0x30] sm:$0xff] %v2678
  %2715 = vst [vmem:[#allocation2 + $0x38] sm:$0xff] %v2679
  %2716 = vst [vmem:[#allocation2 + $0x40] sm:$0xff] %v2680
  %2717 = vst [vmem:[#allocation2 + $0x48] sm:$0xff] %v2681
  %2718 = vst [vmem:[#allocation2 + $0x50] sm:$0xff] %v2682
  %2719 = vst [vmem:[#allocation2 + $0x58] sm:$0xff] %v2683
  %2720 = vst [vmem:[#allocation2 + $0x60] sm:$0xff] %v2684
  %2721 = vst [vmem:[#allocation2 + $0x68] sm:$0xff] %v2685
  %2722 = vst [vmem:[#allocation2 + $0x70] sm:$0xff] %v2686
  %2723 = vst [vmem:[#allocation2 + $0x78] sm:$0xff] %v2687
  %2724 = vst [vmem:[#allocation2 + $0x80] sm:$0xff] %v2688
  %2725 = vst [vmem:[#allocation2 + $0x88] sm:$0xff] %v2689
  %2726 = vst [vmem:[#allocation2 + $0x90] sm:$0xff] %v2690
  %2727 = vst [vmem:[#allocation2 + $0x98] sm:$0xff] %v2691
  %2728 = vst [vmem:[#allocation2 + $0xa0] sm:$0xff] %v2692
  %2729 = vst [vmem:[#allocation2 + $0xa8] sm:$0xff] %v2693
  %2730 = vst [vmem:[#allocation2 + $0xb0] sm:$0xff] %v2694
  %2731 = vst [vmem:[#allocation2 + $0xb8] sm:$0xff] %v2695
  %2732 = vst [vmem:[#allocation2 + $0xc0] sm:$0xff] %v2696
  %2733 = vst [vmem:[#allocation2 + $0xc8] sm:$0xff] %v2697
  %2734 = vst [vmem:[#allocation2 + $0xd0] sm:$0xff] %v2698
  %2735 = vst [vmem:[#allocation2 + $0xd8] sm:$0xff] %v2699
  %2736 = vst [vmem:[#allocation2 + $0xe0] sm:$0xff] %v2700
  %2737 = vst [vmem:[#allocation2 + $0xe8] sm:$0xff] %v2701
  %2738 = vst [vmem:[#allocation2 + $0xf0] sm:$0xff] %v2702
  %2739 = vst [vmem:[#allocation2 + $0xf8] sm:$0xff] %v2703
  %2740 = vst [vmem:[#allocation2 + $0x100] sm:$0xff] %v2704
  %2741 = vst [vmem:[#allocation2 + $0x108] sm:$0xff] %v2705
  %2742 = vst [vmem:[#allocation2 + $0x110] sm:$0xff] %v2706
  %2743 = vst [vmem:[#allocation2 + $0x118] sm:$0xff] %v2707
  %v2744 = vld [vmem:[%s0 + $0x8] sm:$0xc]
  %v2745 = vld [vmem:[%s0 + $0xc] sm:$0xf]
  %v2746 = vld [vmem:[%s0 + $0x10] sm:$0xf]
  %v2747 = vld [vmem:[%s0 + $0x14] sm:$0xf]
  %v2748 = vld [vmem:[%s0 + $0x18] sm:$0xf]
  %v2749 = vld [vmem:[%s0 + $0x1c] sm:$0xf]
  %v2750 = vld [vmem:[%s0 + $0x20] sm:$0xf]
  %v2751 = vld [vmem:[%s0 + $0x24] sm:$0xf]
  %v2752 = vld [vmem:[%s0 + $0x28] sm:$0xf]
  %v2753 = vld [vmem:[%s0 + $0x2c] sm:$0xf]
  %v2754 = vld [vmem:[%s0 + $0x30] sm:$0xf]
  %v2755 = vld [vmem:[%s0 + $0x34] sm:$0xf]
  %v2756 = vld [vmem:[%s0 + $0x38] sm:$0xf]
  %v2757 = vld [vmem:[%s0 + $0x3c] sm:$0xf]
  %v2758 = vld [vmem:[%s0 + $0x40] sm:$0xf]
  %v2759 = vld [vmem:[%s0 + $0x44] sm:$0xf]
  %v2760 = vld [vmem:[%s0 + $0x48] sm:$0xf]
  %v2761 = vld [vmem:[%s0 + $0x4c] sm:$0xf]
  %v2762 = vld [vmem:[%s0 + $0x50] sm:$0xf]
  %v2763 = vld [vmem:[%s0 + $0x54] sm:$0xf]
  %v2764 = vld [vmem:[%s0 + $0x58] sm:$0xf]
  %v2765 = vld [vmem:[%s0 + $0x5c] sm:$0xf]
  %v2766 = vld [vmem:[%s0 + $0x60] sm:$0xf]
  %v2767 = vld [vmem:[%s0 + $0x64] sm:$0xf]
  %v2768 = vld [vmem:[%s0 + $0x68] sm:$0xf]
  %v2769 = vld [vmem:[%s0 + $0x6c] sm:$0xf]
  %v2770 = vld [vmem:[%s0 + $0x70] sm:$0xf]
  %v2771 = vld [vmem:[%s0 + $0x74] sm:$0xf]
  %v2772 = vld [vmem:[%s0 + $0x78] sm:$0xf]
  %v2773 = vld [vmem:[%s0 + $0x7c] sm:$0xf]
  %v2774 = vld [vmem:[%s0 + $0x80] sm:$0xf]
  %v2775 = vld [vmem:[%s0 + $0x84] sm:$0xf]
  %v2776 = vld [vmem:[%s0 + $0x88] sm:$0xf]
  %v2777 = vld [vmem:[%s0 + $0x8c] sm:$0xf]
  %v2778 = vld [vmem:[%s0 + $0x90] sm:$0xf]
  %v2779 = vld [vmem:[%s0 + $0x94] sm:$0xf]
  %v2780 = vld [vmem:[%s0 + $0x98] sm:$0x3]
  %s2781 = scalar_lea.vmem %s1, 20
  %v2782 = vld [vmem:[%s2781] sm:$0xf]
  %v2820 = vunpack.c.l.b16 %v2744
  %v2821 = vunpack.c.l.b16 %v2745
  %v2822 = vunpack.c.l.b16 %v2746
  %v2823 = vunpack.c.l.b16 %v2747
  %v2824 = vunpack.c.l.b16 %v2748
  %v2825 = vunpack.c.l.b16 %v2749
  %v2826 = vunpack.c.l.b16 %v2750
  %v2827 = vunpack.c.l.b16 %v2751
  %v2828 = vunpack.c.l.b16 %v2752
  %v2829 = vunpack.c.l.b16 %v2753
  %v2830 = vunpack.c.l.b16 %v2754
  %v2831 = vunpack.c.l.b16 %v2755
  %v2832 = vunpack.c.l.b16 %v2756
  %v2833 = vunpack.c.l.b16 %v2757
  %v2834 = vunpack.c.l.b16 %v2758
  %v2835 = vunpack.c.l.b16 %v2759
  %v2836 = vunpack.c.l.b16 %v2760
  %v2837 = vunpack.c.l.b16 %v2761
  %v2838 = vunpack.c.l.b16 %v2762
  %v2839 = vunpack.c.l.b16 %v2763
  %v2840 = vunpack.c.l.b16 %v2764
  %v2841 = vunpack.c.l.b16 %v2765
  %v2842 = vunpack.c.l.b16 %v2766
  %v2843 = vunpack.c.l.b16 %v2767
  %v2844 = vunpack.c.l.b16 %v2768
  %v2845 = vunpack.c.l.b16 %v2769
  %v2846 = vunpack.c.l.b16 %v2770
  %v2847 = vunpack.c.l.b16 %v2771
  %v2848 = vunpack.c.l.b16 %v2772
  %v2849 = vunpack.c.l.b16 %v2773
  %v2850 = vunpack.c.l.b16 %v2774
  %v2851 = vunpack.c.l.b16 %v2775
  %v2852 = vunpack.c.l.b16 %v2776
  %v2853 = vunpack.c.l.b16 %v2777
  %v2854 = vunpack.c.l.b16 %v2778
  %v2855 = vunpack.c.l.b16 %v2779
  %v2856 = vunpack.c.l.b16 %v2780
  %v2857 = vpack.c.b16 %v2821, %v2820
  %v2858 = vpack.c.b16 %v2823, %v2822
  %v2859 = vpack.c.b16 %v2825, %v2824
  %v2860 = vpack.c.b16 %v2827, %v2826
  %v2861 = vpack.c.b16 %v2829, %v2828
  %v2862 = vpack.c.b16 %v2831, %v2830
  %v2863 = vpack.c.b16 %v2833, %v2832
  %v2864 = vpack.c.b16 %v2835, %v2834
  %v2865 = vpack.c.b16 %v2837, %v2836
  %v2866 = vpack.c.b16 %v2839, %v2838
  %v2867 = vpack.c.b16 %v2841, %v2840
  %v2868 = vpack.c.b16 %v2843, %v2842
  %v2869 = vpack.c.b16 %v2845, %v2844
  %v2870 = vpack.c.b16 %v2847, %v2846
  %v2871 = vpack.c.b16 %v2849, %v2848
  %v2872 = vpack.c.b16 %v2851, %v2850
  %v2873 = vpack.c.b16 %v2853, %v2852
  %v2874 = vpack.c.b16 %v2855, %v2854
  %v2875 = vpack.c.b16 %v2856, %v2856
  %vm2876 = vcmask 1045504
  %v2877 = vrot.slane %v2857, 2
  %v2878 = vrot.slane %v2858, 2
  %v2879 = vsel %vm2876, %v2877, %v2878
  %v2880 = vrot.slane %v2859, 2
  %v2881 = vsel %vm2876, %v2878, %v2880
  %v2882 = vrot.slane %v2860, 2
  %v2883 = vsel %vm2876, %v2880, %v2882
  %v2884 = vrot.slane %v2861, 2
  %v2885 = vsel %vm2876, %v2882, %v2884
  %v2886 = vrot.slane %v2862, 2
  %v2887 = vsel %vm2876, %v2884, %v2886
  %v2888 = vrot.slane %v2863, 2
  %v2889 = vsel %vm2876, %v2886, %v2888
  %v2890 = vrot.slane %v2864, 2
  %v2891 = vsel %vm2876, %v2888, %v2890
  %v2892 = vrot.slane %v2865, 2
  %v2893 = vsel %vm2876, %v2890, %v2892
  %v2894 = vrot.slane %v2866, 2
  %v2895 = vsel %vm2876, %v2892, %v2894
  %v2896 = vrot.slane %v2867, 2
  %v2897 = vsel %vm2876, %v2894, %v2896
  %v2898 = vrot.slane %v2868, 2
  %v2899 = vsel %vm2876, %v2896, %v2898
  %v2900 = vrot.slane %v2869, 2
  %v2901 = vsel %vm2876, %v2898, %v2900
  %v2902 = vrot.slane %v2870, 2
  %v2903 = vsel %vm2876, %v2900, %v2902
  %v2904 = vrot.slane %v2871, 2
  %v2905 = vsel %vm2876, %v2902, %v2904
  %v2906 = vrot.slane %v2872, 2
  %v2907 = vsel %vm2876, %v2904, %v2906
  %v2908 = vrot.slane %v2873, 2
  %v2909 = vsel %vm2876, %v2906, %v2908
  %v2910 = vrot.slane %v2874, 2
  %v2911 = vsel %vm2876, %v2908, %v2910
  %v2912 = vrot.slane %v2875, 2
  %v2913 = vsel %vm2876, %v2910, %v2912
  %v2915 = vsel %vm181, %v2879, 0
  %v2918 = vsel %vm181, %v2881, 0
  %v2921 = vsel %vm181, %v2883, 0
  %v2924 = vsel %vm181, %v2885, 0
  %v2927 = vsel %vm181, %v2887, 0
  %v2930 = vsel %vm181, %v2889, 0
  %v2933 = vsel %vm181, %v2891, 0
  %v2936 = vsel %vm181, %v2893, 0
  %v2939 = vsel %vm181, %v2895, 0
  %v2942 = vsel %vm181, %v2897, 0
  %v2945 = vsel %vm181, %v2899, 0
  %v2948 = vsel %vm181, %v2901, 0
  %v2951 = vsel %vm181, %v2903, 0
  %v2954 = vsel %vm181, %v2905, 0
  %v2957 = vsel %vm181, %v2907, 0
  %v2960 = vsel %vm181, %v2909, 0
  %v2963 = vsel %vm181, %v2911, 0
  %v2966 = vsel %vm181, %v2913, 0
  %v2969 = vsel %vm236, %v2782, 0
  %2971 = vmatprep.subr.bf16.mxu0 0
  %2972 = vmatpush1.bf16.msra.mxu0 %v2969
  %2973 = vmatprep.subr.bf16.mxu0 0
  %2974 = vmatpush1.bf16.msra.mxu0 0
  %2975 = vmatprep.subr.bf16.mxu0 0
  %2976 = vmatpush1.bf16.msra.mxu0 0
  %2977 = vmatprep.subr.bf16.mxu0 0
  %2978 = vmatpush1.bf16.msra.mxu0 0
  %2979 = vmatprep.subr.bf16.mxu0 0
  %2980 = vmatpush1.bf16.msra.mxu0 0
  %2981 = vmatprep.subr.bf16.mxu0 0
  %2982 = vmatpush1.bf16.msra.mxu0 0
  %2983 = vmatprep.subr.bf16.mxu0 0
  %2984 = vmatpush1.bf16.msra.mxu0 0
  %2985 = vmatprep.subr.bf16.mxu0 0
  %2986 = vmatpush1.bf16.msra.mxu0 0
  %2987 = vmatprep.subr.bf16.mxu0 0
  %2988 = vmatpush1.bf16.msra.mxu0 0
  %2989 = vmatprep.subr.bf16.mxu0 0
  %2990 = vmatpush1.bf16.msra.mxu0 0
  %2991 = vmatprep.subr.bf16.mxu0 0
  %2992 = vmatpush1.bf16.msra.mxu0 0
  %2993 = vmatprep.subr.bf16.mxu0 0
  %2994 = vmatpush1.bf16.msra.mxu0 0
  %2995 = vmatprep.subr.bf16.mxu0 0
  %2996 = vmatpush1.bf16.msra.mxu0 0
  %2997 = vmatprep.subr.bf16.mxu0 0
  %2998 = vmatpush1.bf16.msra.mxu0 0
  %2999 = vmatprep.subr.bf16.mxu0 0
  %3000 = vmatpush1.bf16.msra.mxu0 0
  %3001 = vmatprep.subr.bf16.mxu0 0
  %3002 = vmatpush1.bf16.msra.mxu0 0
  %3003 = vmatprep.mubr.bf16.mxu0 0
  %3004 = vmatmul.mubr.bf16.gmra.mrb[0].mxu0 %v2915
  %v3005 = vpop.f32.mrb[0].mxu0
  %v3006 = vadd.f32 0.0, %v3005
  %v3007 = vpop.f32.mrb[0].mxu0
  %v3008 = vpop.f32.mrb[0].mxu0
  %v3009 = vadd.f32 0.0, %v3008
  %v3010 = vpop.f32.mrb[0].mxu0
  %3011 = vmatprep.mubr.bf16.mxu0 0
  %3012 = vmatmul.mubr.bf16.gmra.mrb[0].mxu0 %v2918
  %v3013 = vpop.f32.mrb[0].mxu0
  %v3014 = vadd.f32 0.0, %v3013
  %v3015 = vpop.f32.mrb[0].mxu0
  %v3016 = vpop.f32.mrb[0].mxu0
  %v3017 = vadd.f32 0.0, %v3016
  %v3018 = vpop.f32.mrb[0].mxu0
  %3019 = vmatprep.mubr.bf16.mxu0 0
  %3020 = vmatmul.mubr.bf16.gmra.mrb[0].mxu0 %v2921
  %v3021 = vpop.f32.mrb[0].mxu0
  %v3022 = vadd.f32 0.0, %v3021
  %v3023 = vpop.f32.mrb[0].mxu0
  %v3024 = vpop.f32.mrb[0].mxu0
  %v3025 = vadd.f32 0.0, %v3024
  %v3026 = vpop.f32.mrb[0].mxu0
  %3027 = vmatprep.mubr.bf16.mxu0 0
  %3028 = vmatmul.mubr.bf16.gmra.mrb[0].mxu0 %v2924
  %v3029 = vpop.f32.mrb[0].mxu0
  %v3030 = vadd.f32 0.0, %v3029
  %v3031 = vpop.f32.mrb[0].mxu0
  %v3032 = vpop.f32.mrb[0].mxu0
  %v3033 = vadd.f32 0.0, %v3032
  %v3034 = vpop.f32.mrb[0].mxu0
  %3035 = vmatprep.mubr.bf16.mxu0 0
  %3036 = vmatmul.mubr.bf16.gmra.mrb[0].mxu0 %v2927
  %v3037 = vpop.f32.mrb[0].mxu0
  %v3038 = vadd.f32 0.0, %v3037
  %v3039 = vpop.f32.mrb[0].mxu0
  %v3040 = vpop.f32.mrb[0].mxu0
  %v3041 = vadd.f32 0.0, %v3040
  %v3042 = vpop.f32.mrb[0].mxu0
  %3043 = vmatprep.mubr.bf16.mxu0 0
  %3044 = vmatmul.mubr.bf16.gmra.mrb[0].mxu0 %v2930
  %v3045 = vpop.f32.mrb[0].mxu0
  %v3046 = vadd.f32 0.0, %v3045
  %v3047 = vpop.f32.mrb[0].mxu0
  %v3048 = vpop.f32.mrb[0].mxu0
  %v3049 = vadd.f32 0.0, %v3048
  %v3050 = vpop.f32.mrb[0].mxu0
  %3051 = vmatprep.mubr.bf16.mxu0 0
  %3052 = vmatmul.mubr.bf16.gmra.mrb[0].mxu0 %v2933
  %v3053 = vpop.f32.mrb[0].mxu0
  %v3054 = vadd.f32 0.0, %v3053
  %v3055 = vpop.f32.mrb[0].mxu0
  %v3056 = vpop.f32.mrb[0].mxu0
  %v3057 = vadd.f32 0.0, %v3056
  %v3058 = vpop.f32.mrb[0].mxu0
  %3059 = vmatprep.mubr.bf16.mxu0 0
  %3060 = vmatmul.mubr.bf16.gmra.mrb[0].mxu0 %v2936
  %v3061 = vpop.f32.mrb[0].mxu0
  %v3062 = vadd.f32 0.0, %v3061
  %v3063 = vpop.f32.mrb[0].mxu0
  %v3064 = vpop.f32.mrb[0].mxu0
  %v3065 = vadd.f32 0.0, %v3064
  %v3066 = vpop.f32.mrb[0].mxu0
  %3067 = vmatprep.mubr.bf16.mxu0 0
  %3068 = vmatmul.mubr.bf16.gmra.mrb[0].mxu0 %v2939
  %v3069 = vpop.f32.mrb[0].mxu0
  %v3070 = vadd.f32 0.0, %v3069
  %v3071 = vpop.f32.mrb[0].mxu0
  %v3072 = vpop.f32.mrb[0].mxu0
  %v3073 = vadd.f32 0.0, %v3072
  %v3074 = vpop.f32.mrb[0].mxu0
  %3075 = vmatprep.mubr.bf16.mxu0 0
  %3076 = vmatmul.mubr.bf16.gmra.mrb[0].mxu0 %v2942
  %v3077 = vpop.f32.mrb[0].mxu0
  %v3078 = vadd.f32 0.0, %v3077
  %v3079 = vpop.f32.mrb[0].mxu0
  %v3080 = vpop.f32.mrb[0].mxu0
  %v3081 = vadd.f32 0.0, %v3080
  %v3082 = vpop.f32.mrb[0].mxu0
  %3083 = vmatprep.mubr.bf16.mxu0 0
  %3084 = vmatmul.mubr.bf16.gmra.mrb[0].mxu0 %v2945
  %v3085 = vpop.f32.mrb[0].mxu0
  %v3086 = vadd.f32 0.0, %v3085
  %v3087 = vpop.f32.mrb[0].mxu0
  %v3088 = vpop.f32.mrb[0].mxu0
  %v3089 = vadd.f32 0.0, %v3088
  %v3090 = vpop.f32.mrb[0].mxu0
  %3091 = vmatprep.mubr.bf16.mxu0 0
  %3092 = vmatmul.mubr.bf16.gmra.mrb[0].mxu0 %v2948
  %v3093 = vpop.f32.mrb[0].mxu0
  %v3094 = vadd.f32 0.0, %v3093
  %v3095 = vpop.f32.mrb[0].mxu0
  %v3096 = vpop.f32.mrb[0].mxu0
  %v3097 = vadd.f32 0.0, %v3096
  %v3098 = vpop.f32.mrb[0].mxu0
  %3099 = vmatprep.mubr.bf16.mxu0 0
  %3100 = vmatmul.mubr.bf16.gmra.mrb[0].mxu0 %v2951
  %v3101 = vpop.f32.mrb[0].mxu0
  %v3102 = vadd.f32 0.0, %v3101
  %v3103 = vpop.f32.mrb[0].mxu0
  %v3104 = vpop.f32.mrb[0].mxu0
  %v3105 = vadd.f32 0.0, %v3104
  %v3106 = vpop.f32.mrb[0].mxu0
  %3107 = vmatprep.mubr.bf16.mxu0 0
  %3108 = vmatmul.mubr.bf16.gmra.mrb[0].mxu0 %v2954
  %v3109 = vpop.f32.mrb[0].mxu0
  %v3110 = vadd.f32 0.0, %v3109
  %v3111 = vpop.f32.mrb[0].mxu0
  %v3112 = vpop.f32.mrb[0].mxu0
  %v3113 = vadd.f32 0.0, %v3112
  %v3114 = vpop.f32.mrb[0].mxu0
  %3115 = vmatprep.mubr.bf16.mxu0 0
  %3116 = vmatmul.mubr.bf16.gmra.mrb[0].mxu0 %v2957
  %v3117 = vpop.f32.mrb[0].mxu0
  %v3118 = vadd.f32 0.0, %v3117
  %v3119 = vpop.f32.mrb[0].mxu0
  %v3120 = vpop.f32.mrb[0].mxu0
  %v3121 = vadd.f32 0.0, %v3120
  %v3122 = vpop.f32.mrb[0].mxu0
  %3123 = vmatprep.mubr.bf16.mxu0 0
  %3124 = vmatmul.mubr.bf16.gmra.mrb[0].mxu0 %v2960
  %v3125 = vpop.f32.mrb[0].mxu0
  %v3126 = vadd.f32 0.0, %v3125
  %v3127 = vpop.f32.mrb[0].mxu0
  %v3128 = vpop.f32.mrb[0].mxu0
  %v3129 = vadd.f32 0.0, %v3128
  %v3130 = vpop.f32.mrb[0].mxu0
  %3131 = vmatprep.mubr.bf16.mxu0 0
  %3132 = vmatmul.mubr.bf16.gmra.mrb[0].mxu0 %v2963
  %v3133 = vpop.f32.mrb[0].mxu0
  %v3134 = vadd.f32 0.0, %v3133
  %v3135 = vpop.f32.mrb[0].mxu0
  %v3136 = vpop.f32.mrb[0].mxu0
  %v3137 = vadd.f32 0.0, %v3136
  %v3138 = vpop.f32.mrb[0].mxu0
  %3139 = vmatprep.mubr.bf16.mxu0 0
  %3140 = vmatmul.mubr.bf16.gmra.mrb[0].mxu0 %v2966
  %v3141 = vpop.f32.mrb[0].mxu0
  %v3142 = vadd.f32 0.0, %v3141
  %v3143 = vpop.f32.mrb[0].mxu0
  %v3144 = vpop.f32.mrb[0].mxu0
  %v3145 = vadd.f32 0.0, %v3144
  %v3146 = vpop.f32.mrb[0].mxu0
  %3147 = vdwg.mxu0
  %v3148 = vld [vmem:[#allocation2] sm:$0xff]
  %v3149 = vld [vmem:[#allocation2 + $0x8] sm:$0xff]
  %v3150 = vld [vmem:[#allocation2 + $0x10] sm:$0xff]
  %v3151 = vld [vmem:[#allocation2 + $0x18] sm:$0xff]
  %v3152 = vld [vmem:[#allocation2 + $0x20] sm:$0xff]
  %v3153 = vld [vmem:[#allocation2 + $0x28] sm:$0xff]
  %v3154 = vld [vmem:[#allocation2 + $0x30] sm:$0xff]
  %v3155 = vld [vmem:[#allocation2 + $0x38] sm:$0xff]
  %v3156 = vld [vmem:[#allocation2 + $0x40] sm:$0xff]
  %v3157 = vld [vmem:[#allocation2 + $0x48] sm:$0xff]
  %v3158 = vld [vmem:[#allocation2 + $0x50] sm:$0xff]
  %v3159 = vld [vmem:[#allocation2 + $0x58] sm:$0xff]
  %v3160 = vld [vmem:[#allocation2 + $0x60] sm:$0xff]
  %v3161 = vld [vmem:[#allocation2 + $0x68] sm:$0xff]
  %v3162 = vld [vmem:[#allocation2 + $0x70] sm:$0xff]
  %v3163 = vld [vmem:[#allocation2 + $0x78] sm:$0xff]
  %v3164 = vld [vmem:[#allocation2 + $0x80] sm:$0xff]
  %v3165 = vld [vmem:[#allocation2 + $0x88] sm:$0xff]
  %v3166 = vld [vmem:[#allocation2 + $0x90] sm:$0xff]
  %v3167 = vld [vmem:[#allocation2 + $0x98] sm:$0xff]
  %v3168 = vld [vmem:[#allocation2 + $0xa0] sm:$0xff]
  %v3169 = vld [vmem:[#allocation2 + $0xa8] sm:$0xff]
  %v3170 = vld [vmem:[#allocation2 + $0xb0] sm:$0xff]
  %v3171 = vld [vmem:[#allocation2 + $0xb8] sm:$0xff]
  %v3172 = vld [vmem:[#allocation2 + $0xc0] sm:$0xff]
  %v3173 = vld [vmem:[#allocation2 + $0xc8] sm:$0xff]
  %v3174 = vld [vmem:[#allocation2 + $0xd0] sm:$0xff]
  %v3175 = vld [vmem:[#allocation2 + $0xd8] sm:$0xff]
  %v3176 = vld [vmem:[#allocation2 + $0xe0] sm:$0xff]
  %v3177 = vld [vmem:[#allocation2 + $0xe8] sm:$0xff]
  %v3178 = vld [vmem:[#allocation2 + $0xf0] sm:$0xff]
  %v3179 = vld [vmem:[#allocation2 + $0xf8] sm:$0xff]
  %v3180 = vld [vmem:[#allocation2 + $0x100] sm:$0xff]
  %v3181 = vld [vmem:[#allocation2 + $0x108] sm:$0xff]
  %v3182 = vld [vmem:[#allocation2 + $0x110] sm:$0xff]
  %v3183 = vld [vmem:[#allocation2 + $0x118] sm:$0xff]
  %v3184 = vadd.f32 %v3148, %v3006
  %v3185 = vadd.f32 %v3149, %v3009
  %v3186 = vadd.f32 %v3150, %v3014
  %v3187 = vadd.f32 %v3151, %v3017
  %v3188 = vadd.f32 %v3152, %v3022
  %v3189 = vadd.f32 %v3153, %v3025
  %v3190 = vadd.f32 %v3154, %v3030
  %v3191 = vadd.f32 %v3155, %v3033
  %v3192 = vadd.f32 %v3156, %v3038
  %v3193 = vadd.f32 %v3157, %v3041
  %v3194 = vadd.f32 %v3158, %v3046
  %v3195 = vadd.f32 %v3159, %v3049
  %v3196 = vadd.f32 %v3160, %v3054
  %v3197 = vadd.f32 %v3161, %v3057
  %v3198 = vadd.f32 %v3162, %v3062
  %v3199 = vadd.f32 %v3163, %v3065
  %v3200 = vadd.f32 %v3164, %v3070
  %v3201 = vadd.f32 %v3165, %v3073
  %v3202 = vadd.f32 %v3166, %v3078
  %v3203 = vadd.f32 %v3167, %v3081
  %v3204 = vadd.f32 %v3168, %v3086
  %v3205 = vadd.f32 %v3169, %v3089
  %v3206 = vadd.f32 %v3170, %v3094
  %v3207 = vadd.f32 %v3171, %v3097
  %v3208 = vadd.f32 %v3172, %v3102
  %v3209 = vadd.f32 %v3173, %v3105
  %v3210 = vadd.f32 %v3174, %v3110
  %v3211 = vadd.f32 %v3175, %v3113
  %v3212 = vadd.f32 %v3176, %v3118
  %v3213 = vadd.f32 %v3177, %v3121
  %v3214 = vadd.f32 %v3178, %v3126
  %v3215 = vadd.f32 %v3179, %v3129
  %v3216 = vadd.f32 %v3180, %v3134
  %v3217 = vadd.f32 %v3181, %v3137
  %v3218 = vadd.f32 %v3182, %v3142
  %v3219 = vadd.f32 %v3183, %v3145
  %3220 = vst [vmem:[#allocation2] sm:$0xff] %v3184
  %3221 = vst [vmem:[#allocation2 + $0x8] sm:$0xff] %v3185
  %3222 = vst [vmem:[#allocation2 + $0x10] sm:$0xff] %v3186
  %3223 = vst [vmem:[#allocation2 + $0x18] sm:$0xff] %v3187
  %3224 = vst [vmem:[#allocation2 + $0x20] sm:$0xff] %v3188
  %3225 = vst [vmem:[#allocation2 + $0x28] sm:$0xff] %v3189
  %3226 = vst [vmem:[#allocation2 + $0x30] sm:$0xff] %v3190
  %3227 = vst [vmem:[#allocation2 + $0x38] sm:$0xff] %v3191
  %3228 = vst [vmem:[#allocation2 + $0x40] sm:$0xff] %v3192
  %3229 = vst [vmem:[#allocation2 + $0x48] sm:$0xff] %v3193
  %3230 = vst [vmem:[#allocation2 + $0x50] sm:$0xff] %v3194
  %3231 = vst [vmem:[#allocation2 + $0x58] sm:$0xff] %v3195
  %3232 = vst [vmem:[#allocation2 + $0x60] sm:$0xff] %v3196
  %3233 = vst [vmem:[#allocation2 + $0x68] sm:$0xff] %v3197
  %3234 = vst [vmem:[#allocation2 + $0x70] sm:$0xff] %v3198
  %3235 = vst [vmem:[#allocation2 + $0x78] sm:$0xff] %v3199
  %3236 = vst [vmem:[#allocation2 + $0x80] sm:$0xff] %v3200
  %3237 = vst [vmem:[#allocation2 + $0x88] sm:$0xff] %v3201
  %3238 = vst [vmem:[#allocation2 + $0x90] sm:$0xff] %v3202
  %3239 = vst [vmem:[#allocation2 + $0x98] sm:$0xff] %v3203
  %3240 = vst [vmem:[#allocation2 + $0xa0] sm:$0xff] %v3204
  %3241 = vst [vmem:[#allocation2 + $0xa8] sm:$0xff] %v3205
  %3242 = vst [vmem:[#allocation2 + $0xb0] sm:$0xff] %v3206
  %3243 = vst [vmem:[#allocation2 + $0xb8] sm:$0xff] %v3207
  %3244 = vst [vmem:[#allocation2 + $0xc0] sm:$0xff] %v3208
  %3245 = vst [vmem:[#allocation2 + $0xc8] sm:$0xff] %v3209
  %3246 = vst [vmem:[#allocation2 + $0xd0] sm:$0xff] %v3210
  %3247 = vst [vmem:[#allocation2 + $0xd8] sm:$0xff] %v3211
  %3248 = vst [vmem:[#allocation2 + $0xe0] sm:$0xff] %v3212
  %3249 = vst [vmem:[#allocation2 + $0xe8] sm:$0xff] %v3213
  %3250 = vst [vmem:[#allocation2 + $0xf0] sm:$0xff] %v3214
  %3251 = vst [vmem:[#allocation2 + $0xf8] sm:$0xff] %v3215
  %3252 = vst [vmem:[#allocation2 + $0x100] sm:$0xff] %v3216
  %3253 = vst [vmem:[#allocation2 + $0x108] sm:$0xff] %v3217
  %3254 = vst [vmem:[#allocation2 + $0x110] sm:$0xff] %v3218
  %3255 = vst [vmem:[#allocation2 + $0x118] sm:$0xff] %v3219
  %v3256 = vld [vmem:[%s0 + $0x10] sm:$0xc]
  %v3257 = vld [vmem:[%s0 + $0x14] sm:$0xf]
  %v3258 = vld [vmem:[%s0 + $0x18] sm:$0xf]
  %v3259 = vld [vmem:[%s0 + $0x1c] sm:$0xf]
  %v3260 = vld [vmem:[%s0 + $0x20] sm:$0xf]
  %v3261 = vld [vmem:[%s0 + $0x24] sm:$0xf]
  %v3262 = vld [vmem:[%s0 + $0x28] sm:$0xf]
  %v3263 = vld [vmem:[%s0 + $0x2c] sm:$0xf]
  %v3264 = vld [vmem:[%s0 + $0x30] sm:$0xf]
  %v3265 = vld [vmem:[%s0 + $0x34] sm:$0xf]
  %v3266 = vld [vmem:[%s0 + $0x38] sm:$0xf]
  %v3267 = vld [vmem:[%s0 + $0x3c] sm:$0xf]
  %v3268 = vld [vmem:[%s0 + $0x40] sm:$0xf]
  %v3269 = vld [vmem:[%s0 + $0x44] sm:$0xf]
  %v3270 = vld [vmem:[%s0 + $0x48] sm:$0xf]
  %v3271 = vld [vmem:[%s0 + $0x4c] sm:$0xf]
  %v3272 = vld [vmem:[%s0 + $0x50] sm:$0xf]
  %v3273 = vld [vmem:[%s0 + $0x54] sm:$0xf]
  %v3274 = vld [vmem:[%s0 + $0x58] sm:$0xf]
  %v3275 = vld [vmem:[%s0 + $0x5c] sm:$0xf]
  %v3276 = vld [vmem:[%s0 + $0x60] sm:$0xf]
  %v3277 = vld [vmem:[%s0 + $0x64] sm:$0xf]
  %v3278 = vld [vmem:[%s0 + $0x68] sm:$0xf]
  %v3279 = vld [vmem:[%s0 + $0x6c] sm:$0xf]
  %v3280 = vld [vmem:[%s0 + $0x70] sm:$0xf]
  %v3281 = vld [vmem:[%s0 + $0x74] sm:$0xf]
  %v3282 = vld [vmem:[%s0 + $0x78] sm:$0xf]
  %v3283 = vld [vmem:[%s0 + $0x7c] sm:$0xf]
  %v3284 = vld [vmem:[%s0 + $0x80] sm:$0xf]
  %v3285 = vld [vmem:[%s0 + $0x84] sm:$0xf]
  %v3286 = vld [vmem:[%s0 + $0x88] sm:$0xf]
  %v3287 = vld [vmem:[%s0 + $0x8c] sm:$0xf]
  %v3288 = vld [vmem:[%s0 + $0x90] sm:$0xf]
  %v3289 = vld [vmem:[%s0 + $0x94] sm:$0xf]
  %v3290 = vld [vmem:[%s0 + $0x98] sm:$0xf]
  %v3291 = vld [vmem:[%s0 + $0x9c] sm:$0xf]
  %v3292 = vld [vmem:[%s0 + $0xa0] sm:$0x3]
  %s3293 = scalar_lea.vmem %s1, 24
  %v3294 = vld [vmem:[%s3293] sm:$0xf]
  %v3332 = vunpack.c.l.b16 %v3256
  %v3333 = vunpack.c.l.b16 %v3257
  %v3334 = vunpack.c.l.b16 %v3258
  %v3335 = vunpack.c.l.b16 %v3259
  %v3336 = vunpack.c.l.b16 %v3260
  %v3337 = vunpack.c.l.b16 %v3261
  %v3338 = vunpack.c.l.b16 %v3262
  %v3339 = vunpack.c.l.b16 %v3263
  %v3340 = vunpack.c.l.b16 %v3264
  %v3341 = vunpack.c.l.b16 %v3265
  %v3342 = vunpack.c.l.b16 %v3266
  %v3343 = vunpack.c.l.b16 %v3267
  %v3344 = vunpack.c.l.b16 %v3268
  %v3345 = vunpack.c.l.b16 %v3269
  %v3346 = vunpack.c.l.b16 %v3270
  %v3347 = vunpack.c.l.b16 %v3271
  %v3348 = vunpack.c.l.b16 %v3272
  %v3349 = vunpack.c.l.b16 %v3273
  %v3350 = vunpack.c.l.b16 %v3274
  %v3351 = vunpack.c.l.b16 %v3275
  %v3352 = vunpack.c.l.b16 %v3276
  %v3353 = vunpack.c.l.b16 %v3277
  %v3354 = vunpack.c.l.b16 %v3278
  %v3355 = vunpack.c.l.b16 %v3279
  %v3356 = vunpack.c.l.b16 %v3280
  %v3357 = vunpack.c.l.b16 %v3281
  %v3358 = vunpack.c.l.b16 %v3282
  %v3359 = vunpack.c.l.b16 %v3283
  %v3360 = vunpack.c.l.b16 %v3284
  %v3361 = vunpack.c.l.b16 %v3285
  %v3362 = vunpack.c.l.b16 %v3286
  %v3363 = vunpack.c.l.b16 %v3287
  %v3364 = vunpack.c.l.b16 %v3288
  %v3365 = vunpack.c.l.b16 %v3289
  %v3366 = vunpack.c.l.b16 %v3290
  %v3367 = vunpack.c.l.b16 %v3291
  %v3368 = vunpack.c.l.b16 %v3292
  %v3369 = vpack.c.b16 %v3333, %v3332
  %v3370 = vpack.c.b16 %v3335, %v3334
  %v3371 = vpack.c.b16 %v3337, %v3336
  %v3372 = vpack.c.b16 %v3339, %v3338
  %v3373 = vpack.c.b16 %v3341, %v3340
  %v3374 = vpack.c.b16 %v3343, %v3342
  %v3375 = vpack.c.b16 %v3345, %v3344
  %v3376 = vpack.c.b16 %v3347, %v3346
  %v3377 = vpack.c.b16 %v3349, %v3348
  %v3378 = vpack.c.b16 %v3351, %v3350
  %v3379 = vpack.c.b16 %v3353, %v3352
  %v3380 = vpack.c.b16 %v3355, %v3354
  %v3381 = vpack.c.b16 %v3357, %v3356
  %v3382 = vpack.c.b16 %v3359, %v3358
  %v3383 = vpack.c.b16 %v3361, %v3360
  %v3384 = vpack.c.b16 %v3363, %v3362
  %v3385 = vpack.c.b16 %v3365, %v3364
  %v3386 = vpack.c.b16 %v3367, %v3366
  %v3387 = vpack.c.b16 %v3368, %v3368
  %v3388 = vrot.slane %v3369, 2
  %v3389 = vrot.slane %v3370, 2
  %v3390 = vsel %vm2876, %v3388, %v3389
  %v3391 = vrot.slane %v3371, 2
  %v3392 = vsel %vm2876, %v3389, %v3391
  %v3393 = vrot.slane %v3372, 2
  %v3394 = vsel %vm2876, %v3391, %v3393
  %v3395 = vrot.slane %v3373, 2
  %v3396 = vsel %vm2876, %v3393, %v3395
  %v3397 = vrot.slane %v3374, 2
  %v3398 = vsel %vm2876, %v3395, %v3397
  %v3399 = vrot.slane %v3375, 2
  %v3400 = vsel %vm2876, %v3397, %v3399
  %v3401 = vrot.slane %v3376, 2
  %v3402 = vsel %vm2876, %v3399, %v3401
  %v3403 = vrot.slane %v3377, 2
  %v3404 = vsel %vm2876, %v3401, %v3403
  %v3405 = vrot.slane %v3378, 2
  %v3406 = vsel %vm2876, %v3403, %v3405
  %v3407 = vrot.slane %v3379, 2
  %v3408 = vsel %vm2876, %v3405, %v3407
  %v3409 = vrot.slane %v3380, 2
  %v3410 = vsel %vm2876, %v3407, %v3409
  %v3411 = vrot.slane %v3381, 2
  %v3412 = vsel %vm2876, %v3409, %v3411
  %v3413 = vrot.slane %v3382, 2
  %v3414 = vsel %vm2876, %v3411, %v3413
  %v3415 = vrot.slane %v3383, 2
  %v3416 = vsel %vm2876, %v3413, %v3415
  %v3417 = vrot.slane %v3384, 2
  %v3418 = vsel %vm2876, %v3415, %v3417
  %v3419 = vrot.slane %v3385, 2
  %v3420 = vsel %vm2876, %v3417, %v3419
  %v3421 = vrot.slane %v3386, 2
  %v3422 = vsel %vm2876, %v3419, %v3421
  %v3423 = vrot.slane %v3387, 2
  %v3424 = vsel %vm2876, %v3421, %v3423
  %v3426 = vsel %vm181, %v3390, 0
  %v3429 = vsel %vm181, %v3392, 0
  %v3432 = vsel %vm181, %v3394, 0
  %v3435 = vsel %vm181, %v3396, 0
  %v3438 = vsel %vm181, %v3398, 0
  %v3441 = vsel %vm181, %v3400, 0
  %v3444 = vsel %vm181, %v3402, 0
  %v3447 = vsel %vm181, %v3404, 0
  %v3450 = vsel %vm181, %v3406, 0
  %v3453 = vsel %vm181, %v3408, 0
  %v3456 = vsel %vm181, %v3410, 0
  %v3459 = vsel %vm181, %v3412, 0
  %v3462 = vsel %vm181, %v3414, 0
  %v3465 = vsel %vm181, %v3416, 0
  %v3468 = vsel %vm181, %v3418, 0
  %v3471 = vsel %vm181, %v3420, 0
  %v3474 = vsel %vm181, %v3422, 0
  %v3477 = vsel %vm181, %v3424, 0
  %v3480 = vsel %vm236, %v3294, 0
  %3482 = vmatprep.subr.bf16.mxu0 0
  %3483 = vmatpush1.bf16.msra.mxu0 %v3480
  %3484 = vmatprep.subr.bf16.mxu0 0
  %3485 = vmatpush1.bf16.msra.mxu0 0
  %3486 = vmatprep.subr.bf16.mxu0 0
  %3487 = vmatpush1.bf16.msra.mxu0 0
  %3488 = vmatprep.subr.bf16.mxu0 0
  %3489 = vmatpush1.bf16.msra.mxu0 0
  %3490 = vmatprep.subr.bf16.mxu0 0
  %3491 = vmatpush1.bf16.msra.mxu0 0
  %3492 = vmatprep.subr.bf16.mxu0 0
  %3493 = vmatpush1.bf16.msra.mxu0 0
  %3494 = vmatprep.subr.bf16.mxu0 0
  %3495 = vmatpush1.bf16.msra.mxu0 0
  %3496 = vmatprep.subr.bf16.mxu0 0
  %3497 = vmatpush1.bf16.msra.mxu0 0
  %3498 = vmatprep.subr.bf16.mxu0 0
  %3499 = vmatpush1.bf16.msra.mxu0 0
  %3500 = vmatprep.subr.bf16.mxu0 0
  %3501 = vmatpush1.bf16.msra.mxu0 0
  %3502 = vmatprep.subr.bf16.mxu0 0
  %3503 = vmatpush1.bf16.msra.mxu0 0
  %3504 = vmatprep.subr.bf16.mxu0 0
  %3505 = vmatpush1.bf16.msra.mxu0 0
  %3506 = vmatprep.subr.bf16.mxu0 0
  %3507 = vmatpush1.bf16.msra.mxu0 0
  %3508 = vmatprep.subr.bf16.mxu0 0
  %3509 = vmatpush1.bf16.msra.mxu0 0
  %3510 = vmatprep.subr.bf16.mxu0 0
  %3511 = vmatpush1.bf16.msra.mxu0 0
  %3512 = vmatprep.subr.bf16.mxu0 0
  %3513 = vmatpush1.bf16.msra.mxu0 0
  %3514 = vmatprep.mubr.bf16.mxu0 0
  %3515 = vmatmul.mubr.bf16.gmra.mrb[0].mxu0 %v3426
  %v3516 = vpop.f32.mrb[0].mxu0
  %v3517 = vadd.f32 0.0, %v3516
  %v3518 = vpop.f32.mrb[0].mxu0
  %v3519 = vpop.f32.mrb[0].mxu0
  %v3520 = vadd.f32 0.0, %v3519
  %v3521 = vpop.f32.mrb[0].mxu0
  %3522 = vmatprep.mubr.bf16.mxu0 0
  %3523 = vmatmul.mubr.bf16.gmra.mrb[0].mxu0 %v3429
  %v3524 = vpop.f32.mrb[0].mxu0
  %v3525 = vadd.f32 0.0, %v3524
  %v3526 = vpop.f32.mrb[0].mxu0
  %v3527 = vpop.f32.mrb[0].mxu0
  %v3528 = vadd.f32 0.0, %v3527
  %v3529 = vpop.f32.mrb[0].mxu0
  %3530 = vmatprep.mubr.bf16.mxu0 0
  %3531 = vmatmul.mubr.bf16.gmra.mrb[0].mxu0 %v3432
  %v3532 = vpop.f32.mrb[0].mxu0
  %v3533 = vadd.f32 0.0, %v3532
  %v3534 = vpop.f32.mrb[0].mxu0
  %v3535 = vpop.f32.mrb[0].mxu0
  %v3536 = vadd.f32 0.0, %v3535
  %v3537 = vpop.f32.mrb[0].mxu0
  %3538 = vmatprep.mubr.bf16.mxu0 0
  %3539 = vmatmul.mubr.bf16.gmra.mrb[0].mxu0 %v3435
  %v3540 = vpop.f32.mrb[0].mxu0
  %v3541 = vadd.f32 0.0, %v3540
  %v3542 = vpop.f32.mrb[0].mxu0
  %v3543 = vpop.f32.mrb[0].mxu0
  %v3544 = vadd.f32 0.0, %v3543
  %v3545 = vpop.f32.mrb[0].mxu0
  %3546 = vmatprep.mubr.bf16.mxu0 0
  %3547 = vmatmul.mubr.bf16.gmra.mrb[0].mxu0 %v3438
  %v3548 = vpop.f32.mrb[0].mxu0
  %v3549 = vadd.f32 0.0, %v3548
  %v3550 = vpop.f32.mrb[0].mxu0
  %v3551 = vpop.f32.mrb[0].mxu0
  %v3552 = vadd.f32 0.0, %v3551
  %v3553 = vpop.f32.mrb[0].mxu0
  %3554 = vmatprep.mubr.bf16.mxu0 0
  %3555 = vmatmul.mubr.bf16.gmra.mrb[0].mxu0 %v3441
  %v3556 = vpop.f32.mrb[0].mxu0
  %v3557 = vadd.f32 0.0, %v3556
  %v3558 = vpop.f32.mrb[0].mxu0
  %v3559 = vpop.f32.mrb[0].mxu0
  %v3560 = vadd.f32 0.0, %v3559
  %v3561 = vpop.f32.mrb[0].mxu0
  %3562 = vmatprep.mubr.bf16.mxu0 0
  %3563 = vmatmul.mubr.bf16.gmra.mrb[0].mxu0 %v3444
  %v3564 = vpop.f32.mrb[0].mxu0
  %v3565 = vadd.f32 0.0, %v3564
  %v3566 = vpop.f32.mrb[0].mxu0
  %v3567 = vpop.f32.mrb[0].mxu0
  %v3568 = vadd.f32 0.0, %v3567
  %v3569 = vpop.f32.mrb[0].mxu0
  %3570 = vmatprep.mubr.bf16.mxu0 0
  %3571 = vmatmul.mubr.bf16.gmra.mrb[0].mxu0 %v3447
  %v3572 = vpop.f32.mrb[0].mxu0
  %v3573 = vadd.f32 0.0, %v3572
  %v3574 = vpop.f32.mrb[0].mxu0
  %v3575 = vpop.f32.mrb[0].mxu0
  %v3576 = vadd.f32 0.0, %v3575
  %v3577 = vpop.f32.mrb[0].mxu0
  %3578 = vmatprep.mubr.bf16.mxu0 0
  %3579 = vmatmul.mubr.bf16.gmra.mrb[0].mxu0 %v3450
  %v3580 = vpop.f32.mrb[0].mxu0
  %v3581 = vadd.f32 0.0, %v3580
  %v3582 = vpop.f32.mrb[0].mxu0
  %v3583 = vpop.f32.mrb[0].mxu0
  %v3584 = vadd.f32 0.0, %v3583
  %v3585 = vpop.f32.mrb[0].mxu0
  %3586 = vmatprep.mubr.bf16.mxu0 0
  %3587 = vmatmul.mubr.bf16.gmra.mrb[0].mxu0 %v3453
  %v3588 = vpop.f32.mrb[0].mxu0
  %v3589 = vadd.f32 0.0, %v3588
  %v3590 = vpop.f32.mrb[0].mxu0
  %v3591 = vpop.f32.mrb[0].mxu0
  %v3592 = vadd.f32 0.0, %v3591
  %v3593 = vpop.f32.mrb[0].mxu0
  %3594 = vmatprep.mubr.bf16.mxu0 0
  %3595 = vmatmul.mubr.bf16.gmra.mrb[0].mxu0 %v3456
  %v3596 = vpop.f32.mrb[0].mxu0
  %v3597 = vadd.f32 0.0, %v3596
  %v3598 = vpop.f32.mrb[0].mxu0
  %v3599 = vpop.f32.mrb[0].mxu0
  %v3600 = vadd.f32 0.0, %v3599
  %v3601 = vpop.f32.mrb[0].mxu0
  %3602 = vmatprep.mubr.bf16.mxu0 0
  %3603 = vmatmul.mubr.bf16.gmra.mrb[0].mxu0 %v3459
  %v3604 = vpop.f32.mrb[0].mxu0
  %v3605 = vadd.f32 0.0, %v3604
  %v3606 = vpop.f32.mrb[0].mxu0
  %v3607 = vpop.f32.mrb[0].mxu0
  %v3608 = vadd.f32 0.0, %v3607
  %v3609 = vpop.f32.mrb[0].mxu0
  %3610 = vmatprep.mubr.bf16.mxu0 0
  %3611 = vmatmul.mubr.bf16.gmra.mrb[0].mxu0 %v3462
  %v3612 = vpop.f32.mrb[0].mxu0
  %v3613 = vadd.f32 0.0, %v3612
  %v3614 = vpop.f32.mrb[0].mxu0
  %v3615 = vpop.f32.mrb[0].mxu0
  %v3616 = vadd.f32 0.0, %v3615
  %v3617 = vpop.f32.mrb[0].mxu0
  %3618 = vmatprep.mubr.bf16.mxu0 0
  %3619 = vmatmul.mubr.bf16.gmra.mrb[0].mxu0 %v3465
  %v3620 = vpop.f32.mrb[0].mxu0
  %v3621 = vadd.f32 0.0, %v3620
  %v3622 = vpop.f32.mrb[0].mxu0
  %v3623 = vpop.f32.mrb[0].mxu0
  %v3624 = vadd.f32 0.0, %v3623
  %v3625 = vpop.f32.mrb[0].mxu0
  %3626 = vmatprep.mubr.bf16.mxu0 0
  %3627 = vmatmul.mubr.bf16.gmra.mrb[0].mxu0 %v3468
  %v3628 = vpop.f32.mrb[0].mxu0
  %v3629 = vadd.f32 0.0, %v3628
  %v3630 = vpop.f32.mrb[0].mxu0
  %v3631 = vpop.f32.mrb[0].mxu0
  %v3632 = vadd.f32 0.0, %v3631
  %v3633 = vpop.f32.mrb[0].mxu0
  %3634 = vmatprep.mubr.bf16.mxu0 0
  %3635 = vmatmul.mubr.bf16.gmra.mrb[0].mxu0 %v3471
  %v3636 = vpop.f32.mrb[0].mxu0
  %v3637 = vadd.f32 0.0, %v3636
  %v3638 = vpop.f32.mrb[0].mxu0
  %v3639 = vpop.f32.mrb[0].mxu0
  %v3640 = vadd.f32 0.0, %v3639
  %v3641 = vpop.f32.mrb[0].mxu0
  %3642 = vmatprep.mubr.bf16.mxu0 0
  %3643 = vmatmul.mubr.bf16.gmra.mrb[0].mxu0 %v3474
  %v3644 = vpop.f32.mrb[0].mxu0
  %v3645 = vadd.f32 0.0, %v3644
  %v3646 = vpop.f32.mrb[0].mxu0
  %v3647 = vpop.f32.mrb[0].mxu0
  %v3648 = vadd.f32 0.0, %v3647
  %v3649 = vpop.f32.mrb[0].mxu0
  %3650 = vmatprep.mubr.bf16.mxu0 0
  %3651 = vmatmul.mubr.bf16.gmra.mrb[0].mxu0 %v3477
  %v3652 = vpop.f32.mrb[0].mxu0
  %v3653 = vadd.f32 0.0, %v3652
  %v3654 = vpop.f32.mrb[0].mxu0
  %v3655 = vpop.f32.mrb[0].mxu0
  %v3656 = vadd.f32 0.0, %v3655
  %v3657 = vpop.f32.mrb[0].mxu0
  %3658 = vdwg.mxu0
  %v3659 = vld [vmem:[#allocation2] sm:$0xff]
  %v3660 = vld [vmem:[#allocation2 + $0x8] sm:$0xff]
  %v3661 = vld [vmem:[#allocation2 + $0x10] sm:$0xff]
  %v3662 = vld [vmem:[#allocation2 + $0x18] sm:$0xff]
  %v3663 = vld [vmem:[#allocation2 + $0x20] sm:$0xff]
  %v3664 = vld [vmem:[#allocation2 + $0x28] sm:$0xff]
  %v3665 = vld [vmem:[#allocation2 + $0x30] sm:$0xff]
  %v3666 = vld [vmem:[#allocation2 + $0x38] sm:$0xff]
  %v3667 = vld [vmem:[#allocation2 + $0x40] sm:$0xff]
  %v3668 = vld [vmem:[#allocation2 + $0x48] sm:$0xff]
  %v3669 = vld [vmem:[#allocation2 + $0x50] sm:$0xff]
  %v3670 = vld [vmem:[#allocation2 + $0x58] sm:$0xff]
  %v3671 = vld [vmem:[#allocation2 + $0x60] sm:$0xff]
  %v3672 = vld [vmem:[#allocation2 + $0x68] sm:$0xff]
  %v3673 = vld [vmem:[#allocation2 + $0x70] sm:$0xff]
  %v3674 = vld [vmem:[#allocation2 + $0x78] sm:$0xff]
  %v3675 = vld [vmem:[#allocation2 + $0x80] sm:$0xff]
  %v3676 = vld [vmem:[#allocation2 + $0x88] sm:$0xff]
  %v3677 = vld [vmem:[#allocation2 + $0x90] sm:$0xff]
  %v3678 = vld [vmem:[#allocation2 + $0x98] sm:$0xff]
  %v3679 = vld [vmem:[#allocation2 + $0xa0] sm:$0xff]
  %v3680 = vld [vmem:[#allocation2 + $0xa8] sm:$0xff]
  %v3681 = vld [vmem:[#allocation2 + $0xb0] sm:$0xff]
  %v3682 = vld [vmem:[#allocation2 + $0xb8] sm:$0xff]
  %v3683 = vld [vmem:[#allocation2 + $0xc0] sm:$0xff]
  %v3684 = vld [vmem:[#allocation2 + $0xc8] sm:$0xff]
  %v3685 = vld [vmem:[#allocation2 + $0xd0] sm:$0xff]
  %v3686 = vld [vmem:[#allocation2 + $0xd8] sm:$0xff]
  %v3687 = vld [vmem:[#allocation2 + $0xe0] sm:$0xff]
  %v3688 = vld [vmem:[#allocation2 + $0xe8] sm:$0xff]
  %v3689 = vld [vmem:[#allocation2 + $0xf0] sm:$0xff]
  %v3690 = vld [vmem:[#allocation2 + $0xf8] sm:$0xff]
  %v3691 = vld [vmem:[#allocation2 + $0x100] sm:$0xff]
  %v3692 = vld [vmem:[#allocation2 + $0x108] sm:$0xff]
  %v3693 = vld [vmem:[#allocation2 + $0x110] sm:$0xff]
  %v3694 = vld [vmem:[#allocation2 + $0x118] sm:$0xff]
  %v3695 = vadd.f32 %v3659, %v3517
  %v3696 = vadd.f32 %v3660, %v3520
  %v3697 = vadd.f32 %v3661, %v3525
  %v3698 = vadd.f32 %v3662, %v3528
  %v3699 = vadd.f32 %v3663, %v3533
  %v3700 = vadd.f32 %v3664, %v3536
  %v3701 = vadd.f32 %v3665, %v3541
  %v3702 = vadd.f32 %v3666, %v3544
  %v3703 = vadd.f32 %v3667, %v3549
  %v3704 = vadd.f32 %v3668, %v3552
  %v3705 = vadd.f32 %v3669, %v3557
  %v3706 = vadd.f32 %v3670, %v3560
  %v3707 = vadd.f32 %v3671, %v3565
  %v3708 = vadd.f32 %v3672, %v3568
  %v3709 = vadd.f32 %v3673, %v3573
  %v3710 = vadd.f32 %v3674, %v3576
  %v3711 = vadd.f32 %v3675, %v3581
  %v3712 = vadd.f32 %v3676, %v3584
  %v3713 = vadd.f32 %v3677, %v3589
  %v3714 = vadd.f32 %v3678, %v3592
  %v3715 = vadd.f32 %v3679, %v3597
  %v3716 = vadd.f32 %v3680, %v3600
  %v3717 = vadd.f32 %v3681, %v3605
  %v3718 = vadd.f32 %v3682, %v3608
  %v3719 = vadd.f32 %v3683, %v3613
  %v3720 = vadd.f32 %v3684, %v3616
  %v3721 = vadd.f32 %v3685, %v3621
  %v3722 = vadd.f32 %v3686, %v3624
  %v3723 = vadd.f32 %v3687, %v3629
  %v3724 = vadd.f32 %v3688, %v3632
  %v3725 = vadd.f32 %v3689, %v3637
  %v3726 = vadd.f32 %v3690, %v3640
  %v3727 = vadd.f32 %v3691, %v3645
  %v3728 = vadd.f32 %v3692, %v3648
  %v3729 = vadd.f32 %v3693, %v3653
  %v3730 = vadd.f32 %v3694, %v3656
  %3731 = vst [vmem:[#allocation2] sm:$0xff] %v3695
  %3732 = vst [vmem:[#allocation2 + $0x8] sm:$0xff] %v3696
  %3733 = vst [vmem:[#allocation2 + $0x10] sm:$0xff] %v3697
  %3734 = vst [vmem:[#allocation2 + $0x18] sm:$0xff] %v3698
  %3735 = vst [vmem:[#allocation2 + $0x20] sm:$0xff] %v3699
  %3736 = vst [vmem:[#allocation2 + $0x28] sm:$0xff] %v3700
  %3737 = vst [vmem:[#allocation2 + $0x30] sm:$0xff] %v3701
  %3738 = vst [vmem:[#allocation2 + $0x38] sm:$0xff] %v3702
  %3739 = vst [vmem:[#allocation2 + $0x40] sm:$0xff] %v3703
  %3740 = vst [vmem:[#allocation2 + $0x48] sm:$0xff] %v3704
  %3741 = vst [vmem:[#allocation2 + $0x50] sm:$0xff] %v3705
  %3742 = vst [vmem:[#allocation2 + $0x58] sm:$0xff] %v3706
  %3743 = vst [vmem:[#allocation2 + $0x60] sm:$0xff] %v3707
  %3744 = vst [vmem:[#allocation2 + $0x68] sm:$0xff] %v3708
  %3745 = vst [vmem:[#allocation2 + $0x70] sm:$0xff] %v3709
  %3746 = vst [vmem:[#allocation2 + $0x78] sm:$0xff] %v3710
  %3747 = vst [vmem:[#allocation2 + $0x80] sm:$0xff] %v3711
  %3748 = vst [vmem:[#allocation2 + $0x88] sm:$0xff] %v3712
  %3749 = vst [vmem:[#allocation2 + $0x90] sm:$0xff] %v3713
  %3750 = vst [vmem:[#allocation2 + $0x98] sm:$0xff] %v3714
  %3751 = vst [vmem:[#allocation2 + $0xa0] sm:$0xff] %v3715
  %3752 = vst [vmem:[#allocation2 + $0xa8] sm:$0xff] %v3716
  %3753 = vst [vmem:[#allocation2 + $0xb0] sm:$0xff] %v3717
  %3754 = vst [vmem:[#allocation2 + $0xb8] sm:$0xff] %v3718
  %3755 = vst [vmem:[#allocation2 + $0xc0] sm:$0xff] %v3719
  %3756 = vst [vmem:[#allocation2 + $0xc8] sm:$0xff] %v3720
  %3757 = vst [vmem:[#allocation2 + $0xd0] sm:$0xff] %v3721
  %3758 = vst [vmem:[#allocation2 + $0xd8] sm:$0xff] %v3722
  %3759 = vst [vmem:[#allocation2 + $0xe0] sm:$0xff] %v3723
  %3760 = vst [vmem:[#allocation2 + $0xe8] sm:$0xff] %v3724
  %3761 = vst [vmem:[#allocation2 + $0xf0] sm:$0xff] %v3725
  %3762 = vst [vmem:[#allocation2 + $0xf8] sm:$0xff] %v3726
  %3763 = vst [vmem:[#allocation2 + $0x100] sm:$0xff] %v3727
  %3764 = vst [vmem:[#allocation2 + $0x108] sm:$0xff] %v3728
  %3765 = vst [vmem:[#allocation2 + $0x110] sm:$0xff] %v3729
  %3766 = vst [vmem:[#allocation2 + $0x118] sm:$0xff] %v3730
  %v3767 = vld [vmem:[%s0 + $0x10] sm:$0xc]
  %v3768 = vld [vmem:[%s0 + $0x14] sm:$0xf]
  %v3769 = vld [vmem:[%s0 + $0x18] sm:$0xf]
  %v3770 = vld [vmem:[%s0 + $0x1c] sm:$0xf]
  %v3771 = vld [vmem:[%s0 + $0x20] sm:$0xf]
  %v3772 = vld [vmem:[%s0 + $0x24] sm:$0xf]
  %v3773 = vld [vmem:[%s0 + $0x28] sm:$0xf]
  %v3774 = vld [vmem:[%s0 + $0x2c] sm:$0xf]
  %v3775 = vld [vmem:[%s0 + $0x30] sm:$0xf]
  %v3776 = vld [vmem:[%s0 + $0x34] sm:$0xf]
  %v3777 = vld [vmem:[%s0 + $0x38] sm:$0xf]
  %v3778 = vld [vmem:[%s0 + $0x3c] sm:$0xf]
  %v3779 = vld [vmem:[%s0 + $0x40] sm:$0xf]
  %v3780 = vld [vmem:[%s0 + $0x44] sm:$0xf]
  %v3781 = vld [vmem:[%s0 + $0x48] sm:$0xf]
  %v3782 = vld [vmem:[%s0 + $0x4c] sm:$0xf]
  %v3783 = vld [vmem:[%s0 + $0x50] sm:$0xf]
  %v3784 = vld [vmem:[%s0 + $0x54] sm:$0xf]
  %v3785 = vld [vmem:[%s0 + $0x58] sm:$0xf]
  %v3786 = vld [vmem:[%s0 + $0x5c] sm:$0xf]
  %v3787 = vld [vmem:[%s0 + $0x60] sm:$0xf]
  %v3788 = vld [vmem:[%s0 + $0x64] sm:$0xf]
  %v3789 = vld [vmem:[%s0 + $0x68] sm:$0xf]
  %v3790 = vld [vmem:[%s0 + $0x6c] sm:$0xf]
  %v3791 = vld [vmem:[%s0 + $0x70] sm:$0xf]
  %v3792 = vld [vmem:[%s0 + $0x74] sm:$0xf]
  %v3793 = vld [vmem:[%s0 + $0x78] sm:$0xf]
  %v3794 = vld [vmem:[%s0 + $0x7c] sm:$0xf]
  %v3795 = vld [vmem:[%s0 + $0x80] sm:$0xf]
  %v3796 = vld [vmem:[%s0 + $0x84] sm:$0xf]
  %v3797 = vld [vmem:[%s0 + $0x88] sm:$0xf]
  %v3798 = vld [vmem:[%s0 + $0x8c] sm:$0xf]
  %v3799 = vld [vmem:[%s0 + $0x90] sm:$0xf]
  %v3800 = vld [vmem:[%s0 + $0x94] sm:$0xf]
  %v3801 = vld [vmem:[%s0 + $0x98] sm:$0xf]
  %v3802 = vld [vmem:[%s0 + $0x9c] sm:$0xf]
  %v3803 = vld [vmem:[%s0 + $0xa0] sm:$0x7]
  %s3804 = scalar_lea.vmem %s1, 28
  %v3805 = vld [vmem:[%s3804] sm:$0xf]
  %v3843 = vunpack.c.l.b16 %v3767
  %v3844 = vunpack.c.l.b16 %v3768
  %v3845 = vunpack.c.l.b16 %v3769
  %v3846 = vunpack.c.l.b16 %v3770
  %v3847 = vunpack.c.l.b16 %v3771
  %v3848 = vunpack.c.l.b16 %v3772
  %v3849 = vunpack.c.l.b16 %v3773
  %v3850 = vunpack.c.l.b16 %v3774
  %v3851 = vunpack.c.l.b16 %v3775
  %v3852 = vunpack.c.l.b16 %v3776
  %v3853 = vunpack.c.l.b16 %v3777
  %v3854 = vunpack.c.l.b16 %v3778
  %v3855 = vunpack.c.l.b16 %v3779
  %v3856 = vunpack.c.l.b16 %v3780
  %v3857 = vunpack.c.l.b16 %v3781
  %v3858 = vunpack.c.l.b16 %v3782
  %v3859 = vunpack.c.l.b16 %v3783
  %v3860 = vunpack.c.l.b16 %v3784
  %v3861 = vunpack.c.l.b16 %v3785
  %v3862 = vunpack.c.l.b16 %v3786
  %v3863 = vunpack.c.l.b16 %v3787
  %v3864 = vunpack.c.l.b16 %v3788
  %v3865 = vunpack.c.l.b16 %v3789
  %v3866 = vunpack.c.l.b16 %v3790
  %v3867 = vunpack.c.l.b16 %v3791
  %v3868 = vunpack.c.l.b16 %v3792
  %v3869 = vunpack.c.l.b16 %v3793
  %v3870 = vunpack.c.l.b16 %v3794
  %v3871 = vunpack.c.l.b16 %v3795
  %v3872 = vunpack.c.l.b16 %v3796
  %v3873 = vunpack.c.l.b16 %v3797
  %v3874 = vunpack.c.l.b16 %v3798
  %v3875 = vunpack.c.l.b16 %v3799
  %v3876 = vunpack.c.l.b16 %v3800
  %v3877 = vunpack.c.l.b16 %v3801
  %v3878 = vunpack.c.l.b16 %v3802
  %v3879 = vunpack.c.l.b16 %v3803
  %v3880 = vpack.c.b16 %v3844, %v3843
  %v3881 = vpack.c.b16 %v3846, %v3845
  %v3882 = vpack.c.b16 %v3848, %v3847
  %v3883 = vpack.c.b16 %v3850, %v3849
  %v3884 = vpack.c.b16 %v3852, %v3851
  %v3885 = vpack.c.b16 %v3854, %v3853
  %v3886 = vpack.c.b16 %v3856, %v3855
  %v3887 = vpack.c.b16 %v3858, %v3857
  %v3888 = vpack.c.b16 %v3860, %v3859
  %v3889 = vpack.c.b16 %v3862, %v3861
  %v3890 = vpack.c.b16 %v3864, %v3863
  %v3891 = vpack.c.b16 %v3866, %v3865
  %v3892 = vpack.c.b16 %v3868, %v3867
  %v3893 = vpack.c.b16 %v3870, %v3869
  %v3894 = vpack.c.b16 %v3872, %v3871
  %v3895 = vpack.c.b16 %v3874, %v3873
  %v3896 = vpack.c.b16 %v3876, %v3875
  %v3897 = vpack.c.b16 %v3878, %v3877
  %v3898 = vpack.c.b16 %v3879, %v3879
  %vm3899 = vsmask.f32 5376
  %v3901 = vshrl.u32 %v3880, 16
  %v3903 = vrot.slane %v3901, 2
  %v3904 = vshll.u32 %v3880, 16
  %v3906 = vrot.slane %v3904, 3
  %v3907 = vor.u32 %v3903, %v3906
  %v3909 = vshrl.u32 %v3881, 16
  %v3911 = vrot.slane %v3909, 2
  %v3912 = vshll.u32 %v3881, 16
  %v3914 = vrot.slane %v3912, 3
  %v3915 = vor.u32 %v3911, %v3914
  %v3916 = vsel %vm3899, %v3907, %v3915
  %v3918 = vshrl.u32 %v3882, 16
  %v3920 = vrot.slane %v3918, 2
  %v3921 = vshll.u32 %v3882, 16
  %v3923 = vrot.slane %v3921, 3
  %v3924 = vor.u32 %v3920, %v3923
  %v3925 = vsel %vm3899, %v3915, %v3924
  %v3927 = vshrl.u32 %v3883, 16
  %v3929 = vrot.slane %v3927, 2
  %v3930 = vshll.u32 %v3883, 16
  %v3932 = vrot.slane %v3930, 3
  %v3933 = vor.u32 %v3929, %v3932
  %v3934 = vsel %vm3899, %v3924, %v3933
  %v3936 = vshrl.u32 %v3884, 16
  %v3938 = vrot.slane %v3936, 2
  %v3939 = vshll.u32 %v3884, 16
  %v3941 = vrot.slane %v3939, 3
  %v3942 = vor.u32 %v3938, %v3941
  %v3943 = vsel %vm3899, %v3933, %v3942
  %v3945 = vshrl.u32 %v3885, 16
  %v3947 = vrot.slane %v3945, 2
  %v3948 = vshll.u32 %v3885, 16
  %v3950 = vrot.slane %v3948, 3
  %v3951 = vor.u32 %v3947, %v3950
  %v3952 = vsel %vm3899, %v3942, %v3951
  %v3954 = vshrl.u32 %v3886, 16
  %v3956 = vrot.slane %v3954, 2
  %v3957 = vshll.u32 %v3886, 16
  %v3959 = vrot.slane %v3957, 3
  %v3960 = vor.u32 %v3956, %v3959
  %v3961 = vsel %vm3899, %v3951, %v3960
  %v3963 = vshrl.u32 %v3887, 16
  %v3965 = vrot.slane %v3963, 2
  %v3966 = vshll.u32 %v3887, 16
  %v3968 = vrot.slane %v3966, 3
  %v3969 = vor.u32 %v3965, %v3968
  %v3970 = vsel %vm3899, %v3960, %v3969
  %v3972 = vshrl.u32 %v3888, 16
  %v3974 = vrot.slane %v3972, 2
  %v3975 = vshll.u32 %v3888, 16
  %v3977 = vrot.slane %v3975, 3
  %v3978 = vor.u32 %v3974, %v3977
  %v3979 = vsel %vm3899, %v3969, %v3978
  %v3981 = vshrl.u32 %v3889, 16
  %v3983 = vrot.slane %v3981, 2
  %v3984 = vshll.u32 %v3889, 16
  %v3986 = vrot.slane %v3984, 3
  %v3987 = vor.u32 %v3983, %v3986
  %v3988 = vsel %vm3899, %v3978, %v3987
  %v3990 = vshrl.u32 %v3890, 16
  %v3992 = vrot.slane %v3990, 2
  %v3993 = vshll.u32 %v3890, 16
  %v3995 = vrot.slane %v3993, 3
  %v3996 = vor.u32 %v3992, %v3995
  %v3997 = vsel %vm3899, %v3987, %v3996
  %v3999 = vshrl.u32 %v3891, 16
  %v4001 = vrot.slane %v3999, 2
  %v4002 = vshll.u32 %v3891, 16
  %v4004 = vrot.slane %v4002, 3
  %v4005 = vor.u32 %v4001, %v4004
  %v4006 = vsel %vm3899, %v3996, %v4005
  %v4008 = vshrl.u32 %v3892, 16
  %v4010 = vrot.slane %v4008, 2
  %v4011 = vshll.u32 %v3892, 16
  %v4013 = vrot.slane %v4011, 3
  %v4014 = vor.u32 %v4010, %v4013
  %v4015 = vsel %vm3899, %v4005, %v4014
  %v4017 = vshrl.u32 %v3893, 16
  %v4019 = vrot.slane %v4017, 2
  %v4020 = vshll.u32 %v3893, 16
  %v4022 = vrot.slane %v4020, 3
  %v4023 = vor.u32 %v4019, %v4022
  %v4024 = vsel %vm3899, %v4014, %v4023
  %v4026 = vshrl.u32 %v3894, 16
  %v4028 = vrot.slane %v4026, 2
  %v4029 = vshll.u32 %v3894, 16
  %v4031 = vrot.slane %v4029, 3
  %v4032 = vor.u32 %v4028, %v4031
  %v4033 = vsel %vm3899, %v4023, %v4032
  %v4035 = vshrl.u32 %v3895, 16
  %v4037 = vrot.slane %v4035, 2
  %v4038 = vshll.u32 %v3895, 16
  %v4040 = vrot.slane %v4038, 3
  %v4041 = vor.u32 %v4037, %v4040
  %v4042 = vsel %vm3899, %v4032, %v4041
  %v4044 = vshrl.u32 %v3896, 16
  %v4046 = vrot.slane %v4044, 2
  %v4047 = vshll.u32 %v3896, 16
  %v4049 = vrot.slane %v4047, 3
  %v4050 = vor.u32 %v4046, %v4049
  %v4051 = vsel %vm3899, %v4041, %v4050
  %v4053 = vshrl.u32 %v3897, 16
  %v4055 = vrot.slane %v4053, 2
  %v4056 = vshll.u32 %v3897, 16
  %v4058 = vrot.slane %v4056, 3
  %v4059 = vor.u32 %v4055, %v4058
  %v4060 = vsel %vm3899, %v4050, %v4059
  %v4062 = vshrl.u32 %v3898, 16
  %v4064 = vrot.slane %v4062, 2
  %v4065 = vshll.u32 %v3898, 16
  %v4067 = vrot.slane %v4065, 3
  %v4068 = vor.u32 %v4064, %v4067
  %v4069 = vsel %vm3899, %v4059, %v4068
  %v4071 = vsel %vm181, %v3916, 0
  %v4074 = vsel %vm181, %v3925, 0
  %v4077 = vsel %vm181, %v3934, 0
  %v4080 = vsel %vm181, %v3943, 0
  %v4083 = vsel %vm181, %v3952, 0
  %v4086 = vsel %vm181, %v3961, 0
  %v4089 = vsel %vm181, %v3970, 0
  %v4092 = vsel %vm181, %v3979, 0
  %v4095 = vsel %vm181, %v3988, 0
  %v4098 = vsel %vm181, %v3997, 0
  %v4101 = vsel %vm181, %v4006, 0
  %v4104 = vsel %vm181, %v4015, 0
  %v4107 = vsel %vm181, %v4024, 0
  %v4110 = vsel %vm181, %v4033, 0
  %v4113 = vsel %vm181, %v4042, 0
  %v4116 = vsel %vm181, %v4051, 0
  %v4119 = vsel %vm181, %v4060, 0
  %v4122 = vsel %vm181, %v4069, 0
  %v4125 = vsel %vm236, %v3805, 0
  %4127 = vmatprep.subr.bf16.mxu0 0
  %4128 = vmatpush1.bf16.msra.mxu0 %v4125
  %4129 = vmatprep.subr.bf16.mxu0 0
  %4130 = vmatpush1.bf16.msra.mxu0 0
  %4131 = vmatprep.subr.bf16.mxu0 0
  %4132 = vmatpush1.bf16.msra.mxu0 0
  %4133 = vmatprep.subr.bf16.mxu0 0
  %4134 = vmatpush1.bf16.msra.mxu0 0
  %4135 = vmatprep.subr.bf16.mxu0 0
  %4136 = vmatpush1.bf16.msra.mxu0 0
  %4137 = vmatprep.subr.bf16.mxu0 0
  %4138 = vmatpush1.bf16.msra.mxu0 0
  %4139 = vmatprep.subr.bf16.mxu0 0
  %4140 = vmatpush1.bf16.msra.mxu0 0
  %4141 = vmatprep.subr.bf16.mxu0 0
  %4142 = vmatpush1.bf16.msra.mxu0 0
  %4143 = vmatprep.subr.bf16.mxu0 0
  %4144 = vmatpush1.bf16.msra.mxu0 0
  %4145 = vmatprep.subr.bf16.mxu0 0
  %4146 = vmatpush1.bf16.msra.mxu0 0
  %4147 = vmatprep.subr.bf16.mxu0 0
  %4148 = vmatpush1.bf16.msra.mxu0 0
  %4149 = vmatprep.subr.bf16.mxu0 0
  %4150 = vmatpush1.bf16.msra.mxu0 0
  %4151 = vmatprep.subr.bf16.mxu0 0
  %4152 = vmatpush1.bf16.msra.mxu0 0
  %4153 = vmatprep.subr.bf16.mxu0 0
  %4154 = vmatpush1.bf16.msra.mxu0 0
  %4155 = vmatprep.subr.bf16.mxu0 0
  %4156 = vmatpush1.bf16.msra.mxu0 0
  %4157 = vmatprep.subr.bf16.mxu0 0
  %4158 = vmatpush1.bf16.msra.mxu0 0
  %4159 = vmatprep.mubr.bf16.mxu0 0
  %4160 = vmatmul.mubr.bf16.gmra.mrb[0].mxu0 %v4071
  %v4161 = vpop.f32.mrb[0].mxu0
  %v4162 = vadd.f32 0.0, %v4161
  %v4163 = vpop.f32.mrb[0].mxu0
  %v4164 = vpop.f32.mrb[0].mxu0
  %v4165 = vadd.f32 0.0, %v4164
  %v4166 = vpop.f32.mrb[0].mxu0
  %4167 = vmatprep.mubr.bf16.mxu0 0
  %4168 = vmatmul.mubr.bf16.gmra.mrb[0].mxu0 %v4074
  %v4169 = vpop.f32.mrb[0].mxu0
  %v4170 = vadd.f32 0.0, %v4169
  %v4171 = vpop.f32.mrb[0].mxu0
  %v4172 = vpop.f32.mrb[0].mxu0
  %v4173 = vadd.f32 0.0, %v4172
  %v4174 = vpop.f32.mrb[0].mxu0
  %4175 = vmatprep.mubr.bf16.mxu0 0
  %4176 = vmatmul.mubr.bf16.gmra.mrb[0].mxu0 %v4077
  %v4177 = vpop.f32.mrb[0].mxu0
  %v4178 = vadd.f32 0.0, %v4177
  %v4179 = vpop.f32.mrb[0].mxu0
  %v4180 = vpop.f32.mrb[0].mxu0
  %v4181 = vadd.f32 0.0, %v4180
  %v4182 = vpop.f32.mrb[0].mxu0
  %4183 = vmatprep.mubr.bf16.mxu0 0
  %4184 = vmatmul.mubr.bf16.gmra.mrb[0].mxu0 %v4080
  %v4185 = vpop.f32.mrb[0].mxu0
  %v4186 = vadd.f32 0.0, %v4185
  %v4187 = vpop.f32.mrb[0].mxu0
  %v4188 = vpop.f32.mrb[0].mxu0
  %v4189 = vadd.f32 0.0, %v4188
  %v4190 = vpop.f32.mrb[0].mxu0
  %4191 = vmatprep.mubr.bf16.mxu0 0
  %4192 = vmatmul.mubr.bf16.gmra.mrb[0].mxu0 %v4083
  %v4193 = vpop.f32.mrb[0].mxu0
  %v4194 = vadd.f32 0.0, %v4193
  %v4195 = vpop.f32.mrb[0].mxu0
  %v4196 = vpop.f32.mrb[0].mxu0
  %v4197 = vadd.f32 0.0, %v4196
  %v4198 = vpop.f32.mrb[0].mxu0
  %4199 = vmatprep.mubr.bf16.mxu0 0
  %4200 = vmatmul.mubr.bf16.gmra.mrb[0].mxu0 %v4086
  %v4201 = vpop.f32.mrb[0].mxu0
  %v4202 = vadd.f32 0.0, %v4201
  %v4203 = vpop.f32.mrb[0].mxu0
  %v4204 = vpop.f32.mrb[0].mxu0
  %v4205 = vadd.f32 0.0, %v4204
  %v4206 = vpop.f32.mrb[0].mxu0
  %4207 = vmatprep.mubr.bf16.mxu0 0
  %4208 = vmatmul.mubr.bf16.gmra.mrb[0].mxu0 %v4089
  %v4209 = vpop.f32.mrb[0].mxu0
  %v4210 = vadd.f32 0.0, %v4209
  %v4211 = vpop.f32.mrb[0].mxu0
  %v4212 = vpop.f32.mrb[0].mxu0
  %v4213 = vadd.f32 0.0, %v4212
  %v4214 = vpop.f32.mrb[0].mxu0
  %4215 = vmatprep.mubr.bf16.mxu0 0
  %4216 = vmatmul.mubr.bf16.gmra.mrb[0].mxu0 %v4092
  %v4217 = vpop.f32.mrb[0].mxu0
  %v4218 = vadd.f32 0.0, %v4217
  %v4219 = vpop.f32.mrb[0].mxu0
  %v4220 = vpop.f32.mrb[0].mxu0
  %v4221 = vadd.f32 0.0, %v4220
  %v4222 = vpop.f32.mrb[0].mxu0
  %4223 = vmatprep.mubr.bf16.mxu0 0
  %4224 = vmatmul.mubr.bf16.gmra.mrb[0].mxu0 %v4095
  %v4225 = vpop.f32.mrb[0].mxu0
  %v4226 = vadd.f32 0.0, %v4225
  %v4227 = vpop.f32.mrb[0].mxu0
  %v4228 = vpop.f32.mrb[0].mxu0
  %v4229 = vadd.f32 0.0, %v4228
  %v4230 = vpop.f32.mrb[0].mxu0
  %4231 = vmatprep.mubr.bf16.mxu0 0
  %4232 = vmatmul.mubr.bf16.gmra.mrb[0].mxu0 %v4098
  %v4233 = vpop.f32.mrb[0].mxu0
  %v4234 = vadd.f32 0.0, %v4233
  %v4235 = vpop.f32.mrb[0].mxu0
  %v4236 = vpop.f32.mrb[0].mxu0
  %v4237 = vadd.f32 0.0, %v4236
  %v4238 = vpop.f32.mrb[0].mxu0
  %4239 = vmatprep.mubr.bf16.mxu0 0
  %4240 = vmatmul.mubr.bf16.gmra.mrb[0].mxu0 %v4101
  %v4241 = vpop.f32.mrb[0].mxu0
  %v4242 = vadd.f32 0.0, %v4241
  %v4243 = vpop.f32.mrb[0].mxu0
  %v4244 = vpop.f32.mrb[0].mxu0
  %v4245 = vadd.f32 0.0, %v4244
  %v4246 = vpop.f32.mrb[0].mxu0
  %4247 = vmatprep.mubr.bf16.mxu0 0
  %4248 = vmatmul.mubr.bf16.gmra.mrb[0].mxu0 %v4104
  %v4249 = vpop.f32.mrb[0].mxu0
  %v4250 = vadd.f32 0.0, %v4249
  %v4251 = vpop.f32.mrb[0].mxu0
  %v4252 = vpop.f32.mrb[0].mxu0
  %v4253 = vadd.f32 0.0, %v4252
  %v4254 = vpop.f32.mrb[0].mxu0
  %4255 = vmatprep.mubr.bf16.mxu0 0
  %4256 = vmatmul.mubr.bf16.gmra.mrb[0].mxu0 %v4107
  %v4257 = vpop.f32.mrb[0].mxu0
  %v4258 = vadd.f32 0.0, %v4257
  %v4259 = vpop.f32.mrb[0].mxu0
  %v4260 = vpop.f32.mrb[0].mxu0
  %v4261 = vadd.f32 0.0, %v4260
  %v4262 = vpop.f32.mrb[0].mxu0
  %4263 = vmatprep.mubr.bf16.mxu0 0
  %4264 = vmatmul.mubr.bf16.gmra.mrb[0].mxu0 %v4110
  %v4265 = vpop.f32.mrb[0].mxu0
  %v4266 = vadd.f32 0.0, %v4265
  %v4267 = vpop.f32.mrb[0].mxu0
  %v4268 = vpop.f32.mrb[0].mxu0
  %v4269 = vadd.f32 0.0, %v4268
  %v4270 = vpop.f32.mrb[0].mxu0
  %4271 = vmatprep.mubr.bf16.mxu0 0
  %4272 = vmatmul.mubr.bf16.gmra.mrb[0].mxu0 %v4113
  %v4273 = vpop.f32.mrb[0].mxu0
  %v4274 = vadd.f32 0.0, %v4273
  %v4275 = vpop.f32.mrb[0].mxu0
  %v4276 = vpop.f32.mrb[0].mxu0
  %v4277 = vadd.f32 0.0, %v4276
  %v4278 = vpop.f32.mrb[0].mxu0
  %4279 = vmatprep.mubr.bf16.mxu0 0
  %4280 = vmatmul.mubr.bf16.gmra.mrb[0].mxu0 %v4116
  %v4281 = vpop.f32.mrb[0].mxu0
  %v4282 = vadd.f32 0.0, %v4281
  %v4283 = vpop.f32.mrb[0].mxu0
  %v4284 = vpop.f32.mrb[0].mxu0
  %v4285 = vadd.f32 0.0, %v4284
  %v4286 = vpop.f32.mrb[0].mxu0
  %4287 = vmatprep.mubr.bf16.mxu0 0
  %4288 = vmatmul.mubr.bf16.gmra.mrb[0].mxu0 %v4119
  %v4289 = vpop.f32.mrb[0].mxu0
  %v4290 = vadd.f32 0.0, %v4289
  %v4291 = vpop.f32.mrb[0].mxu0
  %v4292 = vpop.f32.mrb[0].mxu0
  %v4293 = vadd.f32 0.0, %v4292
  %v4294 = vpop.f32.mrb[0].mxu0
  %4295 = vmatprep.mubr.bf16.mxu0 0
  %4296 = vmatmul.mubr.bf16.gmra.mrb[0].mxu0 %v4122
  %v4297 = vpop.f32.mrb[0].mxu0
  %v4298 = vadd.f32 0.0, %v4297
  %v4299 = vpop.f32.mrb[0].mxu0
  %v4300 = vpop.f32.mrb[0].mxu0
  %v4301 = vadd.f32 0.0, %v4300
  %v4302 = vpop.f32.mrb[0].mxu0
  %4303 = vdwg.mxu0
  %v4304 = vld [vmem:[#allocation2] sm:$0xff]
  %v4305 = vld [vmem:[#allocation2 + $0x8] sm:$0xff]
  %v4306 = vld [vmem:[#allocation2 + $0x10] sm:$0xff]
  %v4307 = vld [vmem:[#allocation2 + $0x18] sm:$0xff]
  %v4308 = vld [vmem:[#allocation2 + $0x20] sm:$0xff]
  %v4309 = vld [vmem:[#allocation2 + $0x28] sm:$0xff]
  %v4310 = vld [vmem:[#allocation2 + $0x30] sm:$0xff]
  %v4311 = vld [vmem:[#allocation2 + $0x38] sm:$0xff]
  %v4312 = vld [vmem:[#allocation2 + $0x40] sm:$0xff]
  %v4313 = vld [vmem:[#allocation2 + $0x48] sm:$0xff]
  %v4314 = vld [vmem:[#allocation2 + $0x50] sm:$0xff]
  %v4315 = vld [vmem:[#allocation2 + $0x58] sm:$0xff]
  %v4316 = vld [vmem:[#allocation2 + $0x60] sm:$0xff]
  %v4317 = vld [vmem:[#allocation2 + $0x68] sm:$0xff]
  %v4318 = vld [vmem:[#allocation2 + $0x70] sm:$0xff]
  %v4319 = vld [vmem:[#allocation2 + $0x78] sm:$0xff]
  %v4320 = vld [vmem:[#allocation2 + $0x80] sm:$0xff]
  %v4321 = vld [vmem:[#allocation2 + $0x88] sm:$0xff]
  %v4322 = vld [vmem:[#allocation2 + $0x90] sm:$0xff]
  %v4323 = vld [vmem:[#allocation2 + $0x98] sm:$0xff]
  %v4324 = vld [vmem:[#allocation2 + $0xa0] sm:$0xff]
  %v4325 = vld [vmem:[#allocation2 + $0xa8] sm:$0xff]
  %v4326 = vld [vmem:[#allocation2 + $0xb0] sm:$0xff]
  %v4327 = vld [vmem:[#allocation2 + $0xb8] sm:$0xff]
  %v4328 = vld [vmem:[#allocation2 + $0xc0] sm:$0xff]
  %v4329 = vld [vmem:[#allocation2 + $0xc8] sm:$0xff]
  %v4330 = vld [vmem:[#allocation2 + $0xd0] sm:$0xff]
  %v4331 = vld [vmem:[#allocation2 + $0xd8] sm:$0xff]
  %v4332 = vld [vmem:[#allocation2 + $0xe0] sm:$0xff]
  %v4333 = vld [vmem:[#allocation2 + $0xe8] sm:$0xff]
  %v4334 = vld [vmem:[#allocation2 + $0xf0] sm:$0xff]
  %v4335 = vld [vmem:[#allocation2 + $0xf8] sm:$0xff]
  %v4336 = vld [vmem:[#allocation2 + $0x100] sm:$0xff]
  %v4337 = vld [vmem:[#allocation2 + $0x108] sm:$0xff]
  %v4338 = vld [vmem:[#allocation2 + $0x110] sm:$0xff]
  %v4339 = vld [vmem:[#allocation2 + $0x118] sm:$0xff]
  %v4340 = vadd.f32 %v4304, %v4162
  %v4341 = vadd.f32 %v4305, %v4165
  %v4342 = vadd.f32 %v4306, %v4170
  %v4343 = vadd.f32 %v4307, %v4173
  %v4344 = vadd.f32 %v4308, %v4178
  %v4345 = vadd.f32 %v4309, %v4181
  %v4346 = vadd.f32 %v4310, %v4186
  %v4347 = vadd.f32 %v4311, %v4189
  %v4348 = vadd.f32 %v4312, %v4194
  %v4349 = vadd.f32 %v4313, %v4197
  %v4350 = vadd.f32 %v4314, %v4202
  %v4351 = vadd.f32 %v4315, %v4205
  %v4352 = vadd.f32 %v4316, %v4210
  %v4353 = vadd.f32 %v4317, %v4213
  %v4354 = vadd.f32 %v4318, %v4218
  %v4355 = vadd.f32 %v4319, %v4221
  %v4356 = vadd.f32 %v4320, %v4226
  %v4357 = vadd.f32 %v4321, %v4229
  %v4358 = vadd.f32 %v4322, %v4234
  %v4359 = vadd.f32 %v4323, %v4237
  %v4360 = vadd.f32 %v4324, %v4242
  %v4361 = vadd.f32 %v4325, %v4245
  %v4362 = vadd.f32 %v4326, %v4250
  %v4363 = vadd.f32 %v4327, %v4253
  %v4364 = vadd.f32 %v4328, %v4258
  %v4365 = vadd.f32 %v4329, %v4261
  %v4366 = vadd.f32 %v4330, %v4266
  %v4367 = vadd.f32 %v4331, %v4269
  %v4368 = vadd.f32 %v4332, %v4274
  %v4369 = vadd.f32 %v4333, %v4277
  %v4370 = vadd.f32 %v4334, %v4282
  %v4371 = vadd.f32 %v4335, %v4285
  %v4372 = vadd.f32 %v4336, %v4290
  %v4373 = vadd.f32 %v4337, %v4293
  %v4374 = vadd.f32 %v4338, %v4298
  %v4375 = vadd.f32 %v4339, %v4301
  %4376 = vst [vmem:[#allocation2] sm:$0xff] %v4340
  %4377 = vst [vmem:[#allocation2 + $0x8] sm:$0xff] %v4341
  %4378 = vst [vmem:[#allocation2 + $0x10] sm:$0xff] %v4342
  %4379 = vst [vmem:[#allocation2 + $0x18] sm:$0xff] %v4343
  %4380 = vst [vmem:[#allocation2 + $0x20] sm:$0xff] %v4344
  %4381 = vst [vmem:[#allocation2 + $0x28] sm:$0xff] %v4345
  %4382 = vst [vmem:[#allocation2 + $0x30] sm:$0xff] %v4346
  %4383 = vst [vmem:[#allocation2 + $0x38] sm:$0xff] %v4347
  %4384 = vst [vmem:[#allocation2 + $0x40] sm:$0xff] %v4348
  %4385 = vst [vmem:[#allocation2 + $0x48] sm:$0xff] %v4349
  %4386 = vst [vmem:[#allocation2 + $0x50] sm:$0xff] %v4350
  %4387 = vst [vmem:[#allocation2 + $0x58] sm:$0xff] %v4351
  %4388 = vst [vmem:[#allocation2 + $0x60] sm:$0xff] %v4352
  %4389 = vst [vmem:[#allocation2 + $0x68] sm:$0xff] %v4353
  %4390 = vst [vmem:[#allocation2 + $0x70] sm:$0xff] %v4354
  %4391 = vst [vmem:[#allocation2 + $0x78] sm:$0xff] %v4355
  %4392 = vst [vmem:[#allocation2 + $0x80] sm:$0xff] %v4356
  %4393 = vst [vmem:[#allocation2 + $0x88] sm:$0xff] %v4357
  %4394 = vst [vmem:[#allocation2 + $0x90] sm:$0xff] %v4358
  %4395 = vst [vmem:[#allocation2 + $0x98] sm:$0xff] %v4359
  %4396 = vst [vmem:[#allocation2 + $0xa0] sm:$0xff] %v4360
  %4397 = vst [vmem:[#allocation2 + $0xa8] sm:$0xff] %v4361
  %4398 = vst [vmem:[#allocation2 + $0xb0] sm:$0xff] %v4362
  %4399 = vst [vmem:[#allocation2 + $0xb8] sm:$0xff] %v4363
  %4400 = vst [vmem:[#allocation2 + $0xc0] sm:$0xff] %v4364
  %4401 = vst [vmem:[#allocation2 + $0xc8] sm:$0xff] %v4365
  %4402 = vst [vmem:[#allocation2 + $0xd0] sm:$0xff] %v4366
  %4403 = vst [vmem:[#allocation2 + $0xd8] sm:$0xff] %v4367
  %4404 = vst [vmem:[#allocation2 + $0xe0] sm:$0xff] %v4368
  %4405 = vst [vmem:[#allocation2 + $0xe8] sm:$0xff] %v4369
  %4406 = vst [vmem:[#allocation2 + $0xf0] sm:$0xff] %v4370
  %4407 = vst [vmem:[#allocation2 + $0xf8] sm:$0xff] %v4371
  %4408 = vst [vmem:[#allocation2 + $0x100] sm:$0xff] %v4372
  %4409 = vst [vmem:[#allocation2 + $0x108] sm:$0xff] %v4373
  %4410 = vst [vmem:[#allocation2 + $0x110] sm:$0xff] %v4374
  %4411 = vst [vmem:[#allocation2 + $0x118] sm:$0xff] %v4375
  %v4412 = vld [vmem:[%s0 + $0x10] sm:$0x8]
  %v4413 = vld [vmem:[%s0 + $0x14] sm:$0xf]
  %v4414 = vld [vmem:[%s0 + $0x18] sm:$0xf]
  %v4415 = vld [vmem:[%s0 + $0x1c] sm:$0xf]
  %v4416 = vld [vmem:[%s0 + $0x20] sm:$0xf]
  %v4417 = vld [vmem:[%s0 + $0x24] sm:$0xf]
  %v4418 = vld [vmem:[%s0 + $0x28] sm:$0xf]
  %v4419 = vld [vmem:[%s0 + $0x2c] sm:$0xf]
  %v4420 = vld [vmem:[%s0 + $0x30] sm:$0xf]
  %v4421 = vld [vmem:[%s0 + $0x34] sm:$0xf]
  %v4422 = vld [vmem:[%s0 + $0x38] sm:$0xf]
  %v4423 = vld [vmem:[%s0 + $0x3c] sm:$0xf]
  %v4424 = vld [vmem:[%s0 + $0x40] sm:$0xf]
  %v4425 = vld [vmem:[%s0 + $0x44] sm:$0xf]
  %v4426 = vld [vmem:[%s0 + $0x48] sm:$0xf]
  %v4427 = vld [vmem:[%s0 + $0x4c] sm:$0xf]
  %v4428 = vld [vmem:[%s0 + $0x50] sm:$0xf]
  %v4429 = vld [vmem:[%s0 + $0x54] sm:$0xf]
  %v4430 = vld [vmem:[%s0 + $0x58] sm:$0xf]
  %v4431 = vld [vmem:[%s0 + $0x5c] sm:$0xf]
  %v4432 = vld [vmem:[%s0 + $0x60] sm:$0xf]
  %v4433 = vld [vmem:[%s0 + $0x64] sm:$0xf]
  %v4434 = vld [vmem:[%s0 + $0x68] sm:$0xf]
  %v4435 = vld [vmem:[%s0 + $0x6c] sm:$0xf]
  %v4436 = vld [vmem:[%s0 + $0x70] sm:$0xf]
  %v4437 = vld [vmem:[%s0 + $0x74] sm:$0xf]
  %v4438 = vld [vmem:[%s0 + $0x78] sm:$0xf]
  %v4439 = vld [vmem:[%s0 + $0x7c] sm:$0xf]
  %v4440 = vld [vmem:[%s0 + $0x80] sm:$0xf]
  %v4441 = vld [vmem:[%s0 + $0x84] sm:$0xf]
  %v4442 = vld [vmem:[%s0 + $0x88] sm:$0xf]
  %v4443 = vld [vmem:[%s0 + $0x8c] sm:$0xf]
  %v4444 = vld [vmem:[%s0 + $0x90] sm:$0xf]
  %v4445 = vld [vmem:[%s0 + $0x94] sm:$0xf]
  %v4446 = vld [vmem:[%s0 + $0x98] sm:$0xf]
  %v4447 = vld [vmem:[%s0 + $0x9c] sm:$0xf]
  %v4448 = vld [vmem:[%s0 + $0xa0] sm:$0x7]
  %s4449 = scalar_lea.vmem %s1, 32
  %v4450 = vld [vmem:[%s4449] sm:$0xf]
  %v4488 = vunpack.c.l.b16 %v4412
  %v4489 = vunpack.c.l.b16 %v4413
  %v4490 = vunpack.c.l.b16 %v4414
  %v4491 = vunpack.c.l.b16 %v4415
  %v4492 = vunpack.c.l.b16 %v4416
  %v4493 = vunpack.c.l.b16 %v4417
  %v4494 = vunpack.c.l.b16 %v4418
  %v4495 = vunpack.c.l.b16 %v4419
  %v4496 = vunpack.c.l.b16 %v4420
  %v4497 = vunpack.c.l.b16 %v4421
  %v4498 = vunpack.c.l.b16 %v4422
  %v4499 = vunpack.c.l.b16 %v4423
  %v4500 = vunpack.c.l.b16 %v4424
  %v4501 = vunpack.c.l.b16 %v4425
  %v4502 = vunpack.c.l.b16 %v4426
  %v4503 = vunpack.c.l.b16 %v4427
  %v4504 = vunpack.c.l.b16 %v4428
  %v4505 = vunpack.c.l.b16 %v4429
  %v4506 = vunpack.c.l.b16 %v4430
  %v4507 = vunpack.c.l.b16 %v4431
  %v4508 = vunpack.c.l.b16 %v4432
  %v4509 = vunpack.c.l.b16 %v4433
  %v4510 = vunpack.c.l.b16 %v4434
  %v4511 = vunpack.c.l.b16 %v4435
  %v4512 = vunpack.c.l.b16 %v4436
  %v4513 = vunpack.c.l.b16 %v4437
  %v4514 = vunpack.c.l.b16 %v4438
  %v4515 = vunpack.c.l.b16 %v4439
  %v4516 = vunpack.c.l.b16 %v4440
  %v4517 = vunpack.c.l.b16 %v4441
  %v4518 = vunpack.c.l.b16 %v4442
  %v4519 = vunpack.c.l.b16 %v4443
  %v4520 = vunpack.c.l.b16 %v4444
  %v4521 = vunpack.c.l.b16 %v4445
  %v4522 = vunpack.c.l.b16 %v4446
  %v4523 = vunpack.c.l.b16 %v4447
  %v4524 = vunpack.c.l.b16 %v4448
  %v4525 = vpack.c.b16 %v4489, %v4488
  %v4526 = vpack.c.b16 %v4491, %v4490
  %v4527 = vpack.c.b16 %v4493, %v4492
  %v4528 = vpack.c.b16 %v4495, %v4494
  %v4529 = vpack.c.b16 %v4497, %v4496
  %v4530 = vpack.c.b16 %v4499, %v4498
  %v4531 = vpack.c.b16 %v4501, %v4500
  %v4532 = vpack.c.b16 %v4503, %v4502
  %v4533 = vpack.c.b16 %v4505, %v4504
  %v4534 = vpack.c.b16 %v4507, %v4506
  %v4535 = vpack.c.b16 %v4509, %v4508
  %v4536 = vpack.c.b16 %v4511, %v4510
  %v4537 = vpack.c.b16 %v4513, %v4512
  %v4538 = vpack.c.b16 %v4515, %v4514
  %v4539 = vpack.c.b16 %v4517, %v4516
  %v4540 = vpack.c.b16 %v4519, %v4518
  %v4541 = vpack.c.b16 %v4521, %v4520
  %v4542 = vpack.c.b16 %v4523, %v4522
  %v4543 = vpack.c.b16 %v4524, %v4524
  %vm4544 = vcmask 1044480
  %v4545 = vrot.slane %v4525, 3
  %v4546 = vrot.slane %v4526, 3
  %v4547 = vsel %vm4544, %v4545, %v4546
  %v4548 = vrot.slane %v4527, 3
  %v4549 = vsel %vm4544, %v4546, %v4548
  %v4550 = vrot.slane %v4528, 3
  %v4551 = vsel %vm4544, %v4548, %v4550
  %v4552 = vrot.slane %v4529, 3
  %v4553 = vsel %vm4544, %v4550, %v4552
  %v4554 = vrot.slane %v4530, 3
  %v4555 = vsel %vm4544, %v4552, %v4554
  %v4556 = vrot.slane %v4531, 3
  %v4557 = vsel %vm4544, %v4554, %v4556
  %v4558 = vrot.slane %v4532, 3
  %v4559 = vsel %vm4544, %v4556, %v4558
  %v4560 = vrot.slane %v4533, 3
  %v4561 = vsel %vm4544, %v4558, %v4560
  %v4562 = vrot.slane %v4534, 3
  %v4563 = vsel %vm4544, %v4560, %v4562
  %v4564 = vrot.slane %v4535, 3
  %v4565 = vsel %vm4544, %v4562, %v4564
  %v4566 = vrot.slane %v4536, 3
  %v4567 = vsel %vm4544, %v4564, %v4566
  %v4568 = vrot.slane %v4537, 3
  %v4569 = vsel %vm4544, %v4566, %v4568
  %v4570 = vrot.slane %v4538, 3
  %v4571 = vsel %vm4544, %v4568, %v4570
  %v4572 = vrot.slane %v4539, 3
  %v4573 = vsel %vm4544, %v4570, %v4572
  %v4574 = vrot.slane %v4540, 3
  %v4575 = vsel %vm4544, %v4572, %v4574
  %v4576 = vrot.slane %v4541, 3
  %v4577 = vsel %vm4544, %v4574, %v4576
  %v4578 = vrot.slane %v4542, 3
  %v4579 = vsel %vm4544, %v4576, %v4578
  %v4580 = vrot.slane %v4543, 3
  %v4581 = vsel %vm4544, %v4578, %v4580
  %v4583 = vsel %vm181, %v4547, 0
  %v4586 = vsel %vm181, %v4549, 0
  %v4589 = vsel %vm181, %v4551, 0
  %v4592 = vsel %vm181, %v4553, 0
  %v4595 = vsel %vm181, %v4555, 0
  %v4598 = vsel %vm181, %v4557, 0
  %v4601 = vsel %vm181, %v4559, 0
  %v4604 = vsel %vm181, %v4561, 0
  %v4607 = vsel %vm181, %v4563, 0
  %v4610 = vsel %vm181, %v4565, 0
  %v4613 = vsel %vm181, %v4567, 0
  %v4616 = vsel %vm181, %v4569, 0
  %v4619 = vsel %vm181, %v4571, 0
  %v4622 = vsel %vm181, %v4573, 0
  %v4625 = vsel %vm181, %v4575, 0
  %v4628 = vsel %vm181, %v4577, 0
  %v4631 = vsel %vm181, %v4579, 0
  %v4634 = vsel %vm181, %v4581, 0
  %v4637 = vsel %vm236, %v4450, 0
  %4639 = vmatprep.subr.bf16.mxu0 0
  %4640 = vmatpush1.bf16.msra.mxu0 %v4637
  %4641 = vmatprep.subr.bf16.mxu0 0
  %4642 = vmatpush1.bf16.msra.mxu0 0
  %4643 = vmatprep.subr.bf16.mxu0 0
  %4644 = vmatpush1.bf16.msra.mxu0 0
  %4645 = vmatprep.subr.bf16.mxu0 0
  %4646 = vmatpush1.bf16.msra.mxu0 0
  %4647 = vmatprep.subr.bf16.mxu0 0
  %4648 = vmatpush1.bf16.msra.mxu0 0
  %4649 = vmatprep.subr.bf16.mxu0 0
  %4650 = vmatpush1.bf16.msra.mxu0 0
  %4651 = vmatprep.subr.bf16.mxu0 0
  %4652 = vmatpush1.bf16.msra.mxu0 0
  %4653 = vmatprep.subr.bf16.mxu0 0
  %4654 = vmatpush1.bf16.msra.mxu0 0
  %4655 = vmatprep.subr.bf16.mxu0 0
  %4656 = vmatpush1.bf16.msra.mxu0 0
  %4657 = vmatprep.subr.bf16.mxu0 0
  %4658 = vmatpush1.bf16.msra.mxu0 0
  %4659 = vmatprep.subr.bf16.mxu0 0
  %4660 = vmatpush1.bf16.msra.mxu0 0
  %4661 = vmatprep.subr.bf16.mxu0 0
  %4662 = vmatpush1.bf16.msra.mxu0 0
  %4663 = vmatprep.subr.bf16.mxu0 0
  %4664 = vmatpush1.bf16.msra.mxu0 0
  %4665 = vmatprep.subr.bf16.mxu0 0
  %4666 = vmatpush1.bf16.msra.mxu0 0
  %4667 = vmatprep.subr.bf16.mxu0 0
  %4668 = vmatpush1.bf16.msra.mxu0 0
  %4669 = vmatprep.subr.bf16.mxu0 0
  %4670 = vmatpush1.bf16.msra.mxu0 0
  %4671 = vmatprep.mubr.bf16.mxu0 0
  %4672 = vmatmul.mubr.bf16.gmra.mrb[0].mxu0 %v4583
  %v4673 = vpop.f32.mrb[0].mxu0
  %v4674 = vadd.f32 0.0, %v4673
  %v4675 = vpop.f32.mrb[0].mxu0
  %v4676 = vpop.f32.mrb[0].mxu0
  %v4677 = vadd.f32 0.0, %v4676
  %v4678 = vpop.f32.mrb[0].mxu0
  %4679 = vmatprep.mubr.bf16.mxu0 0
  %4680 = vmatmul.mubr.bf16.gmra.mrb[0].mxu0 %v4586
  %v4681 = vpop.f32.mrb[0].mxu0
  %v4682 = vadd.f32 0.0, %v4681
  %v4683 = vpop.f32.mrb[0].mxu0
  %v4684 = vpop.f32.mrb[0].mxu0
  %v4685 = vadd.f32 0.0, %v4684
  %v4686 = vpop.f32.mrb[0].mxu0
  %4687 = vmatprep.mubr.bf16.mxu0 0
  %4688 = vmatmul.mubr.bf16.gmra.mrb[0].mxu0 %v4589
  %v4689 = vpop.f32.mrb[0].mxu0
  %v4690 = vadd.f32 0.0, %v4689
  %v4691 = vpop.f32.mrb[0].mxu0
  %v4692 = vpop.f32.mrb[0].mxu0
  %v4693 = vadd.f32 0.0, %v4692
  %v4694 = vpop.f32.mrb[0].mxu0
  %4695 = vmatprep.mubr.bf16.mxu0 0
  %4696 = vmatmul.mubr.bf16.gmra.mrb[0].mxu0 %v4592
  %v4697 = vpop.f32.mrb[0].mxu0
  %v4698 = vadd.f32 0.0, %v4697
  %v4699 = vpop.f32.mrb[0].mxu0
  %v4700 = vpop.f32.mrb[0].mxu0
  %v4701 = vadd.f32 0.0, %v4700
  %v4702 = vpop.f32.mrb[0].mxu0
  %4703 = vmatprep.mubr.bf16.mxu0 0
  %4704 = vmatmul.mubr.bf16.gmra.mrb[0].mxu0 %v4595
  %v4705 = vpop.f32.mrb[0].mxu0
  %v4706 = vadd.f32 0.0, %v4705
  %v4707 = vpop.f32.mrb[0].mxu0
  %v4708 = vpop.f32.mrb[0].mxu0
  %v4709 = vadd.f32 0.0, %v4708
  %v4710 = vpop.f32.mrb[0].mxu0
  %4711 = vmatprep.mubr.bf16.mxu0 0
  %4712 = vmatmul.mubr.bf16.gmra.mrb[0].mxu0 %v4598
  %v4713 = vpop.f32.mrb[0].mxu0
  %v4714 = vadd.f32 0.0, %v4713
  %v4715 = vpop.f32.mrb[0].mxu0
  %v4716 = vpop.f32.mrb[0].mxu0
  %v4717 = vadd.f32 0.0, %v4716
  %v4718 = vpop.f32.mrb[0].mxu0
  %4719 = vmatprep.mubr.bf16.mxu0 0
  %4720 = vmatmul.mubr.bf16.gmra.mrb[0].mxu0 %v4601
  %v4721 = vpop.f32.mrb[0].mxu0
  %v4722 = vadd.f32 0.0, %v4721
  %v4723 = vpop.f32.mrb[0].mxu0
  %v4724 = vpop.f32.mrb[0].mxu0
  %v4725 = vadd.f32 0.0, %v4724
  %v4726 = vpop.f32.mrb[0].mxu0
  %4727 = vmatprep.mubr.bf16.mxu0 0
  %4728 = vmatmul.mubr.bf16.gmra.mrb[0].mxu0 %v4604
  %v4729 = vpop.f32.mrb[0].mxu0
  %v4730 = vadd.f32 0.0, %v4729
  %v4731 = vpop.f32.mrb[0].mxu0
  %v4732 = vpop.f32.mrb[0].mxu0
  %v4733 = vadd.f32 0.0, %v4732
  %v4734 = vpop.f32.mrb[0].mxu0
  %4735 = vmatprep.mubr.bf16.mxu0 0
  %4736 = vmatmul.mubr.bf16.gmra.mrb[0].mxu0 %v4607
  %v4737 = vpop.f32.mrb[0].mxu0
  %v4738 = vadd.f32 0.0, %v4737
  %v4739 = vpop.f32.mrb[0].mxu0
  %v4740 = vpop.f32.mrb[0].mxu0
  %v4741 = vadd.f32 0.0, %v4740
  %v4742 = vpop.f32.mrb[0].mxu0
  %4743 = vmatprep.mubr.bf16.mxu0 0
  %4744 = vmatmul.mubr.bf16.gmra.mrb[0].mxu0 %v4610
  %v4745 = vpop.f32.mrb[0].mxu0
  %v4746 = vadd.f32 0.0, %v4745
  %v4747 = vpop.f32.mrb[0].mxu0
  %v4748 = vpop.f32.mrb[0].mxu0
  %v4749 = vadd.f32 0.0, %v4748
  %v4750 = vpop.f32.mrb[0].mxu0
  %4751 = vmatprep.mubr.bf16.mxu0 0
  %4752 = vmatmul.mubr.bf16.gmra.mrb[0].mxu0 %v4613
  %v4753 = vpop.f32.mrb[0].mxu0
  %v4754 = vadd.f32 0.0, %v4753
  %v4755 = vpop.f32.mrb[0].mxu0
  %v4756 = vpop.f32.mrb[0].mxu0
  %v4757 = vadd.f32 0.0, %v4756
  %v4758 = vpop.f32.mrb[0].mxu0
  %4759 = vmatprep.mubr.bf16.mxu0 0
  %4760 = vmatmul.mubr.bf16.gmra.mrb[0].mxu0 %v4616
  %v4761 = vpop.f32.mrb[0].mxu0
  %v4762 = vadd.f32 0.0, %v4761
  %v4763 = vpop.f32.mrb[0].mxu0
  %v4764 = vpop.f32.mrb[0].mxu0
  %v4765 = vadd.f32 0.0, %v4764
  %v4766 = vpop.f32.mrb[0].mxu0
  %4767 = vmatprep.mubr.bf16.mxu0 0
  %4768 = vmatmul.mubr.bf16.gmra.mrb[0].mxu0 %v4619
  %v4769 = vpop.f32.mrb[0].mxu0
  %v4770 = vadd.f32 0.0, %v4769
  %v4771 = vpop.f32.mrb[0].mxu0
  %v4772 = vpop.f32.mrb[0].mxu0
  %v4773 = vadd.f32 0.0, %v4772
  %v4774 = vpop.f32.mrb[0].mxu0
  %4775 = vmatprep.mubr.bf16.mxu0 0
  %4776 = vmatmul.mubr.bf16.gmra.mrb[0].mxu0 %v4622
  %v4777 = vpop.f32.mrb[0].mxu0
  %v4778 = vadd.f32 0.0, %v4777
  %v4779 = vpop.f32.mrb[0].mxu0
  %v4780 = vpop.f32.mrb[0].mxu0
  %v4781 = vadd.f32 0.0, %v4780
  %v4782 = vpop.f32.mrb[0].mxu0
  %4783 = vmatprep.mubr.bf16.mxu0 0
  %4784 = vmatmul.mubr.bf16.gmra.mrb[0].mxu0 %v4625
  %v4785 = vpop.f32.mrb[0].mxu0
  %v4786 = vadd.f32 0.0, %v4785
  %v4787 = vpop.f32.mrb[0].mxu0
  %v4788 = vpop.f32.mrb[0].mxu0
  %v4789 = vadd.f32 0.0, %v4788
  %v4790 = vpop.f32.mrb[0].mxu0
  %4791 = vmatprep.mubr.bf16.mxu0 0
  %4792 = vmatmul.mubr.bf16.gmra.mrb[0].mxu0 %v4628
  %v4793 = vpop.f32.mrb[0].mxu0
  %v4794 = vadd.f32 0.0, %v4793
  %v4795 = vpop.f32.mrb[0].mxu0
  %v4796 = vpop.f32.mrb[0].mxu0
  %v4797 = vadd.f32 0.0, %v4796
  %v4798 = vpop.f32.mrb[0].mxu0
  %4799 = vmatprep.mubr.bf16.mxu0 0
  %4800 = vmatmul.mubr.bf16.gmra.mrb[0].mxu0 %v4631
  %v4801 = vpop.f32.mrb[0].mxu0
  %v4802 = vadd.f32 0.0, %v4801
  %v4803 = vpop.f32.mrb[0].mxu0
  %v4804 = vpop.f32.mrb[0].mxu0
  %v4805 = vadd.f32 0.0, %v4804
  %v4806 = vpop.f32.mrb[0].mxu0
  %4807 = vmatprep.mubr.bf16.mxu0 0
  %4808 = vmatmul.mubr.bf16.gmra.mrb[0].mxu0 %v4634
  %v4809 = vpop.f32.mrb[0].mxu0
  %v4810 = vadd.f32 0.0, %v4809
  %v4811 = vpop.f32.mrb[0].mxu0
  %v4812 = vpop.f32.mrb[0].mxu0
  %v4813 = vadd.f32 0.0, %v4812
  %v4814 = vpop.f32.mrb[0].mxu0
  %4815 = vdwg.mxu0
  %v4816 = vld [vmem:[#allocation2] sm:$0xff]
  %v4817 = vld [vmem:[#allocation2 + $0x8] sm:$0xff]
  %v4818 = vld [vmem:[#allocation2 + $0x10] sm:$0xff]
  %v4819 = vld [vmem:[#allocation2 + $0x18] sm:$0xff]
  %v4820 = vld [vmem:[#allocation2 + $0x20] sm:$0xff]
  %v4821 = vld [vmem:[#allocation2 + $0x28] sm:$0xff]
  %v4822 = vld [vmem:[#allocation2 + $0x30] sm:$0xff]
  %v4823 = vld [vmem:[#allocation2 + $0x38] sm:$0xff]
  %v4824 = vld [vmem:[#allocation2 + $0x40] sm:$0xff]
  %v4825 = vld [vmem:[#allocation2 + $0x48] sm:$0xff]
  %v4826 = vld [vmem:[#allocation2 + $0x50] sm:$0xff]
  %v4827 = vld [vmem:[#allocation2 + $0x58] sm:$0xff]
  %v4828 = vld [vmem:[#allocation2 + $0x60] sm:$0xff]
  %v4829 = vld [vmem:[#allocation2 + $0x68] sm:$0xff]
  %v4830 = vld [vmem:[#allocation2 + $0x70] sm:$0xff]
  %v4831 = vld [vmem:[#allocation2 + $0x78] sm:$0xff]
  %v4832 = vld [vmem:[#allocation2 + $0x80] sm:$0xff]
  %v4833 = vld [vmem:[#allocation2 + $0x88] sm:$0xff]
  %v4834 = vld [vmem:[#allocation2 + $0x90] sm:$0xff]
  %v4835 = vld [vmem:[#allocation2 + $0x98] sm:$0xff]
  %v4836 = vld [vmem:[#allocation2 + $0xa0] sm:$0xff]
  %v4837 = vld [vmem:[#allocation2 + $0xa8] sm:$0xff]
  %v4838 = vld [vmem:[#allocation2 + $0xb0] sm:$0xff]
  %v4839 = vld [vmem:[#allocation2 + $0xb8] sm:$0xff]
  %v4840 = vld [vmem:[#allocation2 + $0xc0] sm:$0xff]
  %v4841 = vld [vmem:[#allocation2 + $0xc8] sm:$0xff]
  %v4842 = vld [vmem:[#allocation2 + $0xd0] sm:$0xff]
  %v4843 = vld [vmem:[#allocation2 + $0xd8] sm:$0xff]
  %v4844 = vld [vmem:[#allocation2 + $0xe0] sm:$0xff]
  %v4845 = vld [vmem:[#allocation2 + $0xe8] sm:$0xff]
  %v4846 = vld [vmem:[#allocation2 + $0xf0] sm:$0xff]
  %v4847 = vld [vmem:[#allocation2 + $0xf8] sm:$0xff]
  %v4848 = vld [vmem:[#allocation2 + $0x100] sm:$0xff]
  %v4849 = vld [vmem:[#allocation2 + $0x108] sm:$0xff]
  %v4850 = vld [vmem:[#allocation2 + $0x110] sm:$0xff]
  %v4851 = vld [vmem:[#allocation2 + $0x118] sm:$0xff]
  %v4852 = vadd.f32 %v4816, %v4674
  %v4853 = vadd.f32 %v4817, %v4677
  %v4854 = vadd.f32 %v4818, %v4682
  %v4855 = vadd.f32 %v4819, %v4685
  %v4856 = vadd.f32 %v4820, %v4690
  %v4857 = vadd.f32 %v4821, %v4693
  %v4858 = vadd.f32 %v4822, %v4698
  %v4859 = vadd.f32 %v4823, %v4701
  %v4860 = vadd.f32 %v4824, %v4706
  %v4861 = vadd.f32 %v4825, %v4709
  %v4862 = vadd.f32 %v4826, %v4714
  %v4863 = vadd.f32 %v4827, %v4717
  %v4864 = vadd.f32 %v4828, %v4722
  %v4865 = vadd.f32 %v4829, %v4725
  %v4866 = vadd.f32 %v4830, %v4730
  %v4867 = vadd.f32 %v4831, %v4733
  %v4868 = vadd.f32 %v4832, %v4738
  %v4869 = vadd.f32 %v4833, %v4741
  %v4870 = vadd.f32 %v4834, %v4746
  %v4871 = vadd.f32 %v4835, %v4749
  %v4872 = vadd.f32 %v4836, %v4754
  %v4873 = vadd.f32 %v4837, %v4757
  %v4874 = vadd.f32 %v4838, %v4762
  %v4875 = vadd.f32 %v4839, %v4765
  %v4876 = vadd.f32 %v4840, %v4770
  %v4877 = vadd.f32 %v4841, %v4773
  %v4878 = vadd.f32 %v4842, %v4778
  %v4879 = vadd.f32 %v4843, %v4781
  %v4880 = vadd.f32 %v4844, %v4786
  %v4881 = vadd.f32 %v4845, %v4789
  %v4882 = vadd.f32 %v4846, %v4794
  %v4883 = vadd.f32 %v4847, %v4797
  %v4884 = vadd.f32 %v4848, %v4802
  %v4885 = vadd.f32 %v4849, %v4805
  %v4886 = vadd.f32 %v4850, %v4810
  %v4887 = vadd.f32 %v4851, %v4813
  %4888 = vst [vmem:[#allocation2] sm:$0xff] %v4852
  %4889 = vst [vmem:[#allocation2 + $0x8] sm:$0xff] %v4853
  %4890 = vst [vmem:[#allocation2 + $0x10] sm:$0xff] %v4854
  %4891 = vst [vmem:[#allocation2 + $0x18] sm:$0xff] %v4855
  %4892 = vst [vmem:[#allocation2 + $0x20] sm:$0xff] %v4856
  %4893 = vst [vmem:[#allocation2 + $0x28] sm:$0xff] %v4857
  %4894 = vst [vmem:[#allocation2 + $0x30] sm:$0xff] %v4858
  %4895 = vst [vmem:[#allocation2 + $0x38] sm:$0xff] %v4859
  %4896 = vst [vmem:[#allocation2 + $0x40] sm:$0xff] %v4860
  %4897 = vst [vmem:[#allocation2 + $0x48] sm:$0xff] %v4861
  %4898 = vst [vmem:[#allocation2 + $0x50] sm:$0xff] %v4862
  %4899 = vst [vmem:[#allocation2 + $0x58] sm:$0xff] %v4863
  %4900 = vst [vmem:[#allocation2 + $0x60] sm:$0xff] %v4864
  %4901 = vst [vmem:[#allocation2 + $0x68] sm:$0xff] %v4865
  %4902 = vst [vmem:[#allocation2 + $0x70] sm:$0xff] %v4866
  %4903 = vst [vmem:[#allocation2 + $0x78] sm:$0xff] %v4867
  %4904 = vst [vmem:[#allocation2 + $0x80] sm:$0xff] %v4868
  %4905 = vst [vmem:[#allocation2 + $0x88] sm:$0xff] %v4869
  %4906 = vst [vmem:[#allocation2 + $0x90] sm:$0xff] %v4870
  %4907 = vst [vmem:[#allocation2 + $0x98] sm:$0xff] %v4871
  %4908 = vst [vmem:[#allocation2 + $0xa0] sm:$0xff] %v4872
  %4909 = vst [vmem:[#allocation2 + $0xa8] sm:$0xff] %v4873
  %4910 = vst [vmem:[#allocation2 + $0xb0] sm:$0xff] %v4874
  %4911 = vst [vmem:[#allocation2 + $0xb8] sm:$0xff] %v4875
  %4912 = vst [vmem:[#allocation2 + $0xc0] sm:$0xff] %v4876
  %4913 = vst [vmem:[#allocation2 + $0xc8] sm:$0xff] %v4877
  %4914 = vst [vmem:[#allocation2 + $0xd0] sm:$0xff] %v4878
  %4915 = vst [vmem:[#allocation2 + $0xd8] sm:$0xff] %v4879
  %4916 = vst [vmem:[#allocation2 + $0xe0] sm:$0xff] %v4880
  %4917 = vst [vmem:[#allocation2 + $0xe8] sm:$0xff] %v4881
  %4918 = vst [vmem:[#allocation2 + $0xf0] sm:$0xff] %v4882
  %4919 = vst [vmem:[#allocation2 + $0xf8] sm:$0xff] %v4883
  %4920 = vst [vmem:[#allocation2 + $0x100] sm:$0xff] %v4884
  %4921 = vst [vmem:[#allocation2 + $0x108] sm:$0xff] %v4885
  %4922 = vst [vmem:[#allocation2 + $0x110] sm:$0xff] %v4886
  %4923 = vst [vmem:[#allocation2 + $0x118] sm:$0xff] %v4887
  %v4924 = vld [vmem:[#allocation2] sm:$0xff]
  %v4925 = vld [vmem:[#allocation2 + $0x8] sm:$0xff]
  %v4926 = vld [vmem:[#allocation2 + $0x10] sm:$0xff]
  %v4927 = vld [vmem:[#allocation2 + $0x18] sm:$0xff]
  %v4928 = vld [vmem:[#allocation2 + $0x20] sm:$0xff]
  %v4929 = vld [vmem:[#allocation2 + $0x28] sm:$0xff]
  %v4930 = vld [vmem:[#allocation2 + $0x30] sm:$0xff]
  %v4931 = vld [vmem:[#allocation2 + $0x38] sm:$0xff]
  %v4932 = vld [vmem:[#allocation2 + $0x40] sm:$0xff]
  %v4933 = vld [vmem:[#allocation2 + $0x48] sm:$0xff]
  %v4934 = vld [vmem:[#allocation2 + $0x50] sm:$0xff]
  %v4935 = vld [vmem:[#allocation2 + $0x58] sm:$0xff]
  %v4936 = vld [vmem:[#allocation2 + $0x60] sm:$0xff]
  %v4937 = vld [vmem:[#allocation2 + $0x68] sm:$0xff]
  %v4938 = vld [vmem:[#allocation2 + $0x70] sm:$0xff]
  %v4939 = vld [vmem:[#allocation2 + $0x78] sm:$0xff]
  %v4940 = vld [vmem:[#allocation2 + $0x80] sm:$0xff]
  %v4941 = vld [vmem:[#allocation2 + $0x88] sm:$0xff]
  %v4942 = vld [vmem:[#allocation2 + $0x90] sm:$0xff]
  %v4943 = vld [vmem:[#allocation2 + $0x98] sm:$0xff]
  %v4944 = vld [vmem:[#allocation2 + $0xa0] sm:$0xff]
  %v4945 = vld [vmem:[#allocation2 + $0xa8] sm:$0xff]
  %v4946 = vld [vmem:[#allocation2 + $0xb0] sm:$0xff]
  %v4947 = vld [vmem:[#allocation2 + $0xb8] sm:$0xff]
  %v4948 = vld [vmem:[#allocation2 + $0xc0] sm:$0xff]
  %v4949 = vld [vmem:[#allocation2 + $0xc8] sm:$0xff]
  %v4950 = vld [vmem:[#allocation2 + $0xd0] sm:$0xff]
  %v4951 = vld [vmem:[#allocation2 + $0xd8] sm:$0xff]
  %v4952 = vld [vmem:[#allocation2 + $0xe0] sm:$0xff]
  %v4953 = vld [vmem:[#allocation2 + $0xe8] sm:$0xff]
  %v4954 = vld [vmem:[#allocation2 + $0xf0] sm:$0xff]
  %v4955 = vld [vmem:[#allocation2 + $0xf8] sm:$0xff]
  %v4956 = vld [vmem:[#allocation2 + $0x100] sm:$0xff]
  %v4957 = vld [vmem:[#allocation2 + $0x108] sm:$0xff]
  %v4958 = vld [vmem:[#allocation2 + $0x110] sm:$0xff]
  %v4959 = vld [vmem:[#allocation2 + $0x118] sm:$0xff]
  %4961 = vset.pattern.permute.xlu0 0
  %4962 = vperm.xlu0 %4961, %v18
  %v4963 = vpop.permute.xlu0 %4962
  %4966 = vset.pattern.permute.xlu0 0
  %4967 = vperm.xlu0 %4966, %v19
  %v4968 = vpop.permute.xlu0 %4967
  %4971 = vset.pattern.permute.xlu0 0
  %4972 = vperm.xlu0 %4971, %v20
  %v4973 = vpop.permute.xlu0 %4972
  %4976 = vset.pattern.permute.xlu0 0
  %4977 = vperm.xlu0 %4976, %v21
  %v4978 = vpop.permute.xlu0 %4977
  %4981 = vset.pattern.permute.xlu0 0
  %4982 = vperm.xlu0 %4981, %v22
  %v4983 = vpop.permute.xlu0 %4982
  %4986 = vset.pattern.permute.xlu0 0
  %4987 = vperm.xlu0 %4986, %v23
  %v4988 = vpop.permute.xlu0 %4987
  %4991 = vset.pattern.permute.xlu0 0
  %4992 = vperm.xlu0 %4991, %v24
  %v4993 = vpop.permute.xlu0 %4992
  %4996 = vset.pattern.permute.xlu0 0
  %4997 = vperm.xlu0 %4996, %v25
  %v4998 = vpop.permute.xlu0 %4997
  %5001 = vset.pattern.permute.xlu0 0
  %5002 = vperm.xlu0 %5001, %v26
  %v5003 = vpop.permute.xlu0 %5002
  %5006 = vset.pattern.permute.xlu0 0
  %5007 = vperm.xlu0 %5006, %v27
  %v5008 = vpop.permute.xlu0 %5007
  %5011 = vset.pattern.permute.xlu0 0
  %5012 = vperm.xlu0 %5011, %v28
  %v5013 = vpop.permute.xlu0 %5012
  %5016 = vset.pattern.permute.xlu0 0
  %5017 = vperm.xlu0 %5016, %v29
  %v5018 = vpop.permute.xlu0 %5017
  %5021 = vset.pattern.permute.xlu0 0
  %5022 = vperm.xlu0 %5021, %v30
  %v5023 = vpop.permute.xlu0 %5022
  %5026 = vset.pattern.permute.xlu0 0
  %5027 = vperm.xlu0 %5026, %v31
  %v5028 = vpop.permute.xlu0 %5027
  %5031 = vset.pattern.permute.xlu0 0
  %5032 = vperm.xlu0 %5031, %v32
  %v5033 = vpop.permute.xlu0 %5032
  %5036 = vset.pattern.permute.xlu0 0
  %5037 = vperm.xlu0 %5036, %v33
  %v5038 = vpop.permute.xlu0 %5037
  %5041 = vset.pattern.permute.xlu0 0
  %5042 = vperm.xlu0 %5041, %v34
  %v5043 = vpop.permute.xlu0 %5042
  %5046 = vset.pattern.permute.xlu0 0
  %5047 = vperm.xlu0 %5046, %v35
  %v5048 = vpop.permute.xlu0 %5047
  %5051 = vset.pattern.permute.xlu0 0
  %5052 = vperm.xlu0 %5051, %v36
  %v5053 = vpop.permute.xlu0 %5052
  %5056 = vset.pattern.permute.xlu0 0
  %5057 = vperm.xlu0 %5056, %v37
  %v5058 = vpop.permute.xlu0 %5057
  %5061 = vset.pattern.permute.xlu0 0
  %5062 = vperm.xlu0 %5061, %v38
  %v5063 = vpop.permute.xlu0 %5062
  %5066 = vset.pattern.permute.xlu0 0
  %5067 = vperm.xlu0 %5066, %v39
  %v5068 = vpop.permute.xlu0 %5067
  %5071 = vset.pattern.permute.xlu0 0
  %5072 = vperm.xlu0 %5071, %v40
  %v5073 = vpop.permute.xlu0 %5072
  %5076 = vset.pattern.permute.xlu0 0
  %5077 = vperm.xlu0 %5076, %v41
  %v5078 = vpop.permute.xlu0 %5077
  %5081 = vset.pattern.permute.xlu0 0
  %5082 = vperm.xlu0 %5081, %v42
  %v5083 = vpop.permute.xlu0 %5082
  %5086 = vset.pattern.permute.xlu0 0
  %5087 = vperm.xlu0 %5086, %v43
  %v5088 = vpop.permute.xlu0 %5087
  %5091 = vset.pattern.permute.xlu0 0
  %5092 = vperm.xlu0 %5091, %v44
  %v5093 = vpop.permute.xlu0 %5092
  %5096 = vset.pattern.permute.xlu0 0
  %5097 = vperm.xlu0 %5096, %v45
  %v5098 = vpop.permute.xlu0 %5097
  %5101 = vset.pattern.permute.xlu0 0
  %5102 = vperm.xlu0 %5101, %v46
  %v5103 = vpop.permute.xlu0 %5102
  %5106 = vset.pattern.permute.xlu0 0
  %5107 = vperm.xlu0 %5106, %v47
  %v5108 = vpop.permute.xlu0 %5107
  %5111 = vset.pattern.permute.xlu0 0
  %5112 = vperm.xlu0 %5111, %v48
  %v5113 = vpop.permute.xlu0 %5112
  %5116 = vset.pattern.permute.xlu0 0
  %5117 = vperm.xlu0 %5116, %v49
  %v5118 = vpop.permute.xlu0 %5117
  %5121 = vset.pattern.permute.xlu0 0
  %5122 = vperm.xlu0 %5121, %v50
  %v5123 = vpop.permute.xlu0 %5122
  %5126 = vset.pattern.permute.xlu0 0
  %5127 = vperm.xlu0 %5126, %v51
  %v5128 = vpop.permute.xlu0 %5127
  %5131 = vset.pattern.permute.xlu0 0
  %5132 = vperm.xlu0 %5131, %v52
  %v5133 = vpop.permute.xlu0 %5132
  %5136 = vset.pattern.permute.xlu0 0
  %5137 = vperm.xlu0 %5136, %v53
  %v5138 = vpop.permute.xlu0 %5137
  %v5140 = vmul.f32 %v4924, %v4963
  %v5141 = vmul.f32 %v4925, %v4968
  %v5142 = vmul.f32 %v4926, %v4973
  %v5143 = vmul.f32 %v4927, %v4978
  %v5144 = vmul.f32 %v4928, %v4983
  %v5145 = vmul.f32 %v4929, %v4988
  %v5146 = vmul.f32 %v4930, %v4993
  %v5147 = vmul.f32 %v4931, %v4998
  %v5148 = vmul.f32 %v4932, %v5003
  %v5149 = vmul.f32 %v4933, %v5008
  %v5150 = vmul.f32 %v4934, %v5013
  %v5151 = vmul.f32 %v4935, %v5018
  %v5152 = vmul.f32 %v4936, %v5023
  %v5153 = vmul.f32 %v4937, %v5028
  %v5154 = vmul.f32 %v4938, %v5033
  %v5155 = vmul.f32 %v4939, %v5038
  %v5156 = vmul.f32 %v4940, %v5043
  %v5157 = vmul.f32 %v4941, %v5048
  %v5158 = vmul.f32 %v4942, %v5053
  %v5159 = vmul.f32 %v4943, %v5058
  %v5160 = vmul.f32 %v4944, %v5063
  %v5161 = vmul.f32 %v4945, %v5068
  %v5162 = vmul.f32 %v4946, %v5073
  %v5163 = vmul.f32 %v4947, %v5078
  %v5164 = vmul.f32 %v4948, %v5083
  %v5165 = vmul.f32 %v4949, %v5088
  %v5166 = vmul.f32 %v4950, %v5093
  %v5167 = vmul.f32 %v4951, %v5098
  %v5168 = vmul.f32 %v4952, %v5103
  %v5169 = vmul.f32 %v4953, %v5108
  %v5170 = vmul.f32 %v4954, %v5113
  %v5171 = vmul.f32 %v4955, %v5118
  %v5172 = vmul.f32 %v4956, %v5123
  %v5173 = vmul.f32 %v4957, %v5128
  %v5174 = vmul.f32 %v4958, %v5133
  %v5175 = vmul.f32 %v4959, %v5138
  %v5176 = vadd.f32 %v5140, %v5141
  %v5177 = vadd.f32 %v5176, %v5142
  %v5178 = vadd.f32 %v5177, %v5143
  %v5179 = vadd.f32 %v5178, %v5144
  %v5180 = vadd.f32 %v5179, %v5145
  %v5181 = vadd.f32 %v5180, %v5146
  %v5182 = vadd.f32 %v5181, %v5147
  %v5183 = vadd.f32 %v5182, %v5148
  %v5184 = vadd.f32 %v5183, %v5149
  %v5185 = vadd.f32 %v5184, %v5150
  %v5186 = vadd.f32 %v5185, %v5151
  %v5187 = vadd.f32 %v5186, %v5152
  %v5188 = vadd.f32 %v5187, %v5153
  %v5189 = vadd.f32 %v5188, %v5154
  %v5190 = vadd.f32 %v5189, %v5155
  %v5191 = vadd.f32 %v5190, %v5156
  %v5192 = vadd.f32 %v5191, %v5157
  %v5193 = vadd.f32 %v5192, %v5158
  %v5194 = vadd.f32 %v5193, %v5159
  %v5195 = vadd.f32 %v5194, %v5160
  %v5196 = vadd.f32 %v5195, %v5161
  %v5197 = vadd.f32 %v5196, %v5162
  %v5198 = vadd.f32 %v5197, %v5163
  %v5199 = vadd.f32 %v5198, %v5164
  %v5200 = vadd.f32 %v5199, %v5165
  %v5201 = vadd.f32 %v5200, %v5166
  %v5202 = vadd.f32 %v5201, %v5167
  %v5203 = vadd.f32 %v5202, %v5168
  %v5204 = vadd.f32 %v5203, %v5169
  %v5205 = vadd.f32 %v5204, %v5170
  %v5206 = vadd.f32 %v5205, %v5171
  %v5207 = vadd.f32 %v5206, %v5172
  %v5208 = vadd.f32 %v5207, %v5173
  %v5209 = vadd.f32 %v5208, %v5174
  %v5210 = vadd.f32 %v5209, %v5175
  %v5211 = vrot.slane %v5210, 4
  %v5212 = vadd.f32 %v5210, %v5211
  %v5213 = vrot.slane %v5212, 2
  %v5214 = vadd.f32 %v5212, %v5213
  %v5215 = vrot.slane %v5214, 1
  %v5216 = vadd.f32 %v5214, %v5215
  %v5217 = vadd.f32 %v5216, 0.0
  %v5218 = vmul.f32 %v5140, %v4924
  %v5219 = vmul.f32 %v5141, %v4925
  %v5220 = vmul.f32 %v5142, %v4926
  %v5221 = vmul.f32 %v5143, %v4927
  %v5222 = vmul.f32 %v5144, %v4928
  %v5223 = vmul.f32 %v5145, %v4929
  %v5224 = vmul.f32 %v5146, %v4930
  %v5225 = vmul.f32 %v5147, %v4931
  %v5226 = vmul.f32 %v5148, %v4932
  %v5227 = vmul.f32 %v5149, %v4933
  %v5228 = vmul.f32 %v5150, %v4934
  %v5229 = vmul.f32 %v5151, %v4935
  %v5230 = vmul.f32 %v5152, %v4936
  %v5231 = vmul.f32 %v5153, %v4937
  %v5232 = vmul.f32 %v5154, %v4938
  %v5233 = vmul.f32 %v5155, %v4939
  %v5234 = vmul.f32 %v5156, %v4940
  %v5235 = vmul.f32 %v5157, %v4941
  %v5236 = vmul.f32 %v5158, %v4942
  %v5237 = vmul.f32 %v5159, %v4943
  %v5238 = vmul.f32 %v5160, %v4944
  %v5239 = vmul.f32 %v5161, %v4945
  %v5240 = vmul.f32 %v5162, %v4946
  %v5241 = vmul.f32 %v5163, %v4947
  %v5242 = vmul.f32 %v5164, %v4948
  %v5243 = vmul.f32 %v5165, %v4949
  %v5244 = vmul.f32 %v5166, %v4950
  %v5245 = vmul.f32 %v5167, %v4951
  %v5246 = vmul.f32 %v5168, %v4952
  %v5247 = vmul.f32 %v5169, %v4953
  %v5248 = vmul.f32 %v5170, %v4954
  %v5249 = vmul.f32 %v5171, %v4955
  %v5250 = vmul.f32 %v5172, %v4956
  %v5251 = vmul.f32 %v5173, %v4957
  %v5252 = vmul.f32 %v5174, %v4958
  %v5253 = vmul.f32 %v5175, %v4959
  %v5254 = vadd.f32 %v5218, %v5219
  %v5255 = vadd.f32 %v5254, %v5220
  %v5256 = vadd.f32 %v5255, %v5221
  %v5257 = vadd.f32 %v5256, %v5222
  %v5258 = vadd.f32 %v5257, %v5223
  %v5259 = vadd.f32 %v5258, %v5224
  %v5260 = vadd.f32 %v5259, %v5225
  %v5261 = vadd.f32 %v5260, %v5226
  %v5262 = vadd.f32 %v5261, %v5227
  %v5263 = vadd.f32 %v5262, %v5228
  %v5264 = vadd.f32 %v5263, %v5229
  %v5265 = vadd.f32 %v5264, %v5230
  %v5266 = vadd.f32 %v5265, %v5231
  %v5267 = vadd.f32 %v5266, %v5232
  %v5268 = vadd.f32 %v5267, %v5233
  %v5269 = vadd.f32 %v5268, %v5234
  %v5270 = vadd.f32 %v5269, %v5235
  %v5271 = vadd.f32 %v5270, %v5236
  %v5272 = vadd.f32 %v5271, %v5237
  %v5273 = vadd.f32 %v5272, %v5238
  %v5274 = vadd.f32 %v5273, %v5239
  %v5275 = vadd.f32 %v5274, %v5240
  %v5276 = vadd.f32 %v5275, %v5241
  %v5277 = vadd.f32 %v5276, %v5242
  %v5278 = vadd.f32 %v5277, %v5243
  %v5279 = vadd.f32 %v5278, %v5244
  %v5280 = vadd.f32 %v5279, %v5245
  %v5281 = vadd.f32 %v5280, %v5246
  %v5282 = vadd.f32 %v5281, %v5247
  %v5283 = vadd.f32 %v5282, %v5248
  %v5284 = vadd.f32 %v5283, %v5249
  %v5285 = vadd.f32 %v5284, %v5250
  %v5286 = vadd.f32 %v5285, %v5251
  %v5287 = vadd.f32 %v5286, %v5252
  %v5288 = vadd.f32 %v5287, %v5253
  %v5289 = vrot.slane %v5288, 4
  %v5290 = vadd.f32 %v5288, %v5289
  %v5291 = vrot.slane %v5290, 2
  %v5292 = vadd.f32 %v5290, %v5291
  %v5293 = vrot.slane %v5292, 1
  %v5294 = vadd.f32 %v5292, %v5293
  %v5295 = vadd.f32 %v5294, 0.0
  %v5296 = vpack.c.bf16 %v4925, %v4924
  %v5297 = vpack.c.bf16 %v4927, %v4926
  %v5298 = vpack.c.bf16 %v4929, %v4928
  %v5299 = vpack.c.bf16 %v4931, %v4930
  %v5300 = vpack.c.bf16 %v4933, %v4932
  %v5301 = vpack.c.bf16 %v4935, %v4934
  %v5302 = vpack.c.bf16 %v4937, %v4936
  %v5303 = vpack.c.bf16 %v4939, %v4938
  %v5304 = vpack.c.bf16 %v4941, %v4940
  %v5305 = vpack.c.bf16 %v4943, %v4942
  %v5306 = vpack.c.bf16 %v4945, %v4944
  %v5307 = vpack.c.bf16 %v4947, %v4946
  %v5308 = vpack.c.bf16 %v4949, %v4948
  %v5309 = vpack.c.bf16 %v4951, %v4950
  %v5310 = vpack.c.bf16 %v4953, %v4952
  %v5311 = vpack.c.bf16 %v4955, %v4954
  %v5312 = vpack.c.bf16 %v4957, %v4956
  %v5313 = vpack.c.bf16 %v4959, %v4958
  %v5332 = vunpack.c.l.b16 %v5296
  %v5333 = vunpack.c.h.b16 %v5296
  %v5334 = vunpack.c.l.b16 %v5297
  %v5335 = vunpack.c.h.b16 %v5297
  %v5336 = vunpack.c.l.b16 %v5298
  %v5337 = vunpack.c.h.b16 %v5298
  %v5338 = vunpack.c.l.b16 %v5299
  %v5339 = vunpack.c.h.b16 %v5299
  %v5340 = vunpack.c.l.b16 %v5300
  %v5341 = vunpack.c.h.b16 %v5300
  %v5342 = vunpack.c.l.b16 %v5301
  %v5343 = vunpack.c.h.b16 %v5301
  %v5344 = vunpack.c.l.b16 %v5302
  %v5345 = vunpack.c.h.b16 %v5302
  %v5346 = vunpack.c.l.b16 %v5303
  %v5347 = vunpack.c.h.b16 %v5303
  %v5348 = vunpack.c.l.b16 %v5304
  %v5349 = vunpack.c.h.b16 %v5304
  %v5350 = vunpack.c.l.b16 %v5305
  %v5351 = vunpack.c.h.b16 %v5305
  %v5352 = vunpack.c.l.b16 %v5306
  %v5353 = vunpack.c.h.b16 %v5306
  %v5354 = vunpack.c.l.b16 %v5307
  %v5355 = vunpack.c.h.b16 %v5307
  %v5356 = vunpack.c.l.b16 %v5308
  %v5357 = vunpack.c.h.b16 %v5308
  %v5358 = vunpack.c.l.b16 %v5309
  %v5359 = vunpack.c.h.b16 %v5309
  %v5360 = vunpack.c.l.b16 %v5310
  %v5361 = vunpack.c.h.b16 %v5310
  %v5362 = vunpack.c.l.b16 %v5311
  %v5363 = vunpack.c.h.b16 %v5311
  %v5364 = vunpack.c.l.b16 %v5312
  %v5365 = vunpack.c.h.b16 %v5312
  %v5366 = vunpack.c.l.b16 %v5313
  %v5367 = vunpack.c.h.b16 %v5313
  %v5368 = vpack.c.b16 %v5332, %v5332
  %v5369 = vpack.c.b16 %v5333, %v5333
  %v5370 = vpack.c.b16 %v5334, %v5334
  %v5371 = vpack.c.b16 %v5335, %v5335
  %v5372 = vpack.c.b16 %v5336, %v5336
  %v5373 = vpack.c.b16 %v5337, %v5337
  %v5374 = vpack.c.b16 %v5338, %v5338
  %v5375 = vpack.c.b16 %v5339, %v5339
  %v5376 = vpack.c.b16 %v5340, %v5340
  %v5377 = vpack.c.b16 %v5341, %v5341
  %v5378 = vpack.c.b16 %v5342, %v5342
  %v5379 = vpack.c.b16 %v5343, %v5343
  %v5380 = vpack.c.b16 %v5344, %v5344
  %v5381 = vpack.c.b16 %v5345, %v5345
  %v5382 = vpack.c.b16 %v5346, %v5346
  %v5383 = vpack.c.b16 %v5347, %v5347
  %v5384 = vpack.c.b16 %v5348, %v5348
  %v5385 = vpack.c.b16 %v5349, %v5349
  %v5386 = vpack.c.b16 %v5350, %v5350
  %v5387 = vpack.c.b16 %v5351, %v5351
  %v5388 = vpack.c.b16 %v5352, %v5352
  %v5389 = vpack.c.b16 %v5353, %v5353
  %v5390 = vpack.c.b16 %v5354, %v5354
  %v5391 = vpack.c.b16 %v5355, %v5355
  %v5392 = vpack.c.b16 %v5356, %v5356
  %v5393 = vpack.c.b16 %v5357, %v5357
  %v5394 = vpack.c.b16 %v5358, %v5358
  %v5395 = vpack.c.b16 %v5359, %v5359
  %v5396 = vpack.c.b16 %v5360, %v5360
  %v5397 = vpack.c.b16 %v5361, %v5361
  %v5398 = vpack.c.b16 %v5362, %v5362
  %v5399 = vpack.c.b16 %v5363, %v5363
  %v5400 = vpack.c.b16 %v5364, %v5364
  %v5401 = vpack.c.b16 %v5365, %v5365
  %v5402 = vpack.c.b16 %v5366, %v5366
  %v5403 = vpack.c.b16 %v5367, %v5367
  %5440 = vst [vmem:[%s3] sm:$0xf] %v5368
  %5441 = vst [vmem:[%s3 + $0x4] sm:$0xf] %v5369
  %5442 = vst [vmem:[%s3 + $0x8] sm:$0xf] %v5370
  %5443 = vst [vmem:[%s3 + $0xc] sm:$0xf] %v5371
  %5444 = vst [vmem:[%s3 + $0x10] sm:$0xf] %v5372
  %5445 = vst [vmem:[%s3 + $0x14] sm:$0xf] %v5373
  %5446 = vst [vmem:[%s3 + $0x18] sm:$0xf] %v5374
  %5447 = vst [vmem:[%s3 + $0x1c] sm:$0xf] %v5375
  %5448 = vst [vmem:[%s3 + $0x20] sm:$0xf] %v5376
  %5449 = vst [vmem:[%s3 + $0x24] sm:$0xf] %v5377
  %5450 = vst [vmem:[%s3 + $0x28] sm:$0xf] %v5378
  %5451 = vst [vmem:[%s3 + $0x2c] sm:$0xf] %v5379
  %5452 = vst [vmem:[%s3 + $0x30] sm:$0xf] %v5380
  %5453 = vst [vmem:[%s3 + $0x34] sm:$0xf] %v5381
  %5454 = vst [vmem:[%s3 + $0x38] sm:$0xf] %v5382
  %5455 = vst [vmem:[%s3 + $0x3c] sm:$0xf] %v5383
  %5456 = vst [vmem:[%s3 + $0x40] sm:$0xf] %v5384
  %5457 = vst [vmem:[%s3 + $0x44] sm:$0xf] %v5385
  %5458 = vst [vmem:[%s3 + $0x48] sm:$0xf] %v5386
  %5459 = vst [vmem:[%s3 + $0x4c] sm:$0xf] %v5387
  %5460 = vst [vmem:[%s3 + $0x50] sm:$0xf] %v5388
  %5461 = vst [vmem:[%s3 + $0x54] sm:$0xf] %v5389
  %5462 = vst [vmem:[%s3 + $0x58] sm:$0xf] %v5390
  %5463 = vst [vmem:[%s3 + $0x5c] sm:$0xf] %v5391
  %5464 = vst [vmem:[%s3 + $0x60] sm:$0xf] %v5392
  %5465 = vst [vmem:[%s3 + $0x64] sm:$0xf] %v5393
  %5466 = vst [vmem:[%s3 + $0x68] sm:$0xf] %v5394
  %5467 = vst [vmem:[%s3 + $0x6c] sm:$0xf] %v5395
  %5468 = vst [vmem:[%s3 + $0x70] sm:$0xf] %v5396
  %5469 = vst [vmem:[%s3 + $0x74] sm:$0xf] %v5397
  %5470 = vst [vmem:[%s3 + $0x78] sm:$0xf] %v5398
  %5471 = vst [vmem:[%s3 + $0x7c] sm:$0xf] %v5399
  %5472 = vst [vmem:[%s3 + $0x80] sm:$0xf] %v5400
  %5473 = vst [vmem:[%s3 + $0x84] sm:$0xf] %v5401
  %5474 = vst [vmem:[%s3 + $0x88] sm:$0xf] %v5402
  %5475 = vst [vmem:[%s3 + $0x8c] sm:$0xf] %v5403
  %s5476 = scalar_lea.vmem %s0, 164
  %v5477 = vld [vmem:[%s5476] sm:$0xf]
  %v5478 = vld [vmem:[%s5476 + $0x4] sm:$0xf]
  %v5479 = vld [vmem:[%s5476 + $0x8] sm:$0xf]
  %v5480 = vld [vmem:[%s5476 + $0xc] sm:$0xf]
  %v5481 = vld [vmem:[%s5476 + $0x10] sm:$0xf]
  %v5482 = vld [vmem:[%s5476 + $0x14] sm:$0xf]
  %v5483 = vld [vmem:[%s5476 + $0x18] sm:$0xf]
  %v5484 = vld [vmem:[%s5476 + $0x1c] sm:$0xf]
  %v5485 = vld [vmem:[%s5476 + $0x20] sm:$0xf]
  %v5486 = vld [vmem:[%s5476 + $0x24] sm:$0xf]
  %v5487 = vld [vmem:[%s5476 + $0x28] sm:$0xf]
  %v5488 = vld [vmem:[%s5476 + $0x2c] sm:$0xf]
  %v5489 = vld [vmem:[%s5476 + $0x30] sm:$0xf]
  %v5490 = vld [vmem:[%s5476 + $0x34] sm:$0xf]
  %v5491 = vld [vmem:[%s5476 + $0x38] sm:$0xf]
  %v5492 = vld [vmem:[%s5476 + $0x3c] sm:$0xf]
  %v5493 = vld [vmem:[%s5476 + $0x40] sm:$0xf]
  %v5494 = vld [vmem:[%s5476 + $0x44] sm:$0xf]
  %v5495 = vld [vmem:[%s5476 + $0x48] sm:$0xf]
  %v5496 = vld [vmem:[%s5476 + $0x4c] sm:$0xf]
  %v5497 = vld [vmem:[%s5476 + $0x50] sm:$0xf]
  %v5498 = vld [vmem:[%s5476 + $0x54] sm:$0xf]
  %v5499 = vld [vmem:[%s5476 + $0x58] sm:$0xf]
  %v5500 = vld [vmem:[%s5476 + $0x5c] sm:$0xf]
  %v5501 = vld [vmem:[%s5476 + $0x60] sm:$0xf]
  %v5502 = vld [vmem:[%s5476 + $0x64] sm:$0xf]
  %v5503 = vld [vmem:[%s5476 + $0x68] sm:$0xf]
  %v5504 = vld [vmem:[%s5476 + $0x6c] sm:$0xf]
  %v5505 = vld [vmem:[%s5476 + $0x70] sm:$0xf]
  %v5506 = vld [vmem:[%s5476 + $0x74] sm:$0xf]
  %v5507 = vld [vmem:[%s5476 + $0x78] sm:$0xf]
  %v5508 = vld [vmem:[%s5476 + $0x7c] sm:$0xf]
  %v5509 = vld [vmem:[%s5476 + $0x80] sm:$0xf]
  %v5510 = vld [vmem:[%s5476 + $0x84] sm:$0xf]
  %v5511 = vld [vmem:[%s5476 + $0x88] sm:$0xf]
  %v5512 = vld [vmem:[%s5476 + $0x8c] sm:$0xf]
  %v5513 = vld [vmem:[%s1] sm:$0xf]
  %v5550 = vunpack.c.l.b16 %v5477
  %v5551 = vunpack.c.l.b16 %v5478
  %v5552 = vunpack.c.l.b16 %v5479
  %v5553 = vunpack.c.l.b16 %v5480
  %v5554 = vunpack.c.l.b16 %v5481
  %v5555 = vunpack.c.l.b16 %v5482
  %v5556 = vunpack.c.l.b16 %v5483
  %v5557 = vunpack.c.l.b16 %v5484
  %v5558 = vunpack.c.l.b16 %v5485
  %v5559 = vunpack.c.l.b16 %v5486
  %v5560 = vunpack.c.l.b16 %v5487
  %v5561 = vunpack.c.l.b16 %v5488
  %v5562 = vunpack.c.l.b16 %v5489
  %v5563 = vunpack.c.l.b16 %v5490
  %v5564 = vunpack.c.l.b16 %v5491
  %v5565 = vunpack.c.l.b16 %v5492
  %v5566 = vunpack.c.l.b16 %v5493
  %v5567 = vunpack.c.l.b16 %v5494
  %v5568 = vunpack.c.l.b16 %v5495
  %v5569 = vunpack.c.l.b16 %v5496
  %v5570 = vunpack.c.l.b16 %v5497
  %v5571 = vunpack.c.l.b16 %v5498
  %v5572 = vunpack.c.l.b16 %v5499
  %v5573 = vunpack.c.l.b16 %v5500
  %v5574 = vunpack.c.l.b16 %v5501
  %v5575 = vunpack.c.l.b16 %v5502
  %v5576 = vunpack.c.l.b16 %v5503
  %v5577 = vunpack.c.l.b16 %v5504
  %v5578 = vunpack.c.l.b16 %v5505
  %v5579 = vunpack.c.l.b16 %v5506
  %v5580 = vunpack.c.l.b16 %v5507
  %v5581 = vunpack.c.l.b16 %v5508
  %v5582 = vunpack.c.l.b16 %v5509
  %v5583 = vunpack.c.l.b16 %v5510
  %v5584 = vunpack.c.l.b16 %v5511
  %v5585 = vunpack.c.l.b16 %v5512
  %v5586 = vpack.c.b16 %v5551, %v5550
  %v5587 = vpack.c.b16 %v5553, %v5552
  %v5588 = vpack.c.b16 %v5555, %v5554
  %v5589 = vpack.c.b16 %v5557, %v5556
  %v5590 = vpack.c.b16 %v5559, %v5558
  %v5591 = vpack.c.b16 %v5561, %v5560
  %v5592 = vpack.c.b16 %v5563, %v5562
  %v5593 = vpack.c.b16 %v5565, %v5564
  %v5594 = vpack.c.b16 %v5567, %v5566
  %v5595 = vpack.c.b16 %v5569, %v5568
  %v5596 = vpack.c.b16 %v5571, %v5570
  %v5597 = vpack.c.b16 %v5573, %v5572
  %v5598 = vpack.c.b16 %v5575, %v5574
  %v5599 = vpack.c.b16 %v5577, %v5576
  %v5600 = vpack.c.b16 %v5579, %v5578
  %v5601 = vpack.c.b16 %v5581, %v5580
  %v5602 = vpack.c.b16 %v5583, %v5582
  %v5603 = vpack.c.b16 %v5585, %v5584
  %v5605 = vsel %vm181, %v5586, 0
  %v5608 = vsel %vm181, %v5587, 0
  %v5611 = vsel %vm181, %v5588, 0
  %v5614 = vsel %vm181, %v5589, 0
  %v5617 = vsel %vm181, %v5590, 0
  %v5620 = vsel %vm181, %v5591, 0
  %v5623 = vsel %vm181, %v5592, 0
  %v5626 = vsel %vm181, %v5593, 0
  %v5629 = vsel %vm181, %v5594, 0
  %v5632 = vsel %vm181, %v5595, 0
  %v5635 = vsel %vm181, %v5596, 0
  %v5638 = vsel %vm181, %v5597, 0
  %v5641 = vsel %vm181, %v5598, 0
  %v5644 = vsel %vm181, %v5599, 0
  %v5647 = vsel %vm181, %v5600, 0
  %v5650 = vsel %vm181, %v5601, 0
  %v5653 = vsel %vm181, %v5602, 0
  %v5656 = vsel %vm181, %v5603, 0
  %v5659 = vsel %vm236, %v5513, 0
  %5661 = vmatprep.subr.bf16.mxu0 0
  %5662 = vmatpush1.bf16.msra.mxu0 %v5659
  %5663 = vmatprep.subr.bf16.mxu0 0
  %5664 = vmatpush1.bf16.msra.mxu0 0
  %5665 = vmatprep.subr.bf16.mxu0 0
  %5666 = vmatpush1.bf16.msra.mxu0 0
  %5667 = vmatprep.subr.bf16.mxu0 0
  %5668 = vmatpush1.bf16.msra.mxu0 0
  %5669 = vmatprep.subr.bf16.mxu0 0
  %5670 = vmatpush1.bf16.msra.mxu0 0
  %5671 = vmatprep.subr.bf16.mxu0 0
  %5672 = vmatpush1.bf16.msra.mxu0 0
  %5673 = vmatprep.subr.bf16.mxu0 0
  %5674 = vmatpush1.bf16.msra.mxu0 0
  %5675 = vmatprep.subr.bf16.mxu0 0
  %5676 = vmatpush1.bf16.msra.mxu0 0
  %5677 = vmatprep.subr.bf16.mxu0 0
  %5678 = vmatpush1.bf16.msra.mxu0 0
  %5679 = vmatprep.subr.bf16.mxu0 0
  %5680 = vmatpush1.bf16.msra.mxu0 0
  %5681 = vmatprep.subr.bf16.mxu0 0
  %5682 = vmatpush1.bf16.msra.mxu0 0
  %5683 = vmatprep.subr.bf16.mxu0 0
  %5684 = vmatpush1.bf16.msra.mxu0 0
  %5685 = vmatprep.subr.bf16.mxu0 0
  %5686 = vmatpush1.bf16.msra.mxu0 0
  %5687 = vmatprep.subr.bf16.mxu0 0
  %5688 = vmatpush1.bf16.msra.mxu0 0
  %5689 = vmatprep.subr.bf16.mxu0 0
  %5690 = vmatpush1.bf16.msra.mxu0 0
  %5691 = vmatprep.subr.bf16.mxu0 0
  %5692 = vmatpush1.bf16.msra.mxu0 0
  %5693 = vmatprep.mubr.bf16.mxu0 0
  %5694 = vmatmul.mubr.bf16.gmra.mrb[0].mxu0 %v5605
  %v5695 = vpop.f32.mrb[0].mxu0
  %v5696 = vadd.f32 0.0, %v5695
  %v5697 = vpop.f32.mrb[0].mxu0
  %v5698 = vpop.f32.mrb[0].mxu0
  %v5699 = vadd.f32 0.0, %v5698
  %v5700 = vpop.f32.mrb[0].mxu0
  %5701 = vmatprep.mubr.bf16.mxu0 0
  %5702 = vmatmul.mubr.bf16.gmra.mrb[0].mxu0 %v5608
  %v5703 = vpop.f32.mrb[0].mxu0
  %v5704 = vadd.f32 0.0, %v5703
  %v5705 = vpop.f32.mrb[0].mxu0
  %v5706 = vpop.f32.mrb[0].mxu0
  %v5707 = vadd.f32 0.0, %v5706
  %v5708 = vpop.f32.mrb[0].mxu0
  %5709 = vmatprep.mubr.bf16.mxu0 0
  %5710 = vmatmul.mubr.bf16.gmra.mrb[0].mxu0 %v5611
  %v5711 = vpop.f32.mrb[0].mxu0
  %v5712 = vadd.f32 0.0, %v5711
  %v5713 = vpop.f32.mrb[0].mxu0
  %v5714 = vpop.f32.mrb[0].mxu0
  %v5715 = vadd.f32 0.0, %v5714
  %v5716 = vpop.f32.mrb[0].mxu0
  %5717 = vmatprep.mubr.bf16.mxu0 0
  %5718 = vmatmul.mubr.bf16.gmra.mrb[0].mxu0 %v5614
  %v5719 = vpop.f32.mrb[0].mxu0
  %v5720 = vadd.f32 0.0, %v5719
  %v5721 = vpop.f32.mrb[0].mxu0
  %v5722 = vpop.f32.mrb[0].mxu0
  %v5723 = vadd.f32 0.0, %v5722
  %v5724 = vpop.f32.mrb[0].mxu0
  %5725 = vmatprep.mubr.bf16.mxu0 0
  %5726 = vmatmul.mubr.bf16.gmra.mrb[0].mxu0 %v5617
  %v5727 = vpop.f32.mrb[0].mxu0
  %v5728 = vadd.f32 0.0, %v5727
  %v5729 = vpop.f32.mrb[0].mxu0
  %v5730 = vpop.f32.mrb[0].mxu0
  %v5731 = vadd.f32 0.0, %v5730
  %v5732 = vpop.f32.mrb[0].mxu0
  %5733 = vmatprep.mubr.bf16.mxu0 0
  %5734 = vmatmul.mubr.bf16.gmra.mrb[0].mxu0 %v5620
  %v5735 = vpop.f32.mrb[0].mxu0
  %v5736 = vadd.f32 0.0, %v5735
  %v5737 = vpop.f32.mrb[0].mxu0
  %v5738 = vpop.f32.mrb[0].mxu0
  %v5739 = vadd.f32 0.0, %v5738
  %v5740 = vpop.f32.mrb[0].mxu0
  %5741 = vmatprep.mubr.bf16.mxu0 0
  %5742 = vmatmul.mubr.bf16.gmra.mrb[0].mxu0 %v5623
  %v5743 = vpop.f32.mrb[0].mxu0
  %v5744 = vadd.f32 0.0, %v5743
  %v5745 = vpop.f32.mrb[0].mxu0
  %v5746 = vpop.f32.mrb[0].mxu0
  %v5747 = vadd.f32 0.0, %v5746
  %v5748 = vpop.f32.mrb[0].mxu0
  %5749 = vmatprep.mubr.bf16.mxu0 0
  %5750 = vmatmul.mubr.bf16.gmra.mrb[0].mxu0 %v5626
  %v5751 = vpop.f32.mrb[0].mxu0
  %v5752 = vadd.f32 0.0, %v5751
  %v5753 = vpop.f32.mrb[0].mxu0
  %v5754 = vpop.f32.mrb[0].mxu0
  %v5755 = vadd.f32 0.0, %v5754
  %v5756 = vpop.f32.mrb[0].mxu0
  %5757 = vmatprep.mubr.bf16.mxu0 0
  %5758 = vmatmul.mubr.bf16.gmra.mrb[0].mxu0 %v5629
  %v5759 = vpop.f32.mrb[0].mxu0
  %v5760 = vadd.f32 0.0, %v5759
  %v5761 = vpop.f32.mrb[0].mxu0
  %v5762 = vpop.f32.mrb[0].mxu0
  %v5763 = vadd.f32 0.0, %v5762
  %v5764 = vpop.f32.mrb[0].mxu0
  %5765 = vmatprep.mubr.bf16.mxu0 0
  %5766 = vmatmul.mubr.bf16.gmra.mrb[0].mxu0 %v5632
  %v5767 = vpop.f32.mrb[0].mxu0
  %v5768 = vadd.f32 0.0, %v5767
  %v5769 = vpop.f32.mrb[0].mxu0
  %v5770 = vpop.f32.mrb[0].mxu0
  %v5771 = vadd.f32 0.0, %v5770
  %v5772 = vpop.f32.mrb[0].mxu0
  %5773 = vmatprep.mubr.bf16.mxu0 0
  %5774 = vmatmul.mubr.bf16.gmra.mrb[0].mxu0 %v5635
  %v5775 = vpop.f32.mrb[0].mxu0
  %v5776 = vadd.f32 0.0, %v5775
  %v5777 = vpop.f32.mrb[0].mxu0
  %v5778 = vpop.f32.mrb[0].mxu0
  %v5779 = vadd.f32 0.0, %v5778
  %v5780 = vpop.f32.mrb[0].mxu0
  %5781 = vmatprep.mubr.bf16.mxu0 0
  %5782 = vmatmul.mubr.bf16.gmra.mrb[0].mxu0 %v5638
  %v5783 = vpop.f32.mrb[0].mxu0
  %v5784 = vadd.f32 0.0, %v5783
  %v5785 = vpop.f32.mrb[0].mxu0
  %v5786 = vpop.f32.mrb[0].mxu0
  %v5787 = vadd.f32 0.0, %v5786
  %v5788 = vpop.f32.mrb[0].mxu0
  %5789 = vmatprep.mubr.bf16.mxu0 0
  %5790 = vmatmul.mubr.bf16.gmra.mrb[0].mxu0 %v5641
  %v5791 = vpop.f32.mrb[0].mxu0
  %v5792 = vadd.f32 0.0, %v5791
  %v5793 = vpop.f32.mrb[0].mxu0
  %v5794 = vpop.f32.mrb[0].mxu0
  %v5795 = vadd.f32 0.0, %v5794
  %v5796 = vpop.f32.mrb[0].mxu0
  %5797 = vmatprep.mubr.bf16.mxu0 0
  %5798 = vmatmul.mubr.bf16.gmra.mrb[0].mxu0 %v5644
  %v5799 = vpop.f32.mrb[0].mxu0
  %v5800 = vadd.f32 0.0, %v5799
  %v5801 = vpop.f32.mrb[0].mxu0
  %v5802 = vpop.f32.mrb[0].mxu0
  %v5803 = vadd.f32 0.0, %v5802
  %v5804 = vpop.f32.mrb[0].mxu0
  %5805 = vmatprep.mubr.bf16.mxu0 0
  %5806 = vmatmul.mubr.bf16.gmra.mrb[0].mxu0 %v5647
  %v5807 = vpop.f32.mrb[0].mxu0
  %v5808 = vadd.f32 0.0, %v5807
  %v5809 = vpop.f32.mrb[0].mxu0
  %v5810 = vpop.f32.mrb[0].mxu0
  %v5811 = vadd.f32 0.0, %v5810
  %v5812 = vpop.f32.mrb[0].mxu0
  %5813 = vmatprep.mubr.bf16.mxu0 0
  %5814 = vmatmul.mubr.bf16.gmra.mrb[0].mxu0 %v5650
  %v5815 = vpop.f32.mrb[0].mxu0
  %v5816 = vadd.f32 0.0, %v5815
  %v5817 = vpop.f32.mrb[0].mxu0
  %v5818 = vpop.f32.mrb[0].mxu0
  %v5819 = vadd.f32 0.0, %v5818
  %v5820 = vpop.f32.mrb[0].mxu0
  %5821 = vmatprep.mubr.bf16.mxu0 0
  %5822 = vmatmul.mubr.bf16.gmra.mrb[0].mxu0 %v5653
  %v5823 = vpop.f32.mrb[0].mxu0
  %v5824 = vadd.f32 0.0, %v5823
  %v5825 = vpop.f32.mrb[0].mxu0
  %v5826 = vpop.f32.mrb[0].mxu0
  %v5827 = vadd.f32 0.0, %v5826
  %v5828 = vpop.f32.mrb[0].mxu0
  %5829 = vmatprep.mubr.bf16.mxu0 0
  %5830 = vmatmul.mubr.bf16.gmra.mrb[0].mxu0 %v5656
  %v5831 = vpop.f32.mrb[0].mxu0
  %v5832 = vadd.f32 0.0, %v5831
  %v5833 = vpop.f32.mrb[0].mxu0
  %v5834 = vpop.f32.mrb[0].mxu0
  %v5835 = vadd.f32 0.0, %v5834
  %v5836 = vpop.f32.mrb[0].mxu0
  %5837 = vdwg.mxu0
  %5838 = vst [vmem:[#allocation2] sm:$0xff] %v5696
  %5839 = vst [vmem:[#allocation2 + $0x8] sm:$0xff] %v5699
  %5840 = vst [vmem:[#allocation2 + $0x10] sm:$0xff] %v5704
  %5841 = vst [vmem:[#allocation2 + $0x18] sm:$0xff] %v5707
  %5842 = vst [vmem:[#allocation2 + $0x20] sm:$0xff] %v5712
  %5843 = vst [vmem:[#allocation2 + $0x28] sm:$0xff] %v5715
  %5844 = vst [vmem:[#allocation2 + $0x30] sm:$0xff] %v5720
  %5845 = vst [vmem:[#allocation2 + $0x38] sm:$0xff] %v5723
  %5846 = vst [vmem:[#allocation2 + $0x40] sm:$0xff] %v5728
  %5847 = vst [vmem:[#allocation2 + $0x48] sm:$0xff] %v5731
  %5848 = vst [vmem:[#allocation2 + $0x50] sm:$0xff] %v5736
  %5849 = vst [vmem:[#allocation2 + $0x58] sm:$0xff] %v5739
  %5850 = vst [vmem:[#allocation2 + $0x60] sm:$0xff] %v5744
  %5851 = vst [vmem:[#allocation2 + $0x68] sm:$0xff] %v5747
  %5852 = vst [vmem:[#allocation2 + $0x70] sm:$0xff] %v5752
  %5853 = vst [vmem:[#allocation2 + $0x78] sm:$0xff] %v5755
  %5854 = vst [vmem:[#allocation2 + $0x80] sm:$0xff] %v5760
  %5855 = vst [vmem:[#allocation2 + $0x88] sm:$0xff] %v5763
  %5856 = vst [vmem:[#allocation2 + $0x90] sm:$0xff] %v5768
  %5857 = vst [vmem:[#allocation2 + $0x98] sm:$0xff] %v5771
  %5858 = vst [vmem:[#allocation2 + $0xa0] sm:$0xff] %v5776
  %5859 = vst [vmem:[#allocation2 + $0xa8] sm:$0xff] %v5779
  %5860 = vst [vmem:[#allocation2 + $0xb0] sm:$0xff] %v5784
  %5861 = vst [vmem:[#allocation2 + $0xb8] sm:$0xff] %v5787
  %5862 = vst [vmem:[#allocation2 + $0xc0] sm:$0xff] %v5792
  %5863 = vst [vmem:[#allocation2 + $0xc8] sm:$0xff] %v5795
  %5864 = vst [vmem:[#allocation2 + $0xd0] sm:$0xff] %v5800
  %5865 = vst [vmem:[#allocation2 + $0xd8] sm:$0xff] %v5803
  %5866 = vst [vmem:[#allocation2 + $0xe0] sm:$0xff] %v5808
  %5867 = vst [vmem:[#allocation2 + $0xe8] sm:$0xff] %v5811
  %5868 = vst [vmem:[#allocation2 + $0xf0] sm:$0xff] %v5816
  %5869 = vst [vmem:[#allocation2 + $0xf8] sm:$0xff] %v5819
  %5870 = vst [vmem:[#allocation2 + $0x100] sm:$0xff] %v5824
  %5871 = vst [vmem:[#allocation2 + $0x108] sm:$0xff] %v5827
  %5872 = vst [vmem:[#allocation2 + $0x110] sm:$0xff] %v5832
  %5873 = vst [vmem:[#allocation2 + $0x118] sm:$0xff] %v5835
  %v5874 = vld [vmem:[%s5476] sm:$0xf]
  %v5875 = vld [vmem:[%s5476 + $0x4] sm:$0xf]
  %v5876 = vld [vmem:[%s5476 + $0x8] sm:$0xf]
  %v5877 = vld [vmem:[%s5476 + $0xc] sm:$0xf]
  %v5878 = vld [vmem:[%s5476 + $0x10] sm:$0xf]
  %v5879 = vld [vmem:[%s5476 + $0x14] sm:$0xf]
  %v5880 = vld [vmem:[%s5476 + $0x18] sm:$0xf]
  %v5881 = vld [vmem:[%s5476 + $0x1c] sm:$0xf]
  %v5882 = vld [vmem:[%s5476 + $0x20] sm:$0xf]
  %v5883 = vld [vmem:[%s5476 + $0x24] sm:$0xf]
  %v5884 = vld [vmem:[%s5476 + $0x28] sm:$0xf]
  %v5885 = vld [vmem:[%s5476 + $0x2c] sm:$0xf]
  %v5886 = vld [vmem:[%s5476 + $0x30] sm:$0xf]
  %v5887 = vld [vmem:[%s5476 + $0x34] sm:$0xf]
  %v5888 = vld [vmem:[%s5476 + $0x38] sm:$0xf]
  %v5889 = vld [vmem:[%s5476 + $0x3c] sm:$0xf]
  %v5890 = vld [vmem:[%s5476 + $0x40] sm:$0xf]
  %v5891 = vld [vmem:[%s5476 + $0x44] sm:$0xf]
  %v5892 = vld [vmem:[%s5476 + $0x48] sm:$0xf]
  %v5893 = vld [vmem:[%s5476 + $0x4c] sm:$0xf]
  %v5894 = vld [vmem:[%s5476 + $0x50] sm:$0xf]
  %v5895 = vld [vmem:[%s5476 + $0x54] sm:$0xf]
  %v5896 = vld [vmem:[%s5476 + $0x58] sm:$0xf]
  %v5897 = vld [vmem:[%s5476 + $0x5c] sm:$0xf]
  %v5898 = vld [vmem:[%s5476 + $0x60] sm:$0xf]
  %v5899 = vld [vmem:[%s5476 + $0x64] sm:$0xf]
  %v5900 = vld [vmem:[%s5476 + $0x68] sm:$0xf]
  %v5901 = vld [vmem:[%s5476 + $0x6c] sm:$0xf]
  %v5902 = vld [vmem:[%s5476 + $0x70] sm:$0xf]
  %v5903 = vld [vmem:[%s5476 + $0x74] sm:$0xf]
  %v5904 = vld [vmem:[%s5476 + $0x78] sm:$0xf]
  %v5905 = vld [vmem:[%s5476 + $0x7c] sm:$0xf]
  %v5906 = vld [vmem:[%s5476 + $0x80] sm:$0xf]
  %v5907 = vld [vmem:[%s5476 + $0x84] sm:$0xf]
  %v5908 = vld [vmem:[%s5476 + $0x88] sm:$0xf]
  %v5909 = vld [vmem:[%s5476 + $0x8c] sm:$0xf]
  %v5910 = vld [vmem:[%s5476 + $0x90] sm:$0x1]
  %v5911 = vld [vmem:[%s490] sm:$0xf]
  %v5949 = vunpack.c.l.b16 %v5874
  %v5950 = vunpack.c.l.b16 %v5875
  %v5951 = vunpack.c.l.b16 %v5876
  %v5952 = vunpack.c.l.b16 %v5877
  %v5953 = vunpack.c.l.b16 %v5878
  %v5954 = vunpack.c.l.b16 %v5879
  %v5955 = vunpack.c.l.b16 %v5880
  %v5956 = vunpack.c.l.b16 %v5881
  %v5957 = vunpack.c.l.b16 %v5882
  %v5958 = vunpack.c.l.b16 %v5883
  %v5959 = vunpack.c.l.b16 %v5884
  %v5960 = vunpack.c.l.b16 %v5885
  %v5961 = vunpack.c.l.b16 %v5886
  %v5962 = vunpack.c.l.b16 %v5887
  %v5963 = vunpack.c.l.b16 %v5888
  %v5964 = vunpack.c.l.b16 %v5889
  %v5965 = vunpack.c.l.b16 %v5890
  %v5966 = vunpack.c.l.b16 %v5891
  %v5967 = vunpack.c.l.b16 %v5892
  %v5968 = vunpack.c.l.b16 %v5893
  %v5969 = vunpack.c.l.b16 %v5894
  %v5970 = vunpack.c.l.b16 %v5895
  %v5971 = vunpack.c.l.b16 %v5896
  %v5972 = vunpack.c.l.b16 %v5897
  %v5973 = vunpack.c.l.b16 %v5898
  %v5974 = vunpack.c.l.b16 %v5899
  %v5975 = vunpack.c.l.b16 %v5900
  %v5976 = vunpack.c.l.b16 %v5901
  %v5977 = vunpack.c.l.b16 %v5902
  %v5978 = vunpack.c.l.b16 %v5903
  %v5979 = vunpack.c.l.b16 %v5904
  %v5980 = vunpack.c.l.b16 %v5905
  %v5981 = vunpack.c.l.b16 %v5906
  %v5982 = vunpack.c.l.b16 %v5907
  %v5983 = vunpack.c.l.b16 %v5908
  %v5984 = vunpack.c.l.b16 %v5909
  %v5985 = vunpack.c.l.b16 %v5910
  %v5986 = vpack.c.b16 %v5950, %v5949
  %v5987 = vpack.c.b16 %v5952, %v5951
  %v5988 = vpack.c.b16 %v5954, %v5953
  %v5989 = vpack.c.b16 %v5956, %v5955
  %v5990 = vpack.c.b16 %v5958, %v5957
  %v5991 = vpack.c.b16 %v5960, %v5959
  %v5992 = vpack.c.b16 %v5962, %v5961
  %v5993 = vpack.c.b16 %v5964, %v5963
  %v5994 = vpack.c.b16 %v5966, %v5965
  %v5995 = vpack.c.b16 %v5968, %v5967
  %v5996 = vpack.c.b16 %v5970, %v5969
  %v5997 = vpack.c.b16 %v5972, %v5971
  %v5998 = vpack.c.b16 %v5974, %v5973
  %v5999 = vpack.c.b16 %v5976, %v5975
  %v6000 = vpack.c.b16 %v5978, %v5977
  %v6001 = vpack.c.b16 %v5980, %v5979
  %v6002 = vpack.c.b16 %v5982, %v5981
  %v6003 = vpack.c.b16 %v5984, %v5983
  %v6004 = vpack.c.b16 %v5985, %v5985
  %v6006 = vshrl.u32 %v5986, 16
  %v6008 = vshll.u32 %v5986, 16
  %v6010 = vrot.slane %v6008, 1
  %v6011 = vor.u32 %v6006, %v6010
  %v6013 = vshll.u32 %v5987, 16
  %v6015 = vrot.slane %v6013, 1
  %v6016 = vsel %vm585, %v6011, %v6015
  %v6017 = vshrl.u32 %v5987, 16
  %v6019 = vor.u32 %v6017, %v6015
  %v6021 = vshll.u32 %v5988, 16
  %v6023 = vrot.slane %v6021, 1
  %v6024 = vsel %vm585, %v6019, %v6023
  %v6025 = vshrl.u32 %v5988, 16
  %v6027 = vor.u32 %v6025, %v6023
  %v6029 = vshll.u32 %v5989, 16
  %v6031 = vrot.slane %v6029, 1
  %v6032 = vsel %vm585, %v6027, %v6031
  %v6033 = vshrl.u32 %v5989, 16
  %v6035 = vor.u32 %v6033, %v6031
  %v6037 = vshll.u32 %v5990, 16
  %v6039 = vrot.slane %v6037, 1
  %v6040 = vsel %vm585, %v6035, %v6039
  %v6041 = vshrl.u32 %v5990, 16
  %v6043 = vor.u32 %v6041, %v6039
  %v6045 = vshll.u32 %v5991, 16
  %v6047 = vrot.slane %v6045, 1
  %v6048 = vsel %vm585, %v6043, %v6047
  %v6049 = vshrl.u32 %v5991, 16
  %v6051 = vor.u32 %v6049, %v6047
  %v6053 = vshll.u32 %v5992, 16
  %v6055 = vrot.slane %v6053, 1
  %v6056 = vsel %vm585, %v6051, %v6055
  %v6057 = vshrl.u32 %v5992, 16
  %v6059 = vor.u32 %v6057, %v6055
  %v6061 = vshll.u32 %v5993, 16
  %v6063 = vrot.slane %v6061, 1
  %v6064 = vsel %vm585, %v6059, %v6063
  %v6065 = vshrl.u32 %v5993, 16
  %v6067 = vor.u32 %v6065, %v6063
  %v6069 = vshll.u32 %v5994, 16
  %v6071 = vrot.slane %v6069, 1
  %v6072 = vsel %vm585, %v6067, %v6071
  %v6073 = vshrl.u32 %v5994, 16
  %v6075 = vor.u32 %v6073, %v6071
  %v6077 = vshll.u32 %v5995, 16
  %v6079 = vrot.slane %v6077, 1
  %v6080 = vsel %vm585, %v6075, %v6079
  %v6081 = vshrl.u32 %v5995, 16
  %v6083 = vor.u32 %v6081, %v6079
  %v6085 = vshll.u32 %v5996, 16
  %v6087 = vrot.slane %v6085, 1
  %v6088 = vsel %vm585, %v6083, %v6087
  %v6089 = vshrl.u32 %v5996, 16
  %v6091 = vor.u32 %v6089, %v6087
  %v6093 = vshll.u32 %v5997, 16
  %v6095 = vrot.slane %v6093, 1
  %v6096 = vsel %vm585, %v6091, %v6095
  %v6097 = vshrl.u32 %v5997, 16
  %v6099 = vor.u32 %v6097, %v6095
  %v6101 = vshll.u32 %v5998, 16
  %v6103 = vrot.slane %v6101, 1
  %v6104 = vsel %vm585, %v6099, %v6103
  %v6105 = vshrl.u32 %v5998, 16
  %v6107 = vor.u32 %v6105, %v6103
  %v6109 = vshll.u32 %v5999, 16
  %v6111 = vrot.slane %v6109, 1
  %v6112 = vsel %vm585, %v6107, %v6111
  %v6113 = vshrl.u32 %v5999, 16
  %v6115 = vor.u32 %v6113, %v6111
  %v6117 = vshll.u32 %v6000, 16
  %v6119 = vrot.slane %v6117, 1
  %v6120 = vsel %vm585, %v6115, %v6119
  %v6121 = vshrl.u32 %v6000, 16
  %v6123 = vor.u32 %v6121, %v6119
  %v6125 = vshll.u32 %v6001, 16
  %v6127 = vrot.slane %v6125, 1
  %v6128 = vsel %vm585, %v6123, %v6127
  %v6129 = vshrl.u32 %v6001, 16
  %v6131 = vor.u32 %v6129, %v6127
  %v6133 = vshll.u32 %v6002, 16
  %v6135 = vrot.slane %v6133, 1
  %v6136 = vsel %vm585, %v6131, %v6135
  %v6137 = vshrl.u32 %v6002, 16
  %v6139 = vor.u32 %v6137, %v6135
  %v6141 = vshll.u32 %v6003, 16
  %v6143 = vrot.slane %v6141, 1
  %v6144 = vsel %vm585, %v6139, %v6143
  %v6145 = vshrl.u32 %v6003, 16
  %v6147 = vor.u32 %v6145, %v6143
  %v6149 = vshll.u32 %v6004, 16
  %v6151 = vrot.slane %v6149, 1
  %v6152 = vsel %vm585, %v6147, %v6151
  %v6154 = vsel %vm181, %v6016, 0
  %v6157 = vsel %vm181, %v6024, 0
  %v6160 = vsel %vm181, %v6032, 0
  %v6163 = vsel %vm181, %v6040, 0
  %v6166 = vsel %vm181, %v6048, 0
  %v6169 = vsel %vm181, %v6056, 0
  %v6172 = vsel %vm181, %v6064, 0
  %v6175 = vsel %vm181, %v6072, 0
  %v6178 = vsel %vm181, %v6080, 0
  %v6181 = vsel %vm181, %v6088, 0
  %v6184 = vsel %vm181, %v6096, 0
  %v6187 = vsel %vm181, %v6104, 0
  %v6190 = vsel %vm181, %v6112, 0
  %v6193 = vsel %vm181, %v6120, 0
  %v6196 = vsel %vm181, %v6128, 0
  %v6199 = vsel %vm181, %v6136, 0
  %v6202 = vsel %vm181, %v6144, 0
  %v6205 = vsel %vm181, %v6152, 0
  %v6208 = vsel %vm236, %v5911, 0
  %6210 = vmatprep.subr.bf16.mxu0 0
  %6211 = vmatpush1.bf16.msra.mxu0 %v6208
  %6212 = vmatprep.subr.bf16.mxu0 0
  %6213 = vmatpush1.bf16.msra.mxu0 0
  %6214 = vmatprep.subr.bf16.mxu0 0
  %6215 = vmatpush1.bf16.msra.mxu0 0
  %6216 = vmatprep.subr.bf16.mxu0 0
  %6217 = vmatpush1.bf16.msra.mxu0 0
  %6218 = vmatprep.subr.bf16.mxu0 0
  %6219 = vmatpush1.bf16.msra.mxu0 0
  %6220 = vmatprep.subr.bf16.mxu0 0
  %6221 = vmatpush1.bf16.msra.mxu0 0
  %6222 = vmatprep.subr.bf16.mxu0 0
  %6223 = vmatpush1.bf16.msra.mxu0 0
  %6224 = vmatprep.subr.bf16.mxu0 0
  %6225 = vmatpush1.bf16.msra.mxu0 0
  %6226 = vmatprep.subr.bf16.mxu0 0
  %6227 = vmatpush1.bf16.msra.mxu0 0
  %6228 = vmatprep.subr.bf16.mxu0 0
  %6229 = vmatpush1.bf16.msra.mxu0 0
  %6230 = vmatprep.subr.bf16.mxu0 0
  %6231 = vmatpush1.bf16.msra.mxu0 0
  %6232 = vmatprep.subr.bf16.mxu0 0
  %6233 = vmatpush1.bf16.msra.mxu0 0
  %6234 = vmatprep.subr.bf16.mxu0 0
  %6235 = vmatpush1.bf16.msra.mxu0 0
  %6236 = vmatprep.subr.bf16.mxu0 0
  %6237 = vmatpush1.bf16.msra.mxu0 0
  %6238 = vmatprep.subr.bf16.mxu0 0
  %6239 = vmatpush1.bf16.msra.mxu0 0
  %6240 = vmatprep.subr.bf16.mxu0 0
  %6241 = vmatpush1.bf16.msra.mxu0 0
  %6242 = vmatprep.mubr.bf16.mxu0 0
  %6243 = vmatmul.mubr.bf16.gmra.mrb[0].mxu0 %v6154
  %v6244 = vpop.f32.mrb[0].mxu0
  %v6245 = vadd.f32 0.0, %v6244
  %v6246 = vpop.f32.mrb[0].mxu0
  %v6247 = vpop.f32.mrb[0].mxu0
  %v6248 = vadd.f32 0.0, %v6247
  %v6249 = vpop.f32.mrb[0].mxu0
  %6250 = vmatprep.mubr.bf16.mxu0 0
  %6251 = vmatmul.mubr.bf16.gmra.mrb[0].mxu0 %v6157
  %v6252 = vpop.f32.mrb[0].mxu0
  %v6253 = vadd.f32 0.0, %v6252
  %v6254 = vpop.f32.mrb[0].mxu0
  %v6255 = vpop.f32.mrb[0].mxu0
  %v6256 = vadd.f32 0.0, %v6255
  %v6257 = vpop.f32.mrb[0].mxu0
  %6258 = vmatprep.mubr.bf16.mxu0 0
  %6259 = vmatmul.mubr.bf16.gmra.mrb[0].mxu0 %v6160
  %v6260 = vpop.f32.mrb[0].mxu0
  %v6261 = vadd.f32 0.0, %v6260
  %v6262 = vpop.f32.mrb[0].mxu0
  %v6263 = vpop.f32.mrb[0].mxu0
  %v6264 = vadd.f32 0.0, %v6263
  %v6265 = vpop.f32.mrb[0].mxu0
  %6266 = vmatprep.mubr.bf16.mxu0 0
  %6267 = vmatmul.mubr.bf16.gmra.mrb[0].mxu0 %v6163
  %v6268 = vpop.f32.mrb[0].mxu0
  %v6269 = vadd.f32 0.0, %v6268
  %v6270 = vpop.f32.mrb[0].mxu0
  %v6271 = vpop.f32.mrb[0].mxu0
  %v6272 = vadd.f32 0.0, %v6271
  %v6273 = vpop.f32.mrb[0].mxu0
  %6274 = vmatprep.mubr.bf16.mxu0 0
  %6275 = vmatmul.mubr.bf16.gmra.mrb[0].mxu0 %v6166
  %v6276 = vpop.f32.mrb[0].mxu0
  %v6277 = vadd.f32 0.0, %v6276
  %v6278 = vpop.f32.mrb[0].mxu0
  %v6279 = vpop.f32.mrb[0].mxu0
  %v6280 = vadd.f32 0.0, %v6279
  %v6281 = vpop.f32.mrb[0].mxu0
  %6282 = vmatprep.mubr.bf16.mxu0 0
  %6283 = vmatmul.mubr.bf16.gmra.mrb[0].mxu0 %v6169
  %v6284 = vpop.f32.mrb[0].mxu0
  %v6285 = vadd.f32 0.0, %v6284
  %v6286 = vpop.f32.mrb[0].mxu0
  %v6287 = vpop.f32.mrb[0].mxu0
  %v6288 = vadd.f32 0.0, %v6287
  %v6289 = vpop.f32.mrb[0].mxu0
  %6290 = vmatprep.mubr.bf16.mxu0 0
  %6291 = vmatmul.mubr.bf16.gmra.mrb[0].mxu0 %v6172
  %v6292 = vpop.f32.mrb[0].mxu0
  %v6293 = vadd.f32 0.0, %v6292
  %v6294 = vpop.f32.mrb[0].mxu0
  %v6295 = vpop.f32.mrb[0].mxu0
  %v6296 = vadd.f32 0.0, %v6295
  %v6297 = vpop.f32.mrb[0].mxu0
  %6298 = vmatprep.mubr.bf16.mxu0 0
  %6299 = vmatmul.mubr.bf16.gmra.mrb[0].mxu0 %v6175
  %v6300 = vpop.f32.mrb[0].mxu0
  %v6301 = vadd.f32 0.0, %v6300
  %v6302 = vpop.f32.mrb[0].mxu0
  %v6303 = vpop.f32.mrb[0].mxu0
  %v6304 = vadd.f32 0.0, %v6303
  %v6305 = vpop.f32.mrb[0].mxu0
  %6306 = vmatprep.mubr.bf16.mxu0 0
  %6307 = vmatmul.mubr.bf16.gmra.mrb[0].mxu0 %v6178
  %v6308 = vpop.f32.mrb[0].mxu0
  %v6309 = vadd.f32 0.0, %v6308
  %v6310 = vpop.f32.mrb[0].mxu0
  %v6311 = vpop.f32.mrb[0].mxu0
  %v6312 = vadd.f32 0.0, %v6311
  %v6313 = vpop.f32.mrb[0].mxu0
  %6314 = vmatprep.mubr.bf16.mxu0 0
  %6315 = vmatmul.mubr.bf16.gmra.mrb[0].mxu0 %v6181
  %v6316 = vpop.f32.mrb[0].mxu0
  %v6317 = vadd.f32 0.0, %v6316
  %v6318 = vpop.f32.mrb[0].mxu0
  %v6319 = vpop.f32.mrb[0].mxu0
  %v6320 = vadd.f32 0.0, %v6319
  %v6321 = vpop.f32.mrb[0].mxu0
  %6322 = vmatprep.mubr.bf16.mxu0 0
  %6323 = vmatmul.mubr.bf16.gmra.mrb[0].mxu0 %v6184
  %v6324 = vpop.f32.mrb[0].mxu0
  %v6325 = vadd.f32 0.0, %v6324
  %v6326 = vpop.f32.mrb[0].mxu0
  %v6327 = vpop.f32.mrb[0].mxu0
  %v6328 = vadd.f32 0.0, %v6327
  %v6329 = vpop.f32.mrb[0].mxu0
  %6330 = vmatprep.mubr.bf16.mxu0 0
  %6331 = vmatmul.mubr.bf16.gmra.mrb[0].mxu0 %v6187
  %v6332 = vpop.f32.mrb[0].mxu0
  %v6333 = vadd.f32 0.0, %v6332
  %v6334 = vpop.f32.mrb[0].mxu0
  %v6335 = vpop.f32.mrb[0].mxu0
  %v6336 = vadd.f32 0.0, %v6335
  %v6337 = vpop.f32.mrb[0].mxu0
  %6338 = vmatprep.mubr.bf16.mxu0 0
  %6339 = vmatmul.mubr.bf16.gmra.mrb[0].mxu0 %v6190
  %v6340 = vpop.f32.mrb[0].mxu0
  %v6341 = vadd.f32 0.0, %v6340
  %v6342 = vpop.f32.mrb[0].mxu0
  %v6343 = vpop.f32.mrb[0].mxu0
  %v6344 = vadd.f32 0.0, %v6343
  %v6345 = vpop.f32.mrb[0].mxu0
  %6346 = vmatprep.mubr.bf16.mxu0 0
  %6347 = vmatmul.mubr.bf16.gmra.mrb[0].mxu0 %v6193
  %v6348 = vpop.f32.mrb[0].mxu0
  %v6349 = vadd.f32 0.0, %v6348
  %v6350 = vpop.f32.mrb[0].mxu0
  %v6351 = vpop.f32.mrb[0].mxu0
  %v6352 = vadd.f32 0.0, %v6351
  %v6353 = vpop.f32.mrb[0].mxu0
  %6354 = vmatprep.mubr.bf16.mxu0 0
  %6355 = vmatmul.mubr.bf16.gmra.mrb[0].mxu0 %v6196
  %v6356 = vpop.f32.mrb[0].mxu0
  %v6357 = vadd.f32 0.0, %v6356
  %v6358 = vpop.f32.mrb[0].mxu0
  %v6359 = vpop.f32.mrb[0].mxu0
  %v6360 = vadd.f32 0.0, %v6359
  %v6361 = vpop.f32.mrb[0].mxu0
  %6362 = vmatprep.mubr.bf16.mxu0 0
  %6363 = vmatmul.mubr.bf16.gmra.mrb[0].mxu0 %v6199
  %v6364 = vpop.f32.mrb[0].mxu0
  %v6365 = vadd.f32 0.0, %v6364
  %v6366 = vpop.f32.mrb[0].mxu0
  %v6367 = vpop.f32.mrb[0].mxu0
  %v6368 = vadd.f32 0.0, %v6367
  %v6369 = vpop.f32.mrb[0].mxu0
  %6370 = vmatprep.mubr.bf16.mxu0 0
  %6371 = vmatmul.mubr.bf16.gmra.mrb[0].mxu0 %v6202
  %v6372 = vpop.f32.mrb[0].mxu0
  %v6373 = vadd.f32 0.0, %v6372
  %v6374 = vpop.f32.mrb[0].mxu0
  %v6375 = vpop.f32.mrb[0].mxu0
  %v6376 = vadd.f32 0.0, %v6375
  %v6377 = vpop.f32.mrb[0].mxu0
  %6378 = vmatprep.mubr.bf16.mxu0 0
  %6379 = vmatmul.mubr.bf16.gmra.mrb[0].mxu0 %v6205
  %v6380 = vpop.f32.mrb[0].mxu0
  %v6381 = vadd.f32 0.0, %v6380
  %v6382 = vpop.f32.mrb[0].mxu0
  %v6383 = vpop.f32.mrb[0].mxu0
  %v6384 = vadd.f32 0.0, %v6383
  %v6385 = vpop.f32.mrb[0].mxu0
  %6386 = vdwg.mxu0
  %v6387 = vld [vmem:[#allocation2] sm:$0xff]
  %v6388 = vld [vmem:[#allocation2 + $0x8] sm:$0xff]
  %v6389 = vld [vmem:[#allocation2 + $0x10] sm:$0xff]
  %v6390 = vld [vmem:[#allocation2 + $0x18] sm:$0xff]
  %v6391 = vld [vmem:[#allocation2 + $0x20] sm:$0xff]
  %v6392 = vld [vmem:[#allocation2 + $0x28] sm:$0xff]
  %v6393 = vld [vmem:[#allocation2 + $0x30] sm:$0xff]
  %v6394 = vld [vmem:[#allocation2 + $0x38] sm:$0xff]
  %v6395 = vld [vmem:[#allocation2 + $0x40] sm:$0xff]
  %v6396 = vld [vmem:[#allocation2 + $0x48] sm:$0xff]
  %v6397 = vld [vmem:[#allocation2 + $0x50] sm:$0xff]
  %v6398 = vld [vmem:[#allocation2 + $0x58] sm:$0xff]
  %v6399 = vld [vmem:[#allocation2 + $0x60] sm:$0xff]
  %v6400 = vld [vmem:[#allocation2 + $0x68] sm:$0xff]
  %v6401 = vld [vmem:[#allocation2 + $0x70] sm:$0xff]
  %v6402 = vld [vmem:[#allocation2 + $0x78] sm:$0xff]
  %v6403 = vld [vmem:[#allocation2 + $0x80] sm:$0xff]
  %v6404 = vld [vmem:[#allocation2 + $0x88] sm:$0xff]
  %v6405 = vld [vmem:[#allocation2 + $0x90] sm:$0xff]
  %v6406 = vld [vmem:[#allocation2 + $0x98] sm:$0xff]
  %v6407 = vld [vmem:[#allocation2 + $0xa0] sm:$0xff]
  %v6408 = vld [vmem:[#allocation2 + $0xa8] sm:$0xff]
  %v6409 = vld [vmem:[#allocation2 + $0xb0] sm:$0xff]
  %v6410 = vld [vmem:[#allocation2 + $0xb8] sm:$0xff]
  %v6411 = vld [vmem:[#allocation2 + $0xc0] sm:$0xff]
  %v6412 = vld [vmem:[#allocation2 + $0xc8] sm:$0xff]
  %v6413 = vld [vmem:[#allocation2 + $0xd0] sm:$0xff]
  %v6414 = vld [vmem:[#allocation2 + $0xd8] sm:$0xff]
  %v6415 = vld [vmem:[#allocation2 + $0xe0] sm:$0xff]
  %v6416 = vld [vmem:[#allocation2 + $0xe8] sm:$0xff]
  %v6417 = vld [vmem:[#allocation2 + $0xf0] sm:$0xff]
  %v6418 = vld [vmem:[#allocation2 + $0xf8] sm:$0xff]
  %v6419 = vld [vmem:[#allocation2 + $0x100] sm:$0xff]
  %v6420 = vld [vmem:[#allocation2 + $0x108] sm:$0xff]
  %v6421 = vld [vmem:[#allocation2 + $0x110] sm:$0xff]
  %v6422 = vld [vmem:[#allocation2 + $0x118] sm:$0xff]
  %v6423 = vadd.f32 %v6387, %v6245
  %v6424 = vadd.f32 %v6388, %v6248
  %v6425 = vadd.f32 %v6389, %v6253
  %v6426 = vadd.f32 %v6390, %v6256
  %v6427 = vadd.f32 %v6391, %v6261
  %v6428 = vadd.f32 %v6392, %v6264
  %v6429 = vadd.f32 %v6393, %v6269
  %v6430 = vadd.f32 %v6394, %v6272
  %v6431 = vadd.f32 %v6395, %v6277
  %v6432 = vadd.f32 %v6396, %v6280
  %v6433 = vadd.f32 %v6397, %v6285
  %v6434 = vadd.f32 %v6398, %v6288
  %v6435 = vadd.f32 %v6399, %v6293
  %v6436 = vadd.f32 %v6400, %v6296
  %v6437 = vadd.f32 %v6401, %v6301
  %v6438 = vadd.f32 %v6402, %v6304
  %v6439 = vadd.f32 %v6403, %v6309
  %v6440 = vadd.f32 %v6404, %v6312
  %v6441 = vadd.f32 %v6405, %v6317
  %v6442 = vadd.f32 %v6406, %v6320
  %v6443 = vadd.f32 %v6407, %v6325
  %v6444 = vadd.f32 %v6408, %v6328
  %v6445 = vadd.f32 %v6409, %v6333
  %v6446 = vadd.f32 %v6410, %v6336
  %v6447 = vadd.f32 %v6411, %v6341
  %v6448 = vadd.f32 %v6412, %v6344
  %v6449 = vadd.f32 %v6413, %v6349
  %v6450 = vadd.f32 %v6414, %v6352
  %v6451 = vadd.f32 %v6415, %v6357
  %v6452 = vadd.f32 %v6416, %v6360
  %v6453 = vadd.f32 %v6417, %v6365
  %v6454 = vadd.f32 %v6418, %v6368
  %v6455 = vadd.f32 %v6419, %v6373
  %v6456 = vadd.f32 %v6420, %v6376
  %v6457 = vadd.f32 %v6421, %v6381
  %v6458 = vadd.f32 %v6422, %v6384
  %6459 = vst [vmem:[#allocation2] sm:$0xff] %v6423
  %6460 = vst [vmem:[#allocation2 + $0x8] sm:$0xff] %v6424
  %6461 = vst [vmem:[#allocation2 + $0x10] sm:$0xff] %v6425
  %6462 = vst [vmem:[#allocation2 + $0x18] sm:$0xff] %v6426
  %6463 = vst [vmem:[#allocation2 + $0x20] sm:$0xff] %v6427
  %6464 = vst [vmem:[#allocation2 + $0x28] sm:$0xff] %v6428
  %6465 = vst [vmem:[#allocation2 + $0x30] sm:$0xff] %v6429
  %6466 = vst [vmem:[#allocation2 + $0x38] sm:$0xff] %v6430
  %6467 = vst [vmem:[#allocation2 + $0x40] sm:$0xff] %v6431
  %6468 = vst [vmem:[#allocation2 + $0x48] sm:$0xff] %v6432
  %6469 = vst [vmem:[#allocation2 + $0x50] sm:$0xff] %v6433
  %6470 = vst [vmem:[#allocation2 + $0x58] sm:$0xff] %v6434
  %6471 = vst [vmem:[#allocation2 + $0x60] sm:$0xff] %v6435
  %6472 = vst [vmem:[#allocation2 + $0x68] sm:$0xff] %v6436
  %6473 = vst [vmem:[#allocation2 + $0x70] sm:$0xff] %v6437
  %6474 = vst [vmem:[#allocation2 + $0x78] sm:$0xff] %v6438
  %6475 = vst [vmem:[#allocation2 + $0x80] sm:$0xff] %v6439
  %6476 = vst [vmem:[#allocation2 + $0x88] sm:$0xff] %v6440
  %6477 = vst [vmem:[#allocation2 + $0x90] sm:$0xff] %v6441
  %6478 = vst [vmem:[#allocation2 + $0x98] sm:$0xff] %v6442
  %6479 = vst [vmem:[#allocation2 + $0xa0] sm:$0xff] %v6443
  %6480 = vst [vmem:[#allocation2 + $0xa8] sm:$0xff] %v6444
  %6481 = vst [vmem:[#allocation2 + $0xb0] sm:$0xff] %v6445
  %6482 = vst [vmem:[#allocation2 + $0xb8] sm:$0xff] %v6446
  %6483 = vst [vmem:[#allocation2 + $0xc0] sm:$0xff] %v6447
  %6484 = vst [vmem:[#allocation2 + $0xc8] sm:$0xff] %v6448
  %6485 = vst [vmem:[#allocation2 + $0xd0] sm:$0xff] %v6449
  %6486 = vst [vmem:[#allocation2 + $0xd8] sm:$0xff] %v6450
  %6487 = vst [vmem:[#allocation2 + $0xe0] sm:$0xff] %v6451
  %6488 = vst [vmem:[#allocation2 + $0xe8] sm:$0xff] %v6452
  %6489 = vst [vmem:[#allocation2 + $0xf0] sm:$0xff] %v6453
  %6490 = vst [vmem:[#allocation2 + $0xf8] sm:$0xff] %v6454
  %6491 = vst [vmem:[#allocation2 + $0x100] sm:$0xff] %v6455
  %6492 = vst [vmem:[#allocation2 + $0x108] sm:$0xff] %v6456
  %6493 = vst [vmem:[#allocation2 + $0x110] sm:$0xff] %v6457
  %6494 = vst [vmem:[#allocation2 + $0x118] sm:$0xff] %v6458
  %v6495 = vld [vmem:[%s5476] sm:$0xe]
  %v6496 = vld [vmem:[%s5476 + $0x4] sm:$0xf]
  %v6497 = vld [vmem:[%s5476 + $0x8] sm:$0xf]
  %v6498 = vld [vmem:[%s5476 + $0xc] sm:$0xf]
  %v6499 = vld [vmem:[%s5476 + $0x10] sm:$0xf]
  %v6500 = vld [vmem:[%s5476 + $0x14] sm:$0xf]
  %v6501 = vld [vmem:[%s5476 + $0x18] sm:$0xf]
  %v6502 = vld [vmem:[%s5476 + $0x1c] sm:$0xf]
  %v6503 = vld [vmem:[%s5476 + $0x20] sm:$0xf]
  %v6504 = vld [vmem:[%s5476 + $0x24] sm:$0xf]
  %v6505 = vld [vmem:[%s5476 + $0x28] sm:$0xf]
  %v6506 = vld [vmem:[%s5476 + $0x2c] sm:$0xf]
  %v6507 = vld [vmem:[%s5476 + $0x30] sm:$0xf]
  %v6508 = vld [vmem:[%s5476 + $0x34] sm:$0xf]
  %v6509 = vld [vmem:[%s5476 + $0x38] sm:$0xf]
  %v6510 = vld [vmem:[%s5476 + $0x3c] sm:$0xf]
  %v6511 = vld [vmem:[%s5476 + $0x40] sm:$0xf]
  %v6512 = vld [vmem:[%s5476 + $0x44] sm:$0xf]
  %v6513 = vld [vmem:[%s5476 + $0x48] sm:$0xf]
  %v6514 = vld [vmem:[%s5476 + $0x4c] sm:$0xf]
  %v6515 = vld [vmem:[%s5476 + $0x50] sm:$0xf]
  %v6516 = vld [vmem:[%s5476 + $0x54] sm:$0xf]
  %v6517 = vld [vmem:[%s5476 + $0x58] sm:$0xf]
  %v6518 = vld [vmem:[%s5476 + $0x5c] sm:$0xf]
  %v6519 = vld [vmem:[%s5476 + $0x60] sm:$0xf]
  %v6520 = vld [vmem:[%s5476 + $0x64] sm:$0xf]
  %v6521 = vld [vmem:[%s5476 + $0x68] sm:$0xf]
  %v6522 = vld [vmem:[%s5476 + $0x6c] sm:$0xf]
  %v6523 = vld [vmem:[%s5476 + $0x70] sm:$0xf]
  %v6524 = vld [vmem:[%s5476 + $0x74] sm:$0xf]
  %v6525 = vld [vmem:[%s5476 + $0x78] sm:$0xf]
  %v6526 = vld [vmem:[%s5476 + $0x7c] sm:$0xf]
  %v6527 = vld [vmem:[%s5476 + $0x80] sm:$0xf]
  %v6528 = vld [vmem:[%s5476 + $0x84] sm:$0xf]
  %v6529 = vld [vmem:[%s5476 + $0x88] sm:$0xf]
  %v6530 = vld [vmem:[%s5476 + $0x8c] sm:$0xf]
  %v6531 = vld [vmem:[%s5476 + $0x90] sm:$0x1]
  %v6532 = vld [vmem:[%s1113] sm:$0xf]
  %v6570 = vunpack.c.l.b16 %v6495
  %v6571 = vunpack.c.l.b16 %v6496
  %v6572 = vunpack.c.l.b16 %v6497
  %v6573 = vunpack.c.l.b16 %v6498
  %v6574 = vunpack.c.l.b16 %v6499
  %v6575 = vunpack.c.l.b16 %v6500
  %v6576 = vunpack.c.l.b16 %v6501
  %v6577 = vunpack.c.l.b16 %v6502
  %v6578 = vunpack.c.l.b16 %v6503
  %v6579 = vunpack.c.l.b16 %v6504
  %v6580 = vunpack.c.l.b16 %v6505
  %v6581 = vunpack.c.l.b16 %v6506
  %v6582 = vunpack.c.l.b16 %v6507
  %v6583 = vunpack.c.l.b16 %v6508
  %v6584 = vunpack.c.l.b16 %v6509
  %v6585 = vunpack.c.l.b16 %v6510
  %v6586 = vunpack.c.l.b16 %v6511
  %v6587 = vunpack.c.l.b16 %v6512
  %v6588 = vunpack.c.l.b16 %v6513
  %v6589 = vunpack.c.l.b16 %v6514
  %v6590 = vunpack.c.l.b16 %v6515
  %v6591 = vunpack.c.l.b16 %v6516
  %v6592 = vunpack.c.l.b16 %v6517
  %v6593 = vunpack.c.l.b16 %v6518
  %v6594 = vunpack.c.l.b16 %v6519
  %v6595 = vunpack.c.l.b16 %v6520
  %v6596 = vunpack.c.l.b16 %v6521
  %v6597 = vunpack.c.l.b16 %v6522
  %v6598 = vunpack.c.l.b16 %v6523
  %v6599 = vunpack.c.l.b16 %v6524
  %v6600 = vunpack.c.l.b16 %v6525
  %v6601 = vunpack.c.l.b16 %v6526
  %v6602 = vunpack.c.l.b16 %v6527
  %v6603 = vunpack.c.l.b16 %v6528
  %v6604 = vunpack.c.l.b16 %v6529
  %v6605 = vunpack.c.l.b16 %v6530
  %v6606 = vunpack.c.l.b16 %v6531
  %v6607 = vpack.c.b16 %v6571, %v6570
  %v6608 = vpack.c.b16 %v6573, %v6572
  %v6609 = vpack.c.b16 %v6575, %v6574
  %v6610 = vpack.c.b16 %v6577, %v6576
  %v6611 = vpack.c.b16 %v6579, %v6578
  %v6612 = vpack.c.b16 %v6581, %v6580
  %v6613 = vpack.c.b16 %v6583, %v6582
  %v6614 = vpack.c.b16 %v6585, %v6584
  %v6615 = vpack.c.b16 %v6587, %v6586
  %v6616 = vpack.c.b16 %v6589, %v6588
  %v6617 = vpack.c.b16 %v6591, %v6590
  %v6618 = vpack.c.b16 %v6593, %v6592
  %v6619 = vpack.c.b16 %v6595, %v6594
  %v6620 = vpack.c.b16 %v6597, %v6596
  %v6621 = vpack.c.b16 %v6599, %v6598
  %v6622 = vpack.c.b16 %v6601, %v6600
  %v6623 = vpack.c.b16 %v6603, %v6602
  %v6624 = vpack.c.b16 %v6605, %v6604
  %v6625 = vpack.c.b16 %v6606, %v6606
  %v6626 = vrot.slane %v6607, 1
  %v6627 = vrot.slane %v6608, 1
  %v6628 = vsel %vm1208, %v6626, %v6627
  %v6629 = vrot.slane %v6609, 1
  %v6630 = vsel %vm1208, %v6627, %v6629
  %v6631 = vrot.slane %v6610, 1
  %v6632 = vsel %vm1208, %v6629, %v6631
  %v6633 = vrot.slane %v6611, 1
  %v6634 = vsel %vm1208, %v6631, %v6633
  %v6635 = vrot.slane %v6612, 1
  %v6636 = vsel %vm1208, %v6633, %v6635
  %v6637 = vrot.slane %v6613, 1
  %v6638 = vsel %vm1208, %v6635, %v6637
  %v6639 = vrot.slane %v6614, 1
  %v6640 = vsel %vm1208, %v6637, %v6639
  %v6641 = vrot.slane %v6615, 1
  %v6642 = vsel %vm1208, %v6639, %v6641
  %v6643 = vrot.slane %v6616, 1
  %v6644 = vsel %vm1208, %v6641, %v6643
  %v6645 = vrot.slane %v6617, 1
  %v6646 = vsel %vm1208, %v6643, %v6645
  %v6647 = vrot.slane %v6618, 1
  %v6648 = vsel %vm1208, %v6645, %v6647
  %v6649 = vrot.slane %v6619, 1
  %v6650 = vsel %vm1208, %v6647, %v6649
  %v6651 = vrot.slane %v6620, 1
  %v6652 = vsel %vm1208, %v6649, %v6651
  %v6653 = vrot.slane %v6621, 1
  %v6654 = vsel %vm1208, %v6651, %v6653
  %v6655 = vrot.slane %v6622, 1
  %v6656 = vsel %vm1208, %v6653, %v6655
  %v6657 = vrot.slane %v6623, 1
  %v6658 = vsel %vm1208, %v6655, %v6657
  %v6659 = vrot.slane %v6624, 1
  %v6660 = vsel %vm1208, %v6657, %v6659
  %v6661 = vrot.slane %v6625, 1
  %v6662 = vsel %vm1208, %v6659, %v6661
  %v6664 = vsel %vm181, %v6628, 0
  %v6667 = vsel %vm181, %v6630, 0
  %v6670 = vsel %vm181, %v6632, 0
  %v6673 = vsel %vm181, %v6634, 0
  %v6676 = vsel %vm181, %v6636, 0
  %v6679 = vsel %vm181, %v6638, 0
  %v6682 = vsel %vm181, %v6640, 0
  %v6685 = vsel %vm181, %v6642, 0
  %v6688 = vsel %vm181, %v6644, 0
  %v6691 = vsel %vm181, %v6646, 0
  %v6694 = vsel %vm181, %v6648, 0
  %v6697 = vsel %vm181, %v6650, 0
  %v6700 = vsel %vm181, %v6652, 0
  %v6703 = vsel %vm181, %v6654, 0
  %v6706 = vsel %vm181, %v6656, 0
  %v6709 = vsel %vm181, %v6658, 0
  %v6712 = vsel %vm181, %v6660, 0
  %v6715 = vsel %vm181, %v6662, 0
  %v6718 = vsel %vm236, %v6532, 0
  %6720 = vmatprep.subr.bf16.mxu0 0
  %6721 = vmatpush1.bf16.msra.mxu0 %v6718
  %6722 = vmatprep.subr.bf16.mxu0 0
  %6723 = vmatpush1.bf16.msra.mxu0 0
  %6724 = vmatprep.subr.bf16.mxu0 0
  %6725 = vmatpush1.bf16.msra.mxu0 0
  %6726 = vmatprep.subr.bf16.mxu0 0
  %6727 = vmatpush1.bf16.msra.mxu0 0
  %6728 = vmatprep.subr.bf16.mxu0 0
  %6729 = vmatpush1.bf16.msra.mxu0 0
  %6730 = vmatprep.subr.bf16.mxu0 0
  %6731 = vmatpush1.bf16.msra.mxu0 0
  %6732 = vmatprep.subr.bf16.mxu0 0
  %6733 = vmatpush1.bf16.msra.mxu0 0
  %6734 = vmatprep.subr.bf16.mxu0 0
  %6735 = vmatpush1.bf16.msra.mxu0 0
  %6736 = vmatprep.subr.bf16.mxu0 0
  %6737 = vmatpush1.bf16.msra.mxu0 0
  %6738 = vmatprep.subr.bf16.mxu0 0
  %6739 = vmatpush1.bf16.msra.mxu0 0
  %6740 = vmatprep.subr.bf16.mxu0 0
  %6741 = vmatpush1.bf16.msra.mxu0 0
  %6742 = vmatprep.subr.bf16.mxu0 0
  %6743 = vmatpush1.bf16.msra.mxu0 0
  %6744 = vmatprep.subr.bf16.mxu0 0
  %6745 = vmatpush1.bf16.msra.mxu0 0
  %6746 = vmatprep.subr.bf16.mxu0 0
  %6747 = vmatpush1.bf16.msra.mxu0 0
  %6748 = vmatprep.subr.bf16.mxu0 0
  %6749 = vmatpush1.bf16.msra.mxu0 0
  %6750 = vmatprep.subr.bf16.mxu0 0
  %6751 = vmatpush1.bf16.msra.mxu0 0
  %6752 = vmatprep.mubr.bf16.mxu0 0
  %6753 = vmatmul.mubr.bf16.gmra.mrb[0].mxu0 %v6664
  %v6754 = vpop.f32.mrb[0].mxu0
  %v6755 = vadd.f32 0.0, %v6754
  %v6756 = vpop.f32.mrb[0].mxu0
  %v6757 = vpop.f32.mrb[0].mxu0
  %v6758 = vadd.f32 0.0, %v6757
  %v6759 = vpop.f32.mrb[0].mxu0
  %6760 = vmatprep.mubr.bf16.mxu0 0
  %6761 = vmatmul.mubr.bf16.gmra.mrb[0].mxu0 %v6667
  %v6762 = vpop.f32.mrb[0].mxu0
  %v6763 = vadd.f32 0.0, %v6762
  %v6764 = vpop.f32.mrb[0].mxu0
  %v6765 = vpop.f32.mrb[0].mxu0
  %v6766 = vadd.f32 0.0, %v6765
  %v6767 = vpop.f32.mrb[0].mxu0
  %6768 = vmatprep.mubr.bf16.mxu0 0
  %6769 = vmatmul.mubr.bf16.gmra.mrb[0].mxu0 %v6670
  %v6770 = vpop.f32.mrb[0].mxu0
  %v6771 = vadd.f32 0.0, %v6770
  %v6772 = vpop.f32.mrb[0].mxu0
  %v6773 = vpop.f32.mrb[0].mxu0
  %v6774 = vadd.f32 0.0, %v6773
  %v6775 = vpop.f32.mrb[0].mxu0
  %6776 = vmatprep.mubr.bf16.mxu0 0
  %6777 = vmatmul.mubr.bf16.gmra.mrb[0].mxu0 %v6673
  %v6778 = vpop.f32.mrb[0].mxu0
  %v6779 = vadd.f32 0.0, %v6778
  %v6780 = vpop.f32.mrb[0].mxu0
  %v6781 = vpop.f32.mrb[0].mxu0
  %v6782 = vadd.f32 0.0, %v6781
  %v6783 = vpop.f32.mrb[0].mxu0
  %6784 = vmatprep.mubr.bf16.mxu0 0
  %6785 = vmatmul.mubr.bf16.gmra.mrb[0].mxu0 %v6676
  %v6786 = vpop.f32.mrb[0].mxu0
  %v6787 = vadd.f32 0.0, %v6786
  %v6788 = vpop.f32.mrb[0].mxu0
  %v6789 = vpop.f32.mrb[0].mxu0
  %v6790 = vadd.f32 0.0, %v6789
  %v6791 = vpop.f32.mrb[0].mxu0
  %6792 = vmatprep.mubr.bf16.mxu0 0
  %6793 = vmatmul.mubr.bf16.gmra.mrb[0].mxu0 %v6679
  %v6794 = vpop.f32.mrb[0].mxu0
  %v6795 = vadd.f32 0.0, %v6794
  %v6796 = vpop.f32.mrb[0].mxu0
  %v6797 = vpop.f32.mrb[0].mxu0
  %v6798 = vadd.f32 0.0, %v6797
  %v6799 = vpop.f32.mrb[0].mxu0
  %6800 = vmatprep.mubr.bf16.mxu0 0
  %6801 = vmatmul.mubr.bf16.gmra.mrb[0].mxu0 %v6682
  %v6802 = vpop.f32.mrb[0].mxu0
  %v6803 = vadd.f32 0.0, %v6802
  %v6804 = vpop.f32.mrb[0].mxu0
  %v6805 = vpop.f32.mrb[0].mxu0
  %v6806 = vadd.f32 0.0, %v6805
  %v6807 = vpop.f32.mrb[0].mxu0
  %6808 = vmatprep.mubr.bf16.mxu0 0
  %6809 = vmatmul.mubr.bf16.gmra.mrb[0].mxu0 %v6685
  %v6810 = vpop.f32.mrb[0].mxu0
  %v6811 = vadd.f32 0.0, %v6810
  %v6812 = vpop.f32.mrb[0].mxu0
  %v6813 = vpop.f32.mrb[0].mxu0
  %v6814 = vadd.f32 0.0, %v6813
  %v6815 = vpop.f32.mrb[0].mxu0
  %6816 = vmatprep.mubr.bf16.mxu0 0
  %6817 = vmatmul.mubr.bf16.gmra.mrb[0].mxu0 %v6688
  %v6818 = vpop.f32.mrb[0].mxu0
  %v6819 = vadd.f32 0.0, %v6818
  %v6820 = vpop.f32.mrb[0].mxu0
  %v6821 = vpop.f32.mrb[0].mxu0
  %v6822 = vadd.f32 0.0, %v6821
  %v6823 = vpop.f32.mrb[0].mxu0
  %6824 = vmatprep.mubr.bf16.mxu0 0
  %6825 = vmatmul.mubr.bf16.gmra.mrb[0].mxu0 %v6691
  %v6826 = vpop.f32.mrb[0].mxu0
  %v6827 = vadd.f32 0.0, %v6826
  %v6828 = vpop.f32.mrb[0].mxu0
  %v6829 = vpop.f32.mrb[0].mxu0
  %v6830 = vadd.f32 0.0, %v6829
  %v6831 = vpop.f32.mrb[0].mxu0
  %6832 = vmatprep.mubr.bf16.mxu0 0
  %6833 = vmatmul.mubr.bf16.gmra.mrb[0].mxu0 %v6694
  %v6834 = vpop.f32.mrb[0].mxu0
  %v6835 = vadd.f32 0.0, %v6834
  %v6836 = vpop.f32.mrb[0].mxu0
  %v6837 = vpop.f32.mrb[0].mxu0
  %v6838 = vadd.f32 0.0, %v6837
  %v6839 = vpop.f32.mrb[0].mxu0
  %6840 = vmatprep.mubr.bf16.mxu0 0
  %6841 = vmatmul.mubr.bf16.gmra.mrb[0].mxu0 %v6697
  %v6842 = vpop.f32.mrb[0].mxu0
  %v6843 = vadd.f32 0.0, %v6842
  %v6844 = vpop.f32.mrb[0].mxu0
  %v6845 = vpop.f32.mrb[0].mxu0
  %v6846 = vadd.f32 0.0, %v6845
  %v6847 = vpop.f32.mrb[0].mxu0
  %6848 = vmatprep.mubr.bf16.mxu0 0
  %6849 = vmatmul.mubr.bf16.gmra.mrb[0].mxu0 %v6700
  %v6850 = vpop.f32.mrb[0].mxu0
  %v6851 = vadd.f32 0.0, %v6850
  %v6852 = vpop.f32.mrb[0].mxu0
  %v6853 = vpop.f32.mrb[0].mxu0
  %v6854 = vadd.f32 0.0, %v6853
  %v6855 = vpop.f32.mrb[0].mxu0
  %6856 = vmatprep.mubr.bf16.mxu0 0
  %6857 = vmatmul.mubr.bf16.gmra.mrb[0].mxu0 %v6703
  %v6858 = vpop.f32.mrb[0].mxu0
  %v6859 = vadd.f32 0.0, %v6858
  %v6860 = vpop.f32.mrb[0].mxu0
  %v6861 = vpop.f32.mrb[0].mxu0
  %v6862 = vadd.f32 0.0, %v6861
  %v6863 = vpop.f32.mrb[0].mxu0
  %6864 = vmatprep.mubr.bf16.mxu0 0
  %6865 = vmatmul.mubr.bf16.gmra.mrb[0].mxu0 %v6706
  %v6866 = vpop.f32.mrb[0].mxu0
  %v6867 = vadd.f32 0.0, %v6866
  %v6868 = vpop.f32.mrb[0].mxu0
  %v6869 = vpop.f32.mrb[0].mxu0
  %v6870 = vadd.f32 0.0, %v6869
  %v6871 = vpop.f32.mrb[0].mxu0
  %6872 = vmatprep.mubr.bf16.mxu0 0
  %6873 = vmatmul.mubr.bf16.gmra.mrb[0].mxu0 %v6709
  %v6874 = vpop.f32.mrb[0].mxu0
  %v6875 = vadd.f32 0.0, %v6874
  %v6876 = vpop.f32.mrb[0].mxu0
  %v6877 = vpop.f32.mrb[0].mxu0
  %v6878 = vadd.f32 0.0, %v6877
  %v6879 = vpop.f32.mrb[0].mxu0
  %6880 = vmatprep.mubr.bf16.mxu0 0
  %6881 = vmatmul.mubr.bf16.gmra.mrb[0].mxu0 %v6712
  %v6882 = vpop.f32.mrb[0].mxu0
  %v6883 = vadd.f32 0.0, %v6882
  %v6884 = vpop.f32.mrb[0].mxu0
  %v6885 = vpop.f32.mrb[0].mxu0
  %v6886 = vadd.f32 0.0, %v6885
  %v6887 = vpop.f32.mrb[0].mxu0
  %6888 = vmatprep.mubr.bf16.mxu0 0
  %6889 = vmatmul.mubr.bf16.gmra.mrb[0].mxu0 %v6715
  %v6890 = vpop.f32.mrb[0].mxu0
  %v6891 = vadd.f32 0.0, %v6890
  %v6892 = vpop.f32.mrb[0].mxu0
  %v6893 = vpop.f32.mrb[0].mxu0
  %v6894 = vadd.f32 0.0, %v6893
  %v6895 = vpop.f32.mrb[0].mxu0
  %6896 = vdwg.mxu0
  %v6897 = vld [vmem:[#allocation2] sm:$0xff]
  %v6898 = vld [vmem:[#allocation2 + $0x8] sm:$0xff]
  %v6899 = vld [vmem:[#allocation2 + $0x10] sm:$0xff]
  %v6900 = vld [vmem:[#allocation2 + $0x18] sm:$0xff]
  %v6901 = vld [vmem:[#allocation2 + $0x20] sm:$0xff]
  %v6902 = vld [vmem:[#allocation2 + $0x28] sm:$0xff]
  %v6903 = vld [vmem:[#allocation2 + $0x30] sm:$0xff]
  %v6904 = vld [vmem:[#allocation2 + $0x38] sm:$0xff]
  %v6905 = vld [vmem:[#allocation2 + $0x40] sm:$0xff]
  %v6906 = vld [vmem:[#allocation2 + $0x48] sm:$0xff]
  %v6907 = vld [vmem:[#allocation2 + $0x50] sm:$0xff]
  %v6908 = vld [vmem:[#allocation2 + $0x58] sm:$0xff]
  %v6909 = vld [vmem:[#allocation2 + $0x60] sm:$0xff]
  %v6910 = vld [vmem:[#allocation2 + $0x68] sm:$0xff]
  %v6911 = vld [vmem:[#allocation2 + $0x70] sm:$0xff]
  %v6912 = vld [vmem:[#allocation2 + $0x78] sm:$0xff]
  %v6913 = vld [vmem:[#allocation2 + $0x80] sm:$0xff]
  %v6914 = vld [vmem:[#allocation2 + $0x88] sm:$0xff]
  %v6915 = vld [vmem:[#allocation2 + $0x90] sm:$0xff]
  %v6916 = vld [vmem:[#allocation2 + $0x98] sm:$0xff]
  %v6917 = vld [vmem:[#allocation2 + $0xa0] sm:$0xff]
  %v6918 = vld [vmem:[#allocation2 + $0xa8] sm:$0xff]
  %v6919 = vld [vmem:[#allocation2 + $0xb0] sm:$0xff]
  %v6920 = vld [vmem:[#allocation2 + $0xb8] sm:$0xff]
  %v6921 = vld [vmem:[#allocation2 + $0xc0] sm:$0xff]
  %v6922 = vld [vmem:[#allocation2 + $0xc8] sm:$0xff]
  %v6923 = vld [vmem:[#allocation2 + $0xd0] sm:$0xff]
  %v6924 = vld [vmem:[#allocation2 + $0xd8] sm:$0xff]
  %v6925 = vld [vmem:[#allocation2 + $0xe0] sm:$0xff]
  %v6926 = vld [vmem:[#allocation2 + $0xe8] sm:$0xff]
  %v6927 = vld [vmem:[#allocation2 + $0xf0] sm:$0xff]
  %v6928 = vld [vmem:[#allocation2 + $0xf8] sm:$0xff]
  %v6929 = vld [vmem:[#allocation2 + $0x100] sm:$0xff]
  %v6930 = vld [vmem:[#allocation2 + $0x108] sm:$0xff]
  %v6931 = vld [vmem:[#allocation2 + $0x110] sm:$0xff]
  %v6932 = vld [vmem:[#allocation2 + $0x118] sm:$0xff]
  %v6933 = vadd.f32 %v6897, %v6755
  %v6934 = vadd.f32 %v6898, %v6758
  %v6935 = vadd.f32 %v6899, %v6763
  %v6936 = vadd.f32 %v6900, %v6766
  %v6937 = vadd.f32 %v6901, %v6771
  %v6938 = vadd.f32 %v6902, %v6774
  %v6939 = vadd.f32 %v6903, %v6779
  %v6940 = vadd.f32 %v6904, %v6782
  %v6941 = vadd.f32 %v6905, %v6787
  %v6942 = vadd.f32 %v6906, %v6790
  %v6943 = vadd.f32 %v6907, %v6795
  %v6944 = vadd.f32 %v6908, %v6798
  %v6945 = vadd.f32 %v6909, %v6803
  %v6946 = vadd.f32 %v6910, %v6806
  %v6947 = vadd.f32 %v6911, %v6811
  %v6948 = vadd.f32 %v6912, %v6814
  %v6949 = vadd.f32 %v6913, %v6819
  %v6950 = vadd.f32 %v6914, %v6822
  %v6951 = vadd.f32 %v6915, %v6827
  %v6952 = vadd.f32 %v6916, %v6830
  %v6953 = vadd.f32 %v6917, %v6835
  %v6954 = vadd.f32 %v6918, %v6838
  %v6955 = vadd.f32 %v6919, %v6843
  %v6956 = vadd.f32 %v6920, %v6846
  %v6957 = vadd.f32 %v6921, %v6851
  %v6958 = vadd.f32 %v6922, %v6854
  %v6959 = vadd.f32 %v6923, %v6859
  %v6960 = vadd.f32 %v6924, %v6862
  %v6961 = vadd.f32 %v6925, %v6867
  %v6962 = vadd.f32 %v6926, %v6870
  %v6963 = vadd.f32 %v6927, %v6875
  %v6964 = vadd.f32 %v6928, %v6878
  %v6965 = vadd.f32 %v6929, %v6883
  %v6966 = vadd.f32 %v6930, %v6886
  %v6967 = vadd.f32 %v6931, %v6891
  %v6968 = vadd.f32 %v6932, %v6894
  %6969 = vst [vmem:[#allocation2] sm:$0xff] %v6933
  %6970 = vst [vmem:[#allocation2 + $0x8] sm:$0xff] %v6934
  %6971 = vst [vmem:[#allocation2 + $0x10] sm:$0xff] %v6935
  %6972 = vst [vmem:[#allocation2 + $0x18] sm:$0xff] %v6936
  %6973 = vst [vmem:[#allocation2 + $0x20] sm:$0xff] %v6937
  %6974 = vst [vmem:[#allocation2 + $0x28] sm:$0xff] %v6938
  %6975 = vst [vmem:[#allocation2 + $0x30] sm:$0xff] %v6939
  %6976 = vst [vmem:[#allocation2 + $0x38] sm:$0xff] %v6940
  %6977 = vst [vmem:[#allocation2 + $0x40] sm:$0xff] %v6941
  %6978 = vst [vmem:[#allocation2 + $0x48] sm:$0xff] %v6942
  %6979 = vst [vmem:[#allocation2 + $0x50] sm:$0xff] %v6943
  %6980 = vst [vmem:[#allocation2 + $0x58] sm:$0xff] %v6944
  %6981 = vst [vmem:[#allocation2 + $0x60] sm:$0xff] %v6945
  %6982 = vst [vmem:[#allocation2 + $0x68] sm:$0xff] %v6946
  %6983 = vst [vmem:[#allocation2 + $0x70] sm:$0xff] %v6947
  %6984 = vst [vmem:[#allocation2 + $0x78] sm:$0xff] %v6948
  %6985 = vst [vmem:[#allocation2 + $0x80] sm:$0xff] %v6949
  %6986 = vst [vmem:[#allocation2 + $0x88] sm:$0xff] %v6950
  %6987 = vst [vmem:[#allocation2 + $0x90] sm:$0xff] %v6951
  %6988 = vst [vmem:[#allocation2 + $0x98] sm:$0xff] %v6952
  %6989 = vst [vmem:[#allocation2 + $0xa0] sm:$0xff] %v6953
  %6990 = vst [vmem:[#allocation2 + $0xa8] sm:$0xff] %v6954
  %6991 = vst [vmem:[#allocation2 + $0xb0] sm:$0xff] %v6955
  %6992 = vst [vmem:[#allocation2 + $0xb8] sm:$0xff] %v6956
  %6993 = vst [vmem:[#allocation2 + $0xc0] sm:$0xff] %v6957
  %6994 = vst [vmem:[#allocation2 + $0xc8] sm:$0xff] %v6958
  %6995 = vst [vmem:[#allocation2 + $0xd0] sm:$0xff] %v6959
  %6996 = vst [vmem:[#allocation2 + $0xd8] sm:$0xff] %v6960
  %6997 = vst [vmem:[#allocation2 + $0xe0] sm:$0xff] %v6961
  %6998 = vst [vmem:[#allocation2 + $0xe8] sm:$0xff] %v6962
  %6999 = vst [vmem:[#allocation2 + $0xf0] sm:$0xff] %v6963
  %7000 = vst [vmem:[#allocation2 + $0xf8] sm:$0xff] %v6964
  %7001 = vst [vmem:[#allocation2 + $0x100] sm:$0xff] %v6965
  %7002 = vst [vmem:[#allocation2 + $0x108] sm:$0xff] %v6966
  %7003 = vst [vmem:[#allocation2 + $0x110] sm:$0xff] %v6967
  %7004 = vst [vmem:[#allocation2 + $0x118] sm:$0xff] %v6968
  %v7005 = vld [vmem:[%s5476 + $0x8] sm:$0xe]
  %v7006 = vld [vmem:[%s5476 + $0xc] sm:$0xf]
  %v7007 = vld [vmem:[%s5476 + $0x10] sm:$0xf]
  %v7008 = vld [vmem:[%s5476 + $0x14] sm:$0xf]
  %v7009 = vld [vmem:[%s5476 + $0x18] sm:$0xf]
  %v7010 = vld [vmem:[%s5476 + $0x1c] sm:$0xf]
  %v7011 = vld [vmem:[%s5476 + $0x20] sm:$0xf]
  %v7012 = vld [vmem:[%s5476 + $0x24] sm:$0xf]
  %v7013 = vld [vmem:[%s5476 + $0x28] sm:$0xf]
  %v7014 = vld [vmem:[%s5476 + $0x2c] sm:$0xf]
  %v7015 = vld [vmem:[%s5476 + $0x30] sm:$0xf]
  %v7016 = vld [vmem:[%s5476 + $0x34] sm:$0xf]
  %v7017 = vld [vmem:[%s5476 + $0x38] sm:$0xf]
  %v7018 = vld [vmem:[%s5476 + $0x3c] sm:$0xf]
  %v7019 = vld [vmem:[%s5476 + $0x40] sm:$0xf]
  %v7020 = vld [vmem:[%s5476 + $0x44] sm:$0xf]
  %v7021 = vld [vmem:[%s5476 + $0x48] sm:$0xf]
  %v7022 = vld [vmem:[%s5476 + $0x4c] sm:$0xf]
  %v7023 = vld [vmem:[%s5476 + $0x50] sm:$0xf]
  %v7024 = vld [vmem:[%s5476 + $0x54] sm:$0xf]
  %v7025 = vld [vmem:[%s5476 + $0x58] sm:$0xf]
  %v7026 = vld [vmem:[%s5476 + $0x5c] sm:$0xf]
  %v7027 = vld [vmem:[%s5476 + $0x60] sm:$0xf]
  %v7028 = vld [vmem:[%s5476 + $0x64] sm:$0xf]
  %v7029 = vld [vmem:[%s5476 + $0x68] sm:$0xf]
  %v7030 = vld [vmem:[%s5476 + $0x6c] sm:$0xf]
  %v7031 = vld [vmem:[%s5476 + $0x70] sm:$0xf]
  %v7032 = vld [vmem:[%s5476 + $0x74] sm:$0xf]
  %v7033 = vld [vmem:[%s5476 + $0x78] sm:$0xf]
  %v7034 = vld [vmem:[%s5476 + $0x7c] sm:$0xf]
  %v7035 = vld [vmem:[%s5476 + $0x80] sm:$0xf]
  %v7036 = vld [vmem:[%s5476 + $0x84] sm:$0xf]
  %v7037 = vld [vmem:[%s5476 + $0x88] sm:$0xf]
  %v7038 = vld [vmem:[%s5476 + $0x8c] sm:$0xf]
  %v7039 = vld [vmem:[%s5476 + $0x90] sm:$0xf]
  %v7040 = vld [vmem:[%s5476 + $0x94] sm:$0xf]
  %v7041 = vld [vmem:[%s5476 + $0x98] sm:$0x1]
  %v7042 = vld [vmem:[%s1625] sm:$0xf]
  %v7080 = vunpack.c.l.b16 %v7005
  %v7081 = vunpack.c.l.b16 %v7006
  %v7082 = vunpack.c.l.b16 %v7007
  %v7083 = vunpack.c.l.b16 %v7008
  %v7084 = vunpack.c.l.b16 %v7009
  %v7085 = vunpack.c.l.b16 %v7010
  %v7086 = vunpack.c.l.b16 %v7011
  %v7087 = vunpack.c.l.b16 %v7012
  %v7088 = vunpack.c.l.b16 %v7013
  %v7089 = vunpack.c.l.b16 %v7014
  %v7090 = vunpack.c.l.b16 %v7015
  %v7091 = vunpack.c.l.b16 %v7016
  %v7092 = vunpack.c.l.b16 %v7017
  %v7093 = vunpack.c.l.b16 %v7018
  %v7094 = vunpack.c.l.b16 %v7019
  %v7095 = vunpack.c.l.b16 %v7020
  %v7096 = vunpack.c.l.b16 %v7021
  %v7097 = vunpack.c.l.b16 %v7022
  %v7098 = vunpack.c.l.b16 %v7023
  %v7099 = vunpack.c.l.b16 %v7024
  %v7100 = vunpack.c.l.b16 %v7025
  %v7101 = vunpack.c.l.b16 %v7026
  %v7102 = vunpack.c.l.b16 %v7027
  %v7103 = vunpack.c.l.b16 %v7028
  %v7104 = vunpack.c.l.b16 %v7029
  %v7105 = vunpack.c.l.b16 %v7030
  %v7106 = vunpack.c.l.b16 %v7031
  %v7107 = vunpack.c.l.b16 %v7032
  %v7108 = vunpack.c.l.b16 %v7033
  %v7109 = vunpack.c.l.b16 %v7034
  %v7110 = vunpack.c.l.b16 %v7035
  %v7111 = vunpack.c.l.b16 %v7036
  %v7112 = vunpack.c.l.b16 %v7037
  %v7113 = vunpack.c.l.b16 %v7038
  %v7114 = vunpack.c.l.b16 %v7039
  %v7115 = vunpack.c.l.b16 %v7040
  %v7116 = vunpack.c.l.b16 %v7041
  %v7117 = vpack.c.b16 %v7081, %v7080
  %v7118 = vpack.c.b16 %v7083, %v7082
  %v7119 = vpack.c.b16 %v7085, %v7084
  %v7120 = vpack.c.b16 %v7087, %v7086
  %v7121 = vpack.c.b16 %v7089, %v7088
  %v7122 = vpack.c.b16 %v7091, %v7090
  %v7123 = vpack.c.b16 %v7093, %v7092
  %v7124 = vpack.c.b16 %v7095, %v7094
  %v7125 = vpack.c.b16 %v7097, %v7096
  %v7126 = vpack.c.b16 %v7099, %v7098
  %v7127 = vpack.c.b16 %v7101, %v7100
  %v7128 = vpack.c.b16 %v7103, %v7102
  %v7129 = vpack.c.b16 %v7105, %v7104
  %v7130 = vpack.c.b16 %v7107, %v7106
  %v7131 = vpack.c.b16 %v7109, %v7108
  %v7132 = vpack.c.b16 %v7111, %v7110
  %v7133 = vpack.c.b16 %v7113, %v7112
  %v7134 = vpack.c.b16 %v7115, %v7114
  %v7135 = vpack.c.b16 %v7116, %v7116
  %v7136 = vrot.slane %v7117, 1
  %v7137 = vrot.slane %v7118, 1
  %v7138 = vsel %vm1208, %v7136, %v7137
  %v7139 = vrot.slane %v7119, 1
  %v7140 = vsel %vm1208, %v7137, %v7139
  %v7141 = vrot.slane %v7120, 1
  %v7142 = vsel %vm1208, %v7139, %v7141
  %v7143 = vrot.slane %v7121, 1
  %v7144 = vsel %vm1208, %v7141, %v7143
  %v7145 = vrot.slane %v7122, 1
  %v7146 = vsel %vm1208, %v7143, %v7145
  %v7147 = vrot.slane %v7123, 1
  %v7148 = vsel %vm1208, %v7145, %v7147
  %v7149 = vrot.slane %v7124, 1
  %v7150 = vsel %vm1208, %v7147, %v7149
  %v7151 = vrot.slane %v7125, 1
  %v7152 = vsel %vm1208, %v7149, %v7151
  %v7153 = vrot.slane %v7126, 1
  %v7154 = vsel %vm1208, %v7151, %v7153
  %v7155 = vrot.slane %v7127, 1
  %v7156 = vsel %vm1208, %v7153, %v7155
  %v7157 = vrot.slane %v7128, 1
  %v7158 = vsel %vm1208, %v7155, %v7157
  %v7159 = vrot.slane %v7129, 1
  %v7160 = vsel %vm1208, %v7157, %v7159
  %v7161 = vrot.slane %v7130, 1
  %v7162 = vsel %vm1208, %v7159, %v7161
  %v7163 = vrot.slane %v7131, 1
  %v7164 = vsel %vm1208, %v7161, %v7163
  %v7165 = vrot.slane %v7132, 1
  %v7166 = vsel %vm1208, %v7163, %v7165
  %v7167 = vrot.slane %v7133, 1
  %v7168 = vsel %vm1208, %v7165, %v7167
  %v7169 = vrot.slane %v7134, 1
  %v7170 = vsel %vm1208, %v7167, %v7169
  %v7171 = vrot.slane %v7135, 1
  %v7172 = vsel %vm1208, %v7169, %v7171
  %v7174 = vsel %vm181, %v7138, 0
  %v7177 = vsel %vm181, %v7140, 0
  %v7180 = vsel %vm181, %v7142, 0
  %v7183 = vsel %vm181, %v7144, 0
  %v7186 = vsel %vm181, %v7146, 0
  %v7189 = vsel %vm181, %v7148, 0
  %v7192 = vsel %vm181, %v7150, 0
  %v7195 = vsel %vm181, %v7152, 0
  %v7198 = vsel %vm181, %v7154, 0
  %v7201 = vsel %vm181, %v7156, 0
  %v7204 = vsel %vm181, %v7158, 0
  %v7207 = vsel %vm181, %v7160, 0
  %v7210 = vsel %vm181, %v7162, 0
  %v7213 = vsel %vm181, %v7164, 0
  %v7216 = vsel %vm181, %v7166, 0
  %v7219 = vsel %vm181, %v7168, 0
  %v7222 = vsel %vm181, %v7170, 0
  %v7225 = vsel %vm181, %v7172, 0
  %v7228 = vsel %vm236, %v7042, 0
  %7230 = vmatprep.subr.bf16.mxu0 0
  %7231 = vmatpush1.bf16.msra.mxu0 %v7228
  %7232 = vmatprep.subr.bf16.mxu0 0
  %7233 = vmatpush1.bf16.msra.mxu0 0
  %7234 = vmatprep.subr.bf16.mxu0 0
  %7235 = vmatpush1.bf16.msra.mxu0 0
  %7236 = vmatprep.subr.bf16.mxu0 0
  %7237 = vmatpush1.bf16.msra.mxu0 0
  %7238 = vmatprep.subr.bf16.mxu0 0
  %7239 = vmatpush1.bf16.msra.mxu0 0
  %7240 = vmatprep.subr.bf16.mxu0 0
  %7241 = vmatpush1.bf16.msra.mxu0 0
  %7242 = vmatprep.subr.bf16.mxu0 0
  %7243 = vmatpush1.bf16.msra.mxu0 0
  %7244 = vmatprep.subr.bf16.mxu0 0
  %7245 = vmatpush1.bf16.msra.mxu0 0
  %7246 = vmatprep.subr.bf16.mxu0 0
  %7247 = vmatpush1.bf16.msra.mxu0 0
  %7248 = vmatprep.subr.bf16.mxu0 0
  %7249 = vmatpush1.bf16.msra.mxu0 0
  %7250 = vmatprep.subr.bf16.mxu0 0
  %7251 = vmatpush1.bf16.msra.mxu0 0
  %7252 = vmatprep.subr.bf16.mxu0 0
  %7253 = vmatpush1.bf16.msra.mxu0 0
  %7254 = vmatprep.subr.bf16.mxu0 0
  %7255 = vmatpush1.bf16.msra.mxu0 0
  %7256 = vmatprep.subr.bf16.mxu0 0
  %7257 = vmatpush1.bf16.msra.mxu0 0
  %7258 = vmatprep.subr.bf16.mxu0 0
  %7259 = vmatpush1.bf16.msra.mxu0 0
  %7260 = vmatprep.subr.bf16.mxu0 0
  %7261 = vmatpush1.bf16.msra.mxu0 0
  %7262 = vmatprep.mubr.bf16.mxu0 0
  %7263 = vmatmul.mubr.bf16.gmra.mrb[0].mxu0 %v7174
  %v7264 = vpop.f32.mrb[0].mxu0
  %v7265 = vadd.f32 0.0, %v7264
  %v7266 = vpop.f32.mrb[0].mxu0
  %v7267 = vpop.f32.mrb[0].mxu0
  %v7268 = vadd.f32 0.0, %v7267
  %v7269 = vpop.f32.mrb[0].mxu0
  %7270 = vmatprep.mubr.bf16.mxu0 0
  %7271 = vmatmul.mubr.bf16.gmra.mrb[0].mxu0 %v7177
  %v7272 = vpop.f32.mrb[0].mxu0
  %v7273 = vadd.f32 0.0, %v7272
  %v7274 = vpop.f32.mrb[0].mxu0
  %v7275 = vpop.f32.mrb[0].mxu0
  %v7276 = vadd.f32 0.0, %v7275
  %v7277 = vpop.f32.mrb[0].mxu0
  %7278 = vmatprep.mubr.bf16.mxu0 0
  %7279 = vmatmul.mubr.bf16.gmra.mrb[0].mxu0 %v7180
  %v7280 = vpop.f32.mrb[0].mxu0
  %v7281 = vadd.f32 0.0, %v7280
  %v7282 = vpop.f32.mrb[0].mxu0
  %v7283 = vpop.f32.mrb[0].mxu0
  %v7284 = vadd.f32 0.0, %v7283
  %v7285 = vpop.f32.mrb[0].mxu0
  %7286 = vmatprep.mubr.bf16.mxu0 0
  %7287 = vmatmul.mubr.bf16.gmra.mrb[0].mxu0 %v7183
  %v7288 = vpop.f32.mrb[0].mxu0
  %v7289 = vadd.f32 0.0, %v7288
  %v7290 = vpop.f32.mrb[0].mxu0
  %v7291 = vpop.f32.mrb[0].mxu0
  %v7292 = vadd.f32 0.0, %v7291
  %v7293 = vpop.f32.mrb[0].mxu0
  %7294 = vmatprep.mubr.bf16.mxu0 0
  %7295 = vmatmul.mubr.bf16.gmra.mrb[0].mxu0 %v7186
  %v7296 = vpop.f32.mrb[0].mxu0
  %v7297 = vadd.f32 0.0, %v7296
  %v7298 = vpop.f32.mrb[0].mxu0
  %v7299 = vpop.f32.mrb[0].mxu0
  %v7300 = vadd.f32 0.0, %v7299
  %v7301 = vpop.f32.mrb[0].mxu0
  %7302 = vmatprep.mubr.bf16.mxu0 0
  %7303 = vmatmul.mubr.bf16.gmra.mrb[0].mxu0 %v7189
  %v7304 = vpop.f32.mrb[0].mxu0
  %v7305 = vadd.f32 0.0, %v7304
  %v7306 = vpop.f32.mrb[0].mxu0
  %v7307 = vpop.f32.mrb[0].mxu0
  %v7308 = vadd.f32 0.0, %v7307
  %v7309 = vpop.f32.mrb[0].mxu0
  %7310 = vmatprep.mubr.bf16.mxu0 0
  %7311 = vmatmul.mubr.bf16.gmra.mrb[0].mxu0 %v7192
  %v7312 = vpop.f32.mrb[0].mxu0
  %v7313 = vadd.f32 0.0, %v7312
  %v7314 = vpop.f32.mrb[0].mxu0
  %v7315 = vpop.f32.mrb[0].mxu0
  %v7316 = vadd.f32 0.0, %v7315
  %v7317 = vpop.f32.mrb[0].mxu0
  %7318 = vmatprep.mubr.bf16.mxu0 0
  %7319 = vmatmul.mubr.bf16.gmra.mrb[0].mxu0 %v7195
  %v7320 = vpop.f32.mrb[0].mxu0
  %v7321 = vadd.f32 0.0, %v7320
  %v7322 = vpop.f32.mrb[0].mxu0
  %v7323 = vpop.f32.mrb[0].mxu0
  %v7324 = vadd.f32 0.0, %v7323
  %v7325 = vpop.f32.mrb[0].mxu0
  %7326 = vmatprep.mubr.bf16.mxu0 0
  %7327 = vmatmul.mubr.bf16.gmra.mrb[0].mxu0 %v7198
  %v7328 = vpop.f32.mrb[0].mxu0
  %v7329 = vadd.f32 0.0, %v7328
  %v7330 = vpop.f32.mrb[0].mxu0
  %v7331 = vpop.f32.mrb[0].mxu0
  %v7332 = vadd.f32 0.0, %v7331
  %v7333 = vpop.f32.mrb[0].mxu0
  %7334 = vmatprep.mubr.bf16.mxu0 0
  %7335 = vmatmul.mubr.bf16.gmra.mrb[0].mxu0 %v7201
  %v7336 = vpop.f32.mrb[0].mxu0
  %v7337 = vadd.f32 0.0, %v7336
  %v7338 = vpop.f32.mrb[0].mxu0
  %v7339 = vpop.f32.mrb[0].mxu0
  %v7340 = vadd.f32 0.0, %v7339
  %v7341 = vpop.f32.mrb[0].mxu0
  %7342 = vmatprep.mubr.bf16.mxu0 0
  %7343 = vmatmul.mubr.bf16.gmra.mrb[0].mxu0 %v7204
  %v7344 = vpop.f32.mrb[0].mxu0
  %v7345 = vadd.f32 0.0, %v7344
  %v7346 = vpop.f32.mrb[0].mxu0
  %v7347 = vpop.f32.mrb[0].mxu0
  %v7348 = vadd.f32 0.0, %v7347
  %v7349 = vpop.f32.mrb[0].mxu0
  %7350 = vmatprep.mubr.bf16.mxu0 0
  %7351 = vmatmul.mubr.bf16.gmra.mrb[0].mxu0 %v7207
  %v7352 = vpop.f32.mrb[0].mxu0
  %v7353 = vadd.f32 0.0, %v7352
  %v7354 = vpop.f32.mrb[0].mxu0
  %v7355 = vpop.f32.mrb[0].mxu0
  %v7356 = vadd.f32 0.0, %v7355
  %v7357 = vpop.f32.mrb[0].mxu0
  %7358 = vmatprep.mubr.bf16.mxu0 0
  %7359 = vmatmul.mubr.bf16.gmra.mrb[0].mxu0 %v7210
  %v7360 = vpop.f32.mrb[0].mxu0
  %v7361 = vadd.f32 0.0, %v7360
  %v7362 = vpop.f32.mrb[0].mxu0
  %v7363 = vpop.f32.mrb[0].mxu0
  %v7364 = vadd.f32 0.0, %v7363
  %v7365 = vpop.f32.mrb[0].mxu0
  %7366 = vmatprep.mubr.bf16.mxu0 0
  %7367 = vmatmul.mubr.bf16.gmra.mrb[0].mxu0 %v7213
  %v7368 = vpop.f32.mrb[0].mxu0
  %v7369 = vadd.f32 0.0, %v7368
  %v7370 = vpop.f32.mrb[0].mxu0
  %v7371 = vpop.f32.mrb[0].mxu0
  %v7372 = vadd.f32 0.0, %v7371
  %v7373 = vpop.f32.mrb[0].mxu0
  %7374 = vmatprep.mubr.bf16.mxu0 0
  %7375 = vmatmul.mubr.bf16.gmra.mrb[0].mxu0 %v7216
  %v7376 = vpop.f32.mrb[0].mxu0
  %v7377 = vadd.f32 0.0, %v7376
  %v7378 = vpop.f32.mrb[0].mxu0
  %v7379 = vpop.f32.mrb[0].mxu0
  %v7380 = vadd.f32 0.0, %v7379
  %v7381 = vpop.f32.mrb[0].mxu0
  %7382 = vmatprep.mubr.bf16.mxu0 0
  %7383 = vmatmul.mubr.bf16.gmra.mrb[0].mxu0 %v7219
  %v7384 = vpop.f32.mrb[0].mxu0
  %v7385 = vadd.f32 0.0, %v7384
  %v7386 = vpop.f32.mrb[0].mxu0
  %v7387 = vpop.f32.mrb[0].mxu0
  %v7388 = vadd.f32 0.0, %v7387
  %v7389 = vpop.f32.mrb[0].mxu0
  %7390 = vmatprep.mubr.bf16.mxu0 0
  %7391 = vmatmul.mubr.bf16.gmra.mrb[0].mxu0 %v7222
  %v7392 = vpop.f32.mrb[0].mxu0
  %v7393 = vadd.f32 0.0, %v7392
  %v7394 = vpop.f32.mrb[0].mxu0
  %v7395 = vpop.f32.mrb[0].mxu0
  %v7396 = vadd.f32 0.0, %v7395
  %v7397 = vpop.f32.mrb[0].mxu0
  %7398 = vmatprep.mubr.bf16.mxu0 0
  %7399 = vmatmul.mubr.bf16.gmra.mrb[0].mxu0 %v7225
  %v7400 = vpop.f32.mrb[0].mxu0
  %v7401 = vadd.f32 0.0, %v7400
  %v7402 = vpop.f32.mrb[0].mxu0
  %v7403 = vpop.f32.mrb[0].mxu0
  %v7404 = vadd.f32 0.0, %v7403
  %v7405 = vpop.f32.mrb[0].mxu0
  %7406 = vdwg.mxu0
  %v7407 = vld [vmem:[#allocation2] sm:$0xff]
  %v7408 = vld [vmem:[#allocation2 + $0x8] sm:$0xff]
  %v7409 = vld [vmem:[#allocation2 + $0x10] sm:$0xff]
  %v7410 = vld [vmem:[#allocation2 + $0x18] sm:$0xff]
  %v7411 = vld [vmem:[#allocation2 + $0x20] sm:$0xff]
  %v7412 = vld [vmem:[#allocation2 + $0x28] sm:$0xff]
  %v7413 = vld [vmem:[#allocation2 + $0x30] sm:$0xff]
  %v7414 = vld [vmem:[#allocation2 + $0x38] sm:$0xff]
  %v7415 = vld [vmem:[#allocation2 + $0x40] sm:$0xff]
  %v7416 = vld [vmem:[#allocation2 + $0x48] sm:$0xff]
  %v7417 = vld [vmem:[#allocation2 + $0x50] sm:$0xff]
  %v7418 = vld [vmem:[#allocation2 + $0x58] sm:$0xff]
  %v7419 = vld [vmem:[#allocation2 + $0x60] sm:$0xff]
  %v7420 = vld [vmem:[#allocation2 + $0x68] sm:$0xff]
  %v7421 = vld [vmem:[#allocation2 + $0x70] sm:$0xff]
  %v7422 = vld [vmem:[#allocation2 + $0x78] sm:$0xff]
  %v7423 = vld [vmem:[#allocation2 + $0x80] sm:$0xff]
  %v7424 = vld [vmem:[#allocation2 + $0x88] sm:$0xff]
  %v7425 = vld [vmem:[#allocation2 + $0x90] sm:$0xff]
  %v7426 = vld [vmem:[#allocation2 + $0x98] sm:$0xff]
  %v7427 = vld [vmem:[#allocation2 + $0xa0] sm:$0xff]
  %v7428 = vld [vmem:[#allocation2 + $0xa8] sm:$0xff]
  %v7429 = vld [vmem:[#allocation2 + $0xb0] sm:$0xff]
  %v7430 = vld [vmem:[#allocation2 + $0xb8] sm:$0xff]
  %v7431 = vld [vmem:[#allocation2 + $0xc0] sm:$0xff]
  %v7432 = vld [vmem:[#allocation2 + $0xc8] sm:$0xff]
  %v7433 = vld [vmem:[#allocation2 + $0xd0] sm:$0xff]
  %v7434 = vld [vmem:[#allocation2 + $0xd8] sm:$0xff]
  %v7435 = vld [vmem:[#allocation2 + $0xe0] sm:$0xff]
  %v7436 = vld [vmem:[#allocation2 + $0xe8] sm:$0xff]
  %v7437 = vld [vmem:[#allocation2 + $0xf0] sm:$0xff]
  %v7438 = vld [vmem:[#allocation2 + $0xf8] sm:$0xff]
  %v7439 = vld [vmem:[#allocation2 + $0x100] sm:$0xff]
  %v7440 = vld [vmem:[#allocation2 + $0x108] sm:$0xff]
  %v7441 = vld [vmem:[#allocation2 + $0x110] sm:$0xff]
  %v7442 = vld [vmem:[#allocation2 + $0x118] sm:$0xff]
  %v7443 = vadd.f32 %v7407, %v7265
  %v7444 = vadd.f32 %v7408, %v7268
  %v7445 = vadd.f32 %v7409, %v7273
  %v7446 = vadd.f32 %v7410, %v7276
  %v7447 = vadd.f32 %v7411, %v7281
  %v7448 = vadd.f32 %v7412, %v7284
  %v7449 = vadd.f32 %v7413, %v7289
  %v7450 = vadd.f32 %v7414, %v7292
  %v7451 = vadd.f32 %v7415, %v7297
  %v7452 = vadd.f32 %v7416, %v7300
  %v7453 = vadd.f32 %v7417, %v7305
  %v7454 = vadd.f32 %v7418, %v7308
  %v7455 = vadd.f32 %v7419, %v7313
  %v7456 = vadd.f32 %v7420, %v7316
  %v7457 = vadd.f32 %v7421, %v7321
  %v7458 = vadd.f32 %v7422, %v7324
  %v7459 = vadd.f32 %v7423, %v7329
  %v7460 = vadd.f32 %v7424, %v7332
  %v7461 = vadd.f32 %v7425, %v7337
  %v7462 = vadd.f32 %v7426, %v7340
  %v7463 = vadd.f32 %v7427, %v7345
  %v7464 = vadd.f32 %v7428, %v7348
  %v7465 = vadd.f32 %v7429, %v7353
  %v7466 = vadd.f32 %v7430, %v7356
  %v7467 = vadd.f32 %v7431, %v7361
  %v7468 = vadd.f32 %v7432, %v7364
  %v7469 = vadd.f32 %v7433, %v7369
  %v7470 = vadd.f32 %v7434, %v7372
  %v7471 = vadd.f32 %v7435, %v7377
  %v7472 = vadd.f32 %v7436, %v7380
  %v7473 = vadd.f32 %v7437, %v7385
  %v7474 = vadd.f32 %v7438, %v7388
  %v7475 = vadd.f32 %v7439, %v7393
  %v7476 = vadd.f32 %v7440, %v7396
  %v7477 = vadd.f32 %v7441, %v7401
  %v7478 = vadd.f32 %v7442, %v7404
  %7479 = vst [vmem:[#allocation2] sm:$0xff] %v7443
  %7480 = vst [vmem:[#allocation2 + $0x8] sm:$0xff] %v7444
  %7481 = vst [vmem:[#allocation2 + $0x10] sm:$0xff] %v7445
  %7482 = vst [vmem:[#allocation2 + $0x18] sm:$0xff] %v7446
  %7483 = vst [vmem:[#allocation2 + $0x20] sm:$0xff] %v7447
  %7484 = vst [vmem:[#allocation2 + $0x28] sm:$0xff] %v7448
  %7485 = vst [vmem:[#allocation2 + $0x30] sm:$0xff] %v7449
  %7486 = vst [vmem:[#allocation2 + $0x38] sm:$0xff] %v7450
  %7487 = vst [vmem:[#allocation2 + $0x40] sm:$0xff] %v7451
  %7488 = vst [vmem:[#allocation2 + $0x48] sm:$0xff] %v7452
  %7489 = vst [vmem:[#allocation2 + $0x50] sm:$0xff] %v7453
  %7490 = vst [vmem:[#allocation2 + $0x58] sm:$0xff] %v7454
  %7491 = vst [vmem:[#allocation2 + $0x60] sm:$0xff] %v7455
  %7492 = vst [vmem:[#allocation2 + $0x68] sm:$0xff] %v7456
  %7493 = vst [vmem:[#allocation2 + $0x70] sm:$0xff] %v7457
  %7494 = vst [vmem:[#allocation2 + $0x78] sm:$0xff] %v7458
  %7495 = vst [vmem:[#allocation2 + $0x80] sm:$0xff] %v7459
  %7496 = vst [vmem:[#allocation2 + $0x88] sm:$0xff] %v7460
  %7497 = vst [vmem:[#allocation2 + $0x90] sm:$0xff] %v7461
  %7498 = vst [vmem:[#allocation2 + $0x98] sm:$0xff] %v7462
  %7499 = vst [vmem:[#allocation2 + $0xa0] sm:$0xff] %v7463
  %7500 = vst [vmem:[#allocation2 + $0xa8] sm:$0xff] %v7464
  %7501 = vst [vmem:[#allocation2 + $0xb0] sm:$0xff] %v7465
  %7502 = vst [vmem:[#allocation2 + $0xb8] sm:$0xff] %v7466
  %7503 = vst [vmem:[#allocation2 + $0xc0] sm:$0xff] %v7467
  %7504 = vst [vmem:[#allocation2 + $0xc8] sm:$0xff] %v7468
  %7505 = vst [vmem:[#allocation2 + $0xd0] sm:$0xff] %v7469
  %7506 = vst [vmem:[#allocation2 + $0xd8] sm:$0xff] %v7470
  %7507 = vst [vmem:[#allocation2 + $0xe0] sm:$0xff] %v7471
  %7508 = vst [vmem:[#allocation2 + $0xe8] sm:$0xff] %v7472
  %7509 = vst [vmem:[#allocation2 + $0xf0] sm:$0xff] %v7473
  %7510 = vst [vmem:[#allocation2 + $0xf8] sm:$0xff] %v7474
  %7511 = vst [vmem:[#allocation2 + $0x100] sm:$0xff] %v7475
  %7512 = vst [vmem:[#allocation2 + $0x108] sm:$0xff] %v7476
  %7513 = vst [vmem:[#allocation2 + $0x110] sm:$0xff] %v7477
  %7514 = vst [vmem:[#allocation2 + $0x118] sm:$0xff] %v7478
  %v7515 = vld [vmem:[%s5476 + $0x8] sm:$0xe]
  %v7516 = vld [vmem:[%s5476 + $0xc] sm:$0xf]
  %v7517 = vld [vmem:[%s5476 + $0x10] sm:$0xf]
  %v7518 = vld [vmem:[%s5476 + $0x14] sm:$0xf]
  %v7519 = vld [vmem:[%s5476 + $0x18] sm:$0xf]
  %v7520 = vld [vmem:[%s5476 + $0x1c] sm:$0xf]
  %v7521 = vld [vmem:[%s5476 + $0x20] sm:$0xf]
  %v7522 = vld [vmem:[%s5476 + $0x24] sm:$0xf]
  %v7523 = vld [vmem:[%s5476 + $0x28] sm:$0xf]
  %v7524 = vld [vmem:[%s5476 + $0x2c] sm:$0xf]
  %v7525 = vld [vmem:[%s5476 + $0x30] sm:$0xf]
  %v7526 = vld [vmem:[%s5476 + $0x34] sm:$0xf]
  %v7527 = vld [vmem:[%s5476 + $0x38] sm:$0xf]
  %v7528 = vld [vmem:[%s5476 + $0x3c] sm:$0xf]
  %v7529 = vld [vmem:[%s5476 + $0x40] sm:$0xf]
  %v7530 = vld [vmem:[%s5476 + $0x44] sm:$0xf]
  %v7531 = vld [vmem:[%s5476 + $0x48] sm:$0xf]
  %v7532 = vld [vmem:[%s5476 + $0x4c] sm:$0xf]
  %v7533 = vld [vmem:[%s5476 + $0x50] sm:$0xf]
  %v7534 = vld [vmem:[%s5476 + $0x54] sm:$0xf]
  %v7535 = vld [vmem:[%s5476 + $0x58] sm:$0xf]
  %v7536 = vld [vmem:[%s5476 + $0x5c] sm:$0xf]
  %v7537 = vld [vmem:[%s5476 + $0x60] sm:$0xf]
  %v7538 = vld [vmem:[%s5476 + $0x64] sm:$0xf]
  %v7539 = vld [vmem:[%s5476 + $0x68] sm:$0xf]
  %v7540 = vld [vmem:[%s5476 + $0x6c] sm:$0xf]
  %v7541 = vld [vmem:[%s5476 + $0x70] sm:$0xf]
  %v7542 = vld [vmem:[%s5476 + $0x74] sm:$0xf]
  %v7543 = vld [vmem:[%s5476 + $0x78] sm:$0xf]
  %v7544 = vld [vmem:[%s5476 + $0x7c] sm:$0xf]
  %v7545 = vld [vmem:[%s5476 + $0x80] sm:$0xf]
  %v7546 = vld [vmem:[%s5476 + $0x84] sm:$0xf]
  %v7547 = vld [vmem:[%s5476 + $0x88] sm:$0xf]
  %v7548 = vld [vmem:[%s5476 + $0x8c] sm:$0xf]
  %v7549 = vld [vmem:[%s5476 + $0x90] sm:$0xf]
  %v7550 = vld [vmem:[%s5476 + $0x94] sm:$0xf]
  %v7551 = vld [vmem:[%s5476 + $0x98] sm:$0x3]
  %v7552 = vld [vmem:[%s2136] sm:$0xf]
  %v7590 = vunpack.c.l.b16 %v7515
  %v7591 = vunpack.c.l.b16 %v7516
  %v7592 = vunpack.c.l.b16 %v7517
  %v7593 = vunpack.c.l.b16 %v7518
  %v7594 = vunpack.c.l.b16 %v7519
  %v7595 = vunpack.c.l.b16 %v7520
  %v7596 = vunpack.c.l.b16 %v7521
  %v7597 = vunpack.c.l.b16 %v7522
  %v7598 = vunpack.c.l.b16 %v7523
  %v7599 = vunpack.c.l.b16 %v7524
  %v7600 = vunpack.c.l.b16 %v7525
  %v7601 = vunpack.c.l.b16 %v7526
  %v7602 = vunpack.c.l.b16 %v7527
  %v7603 = vunpack.c.l.b16 %v7528
  %v7604 = vunpack.c.l.b16 %v7529
  %v7605 = vunpack.c.l.b16 %v7530
  %v7606 = vunpack.c.l.b16 %v7531
  %v7607 = vunpack.c.l.b16 %v7532
  %v7608 = vunpack.c.l.b16 %v7533
  %v7609 = vunpack.c.l.b16 %v7534
  %v7610 = vunpack.c.l.b16 %v7535
  %v7611 = vunpack.c.l.b16 %v7536
  %v7612 = vunpack.c.l.b16 %v7537
  %v7613 = vunpack.c.l.b16 %v7538
  %v7614 = vunpack.c.l.b16 %v7539
  %v7615 = vunpack.c.l.b16 %v7540
  %v7616 = vunpack.c.l.b16 %v7541
  %v7617 = vunpack.c.l.b16 %v7542
  %v7618 = vunpack.c.l.b16 %v7543
  %v7619 = vunpack.c.l.b16 %v7544
  %v7620 = vunpack.c.l.b16 %v7545
  %v7621 = vunpack.c.l.b16 %v7546
  %v7622 = vunpack.c.l.b16 %v7547
  %v7623 = vunpack.c.l.b16 %v7548
  %v7624 = vunpack.c.l.b16 %v7549
  %v7625 = vunpack.c.l.b16 %v7550
  %v7626 = vunpack.c.l.b16 %v7551
  %v7627 = vpack.c.b16 %v7591, %v7590
  %v7628 = vpack.c.b16 %v7593, %v7592
  %v7629 = vpack.c.b16 %v7595, %v7594
  %v7630 = vpack.c.b16 %v7597, %v7596
  %v7631 = vpack.c.b16 %v7599, %v7598
  %v7632 = vpack.c.b16 %v7601, %v7600
  %v7633 = vpack.c.b16 %v7603, %v7602
  %v7634 = vpack.c.b16 %v7605, %v7604
  %v7635 = vpack.c.b16 %v7607, %v7606
  %v7636 = vpack.c.b16 %v7609, %v7608
  %v7637 = vpack.c.b16 %v7611, %v7610
  %v7638 = vpack.c.b16 %v7613, %v7612
  %v7639 = vpack.c.b16 %v7615, %v7614
  %v7640 = vpack.c.b16 %v7617, %v7616
  %v7641 = vpack.c.b16 %v7619, %v7618
  %v7642 = vpack.c.b16 %v7621, %v7620
  %v7643 = vpack.c.b16 %v7623, %v7622
  %v7644 = vpack.c.b16 %v7625, %v7624
  %v7645 = vpack.c.b16 %v7626, %v7626
  %v7647 = vshrl.u32 %v7627, 16
  %v7649 = vrot.slane %v7647, 1
  %v7650 = vshll.u32 %v7627, 16
  %v7652 = vrot.slane %v7650, 2
  %v7653 = vor.u32 %v7649, %v7652
  %v7655 = vshrl.u32 %v7628, 16
  %v7657 = vrot.slane %v7655, 1
  %v7658 = vshll.u32 %v7628, 16
  %v7660 = vrot.slane %v7658, 2
  %v7661 = vor.u32 %v7657, %v7660
  %v7662 = vsel %vm2231, %v7653, %v7661
  %v7664 = vshrl.u32 %v7629, 16
  %v7666 = vrot.slane %v7664, 1
  %v7667 = vshll.u32 %v7629, 16
  %v7669 = vrot.slane %v7667, 2
  %v7670 = vor.u32 %v7666, %v7669
  %v7671 = vsel %vm2231, %v7661, %v7670
  %v7673 = vshrl.u32 %v7630, 16
  %v7675 = vrot.slane %v7673, 1
  %v7676 = vshll.u32 %v7630, 16
  %v7678 = vrot.slane %v7676, 2
  %v7679 = vor.u32 %v7675, %v7678
  %v7680 = vsel %vm2231, %v7670, %v7679
  %v7682 = vshrl.u32 %v7631, 16
  %v7684 = vrot.slane %v7682, 1
  %v7685 = vshll.u32 %v7631, 16
  %v7687 = vrot.slane %v7685, 2
  %v7688 = vor.u32 %v7684, %v7687
  %v7689 = vsel %vm2231, %v7679, %v7688
  %v7691 = vshrl.u32 %v7632, 16
  %v7693 = vrot.slane %v7691, 1
  %v7694 = vshll.u32 %v7632, 16
  %v7696 = vrot.slane %v7694, 2
  %v7697 = vor.u32 %v7693, %v7696
  %v7698 = vsel %vm2231, %v7688, %v7697
  %v7700 = vshrl.u32 %v7633, 16
  %v7702 = vrot.slane %v7700, 1
  %v7703 = vshll.u32 %v7633, 16
  %v7705 = vrot.slane %v7703, 2
  %v7706 = vor.u32 %v7702, %v7705
  %v7707 = vsel %vm2231, %v7697, %v7706
  %v7709 = vshrl.u32 %v7634, 16
  %v7711 = vrot.slane %v7709, 1
  %v7712 = vshll.u32 %v7634, 16
  %v7714 = vrot.slane %v7712, 2
  %v7715 = vor.u32 %v7711, %v7714
  %v7716 = vsel %vm2231, %v7706, %v7715
  %v7718 = vshrl.u32 %v7635, 16
  %v7720 = vrot.slane %v7718, 1
  %v7721 = vshll.u32 %v7635, 16
  %v7723 = vrot.slane %v7721, 2
  %v7724 = vor.u32 %v7720, %v7723
  %v7725 = vsel %vm2231, %v7715, %v7724
  %v7727 = vshrl.u32 %v7636, 16
  %v7729 = vrot.slane %v7727, 1
  %v7730 = vshll.u32 %v7636, 16
  %v7732 = vrot.slane %v7730, 2
  %v7733 = vor.u32 %v7729, %v7732
  %v7734 = vsel %vm2231, %v7724, %v7733
  %v7736 = vshrl.u32 %v7637, 16
  %v7738 = vrot.slane %v7736, 1
  %v7739 = vshll.u32 %v7637, 16
  %v7741 = vrot.slane %v7739, 2
  %v7742 = vor.u32 %v7738, %v7741
  %v7743 = vsel %vm2231, %v7733, %v7742
  %v7745 = vshrl.u32 %v7638, 16
  %v7747 = vrot.slane %v7745, 1
  %v7748 = vshll.u32 %v7638, 16
  %v7750 = vrot.slane %v7748, 2
  %v7751 = vor.u32 %v7747, %v7750
  %v7752 = vsel %vm2231, %v7742, %v7751
  %v7754 = vshrl.u32 %v7639, 16
  %v7756 = vrot.slane %v7754, 1
  %v7757 = vshll.u32 %v7639, 16
  %v7759 = vrot.slane %v7757, 2
  %v7760 = vor.u32 %v7756, %v7759
  %v7761 = vsel %vm2231, %v7751, %v7760
  %v7763 = vshrl.u32 %v7640, 16
  %v7765 = vrot.slane %v7763, 1
  %v7766 = vshll.u32 %v7640, 16
  %v7768 = vrot.slane %v7766, 2
  %v7769 = vor.u32 %v7765, %v7768
  %v7770 = vsel %vm2231, %v7760, %v7769
  %v7772 = vshrl.u32 %v7641, 16
  %v7774 = vrot.slane %v7772, 1
  %v7775 = vshll.u32 %v7641, 16
  %v7777 = vrot.slane %v7775, 2
  %v7778 = vor.u32 %v7774, %v7777
  %v7779 = vsel %vm2231, %v7769, %v7778
  %v7781 = vshrl.u32 %v7642, 16
  %v7783 = vrot.slane %v7781, 1
  %v7784 = vshll.u32 %v7642, 16
  %v7786 = vrot.slane %v7784, 2
  %v7787 = vor.u32 %v7783, %v7786
  %v7788 = vsel %vm2231, %v7778, %v7787
  %v7790 = vshrl.u32 %v7643, 16
  %v7792 = vrot.slane %v7790, 1
  %v7793 = vshll.u32 %v7643, 16
  %v7795 = vrot.slane %v7793, 2
  %v7796 = vor.u32 %v7792, %v7795
  %v7797 = vsel %vm2231, %v7787, %v7796
  %v7799 = vshrl.u32 %v7644, 16
  %v7801 = vrot.slane %v7799, 1
  %v7802 = vshll.u32 %v7644, 16
  %v7804 = vrot.slane %v7802, 2
  %v7805 = vor.u32 %v7801, %v7804
  %v7806 = vsel %vm2231, %v7796, %v7805
  %v7808 = vshrl.u32 %v7645, 16
  %v7810 = vrot.slane %v7808, 1
  %v7811 = vshll.u32 %v7645, 16
  %v7813 = vrot.slane %v7811, 2
  %v7814 = vor.u32 %v7810, %v7813
  %v7815 = vsel %vm2231, %v7805, %v7814
  %v7817 = vsel %vm181, %v7662, 0
  %v7820 = vsel %vm181, %v7671, 0
  %v7823 = vsel %vm181, %v7680, 0
  %v7826 = vsel %vm181, %v7689, 0
  %v7829 = vsel %vm181, %v7698, 0
  %v7832 = vsel %vm181, %v7707, 0
  %v7835 = vsel %vm181, %v7716, 0
  %v7838 = vsel %vm181, %v7725, 0
  %v7841 = vsel %vm181, %v7734, 0
  %v7844 = vsel %vm181, %v7743, 0
  %v7847 = vsel %vm181, %v7752, 0
  %v7850 = vsel %vm181, %v7761, 0
  %v7853 = vsel %vm181, %v7770, 0
  %v7856 = vsel %vm181, %v7779, 0
  %v7859 = vsel %vm181, %v7788, 0
  %v7862 = vsel %vm181, %v7797, 0
  %v7865 = vsel %vm181, %v7806, 0
  %v7868 = vsel %vm181, %v7815, 0
  %v7871 = vsel %vm236, %v7552, 0
  %7873 = vmatprep.subr.bf16.mxu0 0
  %7874 = vmatpush1.bf16.msra.mxu0 %v7871
  %7875 = vmatprep.subr.bf16.mxu0 0
  %7876 = vmatpush1.bf16.msra.mxu0 0
  %7877 = vmatprep.subr.bf16.mxu0 0
  %7878 = vmatpush1.bf16.msra.mxu0 0
  %7879 = vmatprep.subr.bf16.mxu0 0
  %7880 = vmatpush1.bf16.msra.mxu0 0
  %7881 = vmatprep.subr.bf16.mxu0 0
  %7882 = vmatpush1.bf16.msra.mxu0 0
  %7883 = vmatprep.subr.bf16.mxu0 0
  %7884 = vmatpush1.bf16.msra.mxu0 0
  %7885 = vmatprep.subr.bf16.mxu0 0
  %7886 = vmatpush1.bf16.msra.mxu0 0
  %7887 = vmatprep.subr.bf16.mxu0 0
  %7888 = vmatpush1.bf16.msra.mxu0 0
  %7889 = vmatprep.subr.bf16.mxu0 0
  %7890 = vmatpush1.bf16.msra.mxu0 0
  %7891 = vmatprep.subr.bf16.mxu0 0
  %7892 = vmatpush1.bf16.msra.mxu0 0
  %7893 = vmatprep.subr.bf16.mxu0 0
  %7894 = vmatpush1.bf16.msra.mxu0 0
  %7895 = vmatprep.subr.bf16.mxu0 0
  %7896 = vmatpush1.bf16.msra.mxu0 0
  %7897 = vmatprep.subr.bf16.mxu0 0
  %7898 = vmatpush1.bf16.msra.mxu0 0
  %7899 = vmatprep.subr.bf16.mxu0 0
  %7900 = vmatpush1.bf16.msra.mxu0 0
  %7901 = vmatprep.subr.bf16.mxu0 0
  %7902 = vmatpush1.bf16.msra.mxu0 0
  %7903 = vmatprep.subr.bf16.mxu0 0
  %7904 = vmatpush1.bf16.msra.mxu0 0
  %7905 = vmatprep.mubr.bf16.mxu0 0
  %7906 = vmatmul.mubr.bf16.gmra.mrb[0].mxu0 %v7817
  %v7907 = vpop.f32.mrb[0].mxu0
  %v7908 = vadd.f32 0.0, %v7907
  %v7909 = vpop.f32.mrb[0].mxu0
  %v7910 = vpop.f32.mrb[0].mxu0
  %v7911 = vadd.f32 0.0, %v7910
  %v7912 = vpop.f32.mrb[0].mxu0
  %7913 = vmatprep.mubr.bf16.mxu0 0
  %7914 = vmatmul.mubr.bf16.gmra.mrb[0].mxu0 %v7820
  %v7915 = vpop.f32.mrb[0].mxu0
  %v7916 = vadd.f32 0.0, %v7915
  %v7917 = vpop.f32.mrb[0].mxu0
  %v7918 = vpop.f32.mrb[0].mxu0
  %v7919 = vadd.f32 0.0, %v7918
  %v7920 = vpop.f32.mrb[0].mxu0
  %7921 = vmatprep.mubr.bf16.mxu0 0
  %7922 = vmatmul.mubr.bf16.gmra.mrb[0].mxu0 %v7823
  %v7923 = vpop.f32.mrb[0].mxu0
  %v7924 = vadd.f32 0.0, %v7923
  %v7925 = vpop.f32.mrb[0].mxu0
  %v7926 = vpop.f32.mrb[0].mxu0
  %v7927 = vadd.f32 0.0, %v7926
  %v7928 = vpop.f32.mrb[0].mxu0
  %7929 = vmatprep.mubr.bf16.mxu0 0
  %7930 = vmatmul.mubr.bf16.gmra.mrb[0].mxu0 %v7826
  %v7931 = vpop.f32.mrb[0].mxu0
  %v7932 = vadd.f32 0.0, %v7931
  %v7933 = vpop.f32.mrb[0].mxu0
  %v7934 = vpop.f32.mrb[0].mxu0
  %v7935 = vadd.f32 0.0, %v7934
  %v7936 = vpop.f32.mrb[0].mxu0
  %7937 = vmatprep.mubr.bf16.mxu0 0
  %7938 = vmatmul.mubr.bf16.gmra.mrb[0].mxu0 %v7829
  %v7939 = vpop.f32.mrb[0].mxu0
  %v7940 = vadd.f32 0.0, %v7939
  %v7941 = vpop.f32.mrb[0].mxu0
  %v7942 = vpop.f32.mrb[0].mxu0
  %v7943 = vadd.f32 0.0, %v7942
  %v7944 = vpop.f32.mrb[0].mxu0
  %7945 = vmatprep.mubr.bf16.mxu0 0
  %7946 = vmatmul.mubr.bf16.gmra.mrb[0].mxu0 %v7832
  %v7947 = vpop.f32.mrb[0].mxu0
  %v7948 = vadd.f32 0.0, %v7947
  %v7949 = vpop.f32.mrb[0].mxu0
  %v7950 = vpop.f32.mrb[0].mxu0
  %v7951 = vadd.f32 0.0, %v7950
  %v7952 = vpop.f32.mrb[0].mxu0
  %7953 = vmatprep.mubr.bf16.mxu0 0
  %7954 = vmatmul.mubr.bf16.gmra.mrb[0].mxu0 %v7835
  %v7955 = vpop.f32.mrb[0].mxu0
  %v7956 = vadd.f32 0.0, %v7955
  %v7957 = vpop.f32.mrb[0].mxu0
  %v7958 = vpop.f32.mrb[0].mxu0
  %v7959 = vadd.f32 0.0, %v7958
  %v7960 = vpop.f32.mrb[0].mxu0
  %7961 = vmatprep.mubr.bf16.mxu0 0
  %7962 = vmatmul.mubr.bf16.gmra.mrb[0].mxu0 %v7838
  %v7963 = vpop.f32.mrb[0].mxu0
  %v7964 = vadd.f32 0.0, %v7963
  %v7965 = vpop.f32.mrb[0].mxu0
  %v7966 = vpop.f32.mrb[0].mxu0
  %v7967 = vadd.f32 0.0, %v7966
  %v7968 = vpop.f32.mrb[0].mxu0
  %7969 = vmatprep.mubr.bf16.mxu0 0
  %7970 = vmatmul.mubr.bf16.gmra.mrb[0].mxu0 %v7841
  %v7971 = vpop.f32.mrb[0].mxu0
  %v7972 = vadd.f32 0.0, %v7971
  %v7973 = vpop.f32.mrb[0].mxu0
  %v7974 = vpop.f32.mrb[0].mxu0
  %v7975 = vadd.f32 0.0, %v7974
  %v7976 = vpop.f32.mrb[0].mxu0
  %7977 = vmatprep.mubr.bf16.mxu0 0
  %7978 = vmatmul.mubr.bf16.gmra.mrb[0].mxu0 %v7844
  %v7979 = vpop.f32.mrb[0].mxu0
  %v7980 = vadd.f32 0.0, %v7979
  %v7981 = vpop.f32.mrb[0].mxu0
  %v7982 = vpop.f32.mrb[0].mxu0
  %v7983 = vadd.f32 0.0, %v7982
  %v7984 = vpop.f32.mrb[0].mxu0
  %7985 = vmatprep.mubr.bf16.mxu0 0
  %7986 = vmatmul.mubr.bf16.gmra.mrb[0].mxu0 %v7847
  %v7987 = vpop.f32.mrb[0].mxu0
  %v7988 = vadd.f32 0.0, %v7987
  %v7989 = vpop.f32.mrb[0].mxu0
  %v7990 = vpop.f32.mrb[0].mxu0
  %v7991 = vadd.f32 0.0, %v7990
  %v7992 = vpop.f32.mrb[0].mxu0
  %7993 = vmatprep.mubr.bf16.mxu0 0
  %7994 = vmatmul.mubr.bf16.gmra.mrb[0].mxu0 %v7850
  %v7995 = vpop.f32.mrb[0].mxu0
  %v7996 = vadd.f32 0.0, %v7995
  %v7997 = vpop.f32.mrb[0].mxu0
  %v7998 = vpop.f32.mrb[0].mxu0
  %v7999 = vadd.f32 0.0, %v7998
  %v8000 = vpop.f32.mrb[0].mxu0
  %8001 = vmatprep.mubr.bf16.mxu0 0
  %8002 = vmatmul.mubr.bf16.gmra.mrb[0].mxu0 %v7853
  %v8003 = vpop.f32.mrb[0].mxu0
  %v8004 = vadd.f32 0.0, %v8003
  %v8005 = vpop.f32.mrb[0].mxu0
  %v8006 = vpop.f32.mrb[0].mxu0
  %v8007 = vadd.f32 0.0, %v8006
  %v8008 = vpop.f32.mrb[0].mxu0
  %8009 = vmatprep.mubr.bf16.mxu0 0
  %8010 = vmatmul.mubr.bf16.gmra.mrb[0].mxu0 %v7856
  %v8011 = vpop.f32.mrb[0].mxu0
  %v8012 = vadd.f32 0.0, %v8011
  %v8013 = vpop.f32.mrb[0].mxu0
  %v8014 = vpop.f32.mrb[0].mxu0
  %v8015 = vadd.f32 0.0, %v8014
  %v8016 = vpop.f32.mrb[0].mxu0
  %8017 = vmatprep.mubr.bf16.mxu0 0
  %8018 = vmatmul.mubr.bf16.gmra.mrb[0].mxu0 %v7859
  %v8019 = vpop.f32.mrb[0].mxu0
  %v8020 = vadd.f32 0.0, %v8019
  %v8021 = vpop.f32.mrb[0].mxu0
  %v8022 = vpop.f32.mrb[0].mxu0
  %v8023 = vadd.f32 0.0, %v8022
  %v8024 = vpop.f32.mrb[0].mxu0
  %8025 = vmatprep.mubr.bf16.mxu0 0
  %8026 = vmatmul.mubr.bf16.gmra.mrb[0].mxu0 %v7862
  %v8027 = vpop.f32.mrb[0].mxu0
  %v8028 = vadd.f32 0.0, %v8027
  %v8029 = vpop.f32.mrb[0].mxu0
  %v8030 = vpop.f32.mrb[0].mxu0
  %v8031 = vadd.f32 0.0, %v8030
  %v8032 = vpop.f32.mrb[0].mxu0
  %8033 = vmatprep.mubr.bf16.mxu0 0
  %8034 = vmatmul.mubr.bf16.gmra.mrb[0].mxu0 %v7865
  %v8035 = vpop.f32.mrb[0].mxu0
  %v8036 = vadd.f32 0.0, %v8035
  %v8037 = vpop.f32.mrb[0].mxu0
  %v8038 = vpop.f32.mrb[0].mxu0
  %v8039 = vadd.f32 0.0, %v8038
  %v8040 = vpop.f32.mrb[0].mxu0
  %8041 = vmatprep.mubr.bf16.mxu0 0
  %8042 = vmatmul.mubr.bf16.gmra.mrb[0].mxu0 %v7868
  %v8043 = vpop.f32.mrb[0].mxu0
  %v8044 = vadd.f32 0.0, %v8043
  %v8045 = vpop.f32.mrb[0].mxu0
  %v8046 = vpop.f32.mrb[0].mxu0
  %v8047 = vadd.f32 0.0, %v8046
  %v8048 = vpop.f32.mrb[0].mxu0
  %8049 = vdwg.mxu0
  %v8050 = vld [vmem:[#allocation2] sm:$0xff]
  %v8051 = vld [vmem:[#allocation2 + $0x8] sm:$0xff]
  %v8052 = vld [vmem:[#allocation2 + $0x10] sm:$0xff]
  %v8053 = vld [vmem:[#allocation2 + $0x18] sm:$0xff]
  %v8054 = vld [vmem:[#allocation2 + $0x20] sm:$0xff]
  %v8055 = vld [vmem:[#allocation2 + $0x28] sm:$0xff]
  %v8056 = vld [vmem:[#allocation2 + $0x30] sm:$0xff]
  %v8057 = vld [vmem:[#allocation2 + $0x38] sm:$0xff]
  %v8058 = vld [vmem:[#allocation2 + $0x40] sm:$0xff]
  %v8059 = vld [vmem:[#allocation2 + $0x48] sm:$0xff]
  %v8060 = vld [vmem:[#allocation2 + $0x50] sm:$0xff]
  %v8061 = vld [vmem:[#allocation2 + $0x58] sm:$0xff]
  %v8062 = vld [vmem:[#allocation2 + $0x60] sm:$0xff]
  %v8063 = vld [vmem:[#allocation2 + $0x68] sm:$0xff]
  %v8064 = vld [vmem:[#allocation2 + $0x70] sm:$0xff]
  %v8065 = vld [vmem:[#allocation2 + $0x78] sm:$0xff]
  %v8066 = vld [vmem:[#allocation2 + $0x80] sm:$0xff]
  %v8067 = vld [vmem:[#allocation2 + $0x88] sm:$0xff]
  %v8068 = vld [vmem:[#allocation2 + $0x90] sm:$0xff]
  %v8069 = vld [vmem:[#allocation2 + $0x98] sm:$0xff]
  %v8070 = vld [vmem:[#allocation2 + $0xa0] sm:$0xff]
  %v8071 = vld [vmem:[#allocation2 + $0xa8] sm:$0xff]
  %v8072 = vld [vmem:[#allocation2 + $0xb0] sm:$0xff]
  %v8073 = vld [vmem:[#allocation2 + $0xb8] sm:$0xff]
  %v8074 = vld [vmem:[#allocation2 + $0xc0] sm:$0xff]
  %v8075 = vld [vmem:[#allocation2 + $0xc8] sm:$0xff]
  %v8076 = vld [vmem:[#allocation2 + $0xd0] sm:$0xff]
  %v8077 = vld [vmem:[#allocation2 + $0xd8] sm:$0xff]
  %v8078 = vld [vmem:[#allocation2 + $0xe0] sm:$0xff]
  %v8079 = vld [vmem:[#allocation2 + $0xe8] sm:$0xff]
  %v8080 = vld [vmem:[#allocation2 + $0xf0] sm:$0xff]
  %v8081 = vld [vmem:[#allocation2 + $0xf8] sm:$0xff]
  %v8082 = vld [vmem:[#allocation2 + $0x100] sm:$0xff]
  %v8083 = vld [vmem:[#allocation2 + $0x108] sm:$0xff]
  %v8084 = vld [vmem:[#allocation2 + $0x110] sm:$0xff]
  %v8085 = vld [vmem:[#allocation2 + $0x118] sm:$0xff]
  %v8086 = vadd.f32 %v8050, %v7908
  %v8087 = vadd.f32 %v8051, %v7911
  %v8088 = vadd.f32 %v8052, %v7916
  %v8089 = vadd.f32 %v8053, %v7919
  %v8090 = vadd.f32 %v8054, %v7924
  %v8091 = vadd.f32 %v8055, %v7927
  %v8092 = vadd.f32 %v8056, %v7932
  %v8093 = vadd.f32 %v8057, %v7935
  %v8094 = vadd.f32 %v8058, %v7940
  %v8095 = vadd.f32 %v8059, %v7943
  %v8096 = vadd.f32 %v8060, %v7948
  %v8097 = vadd.f32 %v8061, %v7951
  %v8098 = vadd.f32 %v8062, %v7956
  %v8099 = vadd.f32 %v8063, %v7959
  %v8100 = vadd.f32 %v8064, %v7964
  %v8101 = vadd.f32 %v8065, %v7967
  %v8102 = vadd.f32 %v8066, %v7972
  %v8103 = vadd.f32 %v8067, %v7975
  %v8104 = vadd.f32 %v8068, %v7980
  %v8105 = vadd.f32 %v8069, %v7983
  %v8106 = vadd.f32 %v8070, %v7988
  %v8107 = vadd.f32 %v8071, %v7991
  %v8108 = vadd.f32 %v8072, %v7996
  %v8109 = vadd.f32 %v8073, %v7999
  %v8110 = vadd.f32 %v8074, %v8004
  %v8111 = vadd.f32 %v8075, %v8007
  %v8112 = vadd.f32 %v8076, %v8012
  %v8113 = vadd.f32 %v8077, %v8015
  %v8114 = vadd.f32 %v8078, %v8020
  %v8115 = vadd.f32 %v8079, %v8023
  %v8116 = vadd.f32 %v8080, %v8028
  %v8117 = vadd.f32 %v8081, %v8031
  %v8118 = vadd.f32 %v8082, %v8036
  %v8119 = vadd.f32 %v8083, %v8039
  %v8120 = vadd.f32 %v8084, %v8044
  %v8121 = vadd.f32 %v8085, %v8047
  %8122 = vst [vmem:[#allocation2] sm:$0xff] %v8086
  %8123 = vst [vmem:[#allocation2 + $0x8] sm:$0xff] %v8087
  %8124 = vst [vmem:[#allocation2 + $0x10] sm:$0xff] %v8088
  %8125 = vst [vmem:[#allocation2 + $0x18] sm:$0xff] %v8089
  %8126 = vst [vmem:[#allocation2 + $0x20] sm:$0xff] %v8090
  %8127 = vst [vmem:[#allocation2 + $0x28] sm:$0xff] %v8091
  %8128 = vst [vmem:[#allocation2 + $0x30] sm:$0xff] %v8092
  %8129 = vst [vmem:[#allocation2 + $0x38] sm:$0xff] %v8093
  %8130 = vst [vmem:[#allocation2 + $0x40] sm:$0xff] %v8094
  %8131 = vst [vmem:[#allocation2 + $0x48] sm:$0xff] %v8095
  %8132 = vst [vmem:[#allocation2 + $0x50] sm:$0xff] %v8096
  %8133 = vst [vmem:[#allocation2 + $0x58] sm:$0xff] %v8097
  %8134 = vst [vmem:[#allocation2 + $0x60] sm:$0xff] %v8098
  %8135 = vst [vmem:[#allocation2 + $0x68] sm:$0xff] %v8099
  %8136 = vst [vmem:[#allocation2 + $0x70] sm:$0xff] %v8100
  %8137 = vst [vmem:[#allocation2 + $0x78] sm:$0xff] %v8101
  %8138 = vst [vmem:[#allocation2 + $0x80] sm:$0xff] %v8102
  %8139 = vst [vmem:[#allocation2 + $0x88] sm:$0xff] %v8103
  %8140 = vst [vmem:[#allocation2 + $0x90] sm:$0xff] %v8104
  %8141 = vst [vmem:[#allocation2 + $0x98] sm:$0xff] %v8105
  %8142 = vst [vmem:[#allocation2 + $0xa0] sm:$0xff] %v8106
  %8143 = vst [vmem:[#allocation2 + $0xa8] sm:$0xff] %v8107
  %8144 = vst [vmem:[#allocation2 + $0xb0] sm:$0xff] %v8108
  %8145 = vst [vmem:[#allocation2 + $0xb8] sm:$0xff] %v8109
  %8146 = vst [vmem:[#allocation2 + $0xc0] sm:$0xff] %v8110
  %8147 = vst [vmem:[#allocation2 + $0xc8] sm:$0xff] %v8111
  %8148 = vst [vmem:[#allocation2 + $0xd0] sm:$0xff] %v8112
  %8149 = vst [vmem:[#allocation2 + $0xd8] sm:$0xff] %v8113
  %8150 = vst [vmem:[#allocation2 + $0xe0] sm:$0xff] %v8114
  %8151 = vst [vmem:[#allocation2 + $0xe8] sm:$0xff] %v8115
  %8152 = vst [vmem:[#allocation2 + $0xf0] sm:$0xff] %v8116
  %8153 = vst [vmem:[#allocation2 + $0xf8] sm:$0xff] %v8117
  %8154 = vst [vmem:[#allocation2 + $0x100] sm:$0xff] %v8118
  %8155 = vst [vmem:[#allocation2 + $0x108] sm:$0xff] %v8119
  %8156 = vst [vmem:[#allocation2 + $0x110] sm:$0xff] %v8120
  %8157 = vst [vmem:[#allocation2 + $0x118] sm:$0xff] %v8121
  %v8158 = vld [vmem:[%s5476 + $0x8] sm:$0xc]
  %v8159 = vld [vmem:[%s5476 + $0xc] sm:$0xf]
  %v8160 = vld [vmem:[%s5476 + $0x10] sm:$0xf]
  %v8161 = vld [vmem:[%s5476 + $0x14] sm:$0xf]
  %v8162 = vld [vmem:[%s5476 + $0x18] sm:$0xf]
  %v8163 = vld [vmem:[%s5476 + $0x1c] sm:$0xf]
  %v8164 = vld [vmem:[%s5476 + $0x20] sm:$0xf]
  %v8165 = vld [vmem:[%s5476 + $0x24] sm:$0xf]
  %v8166 = vld [vmem:[%s5476 + $0x28] sm:$0xf]
  %v8167 = vld [vmem:[%s5476 + $0x2c] sm:$0xf]
  %v8168 = vld [vmem:[%s5476 + $0x30] sm:$0xf]
  %v8169 = vld [vmem:[%s5476 + $0x34] sm:$0xf]
  %v8170 = vld [vmem:[%s5476 + $0x38] sm:$0xf]
  %v8171 = vld [vmem:[%s5476 + $0x3c] sm:$0xf]
  %v8172 = vld [vmem:[%s5476 + $0x40] sm:$0xf]
  %v8173 = vld [vmem:[%s5476 + $0x44] sm:$0xf]
  %v8174 = vld [vmem:[%s5476 + $0x48] sm:$0xf]
  %v8175 = vld [vmem:[%s5476 + $0x4c] sm:$0xf]
  %v8176 = vld [vmem:[%s5476 + $0x50] sm:$0xf]
  %v8177 = vld [vmem:[%s5476 + $0x54] sm:$0xf]
  %v8178 = vld [vmem:[%s5476 + $0x58] sm:$0xf]
  %v8179 = vld [vmem:[%s5476 + $0x5c] sm:$0xf]
  %v8180 = vld [vmem:[%s5476 + $0x60] sm:$0xf]
  %v8181 = vld [vmem:[%s5476 + $0x64] sm:$0xf]
  %v8182 = vld [vmem:[%s5476 + $0x68] sm:$0xf]
  %v8183 = vld [vmem:[%s5476 + $0x6c] sm:$0xf]
  %v8184 = vld [vmem:[%s5476 + $0x70] sm:$0xf]
  %v8185 = vld [vmem:[%s5476 + $0x74] sm:$0xf]
  %v8186 = vld [vmem:[%s5476 + $0x78] sm:$0xf]
  %v8187 = vld [vmem:[%s5476 + $0x7c] sm:$0xf]
  %v8188 = vld [vmem:[%s5476 + $0x80] sm:$0xf]
  %v8189 = vld [vmem:[%s5476 + $0x84] sm:$0xf]
  %v8190 = vld [vmem:[%s5476 + $0x88] sm:$0xf]
  %v8191 = vld [vmem:[%s5476 + $0x8c] sm:$0xf]
  %v8192 = vld [vmem:[%s5476 + $0x90] sm:$0xf]
  %v8193 = vld [vmem:[%s5476 + $0x94] sm:$0xf]
  %v8194 = vld [vmem:[%s5476 + $0x98] sm:$0x3]
  %v8195 = vld [vmem:[%s2781] sm:$0xf]
  %v8233 = vunpack.c.l.b16 %v8158
  %v8234 = vunpack.c.l.b16 %v8159
  %v8235 = vunpack.c.l.b16 %v8160
  %v8236 = vunpack.c.l.b16 %v8161
  %v8237 = vunpack.c.l.b16 %v8162
  %v8238 = vunpack.c.l.b16 %v8163
  %v8239 = vunpack.c.l.b16 %v8164
  %v8240 = vunpack.c.l.b16 %v8165
  %v8241 = vunpack.c.l.b16 %v8166
  %v8242 = vunpack.c.l.b16 %v8167
  %v8243 = vunpack.c.l.b16 %v8168
  %v8244 = vunpack.c.l.b16 %v8169
  %v8245 = vunpack.c.l.b16 %v8170
  %v8246 = vunpack.c.l.b16 %v8171
  %v8247 = vunpack.c.l.b16 %v8172
  %v8248 = vunpack.c.l.b16 %v8173
  %v8249 = vunpack.c.l.b16 %v8174
  %v8250 = vunpack.c.l.b16 %v8175
  %v8251 = vunpack.c.l.b16 %v8176
  %v8252 = vunpack.c.l.b16 %v8177
  %v8253 = vunpack.c.l.b16 %v8178
  %v8254 = vunpack.c.l.b16 %v8179
  %v8255 = vunpack.c.l.b16 %v8180
  %v8256 = vunpack.c.l.b16 %v8181
  %v8257 = vunpack.c.l.b16 %v8182
  %v8258 = vunpack.c.l.b16 %v8183
  %v8259 = vunpack.c.l.b16 %v8184
  %v8260 = vunpack.c.l.b16 %v8185
  %v8261 = vunpack.c.l.b16 %v8186
  %v8262 = vunpack.c.l.b16 %v8187
  %v8263 = vunpack.c.l.b16 %v8188
  %v8264 = vunpack.c.l.b16 %v8189
  %v8265 = vunpack.c.l.b16 %v8190
  %v8266 = vunpack.c.l.b16 %v8191
  %v8267 = vunpack.c.l.b16 %v8192
  %v8268 = vunpack.c.l.b16 %v8193
  %v8269 = vunpack.c.l.b16 %v8194
  %v8270 = vpack.c.b16 %v8234, %v8233
  %v8271 = vpack.c.b16 %v8236, %v8235
  %v8272 = vpack.c.b16 %v8238, %v8237
  %v8273 = vpack.c.b16 %v8240, %v8239
  %v8274 = vpack.c.b16 %v8242, %v8241
  %v8275 = vpack.c.b16 %v8244, %v8243
  %v8276 = vpack.c.b16 %v8246, %v8245
  %v8277 = vpack.c.b16 %v8248, %v8247
  %v8278 = vpack.c.b16 %v8250, %v8249
  %v8279 = vpack.c.b16 %v8252, %v8251
  %v8280 = vpack.c.b16 %v8254, %v8253
  %v8281 = vpack.c.b16 %v8256, %v8255
  %v8282 = vpack.c.b16 %v8258, %v8257
  %v8283 = vpack.c.b16 %v8260, %v8259
  %v8284 = vpack.c.b16 %v8262, %v8261
  %v8285 = vpack.c.b16 %v8264, %v8263
  %v8286 = vpack.c.b16 %v8266, %v8265
  %v8287 = vpack.c.b16 %v8268, %v8267
  %v8288 = vpack.c.b16 %v8269, %v8269
  %v8289 = vrot.slane %v8270, 2
  %v8290 = vrot.slane %v8271, 2
  %v8291 = vsel %vm2876, %v8289, %v8290
  %v8292 = vrot.slane %v8272, 2
  %v8293 = vsel %vm2876, %v8290, %v8292
  %v8294 = vrot.slane %v8273, 2
  %v8295 = vsel %vm2876, %v8292, %v8294
  %v8296 = vrot.slane %v8274, 2
  %v8297 = vsel %vm2876, %v8294, %v8296
  %v8298 = vrot.slane %v8275, 2
  %v8299 = vsel %vm2876, %v8296, %v8298
  %v8300 = vrot.slane %v8276, 2
  %v8301 = vsel %vm2876, %v8298, %v8300
  %v8302 = vrot.slane %v8277, 2
  %v8303 = vsel %vm2876, %v8300, %v8302
  %v8304 = vrot.slane %v8278, 2
  %v8305 = vsel %vm2876, %v8302, %v8304
  %v8306 = vrot.slane %v8279, 2
  %v8307 = vsel %vm2876, %v8304, %v8306
  %v8308 = vrot.slane %v8280, 2
  %v8309 = vsel %vm2876, %v8306, %v8308
  %v8310 = vrot.slane %v8281, 2
  %v8311 = vsel %vm2876, %v8308, %v8310
  %v8312 = vrot.slane %v8282, 2
  %v8313 = vsel %vm2876, %v8310, %v8312
  %v8314 = vrot.slane %v8283, 2
  %v8315 = vsel %vm2876, %v8312, %v8314
  %v8316 = vrot.slane %v8284, 2
  %v8317 = vsel %vm2876, %v8314, %v8316
  %v8318 = vrot.slane %v8285, 2
  %v8319 = vsel %vm2876, %v8316, %v8318
  %v8320 = vrot.slane %v8286, 2
  %v8321 = vsel %vm2876, %v8318, %v8320
  %v8322 = vrot.slane %v8287, 2
  %v8323 = vsel %vm2876, %v8320, %v8322
  %v8324 = vrot.slane %v8288, 2
  %v8325 = vsel %vm2876, %v8322, %v8324
  %v8327 = vsel %vm181, %v8291, 0
  %v8330 = vsel %vm181, %v8293, 0
  %v8333 = vsel %vm181, %v8295, 0
  %v8336 = vsel %vm181, %v8297, 0
  %v8339 = vsel %vm181, %v8299, 0
  %v8342 = vsel %vm181, %v8301, 0
  %v8345 = vsel %vm181, %v8303, 0
  %v8348 = vsel %vm181, %v8305, 0
  %v8351 = vsel %vm181, %v8307, 0
  %v8354 = vsel %vm181, %v8309, 0
  %v8357 = vsel %vm181, %v8311, 0
  %v8360 = vsel %vm181, %v8313, 0
  %v8363 = vsel %vm181, %v8315, 0
  %v8366 = vsel %vm181, %v8317, 0
  %v8369 = vsel %vm181, %v8319, 0
  %v8372 = vsel %vm181, %v8321, 0
  %v8375 = vsel %vm181, %v8323, 0
  %v8378 = vsel %vm181, %v8325, 0
  %v8381 = vsel %vm236, %v8195, 0
  %8383 = vmatprep.subr.bf16.mxu0 0
  %8384 = vmatpush1.bf16.msra.mxu0 %v8381
  %8385 = vmatprep.subr.bf16.mxu0 0
  %8386 = vmatpush1.bf16.msra.mxu0 0
  %8387 = vmatprep.subr.bf16.mxu0 0
  %8388 = vmatpush1.bf16.msra.mxu0 0
  %8389 = vmatprep.subr.bf16.mxu0 0
  %8390 = vmatpush1.bf16.msra.mxu0 0
  %8391 = vmatprep.subr.bf16.mxu0 0
  %8392 = vmatpush1.bf16.msra.mxu0 0
  %8393 = vmatprep.subr.bf16.mxu0 0
  %8394 = vmatpush1.bf16.msra.mxu0 0
  %8395 = vmatprep.subr.bf16.mxu0 0
  %8396 = vmatpush1.bf16.msra.mxu0 0
  %8397 = vmatprep.subr.bf16.mxu0 0
  %8398 = vmatpush1.bf16.msra.mxu0 0
  %8399 = vmatprep.subr.bf16.mxu0 0
  %8400 = vmatpush1.bf16.msra.mxu0 0
  %8401 = vmatprep.subr.bf16.mxu0 0
  %8402 = vmatpush1.bf16.msra.mxu0 0
  %8403 = vmatprep.subr.bf16.mxu0 0
  %8404 = vmatpush1.bf16.msra.mxu0 0
  %8405 = vmatprep.subr.bf16.mxu0 0
  %8406 = vmatpush1.bf16.msra.mxu0 0
  %8407 = vmatprep.subr.bf16.mxu0 0
  %8408 = vmatpush1.bf16.msra.mxu0 0
  %8409 = vmatprep.subr.bf16.mxu0 0
  %8410 = vmatpush1.bf16.msra.mxu0 0
  %8411 = vmatprep.subr.bf16.mxu0 0
  %8412 = vmatpush1.bf16.msra.mxu0 0
  %8413 = vmatprep.subr.bf16.mxu0 0
  %8414 = vmatpush1.bf16.msra.mxu0 0
  %8415 = vmatprep.mubr.bf16.mxu0 0
  %8416 = vmatmul.mubr.bf16.gmra.mrb[0].mxu0 %v8327
  %v8417 = vpop.f32.mrb[0].mxu0
  %v8418 = vadd.f32 0.0, %v8417
  %v8419 = vpop.f32.mrb[0].mxu0
  %v8420 = vpop.f32.mrb[0].mxu0
  %v8421 = vadd.f32 0.0, %v8420
  %v8422 = vpop.f32.mrb[0].mxu0
  %8423 = vmatprep.mubr.bf16.mxu0 0
  %8424 = vmatmul.mubr.bf16.gmra.mrb[0].mxu0 %v8330
  %v8425 = vpop.f32.mrb[0].mxu0
  %v8426 = vadd.f32 0.0, %v8425
  %v8427 = vpop.f32.mrb[0].mxu0
  %v8428 = vpop.f32.mrb[0].mxu0
  %v8429 = vadd.f32 0.0, %v8428
  %v8430 = vpop.f32.mrb[0].mxu0
  %8431 = vmatprep.mubr.bf16.mxu0 0
  %8432 = vmatmul.mubr.bf16.gmra.mrb[0].mxu0 %v8333
  %v8433 = vpop.f32.mrb[0].mxu0
  %v8434 = vadd.f32 0.0, %v8433
  %v8435 = vpop.f32.mrb[0].mxu0
  %v8436 = vpop.f32.mrb[0].mxu0
  %v8437 = vadd.f32 0.0, %v8436
  %v8438 = vpop.f32.mrb[0].mxu0
  %8439 = vmatprep.mubr.bf16.mxu0 0
  %8440 = vmatmul.mubr.bf16.gmra.mrb[0].mxu0 %v8336
  %v8441 = vpop.f32.mrb[0].mxu0
  %v8442 = vadd.f32 0.0, %v8441
  %v8443 = vpop.f32.mrb[0].mxu0
  %v8444 = vpop.f32.mrb[0].mxu0
  %v8445 = vadd.f32 0.0, %v8444
  %v8446 = vpop.f32.mrb[0].mxu0
  %8447 = vmatprep.mubr.bf16.mxu0 0
  %8448 = vmatmul.mubr.bf16.gmra.mrb[0].mxu0 %v8339
  %v8449 = vpop.f32.mrb[0].mxu0
  %v8450 = vadd.f32 0.0, %v8449
  %v8451 = vpop.f32.mrb[0].mxu0
  %v8452 = vpop.f32.mrb[0].mxu0
  %v8453 = vadd.f32 0.0, %v8452
  %v8454 = vpop.f32.mrb[0].mxu0
  %8455 = vmatprep.mubr.bf16.mxu0 0
  %8456 = vmatmul.mubr.bf16.gmra.mrb[0].mxu0 %v8342
  %v8457 = vpop.f32.mrb[0].mxu0
  %v8458 = vadd.f32 0.0, %v8457
  %v8459 = vpop.f32.mrb[0].mxu0
  %v8460 = vpop.f32.mrb[0].mxu0
  %v8461 = vadd.f32 0.0, %v8460
  %v8462 = vpop.f32.mrb[0].mxu0
  %8463 = vmatprep.mubr.bf16.mxu0 0
  %8464 = vmatmul.mubr.bf16.gmra.mrb[0].mxu0 %v8345
  %v8465 = vpop.f32.mrb[0].mxu0
  %v8466 = vadd.f32 0.0, %v8465
  %v8467 = vpop.f32.mrb[0].mxu0
  %v8468 = vpop.f32.mrb[0].mxu0
  %v8469 = vadd.f32 0.0, %v8468
  %v8470 = vpop.f32.mrb[0].mxu0
  %8471 = vmatprep.mubr.bf16.mxu0 0
  %8472 = vmatmul.mubr.bf16.gmra.mrb[0].mxu0 %v8348
  %v8473 = vpop.f32.mrb[0].mxu0
  %v8474 = vadd.f32 0.0, %v8473
  %v8475 = vpop.f32.mrb[0].mxu0
  %v8476 = vpop.f32.mrb[0].mxu0
  %v8477 = vadd.f32 0.0, %v8476
  %v8478 = vpop.f32.mrb[0].mxu0
  %8479 = vmatprep.mubr.bf16.mxu0 0
  %8480 = vmatmul.mubr.bf16.gmra.mrb[0].mxu0 %v8351
  %v8481 = vpop.f32.mrb[0].mxu0
  %v8482 = vadd.f32 0.0, %v8481
  %v8483 = vpop.f32.mrb[0].mxu0
  %v8484 = vpop.f32.mrb[0].mxu0
  %v8485 = vadd.f32 0.0, %v8484
  %v8486 = vpop.f32.mrb[0].mxu0
  %8487 = vmatprep.mubr.bf16.mxu0 0
  %8488 = vmatmul.mubr.bf16.gmra.mrb[0].mxu0 %v8354
  %v8489 = vpop.f32.mrb[0].mxu0
  %v8490 = vadd.f32 0.0, %v8489
  %v8491 = vpop.f32.mrb[0].mxu0
  %v8492 = vpop.f32.mrb[0].mxu0
  %v8493 = vadd.f32 0.0, %v8492
  %v8494 = vpop.f32.mrb[0].mxu0
  %8495 = vmatprep.mubr.bf16.mxu0 0
  %8496 = vmatmul.mubr.bf16.gmra.mrb[0].mxu0 %v8357
  %v8497 = vpop.f32.mrb[0].mxu0
  %v8498 = vadd.f32 0.0, %v8497
  %v8499 = vpop.f32.mrb[0].mxu0
  %v8500 = vpop.f32.mrb[0].mxu0
  %v8501 = vadd.f32 0.0, %v8500
  %v8502 = vpop.f32.mrb[0].mxu0
  %8503 = vmatprep.mubr.bf16.mxu0 0
  %8504 = vmatmul.mubr.bf16.gmra.mrb[0].mxu0 %v8360
  %v8505 = vpop.f32.mrb[0].mxu0
  %v8506 = vadd.f32 0.0, %v8505
  %v8507 = vpop.f32.mrb[0].mxu0
  %v8508 = vpop.f32.mrb[0].mxu0
  %v8509 = vadd.f32 0.0, %v8508
  %v8510 = vpop.f32.mrb[0].mxu0
  %8511 = vmatprep.mubr.bf16.mxu0 0
  %8512 = vmatmul.mubr.bf16.gmra.mrb[0].mxu0 %v8363
  %v8513 = vpop.f32.mrb[0].mxu0
  %v8514 = vadd.f32 0.0, %v8513
  %v8515 = vpop.f32.mrb[0].mxu0
  %v8516 = vpop.f32.mrb[0].mxu0
  %v8517 = vadd.f32 0.0, %v8516
  %v8518 = vpop.f32.mrb[0].mxu0
  %8519 = vmatprep.mubr.bf16.mxu0 0
  %8520 = vmatmul.mubr.bf16.gmra.mrb[0].mxu0 %v8366
  %v8521 = vpop.f32.mrb[0].mxu0
  %v8522 = vadd.f32 0.0, %v8521
  %v8523 = vpop.f32.mrb[0].mxu0
  %v8524 = vpop.f32.mrb[0].mxu0
  %v8525 = vadd.f32 0.0, %v8524
  %v8526 = vpop.f32.mrb[0].mxu0
  %8527 = vmatprep.mubr.bf16.mxu0 0
  %8528 = vmatmul.mubr.bf16.gmra.mrb[0].mxu0 %v8369
  %v8529 = vpop.f32.mrb[0].mxu0
  %v8530 = vadd.f32 0.0, %v8529
  %v8531 = vpop.f32.mrb[0].mxu0
  %v8532 = vpop.f32.mrb[0].mxu0
  %v8533 = vadd.f32 0.0, %v8532
  %v8534 = vpop.f32.mrb[0].mxu0
  %8535 = vmatprep.mubr.bf16.mxu0 0
  %8536 = vmatmul.mubr.bf16.gmra.mrb[0].mxu0 %v8372
  %v8537 = vpop.f32.mrb[0].mxu0
  %v8538 = vadd.f32 0.0, %v8537
  %v8539 = vpop.f32.mrb[0].mxu0
  %v8540 = vpop.f32.mrb[0].mxu0
  %v8541 = vadd.f32 0.0, %v8540
  %v8542 = vpop.f32.mrb[0].mxu0
  %8543 = vmatprep.mubr.bf16.mxu0 0
  %8544 = vmatmul.mubr.bf16.gmra.mrb[0].mxu0 %v8375
  %v8545 = vpop.f32.mrb[0].mxu0
  %v8546 = vadd.f32 0.0, %v8545
  %v8547 = vpop.f32.mrb[0].mxu0
  %v8548 = vpop.f32.mrb[0].mxu0
  %v8549 = vadd.f32 0.0, %v8548
  %v8550 = vpop.f32.mrb[0].mxu0
  %8551 = vmatprep.mubr.bf16.mxu0 0
  %8552 = vmatmul.mubr.bf16.gmra.mrb[0].mxu0 %v8378
  %v8553 = vpop.f32.mrb[0].mxu0
  %v8554 = vadd.f32 0.0, %v8553
  %v8555 = vpop.f32.mrb[0].mxu0
  %v8556 = vpop.f32.mrb[0].mxu0
  %v8557 = vadd.f32 0.0, %v8556
  %v8558 = vpop.f32.mrb[0].mxu0
  %8559 = vdwg.mxu0
  %v8560 = vld [vmem:[#allocation2] sm:$0xff]
  %v8561 = vld [vmem:[#allocation2 + $0x8] sm:$0xff]
  %v8562 = vld [vmem:[#allocation2 + $0x10] sm:$0xff]
  %v8563 = vld [vmem:[#allocation2 + $0x18] sm:$0xff]
  %v8564 = vld [vmem:[#allocation2 + $0x20] sm:$0xff]
  %v8565 = vld [vmem:[#allocation2 + $0x28] sm:$0xff]
  %v8566 = vld [vmem:[#allocation2 + $0x30] sm:$0xff]
  %v8567 = vld [vmem:[#allocation2 + $0x38] sm:$0xff]
  %v8568 = vld [vmem:[#allocation2 + $0x40] sm:$0xff]
  %v8569 = vld [vmem:[#allocation2 + $0x48] sm:$0xff]
  %v8570 = vld [vmem:[#allocation2 + $0x50] sm:$0xff]
  %v8571 = vld [vmem:[#allocation2 + $0x58] sm:$0xff]
  %v8572 = vld [vmem:[#allocation2 + $0x60] sm:$0xff]
  %v8573 = vld [vmem:[#allocation2 + $0x68] sm:$0xff]
  %v8574 = vld [vmem:[#allocation2 + $0x70] sm:$0xff]
  %v8575 = vld [vmem:[#allocation2 + $0x78] sm:$0xff]
  %v8576 = vld [vmem:[#allocation2 + $0x80] sm:$0xff]
  %v8577 = vld [vmem:[#allocation2 + $0x88] sm:$0xff]
  %v8578 = vld [vmem:[#allocation2 + $0x90] sm:$0xff]
  %v8579 = vld [vmem:[#allocation2 + $0x98] sm:$0xff]
  %v8580 = vld [vmem:[#allocation2 + $0xa0] sm:$0xff]
  %v8581 = vld [vmem:[#allocation2 + $0xa8] sm:$0xff]
  %v8582 = vld [vmem:[#allocation2 + $0xb0] sm:$0xff]
  %v8583 = vld [vmem:[#allocation2 + $0xb8] sm:$0xff]
  %v8584 = vld [vmem:[#allocation2 + $0xc0] sm:$0xff]
  %v8585 = vld [vmem:[#allocation2 + $0xc8] sm:$0xff]
  %v8586 = vld [vmem:[#allocation2 + $0xd0] sm:$0xff]
  %v8587 = vld [vmem:[#allocation2 + $0xd8] sm:$0xff]
  %v8588 = vld [vmem:[#allocation2 + $0xe0] sm:$0xff]
  %v8589 = vld [vmem:[#allocation2 + $0xe8] sm:$0xff]
  %v8590 = vld [vmem:[#allocation2 + $0xf0] sm:$0xff]
  %v8591 = vld [vmem:[#allocation2 + $0xf8] sm:$0xff]
  %v8592 = vld [vmem:[#allocation2 + $0x100] sm:$0xff]
  %v8593 = vld [vmem:[#allocation2 + $0x108] sm:$0xff]
  %v8594 = vld [vmem:[#allocation2 + $0x110] sm:$0xff]
  %v8595 = vld [vmem:[#allocation2 + $0x118] sm:$0xff]
  %v8596 = vadd.f32 %v8560, %v8418
  %v8597 = vadd.f32 %v8561, %v8421
  %v8598 = vadd.f32 %v8562, %v8426
  %v8599 = vadd.f32 %v8563, %v8429
  %v8600 = vadd.f32 %v8564, %v8434
  %v8601 = vadd.f32 %v8565, %v8437
  %v8602 = vadd.f32 %v8566, %v8442
  %v8603 = vadd.f32 %v8567, %v8445
  %v8604 = vadd.f32 %v8568, %v8450
  %v8605 = vadd.f32 %v8569, %v8453
  %v8606 = vadd.f32 %v8570, %v8458
  %v8607 = vadd.f32 %v8571, %v8461
  %v8608 = vadd.f32 %v8572, %v8466
  %v8609 = vadd.f32 %v8573, %v8469
  %v8610 = vadd.f32 %v8574, %v8474
  %v8611 = vadd.f32 %v8575, %v8477
  %v8612 = vadd.f32 %v8576, %v8482
  %v8613 = vadd.f32 %v8577, %v8485
  %v8614 = vadd.f32 %v8578, %v8490
  %v8615 = vadd.f32 %v8579, %v8493
  %v8616 = vadd.f32 %v8580, %v8498
  %v8617 = vadd.f32 %v8581, %v8501
  %v8618 = vadd.f32 %v8582, %v8506
  %v8619 = vadd.f32 %v8583, %v8509
  %v8620 = vadd.f32 %v8584, %v8514
  %v8621 = vadd.f32 %v8585, %v8517
  %v8622 = vadd.f32 %v8586, %v8522
  %v8623 = vadd.f32 %v8587, %v8525
  %v8624 = vadd.f32 %v8588, %v8530
  %v8625 = vadd.f32 %v8589, %v8533
  %v8626 = vadd.f32 %v8590, %v8538
  %v8627 = vadd.f32 %v8591, %v8541
  %v8628 = vadd.f32 %v8592, %v8546
  %v8629 = vadd.f32 %v8593, %v8549
  %v8630 = vadd.f32 %v8594, %v8554
  %v8631 = vadd.f32 %v8595, %v8557
  %8632 = vst [vmem:[#allocation2] sm:$0xff] %v8596
  %8633 = vst [vmem:[#allocation2 + $0x8] sm:$0xff] %v8597
  %8634 = vst [vmem:[#allocation2 + $0x10] sm:$0xff] %v8598
  %8635 = vst [vmem:[#allocation2 + $0x18] sm:$0xff] %v8599
  %8636 = vst [vmem:[#allocation2 + $0x20] sm:$0xff] %v8600
  %8637 = vst [vmem:[#allocation2 + $0x28] sm:$0xff] %v8601
  %8638 = vst [vmem:[#allocation2 + $0x30] sm:$0xff] %v8602
  %8639 = vst [vmem:[#allocation2 + $0x38] sm:$0xff] %v8603
  %8640 = vst [vmem:[#allocation2 + $0x40] sm:$0xff] %v8604
  %8641 = vst [vmem:[#allocation2 + $0x48] sm:$0xff] %v8605
  %8642 = vst [vmem:[#allocation2 + $0x50] sm:$0xff] %v8606
  %8643 = vst [vmem:[#allocation2 + $0x58] sm:$0xff] %v8607
  %8644 = vst [vmem:[#allocation2 + $0x60] sm:$0xff] %v8608
  %8645 = vst [vmem:[#allocation2 + $0x68] sm:$0xff] %v8609
  %8646 = vst [vmem:[#allocation2 + $0x70] sm:$0xff] %v8610
  %8647 = vst [vmem:[#allocation2 + $0x78] sm:$0xff] %v8611
  %8648 = vst [vmem:[#allocation2 + $0x80] sm:$0xff] %v8612
  %8649 = vst [vmem:[#allocation2 + $0x88] sm:$0xff] %v8613
  %8650 = vst [vmem:[#allocation2 + $0x90] sm:$0xff] %v8614
  %8651 = vst [vmem:[#allocation2 + $0x98] sm:$0xff] %v8615
  %8652 = vst [vmem:[#allocation2 + $0xa0] sm:$0xff] %v8616
  %8653 = vst [vmem:[#allocation2 + $0xa8] sm:$0xff] %v8617
  %8654 = vst [vmem:[#allocation2 + $0xb0] sm:$0xff] %v8618
  %8655 = vst [vmem:[#allocation2 + $0xb8] sm:$0xff] %v8619
  %8656 = vst [vmem:[#allocation2 + $0xc0] sm:$0xff] %v8620
  %8657 = vst [vmem:[#allocation2 + $0xc8] sm:$0xff] %v8621
  %8658 = vst [vmem:[#allocation2 + $0xd0] sm:$0xff] %v8622
  %8659 = vst [vmem:[#allocation2 + $0xd8] sm:$0xff] %v8623
  %8660 = vst [vmem:[#allocation2 + $0xe0] sm:$0xff] %v8624
  %8661 = vst [vmem:[#allocation2 + $0xe8] sm:$0xff] %v8625
  %8662 = vst [vmem:[#allocation2 + $0xf0] sm:$0xff] %v8626
  %8663 = vst [vmem:[#allocation2 + $0xf8] sm:$0xff] %v8627
  %8664 = vst [vmem:[#allocation2 + $0x100] sm:$0xff] %v8628
  %8665 = vst [vmem:[#allocation2 + $0x108] sm:$0xff] %v8629
  %8666 = vst [vmem:[#allocation2 + $0x110] sm:$0xff] %v8630
  %8667 = vst [vmem:[#allocation2 + $0x118] sm:$0xff] %v8631
  %v8668 = vld [vmem:[%s5476 + $0x10] sm:$0xc]
  %v8669 = vld [vmem:[%s5476 + $0x14] sm:$0xf]
  %v8670 = vld [vmem:[%s5476 + $0x18] sm:$0xf]
  %v8671 = vld [vmem:[%s5476 + $0x1c] sm:$0xf]
  %v8672 = vld [vmem:[%s5476 + $0x20] sm:$0xf]
  %v8673 = vld [vmem:[%s5476 + $0x24] sm:$0xf]
  %v8674 = vld [vmem:[%s5476 + $0x28] sm:$0xf]
  %v8675 = vld [vmem:[%s5476 + $0x2c] sm:$0xf]
  %v8676 = vld [vmem:[%s5476 + $0x30] sm:$0xf]
  %v8677 = vld [vmem:[%s5476 + $0x34] sm:$0xf]
  %v8678 = vld [vmem:[%s5476 + $0x38] sm:$0xf]
  %v8679 = vld [vmem:[%s5476 + $0x3c] sm:$0xf]
  %v8680 = vld [vmem:[%s5476 + $0x40] sm:$0xf]
  %v8681 = vld [vmem:[%s5476 + $0x44] sm:$0xf]
  %v8682 = vld [vmem:[%s5476 + $0x48] sm:$0xf]
  %v8683 = vld [vmem:[%s5476 + $0x4c] sm:$0xf]
  %v8684 = vld [vmem:[%s5476 + $0x50] sm:$0xf]
  %v8685 = vld [vmem:[%s5476 + $0x54] sm:$0xf]
  %v8686 = vld [vmem:[%s5476 + $0x58] sm:$0xf]
  %v8687 = vld [vmem:[%s5476 + $0x5c] sm:$0xf]
  %v8688 = vld [vmem:[%s5476 + $0x60] sm:$0xf]
  %v8689 = vld [vmem:[%s5476 + $0x64] sm:$0xf]
  %v8690 = vld [vmem:[%s5476 + $0x68] sm:$0xf]
  %v8691 = vld [vmem:[%s5476 + $0x6c] sm:$0xf]
  %v8692 = vld [vmem:[%s5476 + $0x70] sm:$0xf]
  %v8693 = vld [vmem:[%s5476 + $0x74] sm:$0xf]
  %v8694 = vld [vmem:[%s5476 + $0x78] sm:$0xf]
  %v8695 = vld [vmem:[%s5476 + $0x7c] sm:$0xf]
  %v8696 = vld [vmem:[%s5476 + $0x80] sm:$0xf]
  %v8697 = vld [vmem:[%s5476 + $0x84] sm:$0xf]
  %v8698 = vld [vmem:[%s5476 + $0x88] sm:$0xf]
  %v8699 = vld [vmem:[%s5476 + $0x8c] sm:$0xf]
  %v8700 = vld [vmem:[%s5476 + $0x90] sm:$0xf]
  %v8701 = vld [vmem:[%s5476 + $0x94] sm:$0xf]
  %v8702 = vld [vmem:[%s5476 + $0x98] sm:$0xf]
  %v8703 = vld [vmem:[%s5476 + $0x9c] sm:$0xf]
  %v8704 = vld [vmem:[%s5476 + $0xa0] sm:$0x3]
  %v8705 = vld [vmem:[%s3293] sm:$0xf]
  %v8743 = vunpack.c.l.b16 %v8668
  %v8744 = vunpack.c.l.b16 %v8669
  %v8745 = vunpack.c.l.b16 %v8670
  %v8746 = vunpack.c.l.b16 %v8671
  %v8747 = vunpack.c.l.b16 %v8672
  %v8748 = vunpack.c.l.b16 %v8673
  %v8749 = vunpack.c.l.b16 %v8674
  %v8750 = vunpack.c.l.b16 %v8675
  %v8751 = vunpack.c.l.b16 %v8676
  %v8752 = vunpack.c.l.b16 %v8677
  %v8753 = vunpack.c.l.b16 %v8678
  %v8754 = vunpack.c.l.b16 %v8679
  %v8755 = vunpack.c.l.b16 %v8680
  %v8756 = vunpack.c.l.b16 %v8681
  %v8757 = vunpack.c.l.b16 %v8682
  %v8758 = vunpack.c.l.b16 %v8683
  %v8759 = vunpack.c.l.b16 %v8684
  %v8760 = vunpack.c.l.b16 %v8685
  %v8761 = vunpack.c.l.b16 %v8686
  %v8762 = vunpack.c.l.b16 %v8687
  %v8763 = vunpack.c.l.b16 %v8688
  %v8764 = vunpack.c.l.b16 %v8689
  %v8765 = vunpack.c.l.b16 %v8690
  %v8766 = vunpack.c.l.b16 %v8691
  %v8767 = vunpack.c.l.b16 %v8692
  %v8768 = vunpack.c.l.b16 %v8693
  %v8769 = vunpack.c.l.b16 %v8694
  %v8770 = vunpack.c.l.b16 %v8695
  %v8771 = vunpack.c.l.b16 %v8696
  %v8772 = vunpack.c.l.b16 %v8697
  %v8773 = vunpack.c.l.b16 %v8698
  %v8774 = vunpack.c.l.b16 %v8699
  %v8775 = vunpack.c.l.b16 %v8700
  %v8776 = vunpack.c.l.b16 %v8701
  %v8777 = vunpack.c.l.b16 %v8702
  %v8778 = vunpack.c.l.b16 %v8703
  %v8779 = vunpack.c.l.b16 %v8704
  %v8780 = vpack.c.b16 %v8744, %v8743
  %v8781 = vpack.c.b16 %v8746, %v8745
  %v8782 = vpack.c.b16 %v8748, %v8747
  %v8783 = vpack.c.b16 %v8750, %v8749
  %v8784 = vpack.c.b16 %v8752, %v8751
  %v8785 = vpack.c.b16 %v8754, %v8753
  %v8786 = vpack.c.b16 %v8756, %v8755
  %v8787 = vpack.c.b16 %v8758, %v8757
  %v8788 = vpack.c.b16 %v8760, %v8759
  %v8789 = vpack.c.b16 %v8762, %v8761
  %v8790 = vpack.c.b16 %v8764, %v8763
  %v8791 = vpack.c.b16 %v8766, %v8765
  %v8792 = vpack.c.b16 %v8768, %v8767
  %v8793 = vpack.c.b16 %v8770, %v8769
  %v8794 = vpack.c.b16 %v8772, %v8771
  %v8795 = vpack.c.b16 %v8774, %v8773
  %v8796 = vpack.c.b16 %v8776, %v8775
  %v8797 = vpack.c.b16 %v8778, %v8777
  %v8798 = vpack.c.b16 %v8779, %v8779
  %v8799 = vrot.slane %v8780, 2
  %v8800 = vrot.slane %v8781, 2
  %v8801 = vsel %vm2876, %v8799, %v8800
  %v8802 = vrot.slane %v8782, 2
  %v8803 = vsel %vm2876, %v8800, %v8802
  %v8804 = vrot.slane %v8783, 2
  %v8805 = vsel %vm2876, %v8802, %v8804
  %v8806 = vrot.slane %v8784, 2
  %v8807 = vsel %vm2876, %v8804, %v8806
  %v8808 = vrot.slane %v8785, 2
  %v8809 = vsel %vm2876, %v8806, %v8808
  %v8810 = vrot.slane %v8786, 2
  %v8811 = vsel %vm2876, %v8808, %v8810
  %v8812 = vrot.slane %v8787, 2
  %v8813 = vsel %vm2876, %v8810, %v8812
  %v8814 = vrot.slane %v8788, 2
  %v8815 = vsel %vm2876, %v8812, %v8814
  %v8816 = vrot.slane %v8789, 2
  %v8817 = vsel %vm2876, %v8814, %v8816
  %v8818 = vrot.slane %v8790, 2
  %v8819 = vsel %vm2876, %v8816, %v8818
  %v8820 = vrot.slane %v8791, 2
  %v8821 = vsel %vm2876, %v8818, %v8820
  %v8822 = vrot.slane %v8792, 2
  %v8823 = vsel %vm2876, %v8820, %v8822
  %v8824 = vrot.slane %v8793, 2
  %v8825 = vsel %vm2876, %v8822, %v8824
  %v8826 = vrot.slane %v8794, 2
  %v8827 = vsel %vm2876, %v8824, %v8826
  %v8828 = vrot.slane %v8795, 2
  %v8829 = vsel %vm2876, %v8826, %v8828
  %v8830 = vrot.slane %v8796, 2
  %v8831 = vsel %vm2876, %v8828, %v8830
  %v8832 = vrot.slane %v8797, 2
  %v8833 = vsel %vm2876, %v8830, %v8832
  %v8834 = vrot.slane %v8798, 2
  %v8835 = vsel %vm2876, %v8832, %v8834
  %v8837 = vsel %vm181, %v8801, 0
  %v8840 = vsel %vm181, %v8803, 0
  %v8843 = vsel %vm181, %v8805, 0
  %v8846 = vsel %vm181, %v8807, 0
  %v8849 = vsel %vm181, %v8809, 0
  %v8852 = vsel %vm181, %v8811, 0
  %v8855 = vsel %vm181, %v8813, 0
  %v8858 = vsel %vm181, %v8815, 0
  %v8861 = vsel %vm181, %v8817, 0
  %v8864 = vsel %vm181, %v8819, 0
  %v8867 = vsel %vm181, %v8821, 0
  %v8870 = vsel %vm181, %v8823, 0
  %v8873 = vsel %vm181, %v8825, 0
  %v8876 = vsel %vm181, %v8827, 0
  %v8879 = vsel %vm181, %v8829, 0
  %v8882 = vsel %vm181, %v8831, 0
  %v8885 = vsel %vm181, %v8833, 0
  %v8888 = vsel %vm181, %v8835, 0
  %v8891 = vsel %vm236, %v8705, 0
  %8893 = vmatprep.subr.bf16.mxu0 0
  %8894 = vmatpush1.bf16.msra.mxu0 %v8891
  %8895 = vmatprep.subr.bf16.mxu0 0
  %8896 = vmatpush1.bf16.msra.mxu0 0
  %8897 = vmatprep.subr.bf16.mxu0 0
  %8898 = vmatpush1.bf16.msra.mxu0 0
  %8899 = vmatprep.subr.bf16.mxu0 0
  %8900 = vmatpush1.bf16.msra.mxu0 0
  %8901 = vmatprep.subr.bf16.mxu0 0
  %8902 = vmatpush1.bf16.msra.mxu0 0
  %8903 = vmatprep.subr.bf16.mxu0 0
  %8904 = vmatpush1.bf16.msra.mxu0 0
  %8905 = vmatprep.subr.bf16.mxu0 0
  %8906 = vmatpush1.bf16.msra.mxu0 0
  %8907 = vmatprep.subr.bf16.mxu0 0
  %8908 = vmatpush1.bf16.msra.mxu0 0
  %8909 = vmatprep.subr.bf16.mxu0 0
  %8910 = vmatpush1.bf16.msra.mxu0 0
  %8911 = vmatprep.subr.bf16.mxu0 0
  %8912 = vmatpush1.bf16.msra.mxu0 0
  %8913 = vmatprep.subr.bf16.mxu0 0
  %8914 = vmatpush1.bf16.msra.mxu0 0
  %8915 = vmatprep.subr.bf16.mxu0 0
  %8916 = vmatpush1.bf16.msra.mxu0 0
  %8917 = vmatprep.subr.bf16.mxu0 0
  %8918 = vmatpush1.bf16.msra.mxu0 0
  %8919 = vmatprep.subr.bf16.mxu0 0
  %8920 = vmatpush1.bf16.msra.mxu0 0
  %8921 = vmatprep.subr.bf16.mxu0 0
  %8922 = vmatpush1.bf16.msra.mxu0 0
  %8923 = vmatprep.subr.bf16.mxu0 0
  %8924 = vmatpush1.bf16.msra.mxu0 0
  %8925 = vmatprep.mubr.bf16.mxu0 0
  %8926 = vmatmul.mubr.bf16.gmra.mrb[0].mxu0 %v8837
  %v8927 = vpop.f32.mrb[0].mxu0
  %v8928 = vadd.f32 0.0, %v8927
  %v8929 = vpop.f32.mrb[0].mxu0
  %v8930 = vpop.f32.mrb[0].mxu0
  %v8931 = vadd.f32 0.0, %v8930
  %v8932 = vpop.f32.mrb[0].mxu0
  %8933 = vmatprep.mubr.bf16.mxu0 0
  %8934 = vmatmul.mubr.bf16.gmra.mrb[0].mxu0 %v8840
  %v8935 = vpop.f32.mrb[0].mxu0
  %v8936 = vadd.f32 0.0, %v8935
  %v8937 = vpop.f32.mrb[0].mxu0
  %v8938 = vpop.f32.mrb[0].mxu0
  %v8939 = vadd.f32 0.0, %v8938
  %v8940 = vpop.f32.mrb[0].mxu0
  %8941 = vmatprep.mubr.bf16.mxu0 0
  %8942 = vmatmul.mubr.bf16.gmra.mrb[0].mxu0 %v8843
  %v8943 = vpop.f32.mrb[0].mxu0
  %v8944 = vadd.f32 0.0, %v8943
  %v8945 = vpop.f32.mrb[0].mxu0
  %v8946 = vpop.f32.mrb[0].mxu0
  %v8947 = vadd.f32 0.0, %v8946
  %v8948 = vpop.f32.mrb[0].mxu0
  %8949 = vmatprep.mubr.bf16.mxu0 0
  %8950 = vmatmul.mubr.bf16.gmra.mrb[0].mxu0 %v8846
  %v8951 = vpop.f32.mrb[0].mxu0
  %v8952 = vadd.f32 0.0, %v8951
  %v8953 = vpop.f32.mrb[0].mxu0
  %v8954 = vpop.f32.mrb[0].mxu0
  %v8955 = vadd.f32 0.0, %v8954
  %v8956 = vpop.f32.mrb[0].mxu0
  %8957 = vmatprep.mubr.bf16.mxu0 0
  %8958 = vmatmul.mubr.bf16.gmra.mrb[0].mxu0 %v8849
  %v8959 = vpop.f32.mrb[0].mxu0
  %v8960 = vadd.f32 0.0, %v8959
  %v8961 = vpop.f32.mrb[0].mxu0
  %v8962 = vpop.f32.mrb[0].mxu0
  %v8963 = vadd.f32 0.0, %v8962
  %v8964 = vpop.f32.mrb[0].mxu0
  %8965 = vmatprep.mubr.bf16.mxu0 0
  %8966 = vmatmul.mubr.bf16.gmra.mrb[0].mxu0 %v8852
  %v8967 = vpop.f32.mrb[0].mxu0
  %v8968 = vadd.f32 0.0, %v8967
  %v8969 = vpop.f32.mrb[0].mxu0
  %v8970 = vpop.f32.mrb[0].mxu0
  %v8971 = vadd.f32 0.0, %v8970
  %v8972 = vpop.f32.mrb[0].mxu0
  %8973 = vmatprep.mubr.bf16.mxu0 0
  %8974 = vmatmul.mubr.bf16.gmra.mrb[0].mxu0 %v8855
  %v8975 = vpop.f32.mrb[0].mxu0
  %v8976 = vadd.f32 0.0, %v8975
  %v8977 = vpop.f32.mrb[0].mxu0
  %v8978 = vpop.f32.mrb[0].mxu0
  %v8979 = vadd.f32 0.0, %v8978
  %v8980 = vpop.f32.mrb[0].mxu0
  %8981 = vmatprep.mubr.bf16.mxu0 0
  %8982 = vmatmul.mubr.bf16.gmra.mrb[0].mxu0 %v8858
  %v8983 = vpop.f32.mrb[0].mxu0
  %v8984 = vadd.f32 0.0, %v8983
  %v8985 = vpop.f32.mrb[0].mxu0
  %v8986 = vpop.f32.mrb[0].mxu0
  %v8987 = vadd.f32 0.0, %v8986
  %v8988 = vpop.f32.mrb[0].mxu0
  %8989 = vmatprep.mubr.bf16.mxu0 0
  %8990 = vmatmul.mubr.bf16.gmra.mrb[0].mxu0 %v8861
  %v8991 = vpop.f32.mrb[0].mxu0
  %v8992 = vadd.f32 0.0, %v8991
  %v8993 = vpop.f32.mrb[0].mxu0
  %v8994 = vpop.f32.mrb[0].mxu0
  %v8995 = vadd.f32 0.0, %v8994
  %v8996 = vpop.f32.mrb[0].mxu0
  %8997 = vmatprep.mubr.bf16.mxu0 0
  %8998 = vmatmul.mubr.bf16.gmra.mrb[0].mxu0 %v8864
  %v8999 = vpop.f32.mrb[0].mxu0
  %v9000 = vadd.f32 0.0, %v8999
  %v9001 = vpop.f32.mrb[0].mxu0
  %v9002 = vpop.f32.mrb[0].mxu0
  %v9003 = vadd.f32 0.0, %v9002
  %v9004 = vpop.f32.mrb[0].mxu0
  %9005 = vmatprep.mubr.bf16.mxu0 0
  %9006 = vmatmul.mubr.bf16.gmra.mrb[0].mxu0 %v8867
  %v9007 = vpop.f32.mrb[0].mxu0
  %v9008 = vadd.f32 0.0, %v9007
  %v9009 = vpop.f32.mrb[0].mxu0
  %v9010 = vpop.f32.mrb[0].mxu0
  %v9011 = vadd.f32 0.0, %v9010
  %v9012 = vpop.f32.mrb[0].mxu0
  %9013 = vmatprep.mubr.bf16.mxu0 0
  %9014 = vmatmul.mubr.bf16.gmra.mrb[0].mxu0 %v8870
  %v9015 = vpop.f32.mrb[0].mxu0
  %v9016 = vadd.f32 0.0, %v9015
  %v9017 = vpop.f32.mrb[0].mxu0
  %v9018 = vpop.f32.mrb[0].mxu0
  %v9019 = vadd.f32 0.0, %v9018
  %v9020 = vpop.f32.mrb[0].mxu0
  %9021 = vmatprep.mubr.bf16.mxu0 0
  %9022 = vmatmul.mubr.bf16.gmra.mrb[0].mxu0 %v8873
  %v9023 = vpop.f32.mrb[0].mxu0
  %v9024 = vadd.f32 0.0, %v9023
  %v9025 = vpop.f32.mrb[0].mxu0
  %v9026 = vpop.f32.mrb[0].mxu0
  %v9027 = vadd.f32 0.0, %v9026
  %v9028 = vpop.f32.mrb[0].mxu0
  %9029 = vmatprep.mubr.bf16.mxu0 0
  %9030 = vmatmul.mubr.bf16.gmra.mrb[0].mxu0 %v8876
  %v9031 = vpop.f32.mrb[0].mxu0
  %v9032 = vadd.f32 0.0, %v9031
  %v9033 = vpop.f32.mrb[0].mxu0
  %v9034 = vpop.f32.mrb[0].mxu0
  %v9035 = vadd.f32 0.0, %v9034
  %v9036 = vpop.f32.mrb[0].mxu0
  %9037 = vmatprep.mubr.bf16.mxu0 0
  %9038 = vmatmul.mubr.bf16.gmra.mrb[0].mxu0 %v8879
  %v9039 = vpop.f32.mrb[0].mxu0
  %v9040 = vadd.f32 0.0, %v9039
  %v9041 = vpop.f32.mrb[0].mxu0
  %v9042 = vpop.f32.mrb[0].mxu0
  %v9043 = vadd.f32 0.0, %v9042
  %v9044 = vpop.f32.mrb[0].mxu0
  %9045 = vmatprep.mubr.bf16.mxu0 0
  %9046 = vmatmul.mubr.bf16.gmra.mrb[0].mxu0 %v8882
  %v9047 = vpop.f32.mrb[0].mxu0
  %v9048 = vadd.f32 0.0, %v9047
  %v9049 = vpop.f32.mrb[0].mxu0
  %v9050 = vpop.f32.mrb[0].mxu0
  %v9051 = vadd.f32 0.0, %v9050
  %v9052 = vpop.f32.mrb[0].mxu0
  %9053 = vmatprep.mubr.bf16.mxu0 0
  %9054 = vmatmul.mubr.bf16.gmra.mrb[0].mxu0 %v8885
  %v9055 = vpop.f32.mrb[0].mxu0
  %v9056 = vadd.f32 0.0, %v9055
  %v9057 = vpop.f32.mrb[0].mxu0
  %v9058 = vpop.f32.mrb[0].mxu0
  %v9059 = vadd.f32 0.0, %v9058
  %v9060 = vpop.f32.mrb[0].mxu0
  %9061 = vmatprep.mubr.bf16.mxu0 0
  %9062 = vmatmul.mubr.bf16.gmra.mrb[0].mxu0 %v8888
  %v9063 = vpop.f32.mrb[0].mxu0
  %v9064 = vadd.f32 0.0, %v9063
  %v9065 = vpop.f32.mrb[0].mxu0
  %v9066 = vpop.f32.mrb[0].mxu0
  %v9067 = vadd.f32 0.0, %v9066
  %v9068 = vpop.f32.mrb[0].mxu0
  %9069 = vdwg.mxu0
  %v9070 = vld [vmem:[#allocation2] sm:$0xff]
  %v9071 = vld [vmem:[#allocation2 + $0x8] sm:$0xff]
  %v9072 = vld [vmem:[#allocation2 + $0x10] sm:$0xff]
  %v9073 = vld [vmem:[#allocation2 + $0x18] sm:$0xff]
  %v9074 = vld [vmem:[#allocation2 + $0x20] sm:$0xff]
  %v9075 = vld [vmem:[#allocation2 + $0x28] sm:$0xff]
  %v9076 = vld [vmem:[#allocation2 + $0x30] sm:$0xff]
  %v9077 = vld [vmem:[#allocation2 + $0x38] sm:$0xff]
  %v9078 = vld [vmem:[#allocation2 + $0x40] sm:$0xff]
  %v9079 = vld [vmem:[#allocation2 + $0x48] sm:$0xff]
  %v9080 = vld [vmem:[#allocation2 + $0x50] sm:$0xff]
  %v9081 = vld [vmem:[#allocation2 + $0x58] sm:$0xff]
  %v9082 = vld [vmem:[#allocation2 + $0x60] sm:$0xff]
  %v9083 = vld [vmem:[#allocation2 + $0x68] sm:$0xff]
  %v9084 = vld [vmem:[#allocation2 + $0x70] sm:$0xff]
  %v9085 = vld [vmem:[#allocation2 + $0x78] sm:$0xff]
  %v9086 = vld [vmem:[#allocation2 + $0x80] sm:$0xff]
  %v9087 = vld [vmem:[#allocation2 + $0x88] sm:$0xff]
  %v9088 = vld [vmem:[#allocation2 + $0x90] sm:$0xff]
  %v9089 = vld [vmem:[#allocation2 + $0x98] sm:$0xff]
  %v9090 = vld [vmem:[#allocation2 + $0xa0] sm:$0xff]
  %v9091 = vld [vmem:[#allocation2 + $0xa8] sm:$0xff]
  %v9092 = vld [vmem:[#allocation2 + $0xb0] sm:$0xff]
  %v9093 = vld [vmem:[#allocation2 + $0xb8] sm:$0xff]
  %v9094 = vld [vmem:[#allocation2 + $0xc0] sm:$0xff]
  %v9095 = vld [vmem:[#allocation2 + $0xc8] sm:$0xff]
  %v9096 = vld [vmem:[#allocation2 + $0xd0] sm:$0xff]
  %v9097 = vld [vmem:[#allocation2 + $0xd8] sm:$0xff]
  %v9098 = vld [vmem:[#allocation2 + $0xe0] sm:$0xff]
  %v9099 = vld [vmem:[#allocation2 + $0xe8] sm:$0xff]
  %v9100 = vld [vmem:[#allocation2 + $0xf0] sm:$0xff]
  %v9101 = vld [vmem:[#allocation2 + $0xf8] sm:$0xff]
  %v9102 = vld [vmem:[#allocation2 + $0x100] sm:$0xff]
  %v9103 = vld [vmem:[#allocation2 + $0x108] sm:$0xff]
  %v9104 = vld [vmem:[#allocation2 + $0x110] sm:$0xff]
  %v9105 = vld [vmem:[#allocation2 + $0x118] sm:$0xff]
  %v9106 = vadd.f32 %v9070, %v8928
  %v9107 = vadd.f32 %v9071, %v8931
  %v9108 = vadd.f32 %v9072, %v8936
  %v9109 = vadd.f32 %v9073, %v8939
  %v9110 = vadd.f32 %v9074, %v8944
  %v9111 = vadd.f32 %v9075, %v8947
  %v9112 = vadd.f32 %v9076, %v8952
  %v9113 = vadd.f32 %v9077, %v8955
  %v9114 = vadd.f32 %v9078, %v8960
  %v9115 = vadd.f32 %v9079, %v8963
  %v9116 = vadd.f32 %v9080, %v8968
  %v9117 = vadd.f32 %v9081, %v8971
  %v9118 = vadd.f32 %v9082, %v8976
  %v9119 = vadd.f32 %v9083, %v8979
  %v9120 = vadd.f32 %v9084, %v8984
  %v9121 = vadd.f32 %v9085, %v8987
  %v9122 = vadd.f32 %v9086, %v8992
  %v9123 = vadd.f32 %v9087, %v8995
  %v9124 = vadd.f32 %v9088, %v9000
  %v9125 = vadd.f32 %v9089, %v9003
  %v9126 = vadd.f32 %v9090, %v9008
  %v9127 = vadd.f32 %v9091, %v9011
  %v9128 = vadd.f32 %v9092, %v9016
  %v9129 = vadd.f32 %v9093, %v9019
  %v9130 = vadd.f32 %v9094, %v9024
  %v9131 = vadd.f32 %v9095, %v9027
  %v9132 = vadd.f32 %v9096, %v9032
  %v9133 = vadd.f32 %v9097, %v9035
  %v9134 = vadd.f32 %v9098, %v9040
  %v9135 = vadd.f32 %v9099, %v9043
  %v9136 = vadd.f32 %v9100, %v9048
  %v9137 = vadd.f32 %v9101, %v9051
  %v9138 = vadd.f32 %v9102, %v9056
  %v9139 = vadd.f32 %v9103, %v9059
  %v9140 = vadd.f32 %v9104, %v9064
  %v9141 = vadd.f32 %v9105, %v9067
  %9142 = vst [vmem:[#allocation2] sm:$0xff] %v9106
  %9143 = vst [vmem:[#allocation2 + $0x8] sm:$0xff] %v9107
  %9144 = vst [vmem:[#allocation2 + $0x10] sm:$0xff] %v9108
  %9145 = vst [vmem:[#allocation2 + $0x18] sm:$0xff] %v9109
  %9146 = vst [vmem:[#allocation2 + $0x20] sm:$0xff] %v9110
  %9147 = vst [vmem:[#allocation2 + $0x28] sm:$0xff] %v9111
  %9148 = vst [vmem:[#allocation2 + $0x30] sm:$0xff] %v9112
  %9149 = vst [vmem:[#allocation2 + $0x38] sm:$0xff] %v9113
  %9150 = vst [vmem:[#allocation2 + $0x40] sm:$0xff] %v9114
  %9151 = vst [vmem:[#allocation2 + $0x48] sm:$0xff] %v9115
  %9152 = vst [vmem:[#allocation2 + $0x50] sm:$0xff] %v9116
  %9153 = vst [vmem:[#allocation2 + $0x58] sm:$0xff] %v9117
  %9154 = vst [vmem:[#allocation2 + $0x60] sm:$0xff] %v9118
  %9155 = vst [vmem:[#allocation2 + $0x68] sm:$0xff] %v9119
  %9156 = vst [vmem:[#allocation2 + $0x70] sm:$0xff] %v9120
  %9157 = vst [vmem:[#allocation2 + $0x78] sm:$0xff] %v9121
  %9158 = vst [vmem:[#allocation2 + $0x80] sm:$0xff] %v9122
  %9159 = vst [vmem:[#allocation2 + $0x88] sm:$0xff] %v9123
  %9160 = vst [vmem:[#allocation2 + $0x90] sm:$0xff] %v9124
  %9161 = vst [vmem:[#allocation2 + $0x98] sm:$0xff] %v9125
  %9162 = vst [vmem:[#allocation2 + $0xa0] sm:$0xff] %v9126
  %9163 = vst [vmem:[#allocation2 + $0xa8] sm:$0xff] %v9127
  %9164 = vst [vmem:[#allocation2 + $0xb0] sm:$0xff] %v9128
  %9165 = vst [vmem:[#allocation2 + $0xb8] sm:$0xff] %v9129
  %9166 = vst [vmem:[#allocation2 + $0xc0] sm:$0xff] %v9130
  %9167 = vst [vmem:[#allocation2 + $0xc8] sm:$0xff] %v9131
  %9168 = vst [vmem:[#allocation2 + $0xd0] sm:$0xff] %v9132
  %9169 = vst [vmem:[#allocation2 + $0xd8] sm:$0xff] %v9133
  %9170 = vst [vmem:[#allocation2 + $0xe0] sm:$0xff] %v9134
  %9171 = vst [vmem:[#allocation2 + $0xe8] sm:$0xff] %v9135
  %9172 = vst [vmem:[#allocation2 + $0xf0] sm:$0xff] %v9136
  %9173 = vst [vmem:[#allocation2 + $0xf8] sm:$0xff] %v9137
  %9174 = vst [vmem:[#allocation2 + $0x100] sm:$0xff] %v9138
  %9175 = vst [vmem:[#allocation2 + $0x108] sm:$0xff] %v9139
  %9176 = vst [vmem:[#allocation2 + $0x110] sm:$0xff] %v9140
  %9177 = vst [vmem:[#allocation2 + $0x118] sm:$0xff] %v9141
  %v9178 = vld [vmem:[%s5476 + $0x10] sm:$0xc]
  %v9179 = vld [vmem:[%s5476 + $0x14] sm:$0xf]
  %v9180 = vld [vmem:[%s5476 + $0x18] sm:$0xf]
  %v9181 = vld [vmem:[%s5476 + $0x1c] sm:$0xf]
  %v9182 = vld [vmem:[%s5476 + $0x20] sm:$0xf]
  %v9183 = vld [vmem:[%s5476 + $0x24] sm:$0xf]
  %v9184 = vld [vmem:[%s5476 + $0x28] sm:$0xf]
  %v9185 = vld [vmem:[%s5476 + $0x2c] sm:$0xf]
  %v9186 = vld [vmem:[%s5476 + $0x30] sm:$0xf]
  %v9187 = vld [vmem:[%s5476 + $0x34] sm:$0xf]
  %v9188 = vld [vmem:[%s5476 + $0x38] sm:$0xf]
  %v9189 = vld [vmem:[%s5476 + $0x3c] sm:$0xf]
  %v9190 = vld [vmem:[%s5476 + $0x40] sm:$0xf]
  %v9191 = vld [vmem:[%s5476 + $0x44] sm:$0xf]
  %v9192 = vld [vmem:[%s5476 + $0x48] sm:$0xf]
  %v9193 = vld [vmem:[%s5476 + $0x4c] sm:$0xf]
  %v9194 = vld [vmem:[%s5476 + $0x50] sm:$0xf]
  %v9195 = vld [vmem:[%s5476 + $0x54] sm:$0xf]
  %v9196 = vld [vmem:[%s5476 + $0x58] sm:$0xf]
  %v9197 = vld [vmem:[%s5476 + $0x5c] sm:$0xf]
  %v9198 = vld [vmem:[%s5476 + $0x60] sm:$0xf]
  %v9199 = vld [vmem:[%s5476 + $0x64] sm:$0xf]
  %v9200 = vld [vmem:[%s5476 + $0x68] sm:$0xf]
  %v9201 = vld [vmem:[%s5476 + $0x6c] sm:$0xf]
  %v9202 = vld [vmem:[%s5476 + $0x70] sm:$0xf]
  %v9203 = vld [vmem:[%s5476 + $0x74] sm:$0xf]
  %v9204 = vld [vmem:[%s5476 + $0x78] sm:$0xf]
  %v9205 = vld [vmem:[%s5476 + $0x7c] sm:$0xf]
  %v9206 = vld [vmem:[%s5476 + $0x80] sm:$0xf]
  %v9207 = vld [vmem:[%s5476 + $0x84] sm:$0xf]
  %v9208 = vld [vmem:[%s5476 + $0x88] sm:$0xf]
  %v9209 = vld [vmem:[%s5476 + $0x8c] sm:$0xf]
  %v9210 = vld [vmem:[%s5476 + $0x90] sm:$0xf]
  %v9211 = vld [vmem:[%s5476 + $0x94] sm:$0xf]
  %v9212 = vld [vmem:[%s5476 + $0x98] sm:$0xf]
  %v9213 = vld [vmem:[%s5476 + $0x9c] sm:$0xf]
  %v9214 = vld [vmem:[%s5476 + $0xa0] sm:$0x7]
  %v9215 = vld [vmem:[%s3804] sm:$0xf]
  %v9253 = vunpack.c.l.b16 %v9178
  %v9254 = vunpack.c.l.b16 %v9179
  %v9255 = vunpack.c.l.b16 %v9180
  %v9256 = vunpack.c.l.b16 %v9181
  %v9257 = vunpack.c.l.b16 %v9182
  %v9258 = vunpack.c.l.b16 %v9183
  %v9259 = vunpack.c.l.b16 %v9184
  %v9260 = vunpack.c.l.b16 %v9185
  %v9261 = vunpack.c.l.b16 %v9186
  %v9262 = vunpack.c.l.b16 %v9187
  %v9263 = vunpack.c.l.b16 %v9188
  %v9264 = vunpack.c.l.b16 %v9189
  %v9265 = vunpack.c.l.b16 %v9190
  %v9266 = vunpack.c.l.b16 %v9191
  %v9267 = vunpack.c.l.b16 %v9192
  %v9268 = vunpack.c.l.b16 %v9193
  %v9269 = vunpack.c.l.b16 %v9194
  %v9270 = vunpack.c.l.b16 %v9195
  %v9271 = vunpack.c.l.b16 %v9196
  %v9272 = vunpack.c.l.b16 %v9197
  %v9273 = vunpack.c.l.b16 %v9198
  %v9274 = vunpack.c.l.b16 %v9199
  %v9275 = vunpack.c.l.b16 %v9200
  %v9276 = vunpack.c.l.b16 %v9201
  %v9277 = vunpack.c.l.b16 %v9202
  %v9278 = vunpack.c.l.b16 %v9203
  %v9279 = vunpack.c.l.b16 %v9204
  %v9280 = vunpack.c.l.b16 %v9205
  %v9281 = vunpack.c.l.b16 %v9206
  %v9282 = vunpack.c.l.b16 %v9207
  %v9283 = vunpack.c.l.b16 %v9208
  %v9284 = vunpack.c.l.b16 %v9209
  %v9285 = vunpack.c.l.b16 %v9210
  %v9286 = vunpack.c.l.b16 %v9211
  %v9287 = vunpack.c.l.b16 %v9212
  %v9288 = vunpack.c.l.b16 %v9213
  %v9289 = vunpack.c.l.b16 %v9214
  %v9290 = vpack.c.b16 %v9254, %v9253
  %v9291 = vpack.c.b16 %v9256, %v9255
  %v9292 = vpack.c.b16 %v9258, %v9257
  %v9293 = vpack.c.b16 %v9260, %v9259
  %v9294 = vpack.c.b16 %v9262, %v9261
  %v9295 = vpack.c.b16 %v9264, %v9263
  %v9296 = vpack.c.b16 %v9266, %v9265
  %v9297 = vpack.c.b16 %v9268, %v9267
  %v9298 = vpack.c.b16 %v9270, %v9269
  %v9299 = vpack.c.b16 %v9272, %v9271
  %v9300 = vpack.c.b16 %v9274, %v9273
  %v9301 = vpack.c.b16 %v9276, %v9275
  %v9302 = vpack.c.b16 %v9278, %v9277
  %v9303 = vpack.c.b16 %v9280, %v9279
  %v9304 = vpack.c.b16 %v9282, %v9281
  %v9305 = vpack.c.b16 %v9284, %v9283
  %v9306 = vpack.c.b16 %v9286, %v9285
  %v9307 = vpack.c.b16 %v9288, %v9287
  %v9308 = vpack.c.b16 %v9289, %v9289
  %v9310 = vshrl.u32 %v9290, 16
  %v9312 = vrot.slane %v9310, 2
  %v9313 = vshll.u32 %v9290, 16
  %v9315 = vrot.slane %v9313, 3
  %v9316 = vor.u32 %v9312, %v9315
  %v9318 = vshrl.u32 %v9291, 16
  %v9320 = vrot.slane %v9318, 2
  %v9321 = vshll.u32 %v9291, 16
  %v9323 = vrot.slane %v9321, 3
  %v9324 = vor.u32 %v9320, %v9323
  %v9325 = vsel %vm3899, %v9316, %v9324
  %v9327 = vshrl.u32 %v9292, 16
  %v9329 = vrot.slane %v9327, 2
  %v9330 = vshll.u32 %v9292, 16
  %v9332 = vrot.slane %v9330, 3
  %v9333 = vor.u32 %v9329, %v9332
  %v9334 = vsel %vm3899, %v9324, %v9333
  %v9336 = vshrl.u32 %v9293, 16
  %v9338 = vrot.slane %v9336, 2
  %v9339 = vshll.u32 %v9293, 16
  %v9341 = vrot.slane %v9339, 3
  %v9342 = vor.u32 %v9338, %v9341
  %v9343 = vsel %vm3899, %v9333, %v9342
  %v9345 = vshrl.u32 %v9294, 16
  %v9347 = vrot.slane %v9345, 2
  %v9348 = vshll.u32 %v9294, 16
  %v9350 = vrot.slane %v9348, 3
  %v9351 = vor.u32 %v9347, %v9350
  %v9352 = vsel %vm3899, %v9342, %v9351
  %v9354 = vshrl.u32 %v9295, 16
  %v9356 = vrot.slane %v9354, 2
  %v9357 = vshll.u32 %v9295, 16
  %v9359 = vrot.slane %v9357, 3
  %v9360 = vor.u32 %v9356, %v9359
  %v9361 = vsel %vm3899, %v9351, %v9360
  %v9363 = vshrl.u32 %v9296, 16
  %v9365 = vrot.slane %v9363, 2
  %v9366 = vshll.u32 %v9296, 16
  %v9368 = vrot.slane %v9366, 3
  %v9369 = vor.u32 %v9365, %v9368
  %v9370 = vsel %vm3899, %v9360, %v9369
  %v9372 = vshrl.u32 %v9297, 16
  %v9374 = vrot.slane %v9372, 2
  %v9375 = vshll.u32 %v9297, 16
  %v9377 = vrot.slane %v9375, 3
  %v9378 = vor.u32 %v9374, %v9377
  %v9379 = vsel %vm3899, %v9369, %v9378
  %v9381 = vshrl.u32 %v9298, 16
  %v9383 = vrot.slane %v9381, 2
  %v9384 = vshll.u32 %v9298, 16
  %v9386 = vrot.slane %v9384, 3
  %v9387 = vor.u32 %v9383, %v9386
  %v9388 = vsel %vm3899, %v9378, %v9387
  %v9390 = vshrl.u32 %v9299, 16
  %v9392 = vrot.slane %v9390, 2
  %v9393 = vshll.u32 %v9299, 16
  %v9395 = vrot.slane %v9393, 3
  %v9396 = vor.u32 %v9392, %v9395
  %v9397 = vsel %vm3899, %v9387, %v9396
  %v9399 = vshrl.u32 %v9300, 16
  %v9401 = vrot.slane %v9399, 2
  %v9402 = vshll.u32 %v9300, 16
  %v9404 = vrot.slane %v9402, 3
  %v9405 = vor.u32 %v9401, %v9404
  %v9406 = vsel %vm3899, %v9396, %v9405
  %v9408 = vshrl.u32 %v9301, 16
  %v9410 = vrot.slane %v9408, 2
  %v9411 = vshll.u32 %v9301, 16
  %v9413 = vrot.slane %v9411, 3
  %v9414 = vor.u32 %v9410, %v9413
  %v9415 = vsel %vm3899, %v9405, %v9414
  %v9417 = vshrl.u32 %v9302, 16
  %v9419 = vrot.slane %v9417, 2
  %v9420 = vshll.u32 %v9302, 16
  %v9422 = vrot.slane %v9420, 3
  %v9423 = vor.u32 %v9419, %v9422
  %v9424 = vsel %vm3899, %v9414, %v9423
  %v9426 = vshrl.u32 %v9303, 16
  %v9428 = vrot.slane %v9426, 2
  %v9429 = vshll.u32 %v9303, 16
  %v9431 = vrot.slane %v9429, 3
  %v9432 = vor.u32 %v9428, %v9431
  %v9433 = vsel %vm3899, %v9423, %v9432
  %v9435 = vshrl.u32 %v9304, 16
  %v9437 = vrot.slane %v9435, 2
  %v9438 = vshll.u32 %v9304, 16
  %v9440 = vrot.slane %v9438, 3
  %v9441 = vor.u32 %v9437, %v9440
  %v9442 = vsel %vm3899, %v9432, %v9441
  %v9444 = vshrl.u32 %v9305, 16
  %v9446 = vrot.slane %v9444, 2
  %v9447 = vshll.u32 %v9305, 16
  %v9449 = vrot.slane %v9447, 3
  %v9450 = vor.u32 %v9446, %v9449
  %v9451 = vsel %vm3899, %v9441, %v9450
  %v9453 = vshrl.u32 %v9306, 16
  %v9455 = vrot.slane %v9453, 2
  %v9456 = vshll.u32 %v9306, 16
  %v9458 = vrot.slane %v9456, 3
  %v9459 = vor.u32 %v9455, %v9458
  %v9460 = vsel %vm3899, %v9450, %v9459
  %v9462 = vshrl.u32 %v9307, 16
  %v9464 = vrot.slane %v9462, 2
  %v9465 = vshll.u32 %v9307, 16
  %v9467 = vrot.slane %v9465, 3
  %v9468 = vor.u32 %v9464, %v9467
  %v9469 = vsel %vm3899, %v9459, %v9468
  %v9471 = vshrl.u32 %v9308, 16
  %v9473 = vrot.slane %v9471, 2
  %v9474 = vshll.u32 %v9308, 16
  %v9476 = vrot.slane %v9474, 3
  %v9477 = vor.u32 %v9473, %v9476
  %v9478 = vsel %vm3899, %v9468, %v9477
  %v9480 = vsel %vm181, %v9325, 0
  %v9483 = vsel %vm181, %v9334, 0
  %v9486 = vsel %vm181, %v9343, 0
  %v9489 = vsel %vm181, %v9352, 0
  %v9492 = vsel %vm181, %v9361, 0
  %v9495 = vsel %vm181, %v9370, 0
  %v9498 = vsel %vm181, %v9379, 0
  %v9501 = vsel %vm181, %v9388, 0
  %v9504 = vsel %vm181, %v9397, 0
  %v9507 = vsel %vm181, %v9406, 0
  %v9510 = vsel %vm181, %v9415, 0
  %v9513 = vsel %vm181, %v9424, 0
  %v9516 = vsel %vm181, %v9433, 0
  %v9519 = vsel %vm181, %v9442, 0
  %v9522 = vsel %vm181, %v9451, 0
  %v9525 = vsel %vm181, %v9460, 0
  %v9528 = vsel %vm181, %v9469, 0
  %v9531 = vsel %vm181, %v9478, 0
  %v9534 = vsel %vm236, %v9215, 0
  %9536 = vmatprep.subr.bf16.mxu0 0
  %9537 = vmatpush1.bf16.msra.mxu0 %v9534
  %9538 = vmatprep.subr.bf16.mxu0 0
  %9539 = vmatpush1.bf16.msra.mxu0 0
  %9540 = vmatprep.subr.bf16.mxu0 0
  %9541 = vmatpush1.bf16.msra.mxu0 0
  %9542 = vmatprep.subr.bf16.mxu0 0
  %9543 = vmatpush1.bf16.msra.mxu0 0
  %9544 = vmatprep.subr.bf16.mxu0 0
  %9545 = vmatpush1.bf16.msra.mxu0 0
  %9546 = vmatprep.subr.bf16.mxu0 0
  %9547 = vmatpush1.bf16.msra.mxu0 0
  %9548 = vmatprep.subr.bf16.mxu0 0
  %9549 = vmatpush1.bf16.msra.mxu0 0
  %9550 = vmatprep.subr.bf16.mxu0 0
  %9551 = vmatpush1.bf16.msra.mxu0 0
  %9552 = vmatprep.subr.bf16.mxu0 0
  %9553 = vmatpush1.bf16.msra.mxu0 0
  %9554 = vmatprep.subr.bf16.mxu0 0
  %9555 = vmatpush1.bf16.msra.mxu0 0
  %9556 = vmatprep.subr.bf16.mxu0 0
  %9557 = vmatpush1.bf16.msra.mxu0 0
  %9558 = vmatprep.subr.bf16.mxu0 0
  %9559 = vmatpush1.bf16.msra.mxu0 0
  %9560 = vmatprep.subr.bf16.mxu0 0
  %9561 = vmatpush1.bf16.msra.mxu0 0
  %9562 = vmatprep.subr.bf16.mxu0 0
  %9563 = vmatpush1.bf16.msra.mxu0 0
  %9564 = vmatprep.subr.bf16.mxu0 0
  %9565 = vmatpush1.bf16.msra.mxu0 0
  %9566 = vmatprep.subr.bf16.mxu0 0
  %9567 = vmatpush1.bf16.msra.mxu0 0
  %9568 = vmatprep.mubr.bf16.mxu0 0
  %9569 = vmatmul.mubr.bf16.gmra.mrb[0].mxu0 %v9480
  %v9570 = vpop.f32.mrb[0].mxu0
  %v9571 = vadd.f32 0.0, %v9570
  %v9572 = vpop.f32.mrb[0].mxu0
  %v9573 = vpop.f32.mrb[0].mxu0
  %v9574 = vadd.f32 0.0, %v9573
  %v9575 = vpop.f32.mrb[0].mxu0
  %9576 = vmatprep.mubr.bf16.mxu0 0
  %9577 = vmatmul.mubr.bf16.gmra.mrb[0].mxu0 %v9483
  %v9578 = vpop.f32.mrb[0].mxu0
  %v9579 = vadd.f32 0.0, %v9578
  %v9580 = vpop.f32.mrb[0].mxu0
  %v9581 = vpop.f32.mrb[0].mxu0
  %v9582 = vadd.f32 0.0, %v9581
  %v9583 = vpop.f32.mrb[0].mxu0
  %9584 = vmatprep.mubr.bf16.mxu0 0
  %9585 = vmatmul.mubr.bf16.gmra.mrb[0].mxu0 %v9486
  %v9586 = vpop.f32.mrb[0].mxu0
  %v9587 = vadd.f32 0.0, %v9586
  %v9588 = vpop.f32.mrb[0].mxu0
  %v9589 = vpop.f32.mrb[0].mxu0
  %v9590 = vadd.f32 0.0, %v9589
  %v9591 = vpop.f32.mrb[0].mxu0
  %9592 = vmatprep.mubr.bf16.mxu0 0
  %9593 = vmatmul.mubr.bf16.gmra.mrb[0].mxu0 %v9489
  %v9594 = vpop.f32.mrb[0].mxu0
  %v9595 = vadd.f32 0.0, %v9594
  %v9596 = vpop.f32.mrb[0].mxu0
  %v9597 = vpop.f32.mrb[0].mxu0
  %v9598 = vadd.f32 0.0, %v9597
  %v9599 = vpop.f32.mrb[0].mxu0
  %9600 = vmatprep.mubr.bf16.mxu0 0
  %9601 = vmatmul.mubr.bf16.gmra.mrb[0].mxu0 %v9492
  %v9602 = vpop.f32.mrb[0].mxu0
  %v9603 = vadd.f32 0.0, %v9602
  %v9604 = vpop.f32.mrb[0].mxu0
  %v9605 = vpop.f32.mrb[0].mxu0
  %v9606 = vadd.f32 0.0, %v9605
  %v9607 = vpop.f32.mrb[0].mxu0
  %9608 = vmatprep.mubr.bf16.mxu0 0
  %9609 = vmatmul.mubr.bf16.gmra.mrb[0].mxu0 %v9495
  %v9610 = vpop.f32.mrb[0].mxu0
  %v9611 = vadd.f32 0.0, %v9610
  %v9612 = vpop.f32.mrb[0].mxu0
  %v9613 = vpop.f32.mrb[0].mxu0
  %v9614 = vadd.f32 0.0, %v9613
  %v9615 = vpop.f32.mrb[0].mxu0
  %9616 = vmatprep.mubr.bf16.mxu0 0
  %9617 = vmatmul.mubr.bf16.gmra.mrb[0].mxu0 %v9498
  %v9618 = vpop.f32.mrb[0].mxu0
  %v9619 = vadd.f32 0.0, %v9618
  %v9620 = vpop.f32.mrb[0].mxu0
  %v9621 = vpop.f32.mrb[0].mxu0
  %v9622 = vadd.f32 0.0, %v9621
  %v9623 = vpop.f32.mrb[0].mxu0
  %9624 = vmatprep.mubr.bf16.mxu0 0
  %9625 = vmatmul.mubr.bf16.gmra.mrb[0].mxu0 %v9501
  %v9626 = vpop.f32.mrb[0].mxu0
  %v9627 = vadd.f32 0.0, %v9626
  %v9628 = vpop.f32.mrb[0].mxu0
  %v9629 = vpop.f32.mrb[0].mxu0
  %v9630 = vadd.f32 0.0, %v9629
  %v9631 = vpop.f32.mrb[0].mxu0
  %9632 = vmatprep.mubr.bf16.mxu0 0
  %9633 = vmatmul.mubr.bf16.gmra.mrb[0].mxu0 %v9504
  %v9634 = vpop.f32.mrb[0].mxu0
  %v9635 = vadd.f32 0.0, %v9634
  %v9636 = vpop.f32.mrb[0].mxu0
  %v9637 = vpop.f32.mrb[0].mxu0
  %v9638 = vadd.f32 0.0, %v9637
  %v9639 = vpop.f32.mrb[0].mxu0
  %9640 = vmatprep.mubr.bf16.mxu0 0
  %9641 = vmatmul.mubr.bf16.gmra.mrb[0].mxu0 %v9507
  %v9642 = vpop.f32.mrb[0].mxu0
  %v9643 = vadd.f32 0.0, %v9642
  %v9644 = vpop.f32.mrb[0].mxu0
  %v9645 = vpop.f32.mrb[0].mxu0
  %v9646 = vadd.f32 0.0, %v9645
  %v9647 = vpop.f32.mrb[0].mxu0
  %9648 = vmatprep.mubr.bf16.mxu0 0
  %9649 = vmatmul.mubr.bf16.gmra.mrb[0].mxu0 %v9510
  %v9650 = vpop.f32.mrb[0].mxu0
  %v9651 = vadd.f32 0.0, %v9650
  %v9652 = vpop.f32.mrb[0].mxu0
  %v9653 = vpop.f32.mrb[0].mxu0
  %v9654 = vadd.f32 0.0, %v9653
  %v9655 = vpop.f32.mrb[0].mxu0
  %9656 = vmatprep.mubr.bf16.mxu0 0
  %9657 = vmatmul.mubr.bf16.gmra.mrb[0].mxu0 %v9513
  %v9658 = vpop.f32.mrb[0].mxu0
  %v9659 = vadd.f32 0.0, %v9658
  %v9660 = vpop.f32.mrb[0].mxu0
  %v9661 = vpop.f32.mrb[0].mxu0
  %v9662 = vadd.f32 0.0, %v9661
  %v9663 = vpop.f32.mrb[0].mxu0
  %9664 = vmatprep.mubr.bf16.mxu0 0
  %9665 = vmatmul.mubr.bf16.gmra.mrb[0].mxu0 %v9516
  %v9666 = vpop.f32.mrb[0].mxu0
  %v9667 = vadd.f32 0.0, %v9666
  %v9668 = vpop.f32.mrb[0].mxu0
  %v9669 = vpop.f32.mrb[0].mxu0
  %v9670 = vadd.f32 0.0, %v9669
  %v9671 = vpop.f32.mrb[0].mxu0
  %9672 = vmatprep.mubr.bf16.mxu0 0
  %9673 = vmatmul.mubr.bf16.gmra.mrb[0].mxu0 %v9519
  %v9674 = vpop.f32.mrb[0].mxu0
  %v9675 = vadd.f32 0.0, %v9674
  %v9676 = vpop.f32.mrb[0].mxu0
  %v9677 = vpop.f32.mrb[0].mxu0
  %v9678 = vadd.f32 0.0, %v9677
  %v9679 = vpop.f32.mrb[0].mxu0
  %9680 = vmatprep.mubr.bf16.mxu0 0
  %9681 = vmatmul.mubr.bf16.gmra.mrb[0].mxu0 %v9522
  %v9682 = vpop.f32.mrb[0].mxu0
  %v9683 = vadd.f32 0.0, %v9682
  %v9684 = vpop.f32.mrb[0].mxu0
  %v9685 = vpop.f32.mrb[0].mxu0
  %v9686 = vadd.f32 0.0, %v9685
  %v9687 = vpop.f32.mrb[0].mxu0
  %9688 = vmatprep.mubr.bf16.mxu0 0
  %9689 = vmatmul.mubr.bf16.gmra.mrb[0].mxu0 %v9525
  %v9690 = vpop.f32.mrb[0].mxu0
  %v9691 = vadd.f32 0.0, %v9690
  %v9692 = vpop.f32.mrb[0].mxu0
  %v9693 = vpop.f32.mrb[0].mxu0
  %v9694 = vadd.f32 0.0, %v9693
  %v9695 = vpop.f32.mrb[0].mxu0
  %9696 = vmatprep.mubr.bf16.mxu0 0
  %9697 = vmatmul.mubr.bf16.gmra.mrb[0].mxu0 %v9528
  %v9698 = vpop.f32.mrb[0].mxu0
  %v9699 = vadd.f32 0.0, %v9698
  %v9700 = vpop.f32.mrb[0].mxu0
  %v9701 = vpop.f32.mrb[0].mxu0
  %v9702 = vadd.f32 0.0, %v9701
  %v9703 = vpop.f32.mrb[0].mxu0
  %9704 = vmatprep.mubr.bf16.mxu0 0
  %9705 = vmatmul.mubr.bf16.gmra.mrb[0].mxu0 %v9531
  %v9706 = vpop.f32.mrb[0].mxu0
  %v9707 = vadd.f32 0.0, %v9706
  %v9708 = vpop.f32.mrb[0].mxu0
  %v9709 = vpop.f32.mrb[0].mxu0
  %v9710 = vadd.f32 0.0, %v9709
  %v9711 = vpop.f32.mrb[0].mxu0
  %9712 = vdwg.mxu0
  %v9713 = vld [vmem:[#allocation2] sm:$0xff]
  %v9714 = vld [vmem:[#allocation2 + $0x8] sm:$0xff]
  %v9715 = vld [vmem:[#allocation2 + $0x10] sm:$0xff]
  %v9716 = vld [vmem:[#allocation2 + $0x18] sm:$0xff]
  %v9717 = vld [vmem:[#allocation2 + $0x20] sm:$0xff]
  %v9718 = vld [vmem:[#allocation2 + $0x28] sm:$0xff]
  %v9719 = vld [vmem:[#allocation2 + $0x30] sm:$0xff]
  %v9720 = vld [vmem:[#allocation2 + $0x38] sm:$0xff]
  %v9721 = vld [vmem:[#allocation2 + $0x40] sm:$0xff]
  %v9722 = vld [vmem:[#allocation2 + $0x48] sm:$0xff]
  %v9723 = vld [vmem:[#allocation2 + $0x50] sm:$0xff]
  %v9724 = vld [vmem:[#allocation2 + $0x58] sm:$0xff]
  %v9725 = vld [vmem:[#allocation2 + $0x60] sm:$0xff]
  %v9726 = vld [vmem:[#allocation2 + $0x68] sm:$0xff]
  %v9727 = vld [vmem:[#allocation2 + $0x70] sm:$0xff]
  %v9728 = vld [vmem:[#allocation2 + $0x78] sm:$0xff]
  %v9729 = vld [vmem:[#allocation2 + $0x80] sm:$0xff]
  %v9730 = vld [vmem:[#allocation2 + $0x88] sm:$0xff]
  %v9731 = vld [vmem:[#allocation2 + $0x90] sm:$0xff]
  %v9732 = vld [vmem:[#allocation2 + $0x98] sm:$0xff]
  %v9733 = vld [vmem:[#allocation2 + $0xa0] sm:$0xff]
  %v9734 = vld [vmem:[#allocation2 + $0xa8] sm:$0xff]
  %v9735 = vld [vmem:[#allocation2 + $0xb0] sm:$0xff]
  %v9736 = vld [vmem:[#allocation2 + $0xb8] sm:$0xff]
  %v9737 = vld [vmem:[#allocation2 + $0xc0] sm:$0xff]
  %v9738 = vld [vmem:[#allocation2 + $0xc8] sm:$0xff]
  %v9739 = vld [vmem:[#allocation2 + $0xd0] sm:$0xff]
  %v9740 = vld [vmem:[#allocation2 + $0xd8] sm:$0xff]
  %v9741 = vld [vmem:[#allocation2 + $0xe0] sm:$0xff]
  %v9742 = vld [vmem:[#allocation2 + $0xe8] sm:$0xff]
  %v9743 = vld [vmem:[#allocation2 + $0xf0] sm:$0xff]
  %v9744 = vld [vmem:[#allocation2 + $0xf8] sm:$0xff]
  %v9745 = vld [vmem:[#allocation2 + $0x100] sm:$0xff]
  %v9746 = vld [vmem:[#allocation2 + $0x108] sm:$0xff]
  %v9747 = vld [vmem:[#allocation2 + $0x110] sm:$0xff]
  %v9748 = vld [vmem:[#allocation2 + $0x118] sm:$0xff]
  %v9749 = vadd.f32 %v9713, %v9571
  %v9750 = vadd.f32 %v9714, %v9574
  %v9751 = vadd.f32 %v9715, %v9579
  %v9752 = vadd.f32 %v9716, %v9582
  %v9753 = vadd.f32 %v9717, %v9587
  %v9754 = vadd.f32 %v9718, %v9590
  %v9755 = vadd.f32 %v9719, %v9595
  %v9756 = vadd.f32 %v9720, %v9598
  %v9757 = vadd.f32 %v9721, %v9603
  %v9758 = vadd.f32 %v9722, %v9606
  %v9759 = vadd.f32 %v9723, %v9611
  %v9760 = vadd.f32 %v9724, %v9614
  %v9761 = vadd.f32 %v9725, %v9619
  %v9762 = vadd.f32 %v9726, %v9622
  %v9763 = vadd.f32 %v9727, %v9627
  %v9764 = vadd.f32 %v9728, %v9630
  %v9765 = vadd.f32 %v9729, %v9635
  %v9766 = vadd.f32 %v9730, %v9638
  %v9767 = vadd.f32 %v9731, %v9643
  %v9768 = vadd.f32 %v9732, %v9646
  %v9769 = vadd.f32 %v9733, %v9651
  %v9770 = vadd.f32 %v9734, %v9654
  %v9771 = vadd.f32 %v9735, %v9659
  %v9772 = vadd.f32 %v9736, %v9662
  %v9773 = vadd.f32 %v9737, %v9667
  %v9774 = vadd.f32 %v9738, %v9670
  %v9775 = vadd.f32 %v9739, %v9675
  %v9776 = vadd.f32 %v9740, %v9678
  %v9777 = vadd.f32 %v9741, %v9683
  %v9778 = vadd.f32 %v9742, %v9686
  %v9779 = vadd.f32 %v9743, %v9691
  %v9780 = vadd.f32 %v9744, %v9694
  %v9781 = vadd.f32 %v9745, %v9699
  %v9782 = vadd.f32 %v9746, %v9702
  %v9783 = vadd.f32 %v9747, %v9707
  %v9784 = vadd.f32 %v9748, %v9710
  %9785 = vst [vmem:[#allocation2] sm:$0xff] %v9749
  %9786 = vst [vmem:[#allocation2 + $0x8] sm:$0xff] %v9750
  %9787 = vst [vmem:[#allocation2 + $0x10] sm:$0xff] %v9751
  %9788 = vst [vmem:[#allocation2 + $0x18] sm:$0xff] %v9752
  %9789 = vst [vmem:[#allocation2 + $0x20] sm:$0xff] %v9753
  %9790 = vst [vmem:[#allocation2 + $0x28] sm:$0xff] %v9754
  %9791 = vst [vmem:[#allocation2 + $0x30] sm:$0xff] %v9755
  %9792 = vst [vmem:[#allocation2 + $0x38] sm:$0xff] %v9756
  %9793 = vst [vmem:[#allocation2 + $0x40] sm:$0xff] %v9757
  %9794 = vst [vmem:[#allocation2 + $0x48] sm:$0xff] %v9758
  %9795 = vst [vmem:[#allocation2 + $0x50] sm:$0xff] %v9759
  %9796 = vst [vmem:[#allocation2 + $0x58] sm:$0xff] %v9760
  %9797 = vst [vmem:[#allocation2 + $0x60] sm:$0xff] %v9761
  %9798 = vst [vmem:[#allocation2 + $0x68] sm:$0xff] %v9762
  %9799 = vst [vmem:[#allocation2 + $0x70] sm:$0xff] %v9763
  %9800 = vst [vmem:[#allocation2 + $0x78] sm:$0xff] %v9764
  %9801 = vst [vmem:[#allocation2 + $0x80] sm:$0xff] %v9765
  %9802 = vst [vmem:[#allocation2 + $0x88] sm:$0xff] %v9766
  %9803 = vst [vmem:[#allocation2 + $0x90] sm:$0xff] %v9767
  %9804 = vst [vmem:[#allocation2 + $0x98] sm:$0xff] %v9768
  %9805 = vst [vmem:[#allocation2 + $0xa0] sm:$0xff] %v9769
  %9806 = vst [vmem:[#allocation2 + $0xa8] sm:$0xff] %v9770
  %9807 = vst [vmem:[#allocation2 + $0xb0] sm:$0xff] %v9771
  %9808 = vst [vmem:[#allocation2 + $0xb8] sm:$0xff] %v9772
  %9809 = vst [vmem:[#allocation2 + $0xc0] sm:$0xff] %v9773
  %9810 = vst [vmem:[#allocation2 + $0xc8] sm:$0xff] %v9774
  %9811 = vst [vmem:[#allocation2 + $0xd0] sm:$0xff] %v9775
  %9812 = vst [vmem:[#allocation2 + $0xd8] sm:$0xff] %v9776
  %9813 = vst [vmem:[#allocation2 + $0xe0] sm:$0xff] %v9777
  %9814 = vst [vmem:[#allocation2 + $0xe8] sm:$0xff] %v9778
  %9815 = vst [vmem:[#allocation2 + $0xf0] sm:$0xff] %v9779
  %9816 = vst [vmem:[#allocation2 + $0xf8] sm:$0xff] %v9780
  %9817 = vst [vmem:[#allocation2 + $0x100] sm:$0xff] %v9781
  %9818 = vst [vmem:[#allocation2 + $0x108] sm:$0xff] %v9782
  %9819 = vst [vmem:[#allocation2 + $0x110] sm:$0xff] %v9783
  %9820 = vst [vmem:[#allocation2 + $0x118] sm:$0xff] %v9784
  %v9821 = vld [vmem:[%s5476 + $0x10] sm:$0x8]
  %v9822 = vld [vmem:[%s5476 + $0x14] sm:$0xf]
  %v9823 = vld [vmem:[%s5476 + $0x18] sm:$0xf]
  %v9824 = vld [vmem:[%s5476 + $0x1c] sm:$0xf]
  %v9825 = vld [vmem:[%s5476 + $0x20] sm:$0xf]
  %v9826 = vld [vmem:[%s5476 + $0x24] sm:$0xf]
  %v9827 = vld [vmem:[%s5476 + $0x28] sm:$0xf]
  %v9828 = vld [vmem:[%s5476 + $0x2c] sm:$0xf]
  %v9829 = vld [vmem:[%s5476 + $0x30] sm:$0xf]
  %v9830 = vld [vmem:[%s5476 + $0x34] sm:$0xf]
  %v9831 = vld [vmem:[%s5476 + $0x38] sm:$0xf]
  %v9832 = vld [vmem:[%s5476 + $0x3c] sm:$0xf]
  %v9833 = vld [vmem:[%s5476 + $0x40] sm:$0xf]
  %v9834 = vld [vmem:[%s5476 + $0x44] sm:$0xf]
  %v9835 = vld [vmem:[%s5476 + $0x48] sm:$0xf]
  %v9836 = vld [vmem:[%s5476 + $0x4c] sm:$0xf]
  %v9837 = vld [vmem:[%s5476 + $0x50] sm:$0xf]
  %v9838 = vld [vmem:[%s5476 + $0x54] sm:$0xf]
  %v9839 = vld [vmem:[%s5476 + $0x58] sm:$0xf]
  %v9840 = vld [vmem:[%s5476 + $0x5c] sm:$0xf]
  %v9841 = vld [vmem:[%s5476 + $0x60] sm:$0xf]
  %v9842 = vld [vmem:[%s5476 + $0x64] sm:$0xf]
  %v9843 = vld [vmem:[%s5476 + $0x68] sm:$0xf]
  %v9844 = vld [vmem:[%s5476 + $0x6c] sm:$0xf]
  %v9845 = vld [vmem:[%s5476 + $0x70] sm:$0xf]
  %v9846 = vld [vmem:[%s5476 + $0x74] sm:$0xf]
  %v9847 = vld [vmem:[%s5476 + $0x78] sm:$0xf]
  %v9848 = vld [vmem:[%s5476 + $0x7c] sm:$0xf]
  %v9849 = vld [vmem:[%s5476 + $0x80] sm:$0xf]
  %v9850 = vld [vmem:[%s5476 + $0x84] sm:$0xf]
  %v9851 = vld [vmem:[%s5476 + $0x88] sm:$0xf]
  %v9852 = vld [vmem:[%s5476 + $0x8c] sm:$0xf]
  %v9853 = vld [vmem:[%s5476 + $0x90] sm:$0xf]
  %v9854 = vld [vmem:[%s5476 + $0x94] sm:$0xf]
  %v9855 = vld [vmem:[%s5476 + $0x98] sm:$0xf]
  %v9856 = vld [vmem:[%s5476 + $0x9c] sm:$0xf]
  %v9857 = vld [vmem:[%s5476 + $0xa0] sm:$0x7]
  %v9858 = vld [vmem:[%s4449] sm:$0xf]
  %v9896 = vunpack.c.l.b16 %v9821
  %v9897 = vunpack.c.l.b16 %v9822
  %v9898 = vunpack.c.l.b16 %v9823
  %v9899 = vunpack.c.l.b16 %v9824
  %v9900 = vunpack.c.l.b16 %v9825
  %v9901 = vunpack.c.l.b16 %v9826
  %v9902 = vunpack.c.l.b16 %v9827
  %v9903 = vunpack.c.l.b16 %v9828
  %v9904 = vunpack.c.l.b16 %v9829
  %v9905 = vunpack.c.l.b16 %v9830
  %v9906 = vunpack.c.l.b16 %v9831
  %v9907 = vunpack.c.l.b16 %v9832
  %v9908 = vunpack.c.l.b16 %v9833
  %v9909 = vunpack.c.l.b16 %v9834
  %v9910 = vunpack.c.l.b16 %v9835
  %v9911 = vunpack.c.l.b16 %v9836
  %v9912 = vunpack.c.l.b16 %v9837
  %v9913 = vunpack.c.l.b16 %v9838
  %v9914 = vunpack.c.l.b16 %v9839
  %v9915 = vunpack.c.l.b16 %v9840
  %v9916 = vunpack.c.l.b16 %v9841
  %v9917 = vunpack.c.l.b16 %v9842
  %v9918 = vunpack.c.l.b16 %v9843
  %v9919 = vunpack.c.l.b16 %v9844
  %v9920 = vunpack.c.l.b16 %v9845
  %v9921 = vunpack.c.l.b16 %v9846
  %v9922 = vunpack.c.l.b16 %v9847
  %v9923 = vunpack.c.l.b16 %v9848
  %v9924 = vunpack.c.l.b16 %v9849
  %v9925 = vunpack.c.l.b16 %v9850
  %v9926 = vunpack.c.l.b16 %v9851
  %v9927 = vunpack.c.l.b16 %v9852
  %v9928 = vunpack.c.l.b16 %v9853
  %v9929 = vunpack.c.l.b16 %v9854
  %v9930 = vunpack.c.l.b16 %v9855
  %v9931 = vunpack.c.l.b16 %v9856
  %v9932 = vunpack.c.l.b16 %v9857
  %v9933 = vpack.c.b16 %v9897, %v9896
  %v9934 = vpack.c.b16 %v9899, %v9898
  %v9935 = vpack.c.b16 %v9901, %v9900
  %v9936 = vpack.c.b16 %v9903, %v9902
  %v9937 = vpack.c.b16 %v9905, %v9904
  %v9938 = vpack.c.b16 %v9907, %v9906
  %v9939 = vpack.c.b16 %v9909, %v9908
  %v9940 = vpack.c.b16 %v9911, %v9910
  %v9941 = vpack.c.b16 %v9913, %v9912
  %v9942 = vpack.c.b16 %v9915, %v9914
  %v9943 = vpack.c.b16 %v9917, %v9916
  %v9944 = vpack.c.b16 %v9919, %v9918
  %v9945 = vpack.c.b16 %v9921, %v9920
  %v9946 = vpack.c.b16 %v9923, %v9922
  %v9947 = vpack.c.b16 %v9925, %v9924
  %v9948 = vpack.c.b16 %v9927, %v9926
  %v9949 = vpack.c.b16 %v9929, %v9928
  %v9950 = vpack.c.b16 %v9931, %v9930
  %v9951 = vpack.c.b16 %v9932, %v9932
  %v9952 = vrot.slane %v9933, 3
  %v9953 = vrot.slane %v9934, 3
  %v9954 = vsel %vm4544, %v9952, %v9953
  %v9955 = vrot.slane %v9935, 3
  %v9956 = vsel %vm4544, %v9953, %v9955
  %v9957 = vrot.slane %v9936, 3
  %v9958 = vsel %vm4544, %v9955, %v9957
  %v9959 = vrot.slane %v9937, 3
  %v9960 = vsel %vm4544, %v9957, %v9959
  %v9961 = vrot.slane %v9938, 3
  %v9962 = vsel %vm4544, %v9959, %v9961
  %v9963 = vrot.slane %v9939, 3
  %v9964 = vsel %vm4544, %v9961, %v9963
  %v9965 = vrot.slane %v9940, 3
  %v9966 = vsel %vm4544, %v9963, %v9965
  %v9967 = vrot.slane %v9941, 3
  %v9968 = vsel %vm4544, %v9965, %v9967
  %v9969 = vrot.slane %v9942, 3
  %v9970 = vsel %vm4544, %v9967, %v9969
  %v9971 = vrot.slane %v9943, 3
  %v9972 = vsel %vm4544, %v9969, %v9971
  %v9973 = vrot.slane %v9944, 3
  %v9974 = vsel %vm4544, %v9971, %v9973
  %v9975 = vrot.slane %v9945, 3
  %v9976 = vsel %vm4544, %v9973, %v9975
  %v9977 = vrot.slane %v9946, 3
  %v9978 = vsel %vm4544, %v9975, %v9977
  %v9979 = vrot.slane %v9947, 3
  %v9980 = vsel %vm4544, %v9977, %v9979
  %v9981 = vrot.slane %v9948, 3
  %v9982 = vsel %vm4544, %v9979, %v9981
  %v9983 = vrot.slane %v9949, 3
  %v9984 = vsel %vm4544, %v9981, %v9983
  %v9985 = vrot.slane %v9950, 3
  %v9986 = vsel %vm4544, %v9983, %v9985
  %v9987 = vrot.slane %v9951, 3
  %v9988 = vsel %vm4544, %v9985, %v9987
  %v9990 = vsel %vm181, %v9954, 0
  %v9993 = vsel %vm181, %v9956, 0
  %v9996 = vsel %vm181, %v9958, 0
  %v9999 = vsel %vm181, %v9960, 0
  %v10002 = vsel %vm181, %v9962, 0
  %v10005 = vsel %vm181, %v9964, 0
  %v10008 = vsel %vm181, %v9966, 0
  %v10011 = vsel %vm181, %v9968, 0
  %v10014 = vsel %vm181, %v9970, 0
  %v10017 = vsel %vm181, %v9972, 0
  %v10020 = vsel %vm181, %v9974, 0
  %v10023 = vsel %vm181, %v9976, 0
  %v10026 = vsel %vm181, %v9978, 0
  %v10029 = vsel %vm181, %v9980, 0
  %v10032 = vsel %vm181, %v9982, 0
  %v10035 = vsel %vm181, %v9984, 0
  %v10038 = vsel %vm181, %v9986, 0
  %v10041 = vsel %vm181, %v9988, 0
  %v10044 = vsel %vm236, %v9858, 0
  %10046 = vmatprep.subr.bf16.mxu0 0
  %10047 = vmatpush1.bf16.msra.mxu0 %v10044
  %10048 = vmatprep.subr.bf16.mxu0 0
  %10049 = vmatpush1.bf16.msra.mxu0 0
  %10050 = vmatprep.subr.bf16.mxu0 0
  %10051 = vmatpush1.bf16.msra.mxu0 0
  %10052 = vmatprep.subr.bf16.mxu0 0
  %10053 = vmatpush1.bf16.msra.mxu0 0
  %10054 = vmatprep.subr.bf16.mxu0 0
  %10055 = vmatpush1.bf16.msra.mxu0 0
  %10056 = vmatprep.subr.bf16.mxu0 0
  %10057 = vmatpush1.bf16.msra.mxu0 0
  %10058 = vmatprep.subr.bf16.mxu0 0
  %10059 = vmatpush1.bf16.msra.mxu0 0
  %10060 = vmatprep.subr.bf16.mxu0 0
  %10061 = vmatpush1.bf16.msra.mxu0 0
  %10062 = vmatprep.subr.bf16.mxu0 0
  %10063 = vmatpush1.bf16.msra.mxu0 0
  %10064 = vmatprep.subr.bf16.mxu0 0
  %10065 = vmatpush1.bf16.msra.mxu0 0
  %10066 = vmatprep.subr.bf16.mxu0 0
  %10067 = vmatpush1.bf16.msra.mxu0 0
  %10068 = vmatprep.subr.bf16.mxu0 0
  %10069 = vmatpush1.bf16.msra.mxu0 0
  %10070 = vmatprep.subr.bf16.mxu0 0
  %10071 = vmatpush1.bf16.msra.mxu0 0
  %10072 = vmatprep.subr.bf16.mxu0 0
  %10073 = vmatpush1.bf16.msra.mxu0 0
  %10074 = vmatprep.subr.bf16.mxu0 0
  %10075 = vmatpush1.bf16.msra.mxu0 0
  %10076 = vmatprep.subr.bf16.mxu0 0
  %10077 = vmatpush1.bf16.msra.mxu0 0
  %10078 = vmatprep.mubr.bf16.mxu0 0
  %10079 = vmatmul.mubr.bf16.gmra.mrb[0].mxu0 %v9990
  %v10080 = vpop.f32.mrb[0].mxu0
  %v10081 = vadd.f32 0.0, %v10080
  %v10082 = vpop.f32.mrb[0].mxu0
  %v10083 = vpop.f32.mrb[0].mxu0
  %v10084 = vadd.f32 0.0, %v10083
  %v10085 = vpop.f32.mrb[0].mxu0
  %10086 = vmatprep.mubr.bf16.mxu0 0
  %10087 = vmatmul.mubr.bf16.gmra.mrb[0].mxu0 %v9993
  %v10088 = vpop.f32.mrb[0].mxu0
  %v10089 = vadd.f32 0.0, %v10088
  %v10090 = vpop.f32.mrb[0].mxu0
  %v10091 = vpop.f32.mrb[0].mxu0
  %v10092 = vadd.f32 0.0, %v10091
  %v10093 = vpop.f32.mrb[0].mxu0
  %10094 = vmatprep.mubr.bf16.mxu0 0
  %10095 = vmatmul.mubr.bf16.gmra.mrb[0].mxu0 %v9996
  %v10096 = vpop.f32.mrb[0].mxu0
  %v10097 = vadd.f32 0.0, %v10096
  %v10098 = vpop.f32.mrb[0].mxu0
  %v10099 = vpop.f32.mrb[0].mxu0
  %v10100 = vadd.f32 0.0, %v10099
  %v10101 = vpop.f32.mrb[0].mxu0
  %10102 = vmatprep.mubr.bf16.mxu0 0
  %10103 = vmatmul.mubr.bf16.gmra.mrb[0].mxu0 %v9999
  %v10104 = vpop.f32.mrb[0].mxu0
  %v10105 = vadd.f32 0.0, %v10104
  %v10106 = vpop.f32.mrb[0].mxu0
  %v10107 = vpop.f32.mrb[0].mxu0
  %v10108 = vadd.f32 0.0, %v10107
  %v10109 = vpop.f32.mrb[0].mxu0
  %10110 = vmatprep.mubr.bf16.mxu0 0
  %10111 = vmatmul.mubr.bf16.gmra.mrb[0].mxu0 %v10002
  %v10112 = vpop.f32.mrb[0].mxu0
  %v10113 = vadd.f32 0.0, %v10112
  %v10114 = vpop.f32.mrb[0].mxu0
  %v10115 = vpop.f32.mrb[0].mxu0
  %v10116 = vadd.f32 0.0, %v10115
  %v10117 = vpop.f32.mrb[0].mxu0
  %10118 = vmatprep.mubr.bf16.mxu0 0
  %10119 = vmatmul.mubr.bf16.gmra.mrb[0].mxu0 %v10005
  %v10120 = vpop.f32.mrb[0].mxu0
  %v10121 = vadd.f32 0.0, %v10120
  %v10122 = vpop.f32.mrb[0].mxu0
  %v10123 = vpop.f32.mrb[0].mxu0
  %v10124 = vadd.f32 0.0, %v10123
  %v10125 = vpop.f32.mrb[0].mxu0
  %10126 = vmatprep.mubr.bf16.mxu0 0
  %10127 = vmatmul.mubr.bf16.gmra.mrb[0].mxu0 %v10008
  %v10128 = vpop.f32.mrb[0].mxu0
  %v10129 = vadd.f32 0.0, %v10128
  %v10130 = vpop.f32.mrb[0].mxu0
  %v10131 = vpop.f32.mrb[0].mxu0
  %v10132 = vadd.f32 0.0, %v10131
  %v10133 = vpop.f32.mrb[0].mxu0
  %10134 = vmatprep.mubr.bf16.mxu0 0
  %10135 = vmatmul.mubr.bf16.gmra.mrb[0].mxu0 %v10011
  %v10136 = vpop.f32.mrb[0].mxu0
  %v10137 = vadd.f32 0.0, %v10136
  %v10138 = vpop.f32.mrb[0].mxu0
  %v10139 = vpop.f32.mrb[0].mxu0
  %v10140 = vadd.f32 0.0, %v10139
  %v10141 = vpop.f32.mrb[0].mxu0
  %10142 = vmatprep.mubr.bf16.mxu0 0
  %10143 = vmatmul.mubr.bf16.gmra.mrb[0].mxu0 %v10014
  %v10144 = vpop.f32.mrb[0].mxu0
  %v10145 = vadd.f32 0.0, %v10144
  %v10146 = vpop.f32.mrb[0].mxu0
  %v10147 = vpop.f32.mrb[0].mxu0
  %v10148 = vadd.f32 0.0, %v10147
  %v10149 = vpop.f32.mrb[0].mxu0
  %10150 = vmatprep.mubr.bf16.mxu0 0
  %10151 = vmatmul.mubr.bf16.gmra.mrb[0].mxu0 %v10017
  %v10152 = vpop.f32.mrb[0].mxu0
  %v10153 = vadd.f32 0.0, %v10152
  %v10154 = vpop.f32.mrb[0].mxu0
  %v10155 = vpop.f32.mrb[0].mxu0
  %v10156 = vadd.f32 0.0, %v10155
  %v10157 = vpop.f32.mrb[0].mxu0
  %10158 = vmatprep.mubr.bf16.mxu0 0
  %10159 = vmatmul.mubr.bf16.gmra.mrb[0].mxu0 %v10020
  %v10160 = vpop.f32.mrb[0].mxu0
  %v10161 = vadd.f32 0.0, %v10160
  %v10162 = vpop.f32.mrb[0].mxu0
  %v10163 = vpop.f32.mrb[0].mxu0
  %v10164 = vadd.f32 0.0, %v10163
  %v10165 = vpop.f32.mrb[0].mxu0
  %10166 = vmatprep.mubr.bf16.mxu0 0
  %10167 = vmatmul.mubr.bf16.gmra.mrb[0].mxu0 %v10023
  %v10168 = vpop.f32.mrb[0].mxu0
  %v10169 = vadd.f32 0.0, %v10168
  %v10170 = vpop.f32.mrb[0].mxu0
  %v10171 = vpop.f32.mrb[0].mxu0
  %v10172 = vadd.f32 0.0, %v10171
  %v10173 = vpop.f32.mrb[0].mxu0
  %10174 = vmatprep.mubr.bf16.mxu0 0
  %10175 = vmatmul.mubr.bf16.gmra.mrb[0].mxu0 %v10026
  %v10176 = vpop.f32.mrb[0].mxu0
  %v10177 = vadd.f32 0.0, %v10176
  %v10178 = vpop.f32.mrb[0].mxu0
  %v10179 = vpop.f32.mrb[0].mxu0
  %v10180 = vadd.f32 0.0, %v10179
  %v10181 = vpop.f32.mrb[0].mxu0
  %10182 = vmatprep.mubr.bf16.mxu0 0
  %10183 = vmatmul.mubr.bf16.gmra.mrb[0].mxu0 %v10029
  %v10184 = vpop.f32.mrb[0].mxu0
  %v10185 = vadd.f32 0.0, %v10184
  %v10186 = vpop.f32.mrb[0].mxu0
  %v10187 = vpop.f32.mrb[0].mxu0
  %v10188 = vadd.f32 0.0, %v10187
  %v10189 = vpop.f32.mrb[0].mxu0
  %10190 = vmatprep.mubr.bf16.mxu0 0
  %10191 = vmatmul.mubr.bf16.gmra.mrb[0].mxu0 %v10032
  %v10192 = vpop.f32.mrb[0].mxu0
  %v10193 = vadd.f32 0.0, %v10192
  %v10194 = vpop.f32.mrb[0].mxu0
  %v10195 = vpop.f32.mrb[0].mxu0
  %v10196 = vadd.f32 0.0, %v10195
  %v10197 = vpop.f32.mrb[0].mxu0
  %10198 = vmatprep.mubr.bf16.mxu0 0
  %10199 = vmatmul.mubr.bf16.gmra.mrb[0].mxu0 %v10035
  %v10200 = vpop.f32.mrb[0].mxu0
  %v10201 = vadd.f32 0.0, %v10200
  %v10202 = vpop.f32.mrb[0].mxu0
  %v10203 = vpop.f32.mrb[0].mxu0
  %v10204 = vadd.f32 0.0, %v10203
  %v10205 = vpop.f32.mrb[0].mxu0
  %10206 = vmatprep.mubr.bf16.mxu0 0
  %10207 = vmatmul.mubr.bf16.gmra.mrb[0].mxu0 %v10038
  %v10208 = vpop.f32.mrb[0].mxu0
  %v10209 = vadd.f32 0.0, %v10208
  %v10210 = vpop.f32.mrb[0].mxu0
  %v10211 = vpop.f32.mrb[0].mxu0
  %v10212 = vadd.f32 0.0, %v10211
  %v10213 = vpop.f32.mrb[0].mxu0
  %10214 = vmatprep.mubr.bf16.mxu0 0
  %10215 = vmatmul.mubr.bf16.gmra.mrb[0].mxu0 %v10041
  %v10216 = vpop.f32.mrb[0].mxu0
  %v10217 = vadd.f32 0.0, %v10216
  %v10218 = vpop.f32.mrb[0].mxu0
  %v10219 = vpop.f32.mrb[0].mxu0
  %v10220 = vadd.f32 0.0, %v10219
  %v10221 = vpop.f32.mrb[0].mxu0
  %10222 = vdwg.mxu0
  %v10223 = vld [vmem:[#allocation2] sm:$0xff]
  %v10224 = vld [vmem:[#allocation2 + $0x8] sm:$0xff]
  %v10225 = vld [vmem:[#allocation2 + $0x10] sm:$0xff]
  %v10226 = vld [vmem:[#allocation2 + $0x18] sm:$0xff]
  %v10227 = vld [vmem:[#allocation2 + $0x20] sm:$0xff]
  %v10228 = vld [vmem:[#allocation2 + $0x28] sm:$0xff]
  %v10229 = vld [vmem:[#allocation2 + $0x30] sm:$0xff]
  %v10230 = vld [vmem:[#allocation2 + $0x38] sm:$0xff]
  %v10231 = vld [vmem:[#allocation2 + $0x40] sm:$0xff]
  %v10232 = vld [vmem:[#allocation2 + $0x48] sm:$0xff]
  %v10233 = vld [vmem:[#allocation2 + $0x50] sm:$0xff]
  %v10234 = vld [vmem:[#allocation2 + $0x58] sm:$0xff]
  %v10235 = vld [vmem:[#allocation2 + $0x60] sm:$0xff]
  %v10236 = vld [vmem:[#allocation2 + $0x68] sm:$0xff]
  %v10237 = vld [vmem:[#allocation2 + $0x70] sm:$0xff]
  %v10238 = vld [vmem:[#allocation2 + $0x78] sm:$0xff]
  %v10239 = vld [vmem:[#allocation2 + $0x80] sm:$0xff]
  %v10240 = vld [vmem:[#allocation2 + $0x88] sm:$0xff]
  %v10241 = vld [vmem:[#allocation2 + $0x90] sm:$0xff]
  %v10242 = vld [vmem:[#allocation2 + $0x98] sm:$0xff]
  %v10243 = vld [vmem:[#allocation2 + $0xa0] sm:$0xff]
  %v10244 = vld [vmem:[#allocation2 + $0xa8] sm:$0xff]
  %v10245 = vld [vmem:[#allocation2 + $0xb0] sm:$0xff]
  %v10246 = vld [vmem:[#allocation2 + $0xb8] sm:$0xff]
  %v10247 = vld [vmem:[#allocation2 + $0xc0] sm:$0xff]
  %v10248 = vld [vmem:[#allocation2 + $0xc8] sm:$0xff]
  %v10249 = vld [vmem:[#allocation2 + $0xd0] sm:$0xff]
  %v10250 = vld [vmem:[#allocation2 + $0xd8] sm:$0xff]
  %v10251 = vld [vmem:[#allocation2 + $0xe0] sm:$0xff]
  %v10252 = vld [vmem:[#allocation2 + $0xe8] sm:$0xff]
  %v10253 = vld [vmem:[#allocation2 + $0xf0] sm:$0xff]
  %v10254 = vld [vmem:[#allocation2 + $0xf8] sm:$0xff]
  %v10255 = vld [vmem:[#allocation2 + $0x100] sm:$0xff]
  %v10256 = vld [vmem:[#allocation2 + $0x108] sm:$0xff]
  %v10257 = vld [vmem:[#allocation2 + $0x110] sm:$0xff]
  %v10258 = vld [vmem:[#allocation2 + $0x118] sm:$0xff]
  %v10259 = vadd.f32 %v10223, %v10081
  %v10260 = vadd.f32 %v10224, %v10084
  %v10261 = vadd.f32 %v10225, %v10089
  %v10262 = vadd.f32 %v10226, %v10092
  %v10263 = vadd.f32 %v10227, %v10097
  %v10264 = vadd.f32 %v10228, %v10100
  %v10265 = vadd.f32 %v10229, %v10105
  %v10266 = vadd.f32 %v10230, %v10108
  %v10267 = vadd.f32 %v10231, %v10113
  %v10268 = vadd.f32 %v10232, %v10116
  %v10269 = vadd.f32 %v10233, %v10121
  %v10270 = vadd.f32 %v10234, %v10124
  %v10271 = vadd.f32 %v10235, %v10129
  %v10272 = vadd.f32 %v10236, %v10132
  %v10273 = vadd.f32 %v10237, %v10137
  %v10274 = vadd.f32 %v10238, %v10140
  %v10275 = vadd.f32 %v10239, %v10145
  %v10276 = vadd.f32 %v10240, %v10148
  %v10277 = vadd.f32 %v10241, %v10153
  %v10278 = vadd.f32 %v10242, %v10156
  %v10279 = vadd.f32 %v10243, %v10161
  %v10280 = vadd.f32 %v10244, %v10164
  %v10281 = vadd.f32 %v10245, %v10169
  %v10282 = vadd.f32 %v10246, %v10172
  %v10283 = vadd.f32 %v10247, %v10177
  %v10284 = vadd.f32 %v10248, %v10180
  %v10285 = vadd.f32 %v10249, %v10185
  %v10286 = vadd.f32 %v10250, %v10188
  %v10287 = vadd.f32 %v10251, %v10193
  %v10288 = vadd.f32 %v10252, %v10196
  %v10289 = vadd.f32 %v10253, %v10201
  %v10290 = vadd.f32 %v10254, %v10204
  %v10291 = vadd.f32 %v10255, %v10209
  %v10292 = vadd.f32 %v10256, %v10212
  %v10293 = vadd.f32 %v10257, %v10217
  %v10294 = vadd.f32 %v10258, %v10220
  %10295 = vst [vmem:[#allocation2] sm:$0xff] %v10259
  %10296 = vst [vmem:[#allocation2 + $0x8] sm:$0xff] %v10260
  %10297 = vst [vmem:[#allocation2 + $0x10] sm:$0xff] %v10261
  %10298 = vst [vmem:[#allocation2 + $0x18] sm:$0xff] %v10262
  %10299 = vst [vmem:[#allocation2 + $0x20] sm:$0xff] %v10263
  %10300 = vst [vmem:[#allocation2 + $0x28] sm:$0xff] %v10264
  %10301 = vst [vmem:[#allocation2 + $0x30] sm:$0xff] %v10265
  %10302 = vst [vmem:[#allocation2 + $0x38] sm:$0xff] %v10266
  %10303 = vst [vmem:[#allocation2 + $0x40] sm:$0xff] %v10267
  %10304 = vst [vmem:[#allocation2 + $0x48] sm:$0xff] %v10268
  %10305 = vst [vmem:[#allocation2 + $0x50] sm:$0xff] %v10269
  %10306 = vst [vmem:[#allocation2 + $0x58] sm:$0xff] %v10270
  %10307 = vst [vmem:[#allocation2 + $0x60] sm:$0xff] %v10271
  %10308 = vst [vmem:[#allocation2 + $0x68] sm:$0xff] %v10272
  %10309 = vst [vmem:[#allocation2 + $0x70] sm:$0xff] %v10273
  %10310 = vst [vmem:[#allocation2 + $0x78] sm:$0xff] %v10274
  %10311 = vst [vmem:[#allocation2 + $0x80] sm:$0xff] %v10275
  %10312 = vst [vmem:[#allocation2 + $0x88] sm:$0xff] %v10276
  %10313 = vst [vmem:[#allocation2 + $0x90] sm:$0xff] %v10277
  %10314 = vst [vmem:[#allocation2 + $0x98] sm:$0xff] %v10278
  %10315 = vst [vmem:[#allocation2 + $0xa0] sm:$0xff] %v10279
  %10316 = vst [vmem:[#allocation2 + $0xa8] sm:$0xff] %v10280
  %10317 = vst [vmem:[#allocation2 + $0xb0] sm:$0xff] %v10281
  %10318 = vst [vmem:[#allocation2 + $0xb8] sm:$0xff] %v10282
  %10319 = vst [vmem:[#allocation2 + $0xc0] sm:$0xff] %v10283
  %10320 = vst [vmem:[#allocation2 + $0xc8] sm:$0xff] %v10284
  %10321 = vst [vmem:[#allocation2 + $0xd0] sm:$0xff] %v10285
  %10322 = vst [vmem:[#allocation2 + $0xd8] sm:$0xff] %v10286
  %10323 = vst [vmem:[#allocation2 + $0xe0] sm:$0xff] %v10287
  %10324 = vst [vmem:[#allocation2 + $0xe8] sm:$0xff] %v10288
  %10325 = vst [vmem:[#allocation2 + $0xf0] sm:$0xff] %v10289
  %10326 = vst [vmem:[#allocation2 + $0xf8] sm:$0xff] %v10290
  %10327 = vst [vmem:[#allocation2 + $0x100] sm:$0xff] %v10291
  %10328 = vst [vmem:[#allocation2 + $0x108] sm:$0xff] %v10292
  %10329 = vst [vmem:[#allocation2 + $0x110] sm:$0xff] %v10293
  %10330 = vst [vmem:[#allocation2 + $0x118] sm:$0xff] %v10294
  %v10331 = vld [vmem:[#allocation2] sm:$0xff]
  %v10332 = vld [vmem:[#allocation2 + $0x8] sm:$0xff]
  %v10333 = vld [vmem:[#allocation2 + $0x10] sm:$0xff]
  %v10334 = vld [vmem:[#allocation2 + $0x18] sm:$0xff]
  %v10335 = vld [vmem:[#allocation2 + $0x20] sm:$0xff]
  %v10336 = vld [vmem:[#allocation2 + $0x28] sm:$0xff]
  %v10337 = vld [vmem:[#allocation2 + $0x30] sm:$0xff]
  %v10338 = vld [vmem:[#allocation2 + $0x38] sm:$0xff]
  %v10339 = vld [vmem:[#allocation2 + $0x40] sm:$0xff]
  %v10340 = vld [vmem:[#allocation2 + $0x48] sm:$0xff]
  %v10341 = vld [vmem:[#allocation2 + $0x50] sm:$0xff]
  %v10342 = vld [vmem:[#allocation2 + $0x58] sm:$0xff]
  %v10343 = vld [vmem:[#allocation2 + $0x60] sm:$0xff]
  %v10344 = vld [vmem:[#allocation2 + $0x68] sm:$0xff]
  %v10345 = vld [vmem:[#allocation2 + $0x70] sm:$0xff]
  %v10346 = vld [vmem:[#allocation2 + $0x78] sm:$0xff]
  %v10347 = vld [vmem:[#allocation2 + $0x80] sm:$0xff]
  %v10348 = vld [vmem:[#allocation2 + $0x88] sm:$0xff]
  %v10349 = vld [vmem:[#allocation2 + $0x90] sm:$0xff]
  %v10350 = vld [vmem:[#allocation2 + $0x98] sm:$0xff]
  %v10351 = vld [vmem:[#allocation2 + $0xa0] sm:$0xff]
  %v10352 = vld [vmem:[#allocation2 + $0xa8] sm:$0xff]
  %v10353 = vld [vmem:[#allocation2 + $0xb0] sm:$0xff]
  %v10354 = vld [vmem:[#allocation2 + $0xb8] sm:$0xff]
  %v10355 = vld [vmem:[#allocation2 + $0xc0] sm:$0xff]
  %v10356 = vld [vmem:[#allocation2 + $0xc8] sm:$0xff]
  %v10357 = vld [vmem:[#allocation2 + $0xd0] sm:$0xff]
  %v10358 = vld [vmem:[#allocation2 + $0xd8] sm:$0xff]
  %v10359 = vld [vmem:[#allocation2 + $0xe0] sm:$0xff]
  %v10360 = vld [vmem:[#allocation2 + $0xe8] sm:$0xff]
  %v10361 = vld [vmem:[#allocation2 + $0xf0] sm:$0xff]
  %v10362 = vld [vmem:[#allocation2 + $0xf8] sm:$0xff]
  %v10363 = vld [vmem:[#allocation2 + $0x100] sm:$0xff]
  %v10364 = vld [vmem:[#allocation2 + $0x108] sm:$0xff]
  %v10365 = vld [vmem:[#allocation2 + $0x110] sm:$0xff]
  %v10366 = vld [vmem:[#allocation2 + $0x118] sm:$0xff]
  %v10367 = vmul.f32 %v10331, %v4963
  %v10368 = vmul.f32 %v10332, %v4968
  %v10369 = vmul.f32 %v10333, %v4973
  %v10370 = vmul.f32 %v10334, %v4978
  %v10371 = vmul.f32 %v10335, %v4983
  %v10372 = vmul.f32 %v10336, %v4988
  %v10373 = vmul.f32 %v10337, %v4993
  %v10374 = vmul.f32 %v10338, %v4998
  %v10375 = vmul.f32 %v10339, %v5003
  %v10376 = vmul.f32 %v10340, %v5008
  %v10377 = vmul.f32 %v10341, %v5013
  %v10378 = vmul.f32 %v10342, %v5018
  %v10379 = vmul.f32 %v10343, %v5023
  %v10380 = vmul.f32 %v10344, %v5028
  %v10381 = vmul.f32 %v10345, %v5033
  %v10382 = vmul.f32 %v10346, %v5038
  %v10383 = vmul.f32 %v10347, %v5043
  %v10384 = vmul.f32 %v10348, %v5048
  %v10385 = vmul.f32 %v10349, %v5053
  %v10386 = vmul.f32 %v10350, %v5058
  %v10387 = vmul.f32 %v10351, %v5063
  %v10388 = vmul.f32 %v10352, %v5068
  %v10389 = vmul.f32 %v10353, %v5073
  %v10390 = vmul.f32 %v10354, %v5078
  %v10391 = vmul.f32 %v10355, %v5083
  %v10392 = vmul.f32 %v10356, %v5088
  %v10393 = vmul.f32 %v10357, %v5093
  %v10394 = vmul.f32 %v10358, %v5098
  %v10395 = vmul.f32 %v10359, %v5103
  %v10396 = vmul.f32 %v10360, %v5108
  %v10397 = vmul.f32 %v10361, %v5113
  %v10398 = vmul.f32 %v10362, %v5118
  %v10399 = vmul.f32 %v10363, %v5123
  %v10400 = vmul.f32 %v10364, %v5128
  %v10401 = vmul.f32 %v10365, %v5133
  %v10402 = vmul.f32 %v10366, %v5138
  %v10403 = vadd.f32 %v10367, %v10368
  %v10404 = vadd.f32 %v10403, %v10369
  %v10405 = vadd.f32 %v10404, %v10370
  %v10406 = vadd.f32 %v10405, %v10371
  %v10407 = vadd.f32 %v10406, %v10372
  %v10408 = vadd.f32 %v10407, %v10373
  %v10409 = vadd.f32 %v10408, %v10374
  %v10410 = vadd.f32 %v10409, %v10375
  %v10411 = vadd.f32 %v10410, %v10376
  %v10412 = vadd.f32 %v10411, %v10377
  %v10413 = vadd.f32 %v10412, %v10378
  %v10414 = vadd.f32 %v10413, %v10379
  %v10415 = vadd.f32 %v10414, %v10380
  %v10416 = vadd.f32 %v10415, %v10381
  %v10417 = vadd.f32 %v10416, %v10382
  %v10418 = vadd.f32 %v10417, %v10383
  %v10419 = vadd.f32 %v10418, %v10384
  %v10420 = vadd.f32 %v10419, %v10385
  %v10421 = vadd.f32 %v10420, %v10386
  %v10422 = vadd.f32 %v10421, %v10387
  %v10423 = vadd.f32 %v10422, %v10388
  %v10424 = vadd.f32 %v10423, %v10389
  %v10425 = vadd.f32 %v10424, %v10390
  %v10426 = vadd.f32 %v10425, %v10391
  %v10427 = vadd.f32 %v10426, %v10392
  %v10428 = vadd.f32 %v10427, %v10393
  %v10429 = vadd.f32 %v10428, %v10394
  %v10430 = vadd.f32 %v10429, %v10395
  %v10431 = vadd.f32 %v10430, %v10396
  %v10432 = vadd.f32 %v10431, %v10397
  %v10433 = vadd.f32 %v10432, %v10398
  %v10434 = vadd.f32 %v10433, %v10399
  %v10435 = vadd.f32 %v10434, %v10400
  %v10436 = vadd.f32 %v10435, %v10401
  %v10437 = vadd.f32 %v10436, %v10402
  %v10438 = vrot.slane %v10437, 4
  %v10439 = vadd.f32 %v10437, %v10438
  %v10440 = vrot.slane %v10439, 2
  %v10441 = vadd.f32 %v10439, %v10440
  %v10442 = vrot.slane %v10441, 1
  %v10443 = vadd.f32 %v10441, %v10442
  %v10444 = vadd.f32 %v5217, %v10443
  %v10445 = vmul.f32 %v10367, %v10331
  %v10446 = vmul.f32 %v10368, %v10332
  %v10447 = vmul.f32 %v10369, %v10333
  %v10448 = vmul.f32 %v10370, %v10334
  %v10449 = vmul.f32 %v10371, %v10335
  %v10450 = vmul.f32 %v10372, %v10336
  %v10451 = vmul.f32 %v10373, %v10337
  %v10452 = vmul.f32 %v10374, %v10338
  %v10453 = vmul.f32 %v10375, %v10339
  %v10454 = vmul.f32 %v10376, %v10340
  %v10455 = vmul.f32 %v10377, %v10341
  %v10456 = vmul.f32 %v10378, %v10342
  %v10457 = vmul.f32 %v10379, %v10343
  %v10458 = vmul.f32 %v10380, %v10344
  %v10459 = vmul.f32 %v10381, %v10345
  %v10460 = vmul.f32 %v10382, %v10346
  %v10461 = vmul.f32 %v10383, %v10347
  %v10462 = vmul.f32 %v10384, %v10348
  %v10463 = vmul.f32 %v10385, %v10349
  %v10464 = vmul.f32 %v10386, %v10350
  %v10465 = vmul.f32 %v10387, %v10351
  %v10466 = vmul.f32 %v10388, %v10352
  %v10467 = vmul.f32 %v10389, %v10353
  %v10468 = vmul.f32 %v10390, %v10354
  %v10469 = vmul.f32 %v10391, %v10355
  %v10470 = vmul.f32 %v10392, %v10356
  %v10471 = vmul.f32 %v10393, %v10357
  %v10472 = vmul.f32 %v10394, %v10358
  %v10473 = vmul.f32 %v10395, %v10359
  %v10474 = vmul.f32 %v10396, %v10360
  %v10475 = vmul.f32 %v10397, %v10361
  %v10476 = vmul.f32 %v10398, %v10362
  %v10477 = vmul.f32 %v10399, %v10363
  %v10478 = vmul.f32 %v10400, %v10364
  %v10479 = vmul.f32 %v10401, %v10365
  %v10480 = vmul.f32 %v10402, %v10366
  %v10481 = vadd.f32 %v10445, %v10446
  %v10482 = vadd.f32 %v10481, %v10447
  %v10483 = vadd.f32 %v10482, %v10448
  %v10484 = vadd.f32 %v10483, %v10449
  %v10485 = vadd.f32 %v10484, %v10450
  %v10486 = vadd.f32 %v10485, %v10451
  %v10487 = vadd.f32 %v10486, %v10452
  %v10488 = vadd.f32 %v10487, %v10453
  %v10489 = vadd.f32 %v10488, %v10454
  %v10490 = vadd.f32 %v10489, %v10455
  %v10491 = vadd.f32 %v10490, %v10456
  %v10492 = vadd.f32 %v10491, %v10457
  %v10493 = vadd.f32 %v10492, %v10458
  %v10494 = vadd.f32 %v10493, %v10459
  %v10495 = vadd.f32 %v10494, %v10460
  %v10496 = vadd.f32 %v10495, %v10461
  %v10497 = vadd.f32 %v10496, %v10462
  %v10498 = vadd.f32 %v10497, %v10463
  %v10499 = vadd.f32 %v10498, %v10464
  %v10500 = vadd.f32 %v10499, %v10465
  %v10501 = vadd.f32 %v10500, %v10466
  %v10502 = vadd.f32 %v10501, %v10467
  %v10503 = vadd.f32 %v10502, %v10468
  %v10504 = vadd.f32 %v10503, %v10469
  %v10505 = vadd.f32 %v10504, %v10470
  %v10506 = vadd.f32 %v10505, %v10471
  %v10507 = vadd.f32 %v10506, %v10472
  %v10508 = vadd.f32 %v10507, %v10473
  %v10509 = vadd.f32 %v10508, %v10474
  %v10510 = vadd.f32 %v10509, %v10475
  %v10511 = vadd.f32 %v10510, %v10476
  %v10512 = vadd.f32 %v10511, %v10477
  %v10513 = vadd.f32 %v10512, %v10478
  %v10514 = vadd.f32 %v10513, %v10479
  %v10515 = vadd.f32 %v10514, %v10480
  %v10516 = vrot.slane %v10515, 4
  %v10517 = vadd.f32 %v10515, %v10516
  %v10518 = vrot.slane %v10517, 2
  %v10519 = vadd.f32 %v10517, %v10518
  %v10520 = vrot.slane %v10519, 1
  %v10521 = vadd.f32 %v10519, %v10520
  %v10522 = vadd.f32 %v5295, %v10521
  %v10523 = vpack.c.bf16 %v10332, %v10331
  %v10524 = vpack.c.bf16 %v10334, %v10333
  %v10525 = vpack.c.bf16 %v10336, %v10335
  %v10526 = vpack.c.bf16 %v10338, %v10337
  %v10527 = vpack.c.bf16 %v10340, %v10339
  %v10528 = vpack.c.bf16 %v10342, %v10341
  %v10529 = vpack.c.bf16 %v10344, %v10343
  %v10530 = vpack.c.bf16 %v10346, %v10345
  %v10531 = vpack.c.bf16 %v10348, %v10347
  %v10532 = vpack.c.bf16 %v10350, %v10349
  %v10533 = vpack.c.bf16 %v10352, %v10351
  %v10534 = vpack.c.bf16 %v10354, %v10353
  %v10535 = vpack.c.bf16 %v10356, %v10355
  %v10536 = vpack.c.bf16 %v10358, %v10357
  %v10537 = vpack.c.bf16 %v10360, %v10359
  %v10538 = vpack.c.bf16 %v10362, %v10361
  %v10539 = vpack.c.bf16 %v10364, %v10363
  %v10540 = vpack.c.bf16 %v10366, %v10365
  %v10559 = vunpack.c.l.b16 %v10523
  %v10560 = vunpack.c.h.b16 %v10523
  %v10561 = vunpack.c.l.b16 %v10524
  %v10562 = vunpack.c.h.b16 %v10524
  %v10563 = vunpack.c.l.b16 %v10525
  %v10564 = vunpack.c.h.b16 %v10525
  %v10565 = vunpack.c.l.b16 %v10526
  %v10566 = vunpack.c.h.b16 %v10526
  %v10567 = vunpack.c.l.b16 %v10527
  %v10568 = vunpack.c.h.b16 %v10527
  %v10569 = vunpack.c.l.b16 %v10528
  %v10570 = vunpack.c.h.b16 %v10528
  %v10571 = vunpack.c.l.b16 %v10529
  %v10572 = vunpack.c.h.b16 %v10529
  %v10573 = vunpack.c.l.b16 %v10530
  %v10574 = vunpack.c.h.b16 %v10530
  %v10575 = vunpack.c.l.b16 %v10531
  %v10576 = vunpack.c.h.b16 %v10531
  %v10577 = vunpack.c.l.b16 %v10532
  %v10578 = vunpack.c.h.b16 %v10532
  %v10579 = vunpack.c.l.b16 %v10533
  %v10580 = vunpack.c.h.b16 %v10533
  %v10581 = vunpack.c.l.b16 %v10534
  %v10582 = vunpack.c.h.b16 %v10534
  %v10583 = vunpack.c.l.b16 %v10535
  %v10584 = vunpack.c.h.b16 %v10535
  %v10585 = vunpack.c.l.b16 %v10536
  %v10586 = vunpack.c.h.b16 %v10536
  %v10587 = vunpack.c.l.b16 %v10537
  %v10588 = vunpack.c.h.b16 %v10537
  %v10589 = vunpack.c.l.b16 %v10538
  %v10590 = vunpack.c.h.b16 %v10538
  %v10591 = vunpack.c.l.b16 %v10539
  %v10592 = vunpack.c.h.b16 %v10539
  %v10593 = vunpack.c.l.b16 %v10540
  %v10594 = vunpack.c.h.b16 %v10540
  %v10595 = vpack.c.b16 %v10559, %v10559
  %v10596 = vpack.c.b16 %v10560, %v10560
  %v10597 = vpack.c.b16 %v10561, %v10561
  %v10598 = vpack.c.b16 %v10562, %v10562
  %v10599 = vpack.c.b16 %v10563, %v10563
  %v10600 = vpack.c.b16 %v10564, %v10564
  %v10601 = vpack.c.b16 %v10565, %v10565
  %v10602 = vpack.c.b16 %v10566, %v10566
  %v10603 = vpack.c.b16 %v10567, %v10567
  %v10604 = vpack.c.b16 %v10568, %v10568
  %v10605 = vpack.c.b16 %v10569, %v10569
  %v10606 = vpack.c.b16 %v10570, %v10570
  %v10607 = vpack.c.b16 %v10571, %v10571
  %v10608 = vpack.c.b16 %v10572, %v10572
  %v10609 = vpack.c.b16 %v10573, %v10573
  %v10610 = vpack.c.b16 %v10574, %v10574
  %v10611 = vpack.c.b16 %v10575, %v10575
  %v10612 = vpack.c.b16 %v10576, %v10576
  %v10613 = vpack.c.b16 %v10577, %v10577
  %v10614 = vpack.c.b16 %v10578, %v10578
  %v10615 = vpack.c.b16 %v10579, %v10579
  %v10616 = vpack.c.b16 %v10580, %v10580
  %v10617 = vpack.c.b16 %v10581, %v10581
  %v10618 = vpack.c.b16 %v10582, %v10582
  %v10619 = vpack.c.b16 %v10583, %v10583
  %v10620 = vpack.c.b16 %v10584, %v10584
  %v10621 = vpack.c.b16 %v10585, %v10585
  %v10622 = vpack.c.b16 %v10586, %v10586
  %v10623 = vpack.c.b16 %v10587, %v10587
  %v10624 = vpack.c.b16 %v10588, %v10588
  %v10625 = vpack.c.b16 %v10589, %v10589
  %v10626 = vpack.c.b16 %v10590, %v10590
  %v10627 = vpack.c.b16 %v10591, %v10591
  %v10628 = vpack.c.b16 %v10592, %v10592
  %v10629 = vpack.c.b16 %v10593, %v10593
  %v10630 = vpack.c.b16 %v10594, %v10594
  %s10667 = scalar_lea.vmem %s3, 144
  %10668 = vst [vmem:[%s10667] sm:$0xf] %v10595
  %10669 = vst [vmem:[%s10667 + $0x4] sm:$0xf] %v10596
  %10670 = vst [vmem:[%s10667 + $0x8] sm:$0xf] %v10597
  %10671 = vst [vmem:[%s10667 + $0xc] sm:$0xf] %v10598
  %10672 = vst [vmem:[%s10667 + $0x10] sm:$0xf] %v10599
  %10673 = vst [vmem:[%s10667 + $0x14] sm:$0xf] %v10600
  %10674 = vst [vmem:[%s10667 + $0x18] sm:$0xf] %v10601
  %10675 = vst [vmem:[%s10667 + $0x1c] sm:$0xf] %v10602
  %10676 = vst [vmem:[%s10667 + $0x20] sm:$0xf] %v10603
  %10677 = vst [vmem:[%s10667 + $0x24] sm:$0xf] %v10604
  %10678 = vst [vmem:[%s10667 + $0x28] sm:$0xf] %v10605
  %10679 = vst [vmem:[%s10667 + $0x2c] sm:$0xf] %v10606
  %10680 = vst [vmem:[%s10667 + $0x30] sm:$0xf] %v10607
  %10681 = vst [vmem:[%s10667 + $0x34] sm:$0xf] %v10608
  %10682 = vst [vmem:[%s10667 + $0x38] sm:$0xf] %v10609
  %10683 = vst [vmem:[%s10667 + $0x3c] sm:$0xf] %v10610
  %10684 = vst [vmem:[%s10667 + $0x40] sm:$0xf] %v10611
  %10685 = vst [vmem:[%s10667 + $0x44] sm:$0xf] %v10612
  %10686 = vst [vmem:[%s10667 + $0x48] sm:$0xf] %v10613
  %10687 = vst [vmem:[%s10667 + $0x4c] sm:$0xf] %v10614
  %10688 = vst [vmem:[%s10667 + $0x50] sm:$0xf] %v10615
  %10689 = vst [vmem:[%s10667 + $0x54] sm:$0xf] %v10616
  %10690 = vst [vmem:[%s10667 + $0x58] sm:$0xf] %v10617
  %10691 = vst [vmem:[%s10667 + $0x5c] sm:$0xf] %v10618
  %10692 = vst [vmem:[%s10667 + $0x60] sm:$0xf] %v10619
  %10693 = vst [vmem:[%s10667 + $0x64] sm:$0xf] %v10620
  %10694 = vst [vmem:[%s10667 + $0x68] sm:$0xf] %v10621
  %10695 = vst [vmem:[%s10667 + $0x6c] sm:$0xf] %v10622
  %10696 = vst [vmem:[%s10667 + $0x70] sm:$0xf] %v10623
  %10697 = vst [vmem:[%s10667 + $0x74] sm:$0xf] %v10624
  %10698 = vst [vmem:[%s10667 + $0x78] sm:$0xf] %v10625
  %10699 = vst [vmem:[%s10667 + $0x7c] sm:$0xf] %v10626
  %10700 = vst [vmem:[%s10667 + $0x80] sm:$0xf] %v10627
  %10701 = vst [vmem:[%s10667 + $0x84] sm:$0xf] %v10628
  %10702 = vst [vmem:[%s10667 + $0x88] sm:$0xf] %v10629
  %10703 = vst [vmem:[%s10667 + $0x8c] sm:$0xf] %v10630
  %10704 = vst [vmem:[%s4] sm:$0x1] %v10444
  %10705 = vst [vmem:[%s5] sm:$0x1] %v10522
  // Predicated region
  $region14: #{convolution15_forward.1} parent=0 // pred_check
    _
  $region15: #{convolution15_forward.1} parent=0 // pred_check_branch
    %10707 = sbr.rel (0) target = $region17
  $region16: #{convolution15_forward.1} parent=0 // pred_region
    _
  $region17: #{convolution15_forward.1} parent=0 // pred_fallthru
    _
  // Predicated region
  $region18: #{convolution15_forward.1} parent=0 // pred_check
    _
  $region19: #{convolution15_forward.1} parent=0 // pred_check_branch
    %10709 = sbr.rel (0) target = $region21
  $region20: #{convolution15_forward.1} parent=0 // pred_region
    _
  $region21: #{convolution15_forward.1} parent=0 // pred_fallthru
    _
  // Predicated region
  $region22: #{convolution15_forward.1} parent=0 // pred_check
    _
  $region23: #{convolution15_forward.1} parent=0 // pred_check_branch
    %10711 = sbr.rel (0) target = $region25
  $region24: #{convolution15_forward.1} parent=0 // pred_region
    _
  $region25: #{convolution15_forward.1} parent=0 // pred_fallthru
    _
  // Predicated region
  $region26: #{convolution15_forward.1} parent=0 // pred_check
    _
  $region27: #{convolution15_forward.1} parent=0 // pred_check_branch
    %10713 = sbr.rel (0) target = $region29
  $region28: #{convolution15_forward.1} parent=0 // pred_region
    _
  $region29: #{convolution15_forward.1} parent=0 // pred_fallthru
    _
  // Predicated region
  $region30: #{convolution15_forward.1} parent=0 // pred_check
    _
  $region31: #{convolution15_forward.1} parent=0 // pred_check_branch
    %10715 = sbr.rel (0) target = $region33
  $region32: #{convolution15_forward.1} parent=0 // pred_region
    _
  $region33: #{convolution15_forward.1} parent=0 // pred_fallthru
    _
  // Predicated region
  $region34: #{convolution15_forward.1} parent=0 // pred_check
    _
  $region35: #{convolution15_forward.1} parent=0 // pred_check_branch
    %10717 = sbr.rel (0) target = $region37
  $region36: #{convolution15_forward.1} parent=0 // pred_region
    _
  $region37: #{convolution15_forward.1} parent=0 // pred_fallthru
    _

</llo_original>
